<compile_context>
chip_gen: v6e
topology: v6e:2x2x1
jax: 0.10.0
libtpu: 0.0.40
codegen_flags: <defaults>
</compile_context>

<pallas_src>
import functools

import jax
import jax.numpy as jnp
from jax.experimental import pallas as pl
from jax.experimental.pallas import tpu as pltpu

# ----------------------------- small config ---------------------------------
NUM_LAYERS = 2      # num_layers   (scaled down from 6)
NUM_HEADS = 4       # num_heads    (scaled down from 8)
HIDDEN = 32         # hidden_size  (conv in-channels == transformer dim_feedforward)
FILTER = 64         # filter_size  (conv out-channels == transformer d_model)
KERNEL = 9          # kernel_size
SEQ = FILTER        # time dim T; must equal FILTER per the original module's transposes
BATCH = 2
LN_EPS = 1e-5


# --------------------------- in-kernel helpers --------------------------------
def _add_layernorm(x, y, g, b, eps=LN_EPS):
    """LayerNorm(x + y) over the last dim, all in f32."""
    z = x + y
    mu = jnp.mean(z, axis=-1, keepdims=True)
    zc = z - mu
    var = jnp.mean(zc * zc, axis=-1, keepdims=True)
    return zc * jax.lax.rsqrt(var + eps) * g + b


def _encoder_layer(xs, wqkv, wo, w1, w2, vb, qkv_scr, *, batch, seq, num_heads):
    """Post-norm nn.TransformerEncoderLayer (relu FFN, dropout=identity) on
    batch-row-stacked input.

    xs: (B*S, D) f32.  Weights bf16; vb is the (8, 3D) f32 bias / LayerNorm blob.
    Only the (S,S) attention core is split per batch; everything else runs on all
    B*S rows at once.  Returns (B*S, D) f32.
    """
    BS, D = xs.shape
    FF = w1.shape[1]
    dh = D // num_heads
    scale = 1.0 / float(dh) ** 0.5

    # unpack the per-layer bias / LN blob (rows: bqkv, bo, b1, b2, g1, be1, g2, be2)
    bqkv = vb[0:1, :]
    bo = vb[1:2, :D]
    b1 = vb[2:3, :FF]
    b2 = vb[3:4, :D]
    g1, be1 = vb[4:5, :D], vb[5:6, :D]
    g2, be2 = vb[6:7, :D], vb[7:8, :D]

    # --- fused qkv GEMM over both batches' rows; spill once (bf16) to VMEM scratch ---
    qkv = jnp.dot(xs.astype(jnp.bfloat16), wqkv,
                  preferred_element_type=jnp.float32) + bqkv            # (BS, 3D) f32
    qkv_scr[...] = qkv.astype(jnp.bfloat16)

    # --- per-batch (S,S) attention core; heads concatenated, ONE out-proj GEMM ---
    outs = []
    for b in range(batch):
        r0 = b * seq
        heads = []
        for h in range(num_heads):
            qh = qkv_scr[r0:r0 + seq, h * dh:(h + 1) * dh]              # (S, dh) bf16
            kh = qkv_scr[r0:r0 + seq, D + h * dh:D + (h + 1) * dh]
            vh = qkv_scr[r0:r0 + seq, 2 * D + h * dh:2 * D + (h + 1) * dh]
            s = jax.lax.dot_general(qh, kh, (((1,), (1,)), ((), ())),
                                    preferred_element_type=jnp.float32) * scale  # (S,S)
            m = jnp.max(s, axis=-1, keepdims=True)
            p = jnp.exp(s - m)
            p = p * pl.reciprocal(jnp.sum(p, axis=-1, keepdims=True), approx=True)
            heads.append(jnp.dot(p.astype(jnp.bfloat16), vh,
                                 preferred_element_type=jnp.float32))   # (S, dh)
        outs.append(jnp.concatenate(heads, axis=-1))                    # (S, D)
    attn = jnp.concatenate(outs, axis=0)                                # (BS, D)
    attn = jnp.dot(attn.astype(jnp.bfloat16), wo,
                   preferred_element_type=jnp.float32) + bo             # single out-proj
    xs = _add_layernorm(xs, attn, g1, be1)                              # norm1(x + sa(x))

    # --- feed-forward (both batches' rows at once) ---
    h1 = jnp.dot(xs.astype(jnp.bfloat16), w1,
                 preferred_element_type=jnp.float32) + b1               # (BS, FF)
    h1 = jnp.maximum(h1, 0.0)
    h2 = jnp.dot(h1.astype(jnp.bfloat16), w2,
                 preferred_element_type=jnp.float32) + b2               # (BS, D)
    return _add_layernorm(xs, h2, g2, be2)                              # norm2(x + ff(x))


# ------------------------------ fused kernel ----------------------------------
def _phoneme_encoder_kernel(x_ref, cw_ref, cb_ref, wqkv_ref, wo_ref, w1_ref, w2_ref,
                            vec_ref, o_ref, im2col_ref, qkv_scr, *, num_heads):
    B, T, Cin = x_ref.shape
    F, KC = cw_ref.shape
    K = KC // Cin
    pad = (K - 1) // 2
    L = wqkv_ref.shape[0]
    S = F                                 # transformer sequence length (conv channel axis)

    # ---- build the (B*T, K*Cin) im2col buffer once (boundary zeros from memset) ----
    im2col_ref[...] = jnp.zeros(im2col_ref.shape, im2col_ref.dtype)
    for b in range(B):
        xb = x_ref[b]                                                   # (T, Cin) f32
        for k in range(K):
            lo = max(0, pad - k)                                        # dest row range
            hi = min(T, T + pad - k)
            im2col_ref[b * T + lo:b * T + hi, k * Cin:(k + 1) * Cin] = \
                xb[lo + k - pad:hi + k - pad, :]

    # ---- Conv1d + bias + ReLU: ONE depth-K*Cin GEMM per batch; results are stacked
    # ---- along sublanes so rows are (b*F + f) == the transformer's (seq, d_model) view.
    cw = cw_ref[...]                                                    # (F, KC) bf16
    cb = cb_ref[...]                                                    # (F, 1) f32
    pieces = []
    for b in range(B):
        imb = im2col_ref[b * T:(b + 1) * T, :].astype(jnp.bfloat16)     # (T, KC)
        pieces.append(jax.lax.dot_general(cw, imb, (((1,), (1,)), ((), ())),
                                          preferred_element_type=jnp.float32) + cb)
    xs = jnp.maximum(jnp.concatenate(pieces, axis=0), 0.0)              # (B*F, T) f32
    # TODO(synk): dropout is identity (eval-mode); training-mode masks not implemented.

    # ---- transformer encoder stack on batch-row-stacked activations ----
    for li in range(L):
        xs = _encoder_layer(xs, wqkv_ref[li], wo_ref[li], w1_ref[li], w2_ref[li],
                            vec_ref[li], qkv_scr,
                            batch=B, seq=S, num_heads=num_heads)

    for b in range(B):
        o_ref[b] = xs[b * F:(b + 1) * F, :].astype(o_ref.dtype)         # out[b, f, t]


# ------------------------------- wrapper --------------------------------------
def phoneme_encoder(x, params, *, num_heads=NUM_HEADS):
    """x: (B, T, H) float32 -> (B, F, T) float32, matching the PyTorch module."""
    B, T, H = x.shape
    F, KC = params["conv_w2"].shape
    assert KC % H == 0
    L, D, _ = params["wqkv"].shape
    assert T == D, "module requires time dim == filter_size (d_model)"

    kernel = functools.partial(_phoneme_encoder_kernel, num_heads=num_heads)
    return pl.pallas_call(
        kernel,
        out_shape=jax.ShapeDtypeStruct((B, F, T), jnp.float32),
        scratch_shapes=[
            pltpu.VMEM((B * T, KC), jnp.float32),        # im2col buffer
            pltpu.VMEM((B * F, 3 * D), jnp.bfloat16),    # qkv spill (short live ranges)
        ],
    )(x, params["conv_w2"], params["conv_b"], params["wqkv"], params["wo"],
      params["w1"], params["w2"], params["vec"])


# ------------------------- parameters (PyTorch layout) -------------------------
def init_params(key):
    """Random weights in PyTorch layouts (Conv1d: (F, Cin, K); Linear: (out, in))."""
    def nrm(k, shape, scale=0.05):
        return scale * jax.random.normal(k, shape, dtype=jnp.float32)

    keys = jax.random.split(key, 3 + NUM_LAYERS)
    conv_w = nrm(keys[0], (FILTER, HIDDEN, KERNEL))
    conv_b = nrm(keys[1], (FILTER,))
    layers = []
    D = FILTER
    for li in range(NUM_LAYERS):
        lk = jax.random.split(keys[3 + li], 8)
        layers.append(dict(
            in_proj_w=nrm(lk[0], (3 * D, D)), in_proj_b=nrm(lk[1], (3 * D,)),
            out_proj_w=nrm(lk[2], (D, D)),    out_proj_b=nrm(lk[3], (D,)),
            lin1_w=nrm(lk[4], (HIDDEN, D)),   lin1_b=nrm(lk[5], (HIDDEN,)),
            lin2_w=nrm(lk[6], (D, HIDDEN)),   lin2_b=nrm(lk[7], (D,)),
            norm1_w=jnp.ones((D,), jnp.float32), norm1_b=jnp.zeros((D,), jnp.float32),
            norm2_w=jnp.ones((D,), jnp.float32), norm2_b=jnp.zeros((D,), jnp.float32),
        ))
    return conv_w, conv_b, layers


def prepare_params(conv_w, conv_b, layers):
    """One-time conversion to kernel-friendly, packed layouts:
      * conv weight -> (F, K*Cin) bf16 im2col matrix
      * per-layer matmul weights stacked along a leading layer axis (bf16)
      * all per-layer biases / LayerNorm params merged into one (L, 8, 3D) f32 blob
    """
    F, Cin, K = conv_w.shape
    D = layers[0]["out_proj_w"].shape[0]

    conv_w2 = jnp.transpose(conv_w, (0, 2, 1)).reshape(F, K * Cin).astype(jnp.bfloat16)
    conv_b2 = conv_b.reshape(F, 1).astype(jnp.float32)

    def row(v):
        v = jnp.asarray(v, jnp.float32).reshape(-1)
        return jnp.pad(v, (0, 3 * D - v.shape[0]))

    wqkv, wo, w1, w2, vecs = [], [], [], [], []
    for lp in layers:
        wqkv.append(lp["in_proj_w"].T.astype(jnp.bfloat16))     # (D, 3D)
        wo.append(lp["out_proj_w"].T.astype(jnp.bfloat16))      # (D, D)
        w1.append(lp["lin1_w"].T.astype(jnp.bfloat16))          # (D, FF)
        w2.append(lp["lin2_w"].T.astype(jnp.bfloat16))          # (FF, D)
        vecs.append(jnp.stack([
            row(lp["in_proj_b"]), row(lp["out_proj_b"]), row(lp["lin1_b"]),
            row(lp["lin2_b"]), row(lp["norm1_w"]), row(lp["norm1_b"]),
            row(lp["norm2_w"]), row(lp["norm2_b"])], axis=0))   # (8, 3D) f32

    return dict(conv_w2=conv_w2, conv_b=conv_b2,
                wqkv=jnp.stack(wqkv), wo=jnp.stack(wo),
                w1=jnp.stack(w1), w2=jnp.stack(w2),
                vec=jnp.stack(vecs))


# ----------------------------------- main --------------------------------------
if __name__ == "__main__":
    key = jax.random.PRNGKey(0)
    k_x, k_p = jax.random.split(key)
    x = jax.random.normal(k_x, (BATCH, SEQ, HIDDEN), dtype=jnp.float32)   # (B, T, H)
    conv_w, conv_b, layer_params = init_params(k_p)
    params = prepare_params(conv_w, conv_b, layer_params)

    fwd = jax.jit(lambda xx: phoneme_encoder(xx, params))
    out = jax.block_until_ready(fwd(x))

    assert out.shape == (BATCH, FILTER, SEQ), out.shape
    assert bool(jnp.all(jnp.isfinite(out)))
    print("KERNEL_OK")
</pallas_src>

<mosaic_0001>
module attributes {stable_mosaic.version = 11 : i64} {
  func.func @_phoneme_encoder_kernel(%arg0: memref<2x64x32xf32, #tpu.memory_space<vmem>>, %arg1: memref<64x288xbf16, #tpu.memory_space<vmem>>, %arg2: memref<64x1xf32, #tpu.memory_space<vmem>>, %arg3: memref<2x64x192xbf16, #tpu.memory_space<vmem>>, %arg4: memref<2x64x64xbf16, #tpu.memory_space<vmem>>, %arg5: memref<2x64x32xbf16, #tpu.memory_space<vmem>>, %arg6: memref<2x32x64xbf16, #tpu.memory_space<vmem>>, %arg7: memref<2x8x192xf32, #tpu.memory_space<vmem>>, %arg8: memref<2x64x64xf32, #tpu.memory_space<vmem>>, %arg9: memref<128x288xf32, #tpu.memory_space<vmem>>, %arg10: memref<128x192xbf16, #tpu.memory_space<vmem>>) attributes {dimension_semantics = [], scalar_prefetch = 0 : i64, scratch_operands = 2 : i64, tpu.core_type = #tpu.core_type<tc>} {
    %cst = arith.constant 0.000000e+00 : f32
    %0 = vector.broadcast %cst : f32 to vector<128x288xf32>
    %c0 = arith.constant 0 : index
    %c0_0 = arith.constant 0 : index
    %1 = vector.load %arg9[%c0, %c0_0] : memref<128x288xf32, #tpu.memory_space<vmem>>, vector<128x288xf32>
    tpu.vector_store %arg9[%c0, %c0_0], %0 {strides = array<i32>} : memref<128x288xf32, #tpu.memory_space<vmem>>, vector<128x288xf32>,
    %c0_1 = arith.constant 0 : index
    %c0_2 = arith.constant 0 : index
    %c0_3 = arith.constant 0 : index
    %2 = vector.load %arg0[%c0_1, %c0_2, %c0_3] : memref<2x64x32xf32, #tpu.memory_space<vmem>>, vector<1x64x32xf32>
    %3 = vector.shape_cast %2 : vector<1x64x32xf32> to vector<64x32xf32>
    %4 = vector.extract_strided_slice %3 {offsets = [0, 0], sizes = [60, 32], strides = [1, 1]} : vector<64x32xf32> to vector<60x32xf32>
    %c4 = arith.constant 4 : index
    %c0_4 = arith.constant 0 : index
    %5 = vector.load %arg9[%c4, %c0_4] : memref<128x288xf32, #tpu.memory_space<vmem>>, vector<60x32xf32>
    tpu.vector_store %arg9[%c4, %c0_4], %4 {strides = array<i32>} : memref<128x288xf32, #tpu.memory_space<vmem>>, vector<60x32xf32>,
    %6 = vector.extract_strided_slice %3 {offsets = [0, 0], sizes = [61, 32], strides = [1, 1]} : vector<64x32xf32> to vector<61x32xf32>
    %c3 = arith.constant 3 : index
    %c32 = arith.constant 32 : index
    %7 = vector.load %arg9[%c3, %c32] : memref<128x288xf32, #tpu.memory_space<vmem>>, vector<61x32xf32>
    tpu.vector_store %arg9[%c3, %c32], %6 {strides = array<i32>} : memref<128x288xf32, #tpu.memory_space<vmem>>, vector<61x32xf32>,
    %8 = vector.extract_strided_slice %3 {offsets = [0, 0], sizes = [62, 32], strides = [1, 1]} : vector<64x32xf32> to vector<62x32xf32>
    %c2 = arith.constant 2 : index
    %c64 = arith.constant 64 : index
    %9 = vector.load %arg9[%c2, %c64] : memref<128x288xf32, #tpu.memory_space<vmem>>, vector<62x32xf32>
    tpu.vector_store %arg9[%c2, %c64], %8 {strides = array<i32>} : memref<128x288xf32, #tpu.memory_space<vmem>>, vector<62x32xf32>,
    %10 = vector.extract_strided_slice %3 {offsets = [0, 0], sizes = [63, 32], strides = [1, 1]} : vector<64x32xf32> to vector<63x32xf32>
    %c1 = arith.constant 1 : index
    %c96 = arith.constant 96 : index
    %11 = vector.load %arg9[%c1, %c96] : memref<128x288xf32, #tpu.memory_space<vmem>>, vector<63x32xf32>
    tpu.vector_store %arg9[%c1, %c96], %10 {strides = array<i32>} : memref<128x288xf32, #tpu.memory_space<vmem>>, vector<63x32xf32>,
    %c0_5 = arith.constant 0 : index
    %c128 = arith.constant 128 : index
    %12 = vector.load %arg9[%c0_5, %c128] : memref<128x288xf32, #tpu.memory_space<vmem>>, vector<64x32xf32>
    tpu.vector_store %arg9[%c0_5, %c128], %3 {strides = array<i32>} : memref<128x288xf32, #tpu.memory_space<vmem>>, vector<64x32xf32>,
    %13 = vector.extract_strided_slice %3 {offsets = [1, 0], sizes = [63, 32], strides = [1, 1]} : vector<64x32xf32> to vector<63x32xf32>
    %c0_6 = arith.constant 0 : index
    %c160 = arith.constant 160 : index
    %14 = vector.load %arg9[%c0_6, %c160] : memref<128x288xf32, #tpu.memory_space<vmem>>, vector<63x32xf32>
    tpu.vector_store %arg9[%c0_6, %c160], %13 {strides = array<i32>} : memref<128x288xf32, #tpu.memory_space<vmem>>, vector<63x32xf32>,
    %15 = vector.extract_strided_slice %3 {offsets = [2, 0], sizes = [62, 32], strides = [1, 1]} : vector<64x32xf32> to vector<62x32xf32>
    %c0_7 = arith.constant 0 : index
    %c192 = arith.constant 192 : index
    %16 = vector.load %arg9[%c0_7, %c192] : memref<128x288xf32, #tpu.memory_space<vmem>>, vector<62x32xf32>
    tpu.vector_store %arg9[%c0_7, %c192], %15 {strides = array<i32>} : memref<128x288xf32, #tpu.memory_space<vmem>>, vector<62x32xf32>,
    %17 = vector.extract_strided_slice %3 {offsets = [3, 0], sizes = [61, 32], strides = [1, 1]} : vector<64x32xf32> to vector<61x32xf32>
    %c0_8 = arith.constant 0 : index
    %c224 = arith.constant 224 : index
    %18 = vector.load %arg9[%c0_8, %c224] : memref<128x288xf32, #tpu.memory_space<vmem>>, vector<61x32xf32>
    tpu.vector_store %arg9[%c0_8, %c224], %17 {strides = array<i32>} : memref<128x288xf32, #tpu.memory_space<vmem>>, vector<61x32xf32>,
    %19 = vector.extract_strided_slice %3 {offsets = [4, 0], sizes = [60, 32], strides = [1, 1]} : vector<64x32xf32> to vector<60x32xf32>
    %c0_9 = arith.constant 0 : index
    %c256 = arith.constant 256 : index
    %20 = vector.load %arg9[%c0_9, %c256] : memref<128x288xf32, #tpu.memory_space<vmem>>, vector<60x32xf32>
    tpu.vector_store %arg9[%c0_9, %c256], %19 {strides = array<i32>} : memref<128x288xf32, #tpu.memory_space<vmem>>, vector<60x32xf32>,
    %c1_10 = arith.constant 1 : index
    %c0_11 = arith.constant 0 : index
    %c0_12 = arith.constant 0 : index
    %21 = vector.load %arg0[%c1_10, %c0_11, %c0_12] : memref<2x64x32xf32, #tpu.memory_space<vmem>>, vector<1x64x32xf32>
    %22 = vector.shape_cast %21 : vector<1x64x32xf32> to vector<64x32xf32>
    %23 = vector.extract_strided_slice %22 {offsets = [0, 0], sizes = [60, 32], strides = [1, 1]} : vector<64x32xf32> to vector<60x32xf32>
    %c68 = arith.constant 68 : index
    %c0_13 = arith.constant 0 : index
    %24 = vector.load %arg9[%c68, %c0_13] : memref<128x288xf32, #tpu.memory_space<vmem>>, vector<60x32xf32>
    tpu.vector_store %arg9[%c68, %c0_13], %23 {strides = array<i32>} : memref<128x288xf32, #tpu.memory_space<vmem>>, vector<60x32xf32>,
    %25 = vector.extract_strided_slice %22 {offsets = [0, 0], sizes = [61, 32], strides = [1, 1]} : vector<64x32xf32> to vector<61x32xf32>
    %c67 = arith.constant 67 : index
    %c32_14 = arith.constant 32 : index
    %26 = vector.load %arg9[%c67, %c32_14] : memref<128x288xf32, #tpu.memory_space<vmem>>, vector<61x32xf32>
    tpu.vector_store %arg9[%c67, %c32_14], %25 {strides = array<i32>} : memref<128x288xf32, #tpu.memory_space<vmem>>, vector<61x32xf32>,
    %27 = vector.extract_strided_slice %22 {offsets = [0, 0], sizes = [62, 32], strides = [1, 1]} : vector<64x32xf32> to vector<62x32xf32>
    %c66 = arith.constant 66 : index
    %c64_15 = arith.constant 64 : index
    %28 = vector.load %arg9[%c66, %c64_15] : memref<128x288xf32, #tpu.memory_space<vmem>>, vector<62x32xf32>
    tpu.vector_store %arg9[%c66, %c64_15], %27 {strides = array<i32>} : memref<128x288xf32, #tpu.memory_space<vmem>>, vector<62x32xf32>,
    %29 = vector.extract_strided_slice %22 {offsets = [0, 0], sizes = [63, 32], strides = [1, 1]} : vector<64x32xf32> to vector<63x32xf32>
    %c65 = arith.constant 65 : index
    %c96_16 = arith.constant 96 : index
    %30 = vector.load %arg9[%c65, %c96_16] : memref<128x288xf32, #tpu.memory_space<vmem>>, vector<63x32xf32>
    tpu.vector_store %arg9[%c65, %c96_16], %29 {strides = array<i32>} : memref<128x288xf32, #tpu.memory_space<vmem>>, vector<63x32xf32>,
    %c64_17 = arith.constant 64 : index
    %c128_18 = arith.constant 128 : index
    %31 = vector.load %arg9[%c64_17, %c128_18] : memref<128x288xf32, #tpu.memory_space<vmem>>, vector<64x32xf32>
    tpu.vector_store %arg9[%c64_17, %c128_18], %22 {strides = array<i32>} : memref<128x288xf32, #tpu.memory_space<vmem>>, vector<64x32xf32>,
    %32 = vector.extract_strided_slice %22 {offsets = [1, 0], sizes = [63, 32], strides = [1, 1]} : vector<64x32xf32> to vector<63x32xf32>
    %c64_19 = arith.constant 64 : index
    %c160_20 = arith.constant 160 : index
    %33 = vector.load %arg9[%c64_19, %c160_20] : memref<128x288xf32, #tpu.memory_space<vmem>>, vector<63x32xf32>
    tpu.vector_store %arg9[%c64_19, %c160_20], %32 {strides = array<i32>} : memref<128x288xf32, #tpu.memory_space<vmem>>, vector<63x32xf32>,
    %34 = vector.extract_strided_slice %22 {offsets = [2, 0], sizes = [62, 32], strides = [1, 1]} : vector<64x32xf32> to vector<62x32xf32>
    %c64_21 = arith.constant 64 : index
    %c192_22 = arith.constant 192 : index
    %35 = vector.load %arg9[%c64_21, %c192_22] : memref<128x288xf32, #tpu.memory_space<vmem>>, vector<62x32xf32>
    tpu.vector_store %arg9[%c64_21, %c192_22], %34 {strides = array<i32>} : memref<128x288xf32, #tpu.memory_space<vmem>>, vector<62x32xf32>,
    %36 = vector.extract_strided_slice %22 {offsets = [3, 0], sizes = [61, 32], strides = [1, 1]} : vector<64x32xf32> to vector<61x32xf32>
    %c64_23 = arith.constant 64 : index
    %c224_24 = arith.constant 224 : index
    %37 = vector.load %arg9[%c64_23, %c224_24] : memref<128x288xf32, #tpu.memory_space<vmem>>, vector<61x32xf32>
    tpu.vector_store %arg9[%c64_23, %c224_24], %36 {strides = array<i32>} : memref<128x288xf32, #tpu.memory_space<vmem>>, vector<61x32xf32>,
    %38 = vector.extract_strided_slice %22 {offsets = [4, 0], sizes = [60, 32], strides = [1, 1]} : vector<64x32xf32> to vector<60x32xf32>
    %c64_25 = arith.constant 64 : index
    %c256_26 = arith.constant 256 : index
    %39 = vector.load %arg9[%c64_25, %c256_26] : memref<128x288xf32, #tpu.memory_space<vmem>>, vector<60x32xf32>
    tpu.vector_store %arg9[%c64_25, %c256_26], %38 {strides = array<i32>} : memref<128x288xf32, #tpu.memory_space<vmem>>, vector<60x32xf32>,
    %c0_27 = arith.constant 0 : index
    %c0_28 = arith.constant 0 : index
    %40 = vector.load %arg1[%c0_27, %c0_28] : memref<64x288xbf16, #tpu.memory_space<vmem>>, vector<64x288xbf16>
    %c0_29 = arith.constant 0 : index
    %c0_30 = arith.constant 0 : index
    %41 = vector.load %arg2[%c0_29, %c0_30] : memref<64x1xf32, #tpu.memory_space<vmem>>, vector<64x1xf32>
    %c0_31 = arith.constant 0 : index
    %c0_32 = arith.constant 0 : index
    %42 = vector.load %arg9[%c0_31, %c0_32] : memref<128x288xf32, #tpu.memory_space<vmem>>, vector<64x288xf32>
    %43 = arith.truncf %42 : vector<64x288xf32> to vector<64x288xbf16>
    %cst_33 = arith.constant dense<0.000000e+00> : vector<64x64xf32>
    %44 = tpu.matmul %40, %43, %cst_33 {dimension_numbers = #tpu.dot_dimension_numbers<[1], [1], [0], [0], [0, 0, 1, 0], [], []>} : vector<64x288xbf16>, vector<64x288xbf16>, vector<64x64xf32> -> vector<64x64xf32>
    %45 = vector.broadcast %41 : vector<64x1xf32> to vector<64x64xf32>
    %46 = arith.addf %44, %45 : vector<64x64xf32>
    %c64_34 = arith.constant 64 : index
    %c0_35 = arith.constant 0 : index
    %47 = vector.load %arg9[%c64_34, %c0_35] : memref<128x288xf32, #tpu.memory_space<vmem>>, vector<64x288xf32>
    %48 = arith.truncf %47 : vector<64x288xf32> to vector<64x288xbf16>
    %cst_36 = arith.constant dense<0.000000e+00> : vector<64x64xf32>
    %49 = tpu.matmul %40, %48, %cst_36 {dimension_numbers = #tpu.dot_dimension_numbers<[1], [1], [0], [0], [0, 0, 1, 0], [], []>} : vector<64x288xbf16>, vector<64x288xbf16>, vector<64x64xf32> -> vector<64x64xf32>
    %50 = vector.broadcast %41 : vector<64x1xf32> to vector<64x64xf32>
    %51 = arith.addf %49, %50 : vector<64x64xf32>
    %52 = tpu.concatenate %46, %51 in 0 : vector<64x64xf32>, vector<64x64xf32> -> vector<128x64xf32>
    %cst_37 = arith.constant 0.000000e+00 : f32
    %53 = vector.broadcast %cst_37 : f32 to vector<128x64xf32>
    %54 = arith.maximumf %52, %53 : vector<128x64xf32>
    %c0_38 = arith.constant 0 : index
    %c0_39 = arith.constant 0 : index
    %c0_40 = arith.constant 0 : index
    %55 = vector.load %arg3[%c0_38, %c0_39, %c0_40] : memref<2x64x192xbf16, #tpu.memory_space<vmem>>, vector<1x64x192xbf16>
    %56 = vector.shape_cast %55 : vector<1x64x192xbf16> to vector<64x192xbf16>
    %c0_41 = arith.constant 0 : index
    %c0_42 = arith.constant 0 : index
    %c0_43 = arith.constant 0 : index
    %57 = vector.load %arg4[%c0_41, %c0_42, %c0_43] : memref<2x64x64xbf16, #tpu.memory_space<vmem>>, vector<1x64x64xbf16>
    %58 = vector.shape_cast %57 : vector<1x64x64xbf16> to vector<64x64xbf16>
    %c0_44 = arith.constant 0 : index
    %c0_45 = arith.constant 0 : index
    %c0_46 = arith.constant 0 : index
    %59 = vector.load %arg5[%c0_44, %c0_45, %c0_46] : memref<2x64x32xbf16, #tpu.memory_space<vmem>>, vector<1x64x32xbf16>
    %60 = vector.shape_cast %59 : vector<1x64x32xbf16> to vector<64x32xbf16>
    %c0_47 = arith.constant 0 : index
    %c0_48 = arith.constant 0 : index
    %c0_49 = arith.constant 0 : index
    %61 = vector.load %arg6[%c0_47, %c0_48, %c0_49] : memref<2x32x64xbf16, #tpu.memory_space<vmem>>, vector<1x32x64xbf16>
    %62 = vector.shape_cast %61 : vector<1x32x64xbf16> to vector<32x64xbf16>
    %c0_50 = arith.constant 0 : index
    %c0_51 = arith.constant 0 : index
    %c0_52 = arith.constant 0 : index
    %63 = vector.load %arg7[%c0_50, %c0_51, %c0_52] : memref<2x8x192xf32, #tpu.memory_space<vmem>>, vector<1x8x192xf32>
    %64 = vector.shape_cast %63 : vector<1x8x192xf32> to vector<8x192xf32>
    %65 = vector.extract_strided_slice %64 {offsets = [0, 0], sizes = [1, 192], strides = [1, 1]} : vector<8x192xf32> to vector<1x192xf32>
    %66 = vector.extract_strided_slice %64 {offsets = [1, 0], sizes = [1, 64], strides = [1, 1]} : vector<8x192xf32> to vector<1x64xf32>
    %67 = vector.extract_strided_slice %64 {offsets = [2, 0], sizes = [1, 32], strides = [1, 1]} : vector<8x192xf32> to vector<1x32xf32>
    %68 = vector.extract_strided_slice %64 {offsets = [3, 0], sizes = [1, 64], strides = [1, 1]} : vector<8x192xf32> to vector<1x64xf32>
    %69 = vector.extract_strided_slice %64 {offsets = [4, 0], sizes = [1, 64], strides = [1, 1]} : vector<8x192xf32> to vector<1x64xf32>
    %70 = vector.extract_strided_slice %64 {offsets = [5, 0], sizes = [1, 64], strides = [1, 1]} : vector<8x192xf32> to vector<1x64xf32>
    %71 = vector.extract_strided_slice %64 {offsets = [6, 0], sizes = [1, 64], strides = [1, 1]} : vector<8x192xf32> to vector<1x64xf32>
    %72 = vector.extract_strided_slice %64 {offsets = [7, 0], sizes = [1, 64], strides = [1, 1]} : vector<8x192xf32> to vector<1x64xf32>
    %73 = arith.truncf %54 : vector<128x64xf32> to vector<128x64xbf16>
    %cst_53 = arith.constant dense<0.000000e+00> : vector<128x192xf32>
    %74 = tpu.matmul %73, %56, %cst_53 {dimension_numbers = #tpu.dot_dimension_numbers<[1], [0], [0], [1], [0, 0, 1, 1], [], []>} : vector<128x64xbf16>, vector<64x192xbf16>, vector<128x192xf32> -> vector<128x192xf32>
    %75 = vector.broadcast %65 : vector<1x192xf32> to vector<128x192xf32>
    %76 = arith.addf %74, %75 : vector<128x192xf32>
    %77 = arith.truncf %76 : vector<128x192xf32> to vector<128x192xbf16>
    %c0_54 = arith.constant 0 : index
    %c0_55 = arith.constant 0 : index
    %78 = vector.load %arg10[%c0_54, %c0_55] : memref<128x192xbf16, #tpu.memory_space<vmem>>, vector<128x192xbf16>
    tpu.vector_store %arg10[%c0_54, %c0_55], %77 {strides = array<i32>} : memref<128x192xbf16, #tpu.memory_space<vmem>>, vector<128x192xbf16>,
    %c0_56 = arith.constant 0 : index
    %c0_57 = arith.constant 0 : index
    %79 = vector.load %arg10[%c0_56, %c0_57] : memref<128x192xbf16, #tpu.memory_space<vmem>>, vector<64x16xbf16>
    %c0_58 = arith.constant 0 : index
    %c64_59 = arith.constant 64 : index
    %80 = vector.load %arg10[%c0_58, %c64_59] : memref<128x192xbf16, #tpu.memory_space<vmem>>, vector<64x16xbf16>
    %c0_60 = arith.constant 0 : index
    %c128_61 = arith.constant 128 : index
    %81 = vector.load %arg10[%c0_60, %c128_61] : memref<128x192xbf16, #tpu.memory_space<vmem>>, vector<64x16xbf16>
    %cst_62 = arith.constant dense<0.000000e+00> : vector<64x64xf32>
    %82 = tpu.matmul %79, %80, %cst_62 {dimension_numbers = #tpu.dot_dimension_numbers<[1], [1], [0], [0], [0, 0, 1, 0], [], []>} : vector<64x16xbf16>, vector<64x16xbf16>, vector<64x64xf32> -> vector<64x64xf32>
    %cst_63 = arith.constant 2.500000e-01 : f32
    %83 = vector.broadcast %cst_63 : f32 to vector<64x64xf32>
    %84 = arith.mulf %82, %83 : vector<64x64xf32>
    %cst_64 = arith.constant dense<0xFF800000> : vector<64xf32>
    %85 = vector.multi_reduction <maximumf>, %84, %cst_64 [1] : vector<64x64xf32> to vector<64xf32>
    %86 = vector.shape_cast %85 : vector<64xf32> to vector<64x1xf32>
    %87 = vector.broadcast %86 : vector<64x1xf32> to vector<64x64xf32>
    %88 = arith.subf %84, %87 : vector<64x64xf32>
    %89 = math.exp %88 : vector<64x64xf32>
    %cst_65 = arith.constant dense<0.000000e+00> : vector<64xf32>
    %90 = vector.multi_reduction <add>, %89, %cst_65 [1] : vector<64x64xf32> to vector<64xf32>
    %91 = vector.shape_cast %90 : vector<64xf32> to vector<64x1xf32>
    %92 = tpu.reciprocal %91 {approx = true} : vector<64x1xf32> -> vector<64x1xf32>
    %93 = vector.broadcast %92 : vector<64x1xf32> to vector<64x64xf32>
    %94 = arith.mulf %89, %93 : vector<64x64xf32>
    %95 = arith.truncf %94 : vector<64x64xf32> to vector<64x64xbf16>
    %cst_66 = arith.constant dense<0.000000e+00> : vector<64x16xf32>
    %96 = tpu.matmul %95, %81, %cst_66 {dimension_numbers = #tpu.dot_dimension_numbers<[1], [0], [0], [1], [0, 0, 1, 1], [], []>} : vector<64x64xbf16>, vector<64x16xbf16>, vector<64x16xf32> -> vector<64x16xf32>
    %c0_67 = arith.constant 0 : index
    %c16 = arith.constant 16 : index
    %97 = vector.load %arg10[%c0_67, %c16] : memref<128x192xbf16, #tpu.memory_space<vmem>>, vector<64x16xbf16>
    %c0_68 = arith.constant 0 : index
    %c80 = arith.constant 80 : index
    %98 = vector.load %arg10[%c0_68, %c80] : memref<128x192xbf16, #tpu.memory_space<vmem>>, vector<64x16xbf16>
    %c0_69 = arith.constant 0 : index
    %c144 = arith.constant 144 : index
    %99 = vector.load %arg10[%c0_69, %c144] : memref<128x192xbf16, #tpu.memory_space<vmem>>, vector<64x16xbf16>
    %cst_70 = arith.constant dense<0.000000e+00> : vector<64x64xf32>
    %100 = tpu.matmul %97, %98, %cst_70 {dimension_numbers = #tpu.dot_dimension_numbers<[1], [1], [0], [0], [0, 0, 1, 0], [], []>} : vector<64x16xbf16>, vector<64x16xbf16>, vector<64x64xf32> -> vector<64x64xf32>
    %cst_71 = arith.constant 2.500000e-01 : f32
    %101 = vector.broadcast %cst_71 : f32 to vector<64x64xf32>
    %102 = arith.mulf %100, %101 : vector<64x64xf32>
    %cst_72 = arith.constant dense<0xFF800000> : vector<64xf32>
    %103 = vector.multi_reduction <maximumf>, %102, %cst_72 [1] : vector<64x64xf32> to vector<64xf32>
    %104 = vector.shape_cast %103 : vector<64xf32> to vector<64x1xf32>
    %105 = vector.broadcast %104 : vector<64x1xf32> to vector<64x64xf32>
    %106 = arith.subf %102, %105 : vector<64x64xf32>
    %107 = math.exp %106 : vector<64x64xf32>
    %cst_73 = arith.constant dense<0.000000e+00> : vector<64xf32>
    %108 = vector.multi_reduction <add>, %107, %cst_73 [1] : vector<64x64xf32> to vector<64xf32>
    %109 = vector.shape_cast %108 : vector<64xf32> to vector<64x1xf32>
    %110 = tpu.reciprocal %109 {approx = true} : vector<64x1xf32> -> vector<64x1xf32>
    %111 = vector.broadcast %110 : vector<64x1xf32> to vector<64x64xf32>
    %112 = arith.mulf %107, %111 : vector<64x64xf32>
    %113 = arith.truncf %112 : vector<64x64xf32> to vector<64x64xbf16>
    %cst_74 = arith.constant dense<0.000000e+00> : vector<64x16xf32>
    %114 = tpu.matmul %113, %99, %cst_74 {dimension_numbers = #tpu.dot_dimension_numbers<[1], [0], [0], [1], [0, 0, 1, 1], [], []>} : vector<64x64xbf16>, vector<64x16xbf16>, vector<64x16xf32> -> vector<64x16xf32>
    %c0_75 = arith.constant 0 : index
    %c32_76 = arith.constant 32 : index
    %115 = vector.load %arg10[%c0_75, %c32_76] : memref<128x192xbf16, #tpu.memory_space<vmem>>, vector<64x16xbf16>
    %c0_77 = arith.constant 0 : index
    %c96_78 = arith.constant 96 : index
    %116 = vector.load %arg10[%c0_77, %c96_78] : memref<128x192xbf16, #tpu.memory_space<vmem>>, vector<64x16xbf16>
    %c0_79 = arith.constant 0 : index
    %c160_80 = arith.constant 160 : index
    %117 = vector.load %arg10[%c0_79, %c160_80] : memref<128x192xbf16, #tpu.memory_space<vmem>>, vector<64x16xbf16>
    %cst_81 = arith.constant dense<0.000000e+00> : vector<64x64xf32>
    %118 = tpu.matmul %115, %116, %cst_81 {dimension_numbers = #tpu.dot_dimension_numbers<[1], [1], [0], [0], [0, 0, 1, 0], [], []>} : vector<64x16xbf16>, vector<64x16xbf16>, vector<64x64xf32> -> vector<64x64xf32>
    %cst_82 = arith.constant 2.500000e-01 : f32
    %119 = vector.broadcast %cst_82 : f32 to vector<64x64xf32>
    %120 = arith.mulf %118, %119 : vector<64x64xf32>
    %cst_83 = arith.constant dense<0xFF800000> : vector<64xf32>
    %121 = vector.multi_reduction <maximumf>, %120, %cst_83 [1] : vector<64x64xf32> to vector<64xf32>
    %122 = vector.shape_cast %121 : vector<64xf32> to vector<64x1xf32>
    %123 = vector.broadcast %122 : vector<64x1xf32> to vector<64x64xf32>
    %124 = arith.subf %120, %123 : vector<64x64xf32>
    %125 = math.exp %124 : vector<64x64xf32>
    %cst_84 = arith.constant dense<0.000000e+00> : vector<64xf32>
    %126 = vector.multi_reduction <add>, %125, %cst_84 [1] : vector<64x64xf32> to vector<64xf32>
    %127 = vector.shape_cast %126 : vector<64xf32> to vector<64x1xf32>
    %128 = tpu.reciprocal %127 {approx = true} : vector<64x1xf32> -> vector<64x1xf32>
    %129 = vector.broadcast %128 : vector<64x1xf32> to vector<64x64xf32>
    %130 = arith.mulf %125, %129 : vector<64x64xf32>
    %131 = arith.truncf %130 : vector<64x64xf32> to vector<64x64xbf16>
    %cst_85 = arith.constant dense<0.000000e+00> : vector<64x16xf32>
    %132 = tpu.matmul %131, %117, %cst_85 {dimension_numbers = #tpu.dot_dimension_numbers<[1], [0], [0], [1], [0, 0, 1, 1], [], []>} : vector<64x64xbf16>, vector<64x16xbf16>, vector<64x16xf32> -> vector<64x16xf32>
    %c0_86 = arith.constant 0 : index
    %c48 = arith.constant 48 : index
    %133 = vector.load %arg10[%c0_86, %c48] : memref<128x192xbf16, #tpu.memory_space<vmem>>, vector<64x16xbf16>
    %c0_87 = arith.constant 0 : index
    %c112 = arith.constant 112 : index
    %134 = vector.load %arg10[%c0_87, %c112] : memref<128x192xbf16, #tpu.memory_space<vmem>>, vector<64x16xbf16>
    %c0_88 = arith.constant 0 : index
    %c176 = arith.constant 176 : index
    %135 = vector.load %arg10[%c0_88, %c176] : memref<128x192xbf16, #tpu.memory_space<vmem>>, vector<64x16xbf16>
    %cst_89 = arith.constant dense<0.000000e+00> : vector<64x64xf32>
    %136 = tpu.matmul %133, %134, %cst_89 {dimension_numbers = #tpu.dot_dimension_numbers<[1], [1], [0], [0], [0, 0, 1, 0], [], []>} : vector<64x16xbf16>, vector<64x16xbf16>, vector<64x64xf32> -> vector<64x64xf32>
    %cst_90 = arith.constant 2.500000e-01 : f32
    %137 = vector.broadcast %cst_90 : f32 to vector<64x64xf32>
    %138 = arith.mulf %136, %137 : vector<64x64xf32>
    %cst_91 = arith.constant dense<0xFF800000> : vector<64xf32>
    %139 = vector.multi_reduction <maximumf>, %138, %cst_91 [1] : vector<64x64xf32> to vector<64xf32>
    %140 = vector.shape_cast %139 : vector<64xf32> to vector<64x1xf32>
    %141 = vector.broadcast %140 : vector<64x1xf32> to vector<64x64xf32>
    %142 = arith.subf %138, %141 : vector<64x64xf32>
    %143 = math.exp %142 : vector<64x64xf32>
    %cst_92 = arith.constant dense<0.000000e+00> : vector<64xf32>
    %144 = vector.multi_reduction <add>, %143, %cst_92 [1] : vector<64x64xf32> to vector<64xf32>
    %145 = vector.shape_cast %144 : vector<64xf32> to vector<64x1xf32>
    %146 = tpu.reciprocal %145 {approx = true} : vector<64x1xf32> -> vector<64x1xf32>
    %147 = vector.broadcast %146 : vector<64x1xf32> to vector<64x64xf32>
    %148 = arith.mulf %143, %147 : vector<64x64xf32>
    %149 = arith.truncf %148 : vector<64x64xf32> to vector<64x64xbf16>
    %cst_93 = arith.constant dense<0.000000e+00> : vector<64x16xf32>
    %150 = tpu.matmul %149, %135, %cst_93 {dimension_numbers = #tpu.dot_dimension_numbers<[1], [0], [0], [1], [0, 0, 1, 1], [], []>} : vector<64x64xbf16>, vector<64x16xbf16>, vector<64x16xf32> -> vector<64x16xf32>
    %151 = tpu.concatenate %96, %114, %132, %150 in 1 : vector<64x16xf32>, vector<64x16xf32>, vector<64x16xf32>, vector<64x16xf32> -> vector<64x64xf32>
    %c64_94 = arith.constant 64 : index
    %c0_95 = arith.constant 0 : index
    %152 = vector.load %arg10[%c64_94, %c0_95] : memref<128x192xbf16, #tpu.memory_space<vmem>>, vector<64x16xbf16>
    %c64_96 = arith.constant 64 : index
    %c64_97 = arith.constant 64 : index
    %153 = vector.load %arg10[%c64_96, %c64_97] : memref<128x192xbf16, #tpu.memory_space<vmem>>, vector<64x16xbf16>
    %c64_98 = arith.constant 64 : index
    %c128_99 = arith.constant 128 : index
    %154 = vector.load %arg10[%c64_98, %c128_99] : memref<128x192xbf16, #tpu.memory_space<vmem>>, vector<64x16xbf16>
    %cst_100 = arith.constant dense<0.000000e+00> : vector<64x64xf32>
    %155 = tpu.matmul %152, %153, %cst_100 {dimension_numbers = #tpu.dot_dimension_numbers<[1], [1], [0], [0], [0, 0, 1, 0], [], []>} : vector<64x16xbf16>, vector<64x16xbf16>, vector<64x64xf32> -> vector<64x64xf32>
    %cst_101 = arith.constant 2.500000e-01 : f32
    %156 = vector.broadcast %cst_101 : f32 to vector<64x64xf32>
    %157 = arith.mulf %155, %156 : vector<64x64xf32>
    %cst_102 = arith.constant dense<0xFF800000> : vector<64xf32>
    %158 = vector.multi_reduction <maximumf>, %157, %cst_102 [1] : vector<64x64xf32> to vector<64xf32>
    %159 = vector.shape_cast %158 : vector<64xf32> to vector<64x1xf32>
    %160 = vector.broadcast %159 : vector<64x1xf32> to vector<64x64xf32>
    %161 = arith.subf %157, %160 : vector<64x64xf32>
    %162 = math.exp %161 : vector<64x64xf32>
    %cst_103 = arith.constant dense<0.000000e+00> : vector<64xf32>
    %163 = vector.multi_reduction <add>, %162, %cst_103 [1] : vector<64x64xf32> to vector<64xf32>
    %164 = vector.shape_cast %163 : vector<64xf32> to vector<64x1xf32>
    %165 = tpu.reciprocal %164 {approx = true} : vector<64x1xf32> -> vector<64x1xf32>
    %166 = vector.broadcast %165 : vector<64x1xf32> to vector<64x64xf32>
    %167 = arith.mulf %162, %166 : vector<64x64xf32>
    %168 = arith.truncf %167 : vector<64x64xf32> to vector<64x64xbf16>
    %cst_104 = arith.constant dense<0.000000e+00> : vector<64x16xf32>
    %169 = tpu.matmul %168, %154, %cst_104 {dimension_numbers = #tpu.dot_dimension_numbers<[1], [0], [0], [1], [0, 0, 1, 1], [], []>} : vector<64x64xbf16>, vector<64x16xbf16>, vector<64x16xf32> -> vector<64x16xf32>
    %c64_105 = arith.constant 64 : index
    %c16_106 = arith.constant 16 : index
    %170 = vector.load %arg10[%c64_105, %c16_106] : memref<128x192xbf16, #tpu.memory_space<vmem>>, vector<64x16xbf16>
    %c64_107 = arith.constant 64 : index
    %c80_108 = arith.constant 80 : index
    %171 = vector.load %arg10[%c64_107, %c80_108] : memref<128x192xbf16, #tpu.memory_space<vmem>>, vector<64x16xbf16>
    %c64_109 = arith.constant 64 : index
    %c144_110 = arith.constant 144 : index
    %172 = vector.load %arg10[%c64_109, %c144_110] : memref<128x192xbf16, #tpu.memory_space<vmem>>, vector<64x16xbf16>
    %cst_111 = arith.constant dense<0.000000e+00> : vector<64x64xf32>
    %173 = tpu.matmul %170, %171, %cst_111 {dimension_numbers = #tpu.dot_dimension_numbers<[1], [1], [0], [0], [0, 0, 1, 0], [], []>} : vector<64x16xbf16>, vector<64x16xbf16>, vector<64x64xf32> -> vector<64x64xf32>
    %cst_112 = arith.constant 2.500000e-01 : f32
    %174 = vector.broadcast %cst_112 : f32 to vector<64x64xf32>
    %175 = arith.mulf %173, %174 : vector<64x64xf32>
    %cst_113 = arith.constant dense<0xFF800000> : vector<64xf32>
    %176 = vector.multi_reduction <maximumf>, %175, %cst_113 [1] : vector<64x64xf32> to vector<64xf32>
    %177 = vector.shape_cast %176 : vector<64xf32> to vector<64x1xf32>
    %178 = vector.broadcast %177 : vector<64x1xf32> to vector<64x64xf32>
    %179 = arith.subf %175, %178 : vector<64x64xf32>
    %180 = math.exp %179 : vector<64x64xf32>
    %cst_114 = arith.constant dense<0.000000e+00> : vector<64xf32>
    %181 = vector.multi_reduction <add>, %180, %cst_114 [1] : vector<64x64xf32> to vector<64xf32>
    %182 = vector.shape_cast %181 : vector<64xf32> to vector<64x1xf32>
    %183 = tpu.reciprocal %182 {approx = true} : vector<64x1xf32> -> vector<64x1xf32>
    %184 = vector.broadcast %183 : vector<64x1xf32> to vector<64x64xf32>
    %185 = arith.mulf %180, %184 : vector<64x64xf32>
    %186 = arith.truncf %185 : vector<64x64xf32> to vector<64x64xbf16>
    %cst_115 = arith.constant dense<0.000000e+00> : vector<64x16xf32>
    %187 = tpu.matmul %186, %172, %cst_115 {dimension_numbers = #tpu.dot_dimension_numbers<[1], [0], [0], [1], [0, 0, 1, 1], [], []>} : vector<64x64xbf16>, vector<64x16xbf16>, vector<64x16xf32> -> vector<64x16xf32>
    %c64_116 = arith.constant 64 : index
    %c32_117 = arith.constant 32 : index
    %188 = vector.load %arg10[%c64_116, %c32_117] : memref<128x192xbf16, #tpu.memory_space<vmem>>, vector<64x16xbf16>
    %c64_118 = arith.constant 64 : index
    %c96_119 = arith.constant 96 : index
    %189 = vector.load %arg10[%c64_118, %c96_119] : memref<128x192xbf16, #tpu.memory_space<vmem>>, vector<64x16xbf16>
    %c64_120 = arith.constant 64 : index
    %c160_121 = arith.constant 160 : index
    %190 = vector.load %arg10[%c64_120, %c160_121] : memref<128x192xbf16, #tpu.memory_space<vmem>>, vector<64x16xbf16>
    %cst_122 = arith.constant dense<0.000000e+00> : vector<64x64xf32>
    %191 = tpu.matmul %188, %189, %cst_122 {dimension_numbers = #tpu.dot_dimension_numbers<[1], [1], [0], [0], [0, 0, 1, 0], [], []>} : vector<64x16xbf16>, vector<64x16xbf16>, vector<64x64xf32> -> vector<64x64xf32>
    %cst_123 = arith.constant 2.500000e-01 : f32
    %192 = vector.broadcast %cst_123 : f32 to vector<64x64xf32>
    %193 = arith.mulf %191, %192 : vector<64x64xf32>
    %cst_124 = arith.constant dense<0xFF800000> : vector<64xf32>
    %194 = vector.multi_reduction <maximumf>, %193, %cst_124 [1] : vector<64x64xf32> to vector<64xf32>
    %195 = vector.shape_cast %194 : vector<64xf32> to vector<64x1xf32>
    %196 = vector.broadcast %195 : vector<64x1xf32> to vector<64x64xf32>
    %197 = arith.subf %193, %196 : vector<64x64xf32>
    %198 = math.exp %197 : vector<64x64xf32>
    %cst_125 = arith.constant dense<0.000000e+00> : vector<64xf32>
    %199 = vector.multi_reduction <add>, %198, %cst_125 [1] : vector<64x64xf32> to vector<64xf32>
    %200 = vector.shape_cast %199 : vector<64xf32> to vector<64x1xf32>
    %201 = tpu.reciprocal %200 {approx = true} : vector<64x1xf32> -> vector<64x1xf32>
    %202 = vector.broadcast %201 : vector<64x1xf32> to vector<64x64xf32>
    %203 = arith.mulf %198, %202 : vector<64x64xf32>
    %204 = arith.truncf %203 : vector<64x64xf32> to vector<64x64xbf16>
    %cst_126 = arith.constant dense<0.000000e+00> : vector<64x16xf32>
    %205 = tpu.matmul %204, %190, %cst_126 {dimension_numbers = #tpu.dot_dimension_numbers<[1], [0], [0], [1], [0, 0, 1, 1], [], []>} : vector<64x64xbf16>, vector<64x16xbf16>, vector<64x16xf32> -> vector<64x16xf32>
    %c64_127 = arith.constant 64 : index
    %c48_128 = arith.constant 48 : index
    %206 = vector.load %arg10[%c64_127, %c48_128] : memref<128x192xbf16, #tpu.memory_space<vmem>>, vector<64x16xbf16>
    %c64_129 = arith.constant 64 : index
    %c112_130 = arith.constant 112 : index
    %207 = vector.load %arg10[%c64_129, %c112_130] : memref<128x192xbf16, #tpu.memory_space<vmem>>, vector<64x16xbf16>
    %c64_131 = arith.constant 64 : index
    %c176_132 = arith.constant 176 : index
    %208 = vector.load %arg10[%c64_131, %c176_132] : memref<128x192xbf16, #tpu.memory_space<vmem>>, vector<64x16xbf16>
    %cst_133 = arith.constant dense<0.000000e+00> : vector<64x64xf32>
    %209 = tpu.matmul %206, %207, %cst_133 {dimension_numbers = #tpu.dot_dimension_numbers<[1], [1], [0], [0], [0, 0, 1, 0], [], []>} : vector<64x16xbf16>, vector<64x16xbf16>, vector<64x64xf32> -> vector<64x64xf32>
    %cst_134 = arith.constant 2.500000e-01 : f32
    %210 = vector.broadcast %cst_134 : f32 to vector<64x64xf32>
    %211 = arith.mulf %209, %210 : vector<64x64xf32>
    %cst_135 = arith.constant dense<0xFF800000> : vector<64xf32>
    %212 = vector.multi_reduction <maximumf>, %211, %cst_135 [1] : vector<64x64xf32> to vector<64xf32>
    %213 = vector.shape_cast %212 : vector<64xf32> to vector<64x1xf32>
    %214 = vector.broadcast %213 : vector<64x1xf32> to vector<64x64xf32>
    %215 = arith.subf %211, %214 : vector<64x64xf32>
    %216 = math.exp %215 : vector<64x64xf32>
    %cst_136 = arith.constant dense<0.000000e+00> : vector<64xf32>
    %217 = vector.multi_reduction <add>, %216, %cst_136 [1] : vector<64x64xf32> to vector<64xf32>
    %218 = vector.shape_cast %217 : vector<64xf32> to vector<64x1xf32>
    %219 = tpu.reciprocal %218 {approx = true} : vector<64x1xf32> -> vector<64x1xf32>
    %220 = vector.broadcast %219 : vector<64x1xf32> to vector<64x64xf32>
    %221 = arith.mulf %216, %220 : vector<64x64xf32>
    %222 = arith.truncf %221 : vector<64x64xf32> to vector<64x64xbf16>
    %cst_137 = arith.constant dense<0.000000e+00> : vector<64x16xf32>
    %223 = tpu.matmul %222, %208, %cst_137 {dimension_numbers = #tpu.dot_dimension_numbers<[1], [0], [0], [1], [0, 0, 1, 1], [], []>} : vector<64x64xbf16>, vector<64x16xbf16>, vector<64x16xf32> -> vector<64x16xf32>
    %224 = tpu.concatenate %169, %187, %205, %223 in 1 : vector<64x16xf32>, vector<64x16xf32>, vector<64x16xf32>, vector<64x16xf32> -> vector<64x64xf32>
    %225 = tpu.concatenate %151, %224 in 0 : vector<64x64xf32>, vector<64x64xf32> -> vector<128x64xf32>
    %226 = arith.truncf %225 : vector<128x64xf32> to vector<128x64xbf16>
    %cst_138 = arith.constant dense<0.000000e+00> : vector<128x64xf32>
    %227 = tpu.matmul %226, %58, %cst_138 {dimension_numbers = #tpu.dot_dimension_numbers<[1], [0], [0], [1], [0, 0, 1, 1], [], []>} : vector<128x64xbf16>, vector<64x64xbf16>, vector<128x64xf32> -> vector<128x64xf32>
    %228 = vector.broadcast %66 : vector<1x64xf32> to vector<128x64xf32>
    %229 = arith.addf %227, %228 : vector<128x64xf32>
    %230 = arith.addf %54, %229 : vector<128x64xf32>
    %cst_139 = arith.constant dense<0.000000e+00> : vector<128xf32>
    %231 = vector.multi_reduction <add>, %230, %cst_139 [1] : vector<128x64xf32> to vector<128xf32>
    %232 = vector.shape_cast %231 : vector<128xf32> to vector<128x1xf32>
    %cst_140 = arith.constant 6.400000e+01 : f32
    %233 = vector.broadcast %cst_140 : f32 to vector<128x1xf32>
    %234 = arith.divf %232, %233 : vector<128x1xf32>
    %235 = vector.broadcast %234 : vector<128x1xf32> to vector<128x64xf32>
    %236 = arith.subf %230, %235 : vector<128x64xf32>
    %237 = arith.mulf %236, %236 : vector<128x64xf32>
    %cst_141 = arith.constant dense<0.000000e+00> : vector<128xf32>
    %238 = vector.multi_reduction <add>, %237, %cst_141 [1] : vector<128x64xf32> to vector<128xf32>
    %239 = vector.shape_cast %238 : vector<128xf32> to vector<128x1xf32>
    %cst_142 = arith.constant 6.400000e+01 : f32
    %240 = vector.broadcast %cst_142 : f32 to vector<128x1xf32>
    %241 = arith.divf %239, %240 : vector<128x1xf32>
    %cst_143 = arith.constant 9.99999974E-6 : f32
    %242 = vector.broadcast %cst_143 : f32 to vector<128x1xf32>
    %243 = arith.addf %241, %242 : vector<128x1xf32>
    %244 = math.rsqrt %243 : vector<128x1xf32>
    %245 = vector.broadcast %244 : vector<128x1xf32> to vector<128x64xf32>
    %246 = arith.mulf %236, %245 : vector<128x64xf32>
    %247 = vector.broadcast %69 : vector<1x64xf32> to vector<128x64xf32>
    %248 = arith.mulf %246, %247 : vector<128x64xf32>
    %249 = vector.broadcast %70 : vector<1x64xf32> to vector<128x64xf32>
    %250 = arith.addf %248, %249 : vector<128x64xf32>
    %251 = arith.truncf %250 : vector<128x64xf32> to vector<128x64xbf16>
    %cst_144 = arith.constant dense<0.000000e+00> : vector<128x32xf32>
    %252 = tpu.matmul %251, %60, %cst_144 {dimension_numbers = #tpu.dot_dimension_numbers<[1], [0], [0], [1], [0, 0, 1, 1], [], []>} : vector<128x64xbf16>, vector<64x32xbf16>, vector<128x32xf32> -> vector<128x32xf32>
    %253 = vector.broadcast %67 : vector<1x32xf32> to vector<128x32xf32>
    %254 = arith.addf %252, %253 : vector<128x32xf32>
    %cst_145 = arith.constant 0.000000e+00 : f32
    %255 = vector.broadcast %cst_145 : f32 to vector<128x32xf32>
    %256 = arith.maximumf %254, %255 : vector<128x32xf32>
    %257 = arith.truncf %256 : vector<128x32xf32> to vector<128x32xbf16>
    %cst_146 = arith.constant dense<0.000000e+00> : vector<128x64xf32>
    %258 = tpu.matmul %257, %62, %cst_146 {dimension_numbers = #tpu.dot_dimension_numbers<[1], [0], [0], [1], [0, 0, 1, 1], [], []>} : vector<128x32xbf16>, vector<32x64xbf16>, vector<128x64xf32> -> vector<128x64xf32>
    %259 = vector.broadcast %68 : vector<1x64xf32> to vector<128x64xf32>
    %260 = arith.addf %258, %259 : vector<128x64xf32>
    %261 = arith.addf %250, %260 : vector<128x64xf32>
    %cst_147 = arith.constant dense<0.000000e+00> : vector<128xf32>
    %262 = vector.multi_reduction <add>, %261, %cst_147 [1] : vector<128x64xf32> to vector<128xf32>
    %263 = vector.shape_cast %262 : vector<128xf32> to vector<128x1xf32>
    %cst_148 = arith.constant 6.400000e+01 : f32
    %264 = vector.broadcast %cst_148 : f32 to vector<128x1xf32>
    %265 = arith.divf %263, %264 : vector<128x1xf32>
    %266 = vector.broadcast %265 : vector<128x1xf32> to vector<128x64xf32>
    %267 = arith.subf %261, %266 : vector<128x64xf32>
    %268 = arith.mulf %267, %267 : vector<128x64xf32>
    %cst_149 = arith.constant dense<0.000000e+00> : vector<128xf32>
    %269 = vector.multi_reduction <add>, %268, %cst_149 [1] : vector<128x64xf32> to vector<128xf32>
    %270 = vector.shape_cast %269 : vector<128xf32> to vector<128x1xf32>
    %cst_150 = arith.constant 6.400000e+01 : f32
    %271 = vector.broadcast %cst_150 : f32 to vector<128x1xf32>
    %272 = arith.divf %270, %271 : vector<128x1xf32>
    %cst_151 = arith.constant 9.99999974E-6 : f32
    %273 = vector.broadcast %cst_151 : f32 to vector<128x1xf32>
    %274 = arith.addf %272, %273 : vector<128x1xf32>
    %275 = math.rsqrt %274 : vector<128x1xf32>
    %276 = vector.broadcast %275 : vector<128x1xf32> to vector<128x64xf32>
    %277 = arith.mulf %267, %276 : vector<128x64xf32>
    %278 = vector.broadcast %71 : vector<1x64xf32> to vector<128x64xf32>
    %279 = arith.mulf %277, %278 : vector<128x64xf32>
    %280 = vector.broadcast %72 : vector<1x64xf32> to vector<128x64xf32>
    %281 = arith.addf %279, %280 : vector<128x64xf32>
    %c1_152 = arith.constant 1 : index
    %c0_153 = arith.constant 0 : index
    %c0_154 = arith.constant 0 : index
    %282 = vector.load %arg3[%c1_152, %c0_153, %c0_154] : memref<2x64x192xbf16, #tpu.memory_space<vmem>>, vector<1x64x192xbf16>
    %283 = vector.shape_cast %282 : vector<1x64x192xbf16> to vector<64x192xbf16>
    %c1_155 = arith.constant 1 : index
    %c0_156 = arith.constant 0 : index
    %c0_157 = arith.constant 0 : index
    %284 = vector.load %arg4[%c1_155, %c0_156, %c0_157] : memref<2x64x64xbf16, #tpu.memory_space<vmem>>, vector<1x64x64xbf16>
    %285 = vector.shape_cast %284 : vector<1x64x64xbf16> to vector<64x64xbf16>
    %c1_158 = arith.constant 1 : index
    %c0_159 = arith.constant 0 : index
    %c0_160 = arith.constant 0 : index
    %286 = vector.load %arg5[%c1_158, %c0_159, %c0_160] : memref<2x64x32xbf16, #tpu.memory_space<vmem>>, vector<1x64x32xbf16>
    %287 = vector.shape_cast %286 : vector<1x64x32xbf16> to vector<64x32xbf16>
    %c1_161 = arith.constant 1 : index
    %c0_162 = arith.constant 0 : index
    %c0_163 = arith.constant 0 : index
    %288 = vector.load %arg6[%c1_161, %c0_162, %c0_163] : memref<2x32x64xbf16, #tpu.memory_space<vmem>>, vector<1x32x64xbf16>
    %289 = vector.shape_cast %288 : vector<1x32x64xbf16> to vector<32x64xbf16>
    %c1_164 = arith.constant 1 : index
    %c0_165 = arith.constant 0 : index
    %c0_166 = arith.constant 0 : index
    %290 = vector.load %arg7[%c1_164, %c0_165, %c0_166] : memref<2x8x192xf32, #tpu.memory_space<vmem>>, vector<1x8x192xf32>
    %291 = vector.shape_cast %290 : vector<1x8x192xf32> to vector<8x192xf32>
    %292 = vector.extract_strided_slice %291 {offsets = [0, 0], sizes = [1, 192], strides = [1, 1]} : vector<8x192xf32> to vector<1x192xf32>
    %293 = vector.extract_strided_slice %291 {offsets = [1, 0], sizes = [1, 64], strides = [1, 1]} : vector<8x192xf32> to vector<1x64xf32>
    %294 = vector.extract_strided_slice %291 {offsets = [2, 0], sizes = [1, 32], strides = [1, 1]} : vector<8x192xf32> to vector<1x32xf32>
    %295 = vector.extract_strided_slice %291 {offsets = [3, 0], sizes = [1, 64], strides = [1, 1]} : vector<8x192xf32> to vector<1x64xf32>
    %296 = vector.extract_strided_slice %291 {offsets = [4, 0], sizes = [1, 64], strides = [1, 1]} : vector<8x192xf32> to vector<1x64xf32>
    %297 = vector.extract_strided_slice %291 {offsets = [5, 0], sizes = [1, 64], strides = [1, 1]} : vector<8x192xf32> to vector<1x64xf32>
    %298 = vector.extract_strided_slice %291 {offsets = [6, 0], sizes = [1, 64], strides = [1, 1]} : vector<8x192xf32> to vector<1x64xf32>
    %299 = vector.extract_strided_slice %291 {offsets = [7, 0], sizes = [1, 64], strides = [1, 1]} : vector<8x192xf32> to vector<1x64xf32>
    %300 = arith.truncf %281 : vector<128x64xf32> to vector<128x64xbf16>
    %cst_167 = arith.constant dense<0.000000e+00> : vector<128x192xf32>
    %301 = tpu.matmul %300, %283, %cst_167 {dimension_numbers = #tpu.dot_dimension_numbers<[1], [0], [0], [1], [0, 0, 1, 1], [], []>} : vector<128x64xbf16>, vector<64x192xbf16>, vector<128x192xf32> -> vector<128x192xf32>
    %302 = vector.broadcast %292 : vector<1x192xf32> to vector<128x192xf32>
    %303 = arith.addf %301, %302 : vector<128x192xf32>
    %304 = arith.truncf %303 : vector<128x192xf32> to vector<128x192xbf16>
    %c0_168 = arith.constant 0 : index
    %c0_169 = arith.constant 0 : index
    %305 = vector.load %arg10[%c0_168, %c0_169] : memref<128x192xbf16, #tpu.memory_space<vmem>>, vector<128x192xbf16>
    tpu.vector_store %arg10[%c0_168, %c0_169], %304 {strides = array<i32>} : memref<128x192xbf16, #tpu.memory_space<vmem>>, vector<128x192xbf16>,
    %c0_170 = arith.constant 0 : index
    %c0_171 = arith.constant 0 : index
    %306 = vector.load %arg10[%c0_170, %c0_171] : memref<128x192xbf16, #tpu.memory_space<vmem>>, vector<64x16xbf16>
    %c0_172 = arith.constant 0 : index
    %c64_173 = arith.constant 64 : index
    %307 = vector.load %arg10[%c0_172, %c64_173] : memref<128x192xbf16, #tpu.memory_space<vmem>>, vector<64x16xbf16>
    %c0_174 = arith.constant 0 : index
    %c128_175 = arith.constant 128 : index
    %308 = vector.load %arg10[%c0_174, %c128_175] : memref<128x192xbf16, #tpu.memory_space<vmem>>, vector<64x16xbf16>
    %cst_176 = arith.constant dense<0.000000e+00> : vector<64x64xf32>
    %309 = tpu.matmul %306, %307, %cst_176 {dimension_numbers = #tpu.dot_dimension_numbers<[1], [1], [0], [0], [0, 0, 1, 0], [], []>} : vector<64x16xbf16>, vector<64x16xbf16>, vector<64x64xf32> -> vector<64x64xf32>
    %cst_177 = arith.constant 2.500000e-01 : f32
    %310 = vector.broadcast %cst_177 : f32 to vector<64x64xf32>
    %311 = arith.mulf %309, %310 : vector<64x64xf32>
    %cst_178 = arith.constant dense<0xFF800000> : vector<64xf32>
    %312 = vector.multi_reduction <maximumf>, %311, %cst_178 [1] : vector<64x64xf32> to vector<64xf32>
    %313 = vector.shape_cast %312 : vector<64xf32> to vector<64x1xf32>
    %314 = vector.broadcast %313 : vector<64x1xf32> to vector<64x64xf32>
    %315 = arith.subf %311, %314 : vector<64x64xf32>
    %316 = math.exp %315 : vector<64x64xf32>
    %cst_179 = arith.constant dense<0.000000e+00> : vector<64xf32>
    %317 = vector.multi_reduction <add>, %316, %cst_179 [1] : vector<64x64xf32> to vector<64xf32>
    %318 = vector.shape_cast %317 : vector<64xf32> to vector<64x1xf32>
    %319 = tpu.reciprocal %318 {approx = true} : vector<64x1xf32> -> vector<64x1xf32>
    %320 = vector.broadcast %319 : vector<64x1xf32> to vector<64x64xf32>
    %321 = arith.mulf %316, %320 : vector<64x64xf32>
    %322 = arith.truncf %321 : vector<64x64xf32> to vector<64x64xbf16>
    %cst_180 = arith.constant dense<0.000000e+00> : vector<64x16xf32>
    %323 = tpu.matmul %322, %308, %cst_180 {dimension_numbers = #tpu.dot_dimension_numbers<[1], [0], [0], [1], [0, 0, 1, 1], [], []>} : vector<64x64xbf16>, vector<64x16xbf16>, vector<64x16xf32> -> vector<64x16xf32>
    %c0_181 = arith.constant 0 : index
    %c16_182 = arith.constant 16 : index
    %324 = vector.load %arg10[%c0_181, %c16_182] : memref<128x192xbf16, #tpu.memory_space<vmem>>, vector<64x16xbf16>
    %c0_183 = arith.constant 0 : index
    %c80_184 = arith.constant 80 : index
    %325 = vector.load %arg10[%c0_183, %c80_184] : memref<128x192xbf16, #tpu.memory_space<vmem>>, vector<64x16xbf16>
    %c0_185 = arith.constant 0 : index
    %c144_186 = arith.constant 144 : index
    %326 = vector.load %arg10[%c0_185, %c144_186] : memref<128x192xbf16, #tpu.memory_space<vmem>>, vector<64x16xbf16>
    %cst_187 = arith.constant dense<0.000000e+00> : vector<64x64xf32>
    %327 = tpu.matmul %324, %325, %cst_187 {dimension_numbers = #tpu.dot_dimension_numbers<[1], [1], [0], [0], [0, 0, 1, 0], [], []>} : vector<64x16xbf16>, vector<64x16xbf16>, vector<64x64xf32> -> vector<64x64xf32>
    %cst_188 = arith.constant 2.500000e-01 : f32
    %328 = vector.broadcast %cst_188 : f32 to vector<64x64xf32>
    %329 = arith.mulf %327, %328 : vector<64x64xf32>
    %cst_189 = arith.constant dense<0xFF800000> : vector<64xf32>
    %330 = vector.multi_reduction <maximumf>, %329, %cst_189 [1] : vector<64x64xf32> to vector<64xf32>
    %331 = vector.shape_cast %330 : vector<64xf32> to vector<64x1xf32>
    %332 = vector.broadcast %331 : vector<64x1xf32> to vector<64x64xf32>
    %333 = arith.subf %329, %332 : vector<64x64xf32>
    %334 = math.exp %333 : vector<64x64xf32>
    %cst_190 = arith.constant dense<0.000000e+00> : vector<64xf32>
    %335 = vector.multi_reduction <add>, %334, %cst_190 [1] : vector<64x64xf32> to vector<64xf32>
    %336 = vector.shape_cast %335 : vector<64xf32> to vector<64x1xf32>
    %337 = tpu.reciprocal %336 {approx = true} : vector<64x1xf32> -> vector<64x1xf32>
    %338 = vector.broadcast %337 : vector<64x1xf32> to vector<64x64xf32>
    %339 = arith.mulf %334, %338 : vector<64x64xf32>
    %340 = arith.truncf %339 : vector<64x64xf32> to vector<64x64xbf16>
    %cst_191 = arith.constant dense<0.000000e+00> : vector<64x16xf32>
    %341 = tpu.matmul %340, %326, %cst_191 {dimension_numbers = #tpu.dot_dimension_numbers<[1], [0], [0], [1], [0, 0, 1, 1], [], []>} : vector<64x64xbf16>, vector<64x16xbf16>, vector<64x16xf32> -> vector<64x16xf32>
    %c0_192 = arith.constant 0 : index
    %c32_193 = arith.constant 32 : index
    %342 = vector.load %arg10[%c0_192, %c32_193] : memref<128x192xbf16, #tpu.memory_space<vmem>>, vector<64x16xbf16>
    %c0_194 = arith.constant 0 : index
    %c96_195 = arith.constant 96 : index
    %343 = vector.load %arg10[%c0_194, %c96_195] : memref<128x192xbf16, #tpu.memory_space<vmem>>, vector<64x16xbf16>
    %c0_196 = arith.constant 0 : index
    %c160_197 = arith.constant 160 : index
    %344 = vector.load %arg10[%c0_196, %c160_197] : memref<128x192xbf16, #tpu.memory_space<vmem>>, vector<64x16xbf16>
    %cst_198 = arith.constant dense<0.000000e+00> : vector<64x64xf32>
    %345 = tpu.matmul %342, %343, %cst_198 {dimension_numbers = #tpu.dot_dimension_numbers<[1], [1], [0], [0], [0, 0, 1, 0], [], []>} : vector<64x16xbf16>, vector<64x16xbf16>, vector<64x64xf32> -> vector<64x64xf32>
    %cst_199 = arith.constant 2.500000e-01 : f32
    %346 = vector.broadcast %cst_199 : f32 to vector<64x64xf32>
    %347 = arith.mulf %345, %346 : vector<64x64xf32>
    %cst_200 = arith.constant dense<0xFF800000> : vector<64xf32>
    %348 = vector.multi_reduction <maximumf>, %347, %cst_200 [1] : vector<64x64xf32> to vector<64xf32>
    %349 = vector.shape_cast %348 : vector<64xf32> to vector<64x1xf32>
    %350 = vector.broadcast %349 : vector<64x1xf32> to vector<64x64xf32>
    %351 = arith.subf %347, %350 : vector<64x64xf32>
    %352 = math.exp %351 : vector<64x64xf32>
    %cst_201 = arith.constant dense<0.000000e+00> : vector<64xf32>
    %353 = vector.multi_reduction <add>, %352, %cst_201 [1] : vector<64x64xf32> to vector<64xf32>
    %354 = vector.shape_cast %353 : vector<64xf32> to vector<64x1xf32>
    %355 = tpu.reciprocal %354 {approx = true} : vector<64x1xf32> -> vector<64x1xf32>
    %356 = vector.broadcast %355 : vector<64x1xf32> to vector<64x64xf32>
    %357 = arith.mulf %352, %356 : vector<64x64xf32>
    %358 = arith.truncf %357 : vector<64x64xf32> to vector<64x64xbf16>
    %cst_202 = arith.constant dense<0.000000e+00> : vector<64x16xf32>
    %359 = tpu.matmul %358, %344, %cst_202 {dimension_numbers = #tpu.dot_dimension_numbers<[1], [0], [0], [1], [0, 0, 1, 1], [], []>} : vector<64x64xbf16>, vector<64x16xbf16>, vector<64x16xf32> -> vector<64x16xf32>
    %c0_203 = arith.constant 0 : index
    %c48_204 = arith.constant 48 : index
    %360 = vector.load %arg10[%c0_203, %c48_204] : memref<128x192xbf16, #tpu.memory_space<vmem>>, vector<64x16xbf16>
    %c0_205 = arith.constant 0 : index
    %c112_206 = arith.constant 112 : index
    %361 = vector.load %arg10[%c0_205, %c112_206] : memref<128x192xbf16, #tpu.memory_space<vmem>>, vector<64x16xbf16>
    %c0_207 = arith.constant 0 : index
    %c176_208 = arith.constant 176 : index
    %362 = vector.load %arg10[%c0_207, %c176_208] : memref<128x192xbf16, #tpu.memory_space<vmem>>, vector<64x16xbf16>
    %cst_209 = arith.constant dense<0.000000e+00> : vector<64x64xf32>
    %363 = tpu.matmul %360, %361, %cst_209 {dimension_numbers = #tpu.dot_dimension_numbers<[1], [1], [0], [0], [0, 0, 1, 0], [], []>} : vector<64x16xbf16>, vector<64x16xbf16>, vector<64x64xf32> -> vector<64x64xf32>
    %cst_210 = arith.constant 2.500000e-01 : f32
    %364 = vector.broadcast %cst_210 : f32 to vector<64x64xf32>
    %365 = arith.mulf %363, %364 : vector<64x64xf32>
    %cst_211 = arith.constant dense<0xFF800000> : vector<64xf32>
    %366 = vector.multi_reduction <maximumf>, %365, %cst_211 [1] : vector<64x64xf32> to vector<64xf32>
    %367 = vector.shape_cast %366 : vector<64xf32> to vector<64x1xf32>
    %368 = vector.broadcast %367 : vector<64x1xf32> to vector<64x64xf32>
    %369 = arith.subf %365, %368 : vector<64x64xf32>
    %370 = math.exp %369 : vector<64x64xf32>
    %cst_212 = arith.constant dense<0.000000e+00> : vector<64xf32>
    %371 = vector.multi_reduction <add>, %370, %cst_212 [1] : vector<64x64xf32> to vector<64xf32>
    %372 = vector.shape_cast %371 : vector<64xf32> to vector<64x1xf32>
    %373 = tpu.reciprocal %372 {approx = true} : vector<64x1xf32> -> vector<64x1xf32>
    %374 = vector.broadcast %373 : vector<64x1xf32> to vector<64x64xf32>
    %375 = arith.mulf %370, %374 : vector<64x64xf32>
    %376 = arith.truncf %375 : vector<64x64xf32> to vector<64x64xbf16>
    %cst_213 = arith.constant dense<0.000000e+00> : vector<64x16xf32>
    %377 = tpu.matmul %376, %362, %cst_213 {dimension_numbers = #tpu.dot_dimension_numbers<[1], [0], [0], [1], [0, 0, 1, 1], [], []>} : vector<64x64xbf16>, vector<64x16xbf16>, vector<64x16xf32> -> vector<64x16xf32>
    %378 = tpu.concatenate %323, %341, %359, %377 in 1 : vector<64x16xf32>, vector<64x16xf32>, vector<64x16xf32>, vector<64x16xf32> -> vector<64x64xf32>
    %c64_214 = arith.constant 64 : index
    %c0_215 = arith.constant 0 : index
    %379 = vector.load %arg10[%c64_214, %c0_215] : memref<128x192xbf16, #tpu.memory_space<vmem>>, vector<64x16xbf16>
    %c64_216 = arith.constant 64 : index
    %c64_217 = arith.constant 64 : index
    %380 = vector.load %arg10[%c64_216, %c64_217] : memref<128x192xbf16, #tpu.memory_space<vmem>>, vector<64x16xbf16>
    %c64_218 = arith.constant 64 : index
    %c128_219 = arith.constant 128 : index
    %381 = vector.load %arg10[%c64_218, %c128_219] : memref<128x192xbf16, #tpu.memory_space<vmem>>, vector<64x16xbf16>
    %cst_220 = arith.constant dense<0.000000e+00> : vector<64x64xf32>
    %382 = tpu.matmul %379, %380, %cst_220 {dimension_numbers = #tpu.dot_dimension_numbers<[1], [1], [0], [0], [0, 0, 1, 0], [], []>} : vector<64x16xbf16>, vector<64x16xbf16>, vector<64x64xf32> -> vector<64x64xf32>
    %cst_221 = arith.constant 2.500000e-01 : f32
    %383 = vector.broadcast %cst_221 : f32 to vector<64x64xf32>
    %384 = arith.mulf %382, %383 : vector<64x64xf32>
    %cst_222 = arith.constant dense<0xFF800000> : vector<64xf32>
    %385 = vector.multi_reduction <maximumf>, %384, %cst_222 [1] : vector<64x64xf32> to vector<64xf32>
    %386 = vector.shape_cast %385 : vector<64xf32> to vector<64x1xf32>
    %387 = vector.broadcast %386 : vector<64x1xf32> to vector<64x64xf32>
    %388 = arith.subf %384, %387 : vector<64x64xf32>
    %389 = math.exp %388 : vector<64x64xf32>
    %cst_223 = arith.constant dense<0.000000e+00> : vector<64xf32>
    %390 = vector.multi_reduction <add>, %389, %cst_223 [1] : vector<64x64xf32> to vector<64xf32>
    %391 = vector.shape_cast %390 : vector<64xf32> to vector<64x1xf32>
    %392 = tpu.reciprocal %391 {approx = true} : vector<64x1xf32> -> vector<64x1xf32>
    %393 = vector.broadcast %392 : vector<64x1xf32> to vector<64x64xf32>
    %394 = arith.mulf %389, %393 : vector<64x64xf32>
    %395 = arith.truncf %394 : vector<64x64xf32> to vector<64x64xbf16>
    %cst_224 = arith.constant dense<0.000000e+00> : vector<64x16xf32>
    %396 = tpu.matmul %395, %381, %cst_224 {dimension_numbers = #tpu.dot_dimension_numbers<[1], [0], [0], [1], [0, 0, 1, 1], [], []>} : vector<64x64xbf16>, vector<64x16xbf16>, vector<64x16xf32> -> vector<64x16xf32>
    %c64_225 = arith.constant 64 : index
    %c16_226 = arith.constant 16 : index
    %397 = vector.load %arg10[%c64_225, %c16_226] : memref<128x192xbf16, #tpu.memory_space<vmem>>, vector<64x16xbf16>
    %c64_227 = arith.constant 64 : index
    %c80_228 = arith.constant 80 : index
    %398 = vector.load %arg10[%c64_227, %c80_228] : memref<128x192xbf16, #tpu.memory_space<vmem>>, vector<64x16xbf16>
    %c64_229 = arith.constant 64 : index
    %c144_230 = arith.constant 144 : index
    %399 = vector.load %arg10[%c64_229, %c144_230] : memref<128x192xbf16, #tpu.memory_space<vmem>>, vector<64x16xbf16>
    %cst_231 = arith.constant dense<0.000000e+00> : vector<64x64xf32>
    %400 = tpu.matmul %397, %398, %cst_231 {dimension_numbers = #tpu.dot_dimension_numbers<[1], [1], [0], [0], [0, 0, 1, 0], [], []>} : vector<64x16xbf16>, vector<64x16xbf16>, vector<64x64xf32> -> vector<64x64xf32>
    %cst_232 = arith.constant 2.500000e-01 : f32
    %401 = vector.broadcast %cst_232 : f32 to vector<64x64xf32>
    %402 = arith.mulf %400, %401 : vector<64x64xf32>
    %cst_233 = arith.constant dense<0xFF800000> : vector<64xf32>
    %403 = vector.multi_reduction <maximumf>, %402, %cst_233 [1] : vector<64x64xf32> to vector<64xf32>
    %404 = vector.shape_cast %403 : vector<64xf32> to vector<64x1xf32>
    %405 = vector.broadcast %404 : vector<64x1xf32> to vector<64x64xf32>
    %406 = arith.subf %402, %405 : vector<64x64xf32>
    %407 = math.exp %406 : vector<64x64xf32>
    %cst_234 = arith.constant dense<0.000000e+00> : vector<64xf32>
    %408 = vector.multi_reduction <add>, %407, %cst_234 [1] : vector<64x64xf32> to vector<64xf32>
    %409 = vector.shape_cast %408 : vector<64xf32> to vector<64x1xf32>
    %410 = tpu.reciprocal %409 {approx = true} : vector<64x1xf32> -> vector<64x1xf32>
    %411 = vector.broadcast %410 : vector<64x1xf32> to vector<64x64xf32>
    %412 = arith.mulf %407, %411 : vector<64x64xf32>
    %413 = arith.truncf %412 : vector<64x64xf32> to vector<64x64xbf16>
    %cst_235 = arith.constant dense<0.000000e+00> : vector<64x16xf32>
    %414 = tpu.matmul %413, %399, %cst_235 {dimension_numbers = #tpu.dot_dimension_numbers<[1], [0], [0], [1], [0, 0, 1, 1], [], []>} : vector<64x64xbf16>, vector<64x16xbf16>, vector<64x16xf32> -> vector<64x16xf32>
    %c64_236 = arith.constant 64 : index
    %c32_237 = arith.constant 32 : index
    %415 = vector.load %arg10[%c64_236, %c32_237] : memref<128x192xbf16, #tpu.memory_space<vmem>>, vector<64x16xbf16>
    %c64_238 = arith.constant 64 : index
    %c96_239 = arith.constant 96 : index
    %416 = vector.load %arg10[%c64_238, %c96_239] : memref<128x192xbf16, #tpu.memory_space<vmem>>, vector<64x16xbf16>
    %c64_240 = arith.constant 64 : index
    %c160_241 = arith.constant 160 : index
    %417 = vector.load %arg10[%c64_240, %c160_241] : memref<128x192xbf16, #tpu.memory_space<vmem>>, vector<64x16xbf16>
    %cst_242 = arith.constant dense<0.000000e+00> : vector<64x64xf32>
    %418 = tpu.matmul %415, %416, %cst_242 {dimension_numbers = #tpu.dot_dimension_numbers<[1], [1], [0], [0], [0, 0, 1, 0], [], []>} : vector<64x16xbf16>, vector<64x16xbf16>, vector<64x64xf32> -> vector<64x64xf32>
    %cst_243 = arith.constant 2.500000e-01 : f32
    %419 = vector.broadcast %cst_243 : f32 to vector<64x64xf32>
    %420 = arith.mulf %418, %419 : vector<64x64xf32>
    %cst_244 = arith.constant dense<0xFF800000> : vector<64xf32>
    %421 = vector.multi_reduction <maximumf>, %420, %cst_244 [1] : vector<64x64xf32> to vector<64xf32>
    %422 = vector.shape_cast %421 : vector<64xf32> to vector<64x1xf32>
    %423 = vector.broadcast %422 : vector<64x1xf32> to vector<64x64xf32>
    %424 = arith.subf %420, %423 : vector<64x64xf32>
    %425 = math.exp %424 : vector<64x64xf32>
    %cst_245 = arith.constant dense<0.000000e+00> : vector<64xf32>
    %426 = vector.multi_reduction <add>, %425, %cst_245 [1] : vector<64x64xf32> to vector<64xf32>
    %427 = vector.shape_cast %426 : vector<64xf32> to vector<64x1xf32>
    %428 = tpu.reciprocal %427 {approx = true} : vector<64x1xf32> -> vector<64x1xf32>
    %429 = vector.broadcast %428 : vector<64x1xf32> to vector<64x64xf32>
    %430 = arith.mulf %425, %429 : vector<64x64xf32>
    %431 = arith.truncf %430 : vector<64x64xf32> to vector<64x64xbf16>
    %cst_246 = arith.constant dense<0.000000e+00> : vector<64x16xf32>
    %432 = tpu.matmul %431, %417, %cst_246 {dimension_numbers = #tpu.dot_dimension_numbers<[1], [0], [0], [1], [0, 0, 1, 1], [], []>} : vector<64x64xbf16>, vector<64x16xbf16>, vector<64x16xf32> -> vector<64x16xf32>
    %c64_247 = arith.constant 64 : index
    %c48_248 = arith.constant 48 : index
    %433 = vector.load %arg10[%c64_247, %c48_248] : memref<128x192xbf16, #tpu.memory_space<vmem>>, vector<64x16xbf16>
    %c64_249 = arith.constant 64 : index
    %c112_250 = arith.constant 112 : index
    %434 = vector.load %arg10[%c64_249, %c112_250] : memref<128x192xbf16, #tpu.memory_space<vmem>>, vector<64x16xbf16>
    %c64_251 = arith.constant 64 : index
    %c176_252 = arith.constant 176 : index
    %435 = vector.load %arg10[%c64_251, %c176_252] : memref<128x192xbf16, #tpu.memory_space<vmem>>, vector<64x16xbf16>
    %cst_253 = arith.constant dense<0.000000e+00> : vector<64x64xf32>
    %436 = tpu.matmul %433, %434, %cst_253 {dimension_numbers = #tpu.dot_dimension_numbers<[1], [1], [0], [0], [0, 0, 1, 0], [], []>} : vector<64x16xbf16>, vector<64x16xbf16>, vector<64x64xf32> -> vector<64x64xf32>
    %cst_254 = arith.constant 2.500000e-01 : f32
    %437 = vector.broadcast %cst_254 : f32 to vector<64x64xf32>
    %438 = arith.mulf %436, %437 : vector<64x64xf32>
    %cst_255 = arith.constant dense<0xFF800000> : vector<64xf32>
    %439 = vector.multi_reduction <maximumf>, %438, %cst_255 [1] : vector<64x64xf32> to vector<64xf32>
    %440 = vector.shape_cast %439 : vector<64xf32> to vector<64x1xf32>
    %441 = vector.broadcast %440 : vector<64x1xf32> to vector<64x64xf32>
    %442 = arith.subf %438, %441 : vector<64x64xf32>
    %443 = math.exp %442 : vector<64x64xf32>
    %cst_256 = arith.constant dense<0.000000e+00> : vector<64xf32>
    %444 = vector.multi_reduction <add>, %443, %cst_256 [1] : vector<64x64xf32> to vector<64xf32>
    %445 = vector.shape_cast %444 : vector<64xf32> to vector<64x1xf32>
    %446 = tpu.reciprocal %445 {approx = true} : vector<64x1xf32> -> vector<64x1xf32>
    %447 = vector.broadcast %446 : vector<64x1xf32> to vector<64x64xf32>
    %448 = arith.mulf %443, %447 : vector<64x64xf32>
    %449 = arith.truncf %448 : vector<64x64xf32> to vector<64x64xbf16>
    %cst_257 = arith.constant dense<0.000000e+00> : vector<64x16xf32>
    %450 = tpu.matmul %449, %435, %cst_257 {dimension_numbers = #tpu.dot_dimension_numbers<[1], [0], [0], [1], [0, 0, 1, 1], [], []>} : vector<64x64xbf16>, vector<64x16xbf16>, vector<64x16xf32> -> vector<64x16xf32>
    %451 = tpu.concatenate %396, %414, %432, %450 in 1 : vector<64x16xf32>, vector<64x16xf32>, vector<64x16xf32>, vector<64x16xf32> -> vector<64x64xf32>
    %452 = tpu.concatenate %378, %451 in 0 : vector<64x64xf32>, vector<64x64xf32> -> vector<128x64xf32>
    %453 = arith.truncf %452 : vector<128x64xf32> to vector<128x64xbf16>
    %cst_258 = arith.constant dense<0.000000e+00> : vector<128x64xf32>
    %454 = tpu.matmul %453, %285, %cst_258 {dimension_numbers = #tpu.dot_dimension_numbers<[1], [0], [0], [1], [0, 0, 1, 1], [], []>} : vector<128x64xbf16>, vector<64x64xbf16>, vector<128x64xf32> -> vector<128x64xf32>
    %455 = vector.broadcast %293 : vector<1x64xf32> to vector<128x64xf32>
    %456 = arith.addf %454, %455 : vector<128x64xf32>
    %457 = arith.addf %281, %456 : vector<128x64xf32>
    %cst_259 = arith.constant dense<0.000000e+00> : vector<128xf32>
    %458 = vector.multi_reduction <add>, %457, %cst_259 [1] : vector<128x64xf32> to vector<128xf32>
    %459 = vector.shape_cast %458 : vector<128xf32> to vector<128x1xf32>
    %cst_260 = arith.constant 6.400000e+01 : f32
    %460 = vector.broadcast %cst_260 : f32 to vector<128x1xf32>
    %461 = arith.divf %459, %460 : vector<128x1xf32>
    %462 = vector.broadcast %461 : vector<128x1xf32> to vector<128x64xf32>
    %463 = arith.subf %457, %462 : vector<128x64xf32>
    %464 = arith.mulf %463, %463 : vector<128x64xf32>
    %cst_261 = arith.constant dense<0.000000e+00> : vector<128xf32>
    %465 = vector.multi_reduction <add>, %464, %cst_261 [1] : vector<128x64xf32> to vector<128xf32>
    %466 = vector.shape_cast %465 : vector<128xf32> to vector<128x1xf32>
    %cst_262 = arith.constant 6.400000e+01 : f32
    %467 = vector.broadcast %cst_262 : f32 to vector<128x1xf32>
    %468 = arith.divf %466, %467 : vector<128x1xf32>
    %cst_263 = arith.constant 9.99999974E-6 : f32
    %469 = vector.broadcast %cst_263 : f32 to vector<128x1xf32>
    %470 = arith.addf %468, %469 : vector<128x1xf32>
    %471 = math.rsqrt %470 : vector<128x1xf32>
    %472 = vector.broadcast %471 : vector<128x1xf32> to vector<128x64xf32>
    %473 = arith.mulf %463, %472 : vector<128x64xf32>
    %474 = vector.broadcast %296 : vector<1x64xf32> to vector<128x64xf32>
    %475 = arith.mulf %473, %474 : vector<128x64xf32>
    %476 = vector.broadcast %297 : vector<1x64xf32> to vector<128x64xf32>
    %477 = arith.addf %475, %476 : vector<128x64xf32>
    %478 = arith.truncf %477 : vector<128x64xf32> to vector<128x64xbf16>
    %cst_264 = arith.constant dense<0.000000e+00> : vector<128x32xf32>
    %479 = tpu.matmul %478, %287, %cst_264 {dimension_numbers = #tpu.dot_dimension_numbers<[1], [0], [0], [1], [0, 0, 1, 1], [], []>} : vector<128x64xbf16>, vector<64x32xbf16>, vector<128x32xf32> -> vector<128x32xf32>
    %480 = vector.broadcast %294 : vector<1x32xf32> to vector<128x32xf32>
    %481 = arith.addf %479, %480 : vector<128x32xf32>
    %cst_265 = arith.constant 0.000000e+00 : f32
    %482 = vector.broadcast %cst_265 : f32 to vector<128x32xf32>
    %483 = arith.maximumf %481, %482 : vector<128x32xf32>
    %484 = arith.truncf %483 : vector<128x32xf32> to vector<128x32xbf16>
    %cst_266 = arith.constant dense<0.000000e+00> : vector<128x64xf32>
    %485 = tpu.matmul %484, %289, %cst_266 {dimension_numbers = #tpu.dot_dimension_numbers<[1], [0], [0], [1], [0, 0, 1, 1], [], []>} : vector<128x32xbf16>, vector<32x64xbf16>, vector<128x64xf32> -> vector<128x64xf32>
    %486 = vector.broadcast %295 : vector<1x64xf32> to vector<128x64xf32>
    %487 = arith.addf %485, %486 : vector<128x64xf32>
    %488 = arith.addf %477, %487 : vector<128x64xf32>
    %cst_267 = arith.constant dense<0.000000e+00> : vector<128xf32>
    %489 = vector.multi_reduction <add>, %488, %cst_267 [1] : vector<128x64xf32> to vector<128xf32>
    %490 = vector.shape_cast %489 : vector<128xf32> to vector<128x1xf32>
    %cst_268 = arith.constant 6.400000e+01 : f32
    %491 = vector.broadcast %cst_268 : f32 to vector<128x1xf32>
    %492 = arith.divf %490, %491 : vector<128x1xf32>
    %493 = vector.broadcast %492 : vector<128x1xf32> to vector<128x64xf32>
    %494 = arith.subf %488, %493 : vector<128x64xf32>
    %495 = arith.mulf %494, %494 : vector<128x64xf32>
    %cst_269 = arith.constant dense<0.000000e+00> : vector<128xf32>
    %496 = vector.multi_reduction <add>, %495, %cst_269 [1] : vector<128x64xf32> to vector<128xf32>
    %497 = vector.shape_cast %496 : vector<128xf32> to vector<128x1xf32>
    %cst_270 = arith.constant 6.400000e+01 : f32
    %498 = vector.broadcast %cst_270 : f32 to vector<128x1xf32>
    %499 = arith.divf %497, %498 : vector<128x1xf32>
    %cst_271 = arith.constant 9.99999974E-6 : f32
    %500 = vector.broadcast %cst_271 : f32 to vector<128x1xf32>
    %501 = arith.addf %499, %500 : vector<128x1xf32>
    %502 = math.rsqrt %501 : vector<128x1xf32>
    %503 = vector.broadcast %502 : vector<128x1xf32> to vector<128x64xf32>
    %504 = arith.mulf %494, %503 : vector<128x64xf32>
    %505 = vector.broadcast %298 : vector<1x64xf32> to vector<128x64xf32>
    %506 = arith.mulf %504, %505 : vector<128x64xf32>
    %507 = vector.broadcast %299 : vector<1x64xf32> to vector<128x64xf32>
    %508 = arith.addf %506, %507 : vector<128x64xf32>
    %509 = vector.extract_strided_slice %508 {offsets = [0, 0], sizes = [64, 64], strides = [1, 1]} : vector<128x64xf32> to vector<64x64xf32>
    %c0_272 = arith.constant 0 : index
    %c0_273 = arith.constant 0 : index
    %c0_274 = arith.constant 0 : index
    %510 = vector.load %arg8[%c0_272, %c0_273, %c0_274] : memref<2x64x64xf32, #tpu.memory_space<vmem>>, vector<1x64x64xf32>
    %511 = vector.shape_cast %510 : vector<1x64x64xf32> to vector<64x64xf32>
    %512 = vector.shape_cast %509 : vector<64x64xf32> to vector<1x64x64xf32>
    tpu.vector_store %arg8[%c0_272, %c0_273, %c0_274], %512 {strides = array<i32>} : memref<2x64x64xf32, #tpu.memory_space<vmem>>, vector<1x64x64xf32>,
    %513 = vector.extract_strided_slice %508 {offsets = [64, 0], sizes = [64, 64], strides = [1, 1]} : vector<128x64xf32> to vector<64x64xf32>
    %c1_275 = arith.constant 1 : index
    %c0_276 = arith.constant 0 : index
    %c0_277 = arith.constant 0 : index
    %514 = vector.load %arg8[%c1_275, %c0_276, %c0_277] : memref<2x64x64xf32, #tpu.memory_space<vmem>>, vector<1x64x64xf32>
    %515 = vector.shape_cast %514 : vector<1x64x64xf32> to vector<64x64xf32>
    %516 = vector.shape_cast %513 : vector<64x64xf32> to vector<1x64x64xf32>
    tpu.vector_store %arg8[%c1_275, %c0_276, %c0_277], %516 {strides = array<i32>} : memref<2x64x64xf32, #tpu.memory_space<vmem>>, vector<1x64x64xf32>,
    return
  }
}

</mosaic_0001>

<llo_original>
// kernel: _lambda_.1
$region0: #{_lambda_.1}
  #allocation0 [shape = 'u32[]', space=smem, size = 0x4, offset = 0x4, fixed_abs, tag = 'smem constant byte address 0x4 - core index']
  #allocation1 [shape = 'u32[144,128]{1,0:T(1,128)}', space=vmem, size = 0x12000, scoped, tag = 'internal scratch']
  #allocation2 [shape = 'f32[128,288]{1,0:T(8,128)}', space=vmem, size = 0x30000, scoped, tag = 'scratch operand']
  #allocation3 [shape = 'bf16[128,192]{1,0:T(8,128)(2,1)}', space=vmem, size = 0x10000, scoped, tag = 'scratch operand']
  %s0 = inlined_call_operand.vmem [shape: f32[2,64,32], index: 0, kind: input, shape index: {}]
  %s1 = inlined_call_operand.hbm [shape: bf16[64,288], index: 1, kind: input, shape index: {}]
  %s2 = inlined_call_operand.hbm [shape: f32[64,1], index: 2, kind: input, shape index: {}]
  %s3 = inlined_call_operand.vmem [shape: bf16[2,64,192], index: 3, kind: input, shape index: {}]
  %s4 = inlined_call_operand.hbm [shape: bf16[2,64,64], index: 4, kind: input, shape index: {}]
  %s5 = inlined_call_operand.vmem [shape: bf16[2,64,32], index: 5, kind: input, shape index: {}]
  %s6 = inlined_call_operand.hbm [shape: bf16[2,32,64], index: 6, kind: input, shape index: {}]
  %s7 = inlined_call_operand.hbm [shape: f32[2,8,192], index: 7, kind: input, shape index: {}]
  %s8 = inlined_call_operand.hbm [shape: f32[2,64,64], index: 8, kind: output, shape index: {}]
  %s9 = sld [smem:[#allocation0]]
  $region62: #{_lambda_.1} parent=0
    _
  %s11 = ssub.s32 1, %s9
  %s12 = scalar_select 0, %s11, %s9
  $region1: #{_lambda_.1} parent=0
    #allocation4 [shape = 'u8[49152]{0}', space=vmem, size = 0xc000, scoped, tag = 'input window, operand 1, single buffered']
    #allocation5 [shape = 's32[1]{0}', space=sflag, size = 0x4, scoped, tag = 'scoped memory for _lambda_.1']
    #allocation6 [shape = 's32[1]{0}', space=sflag, size = 0x4, scoped, tag = 'scoped memory for _lambda_.1']
    #allocation7 [shape = 'u8[32768]{0}', space=vmem, size = 0x8000, scoped, tag = 'input window, operand 2, single buffered']
    #allocation8 [shape = 's32[1]{0}', space=sflag, size = 0x4, scoped, tag = 'scoped memory for _lambda_.1']
    #allocation9 [shape = 'u8[32768]{0}', space=vmem, size = 0x8000, scoped, tag = 'input window, operand 4, single buffered']
    #allocation10 [shape = 'u8[16384]{0}', space=vmem, size = 0x4000, scoped, tag = 'input window, operand 6, single buffered']
    #allocation11 [shape = 's32[1]{0}', space=sflag, size = 0x4, scoped, tag = 'scoped memory for _lambda_.1']
    #allocation12 [shape = 'u8[16384]{0}', space=vmem, size = 0x4000, scoped, tag = 'input window, operand 7, single buffered']
    #allocation13 [shape = 'u8[65536]{0}', space=vmem, size = 0x10000, scoped, tag = 'output window, operand 0, single buffered']
    %13 = vsyncpa [#allocation5], 0
    %14 = vsyncpa [#allocation8], 0
    %15 = vsyncpa [#allocation11], 0
    %16 = vsyncpa [#allocation6], 0
    // Predicated region
    $region2: #{_lambda_.1} parent=1 // pred_check
      _
    $region3: #{_lambda_.1} parent=1 // pred_check_branch
      %18 = sbr.rel (0) target = $region5
    $region4: #{_lambda_.1} parent=1 // pred_region
      _
    $region5: #{_lambda_.1} parent=1 // pred_fallthru
      _
    // Predicated region
    $region6: #{_lambda_.1} parent=1 // pred_check
      _
    $region7: #{_lambda_.1} parent=1 // pred_check_branch
      %20 = sbr.rel (0) target = $region9
    $region8: #{_lambda_.1} parent=1 // pred_region
      %s22 = ssub.s32 1536, 1536
      %23 = vsyncadd [#allocation5], %s22
      %s24 = sshll.u32 [#allocation4], 4
      %s25 = int_to_ptr.vmem [resolvable:$true] %s24
      %30 = dma.hbm_to_vmem [thread:$0]  %s1, 1536, %s25, [#allocation5], 192, 192, 12
    $region9: #{_lambda_.1} parent=1 // pred_fallthru
      _
    // Predicated region
    $region10: #{_lambda_.1} parent=1 // pred_check
      _
    $region11: #{_lambda_.1} parent=1 // pred_check_branch
      %32 = sbr.rel (0) target = $region13
    $region12: #{_lambda_.1} parent=1 // pred_region
      %s34 = ssub.s32 1024, 1024
      %35 = vsyncadd [#allocation8], %s34
      %s36 = sshll.u32 [#allocation7], 4
      %s37 = int_to_ptr.vmem [resolvable:$true] %s36
      %42 = dma.hbm_to_vmem [thread:$0]  %s2, 1024, %s37, [#allocation8], 128, 128, 8
    $region13: #{_lambda_.1} parent=1 // pred_fallthru
      _
    // Predicated region
    $region14: #{_lambda_.1} parent=1 // pred_check
      _
    $region15: #{_lambda_.1} parent=1 // pred_check_branch
      %44 = sbr.rel (0) target = $region17
    $region16: #{_lambda_.1} parent=1 // pred_region
      _
    $region17: #{_lambda_.1} parent=1 // pred_fallthru
      _
    // Predicated region
    $region18: #{_lambda_.1} parent=1 // pred_check
      _
    $region19: #{_lambda_.1} parent=1 // pred_check_branch
      %46 = sbr.rel (0) target = $region21
    $region20: #{_lambda_.1} parent=1 // pred_region
      %s48 = ssub.s32 1024, 1024
      %49 = vsyncadd [#allocation8], %s48
      %s50 = sshll.u32 [#allocation9], 4
      %s51 = int_to_ptr.vmem [resolvable:$true] %s50
      %56 = dma.hbm_to_vmem [thread:$0]  %s4, 1024, %s51, [#allocation8], 64, 64, 4
    $region21: #{_lambda_.1} parent=1 // pred_fallthru
      _
    // Predicated region
    $region22: #{_lambda_.1} parent=1 // pred_check
      _
    $region23: #{_lambda_.1} parent=1 // pred_check_branch
      %58 = sbr.rel (0) target = $region25
    $region24: #{_lambda_.1} parent=1 // pred_region
      _
    $region25: #{_lambda_.1} parent=1 // pred_fallthru
      _
    // Predicated region
    $region26: #{_lambda_.1} parent=1 // pred_check
      _
    $region27: #{_lambda_.1} parent=1 // pred_check_branch
      %60 = sbr.rel (0) target = $region29
    $region28: #{_lambda_.1} parent=1 // pred_region
      %s62 = ssub.s32 512, 512
      %63 = vsyncadd [#allocation11], %s62
      %s64 = sshll.u32 [#allocation10], 4
      %s65 = int_to_ptr.vmem [resolvable:$true] %s64
      %70 = dma.hbm_to_vmem [thread:$0]  %s6, 512, %s65, [#allocation11], 64, 64, 4
    $region29: #{_lambda_.1} parent=1 // pred_fallthru
      _
    // Predicated region
    $region30: #{_lambda_.1} parent=1 // pred_check
      _
    $region31: #{_lambda_.1} parent=1 // pred_check_branch
      %72 = sbr.rel (0) target = $region33
    $region32: #{_lambda_.1} parent=1 // pred_region
      %s74 = ssub.s32 512, 512
      %75 = vsyncadd [#allocation11], %s74
      %s76 = sshll.u32 [#allocation12], 4
      %s77 = int_to_ptr.vmem [resolvable:$true] %s76
      %82 = dma.hbm_to_vmem [thread:$0]  %s7, 512, %s77, [#allocation11], 256, 256, 16
    $region33: #{_lambda_.1} parent=1 // pred_fallthru
      _
    // Predicated region
    $region34: #{_lambda_.1} parent=1 // pred_check
      _
    $region35: #{_lambda_.1} parent=1 // pred_check_branch
      %84 = sbr.rel (0) target = $region37
    $region36: #{_lambda_.1} parent=1 // pred_region
      %85 = dma.done [#allocation5], 1536
    $region37: #{_lambda_.1} parent=1 // pred_fallthru
      _
    // Predicated region
    $region38: #{_lambda_.1} parent=1 // pred_check
      _
    $region39: #{_lambda_.1} parent=1 // pred_check_branch
      %87 = sbr.rel (0) target = $region41
    $region40: #{_lambda_.1} parent=1 // pred_region
      %88 = dma.done [#allocation8], 1024
    $region41: #{_lambda_.1} parent=1 // pred_fallthru
      _
    // Predicated region
    $region42: #{_lambda_.1} parent=1 // pred_check
      _
    $region43: #{_lambda_.1} parent=1 // pred_check_branch
      %90 = sbr.rel (0) target = $region45
    $region44: #{_lambda_.1} parent=1 // pred_region
      %91 = dma.done [#allocation8], 1024
    $region45: #{_lambda_.1} parent=1 // pred_fallthru
      _
    // Predicated region
    $region46: #{_lambda_.1} parent=1 // pred_check
      _
    $region47: #{_lambda_.1} parent=1 // pred_check_branch
      %93 = sbr.rel (0) target = $region49
    $region48: #{_lambda_.1} parent=1 // pred_region
      %94 = dma.done [#allocation11], 512
    $region49: #{_lambda_.1} parent=1 // pred_fallthru
      _
    // Predicated region
    $region50: #{_lambda_.1} parent=1 // pred_check
      _
    $region51: #{_lambda_.1} parent=1 // pred_check_branch
      %96 = sbr.rel (0) target = $region53
    $region52: #{_lambda_.1} parent=1 // pred_region
      %97 = dma.done [#allocation11], 512
    $region53: #{_lambda_.1} parent=1 // pred_fallthru
      _
    %99 = vst [vmem:[#allocation2] sm:$0xff] 0.0
    %100 = vst [vmem:[#allocation2 + $0x8] sm:$0xff] 0.0
    %vm101 = vcmask 261120
    %102 = vst.msk [vmem:[#allocation2 + $0x10] sm:$0xff] %vm101, 0.0
    %103 = vst [vmem:[#allocation2 + $0x18] sm:$0xff] 0.0
    %104 = vst [vmem:[#allocation2 + $0x20] sm:$0xff] 0.0
    %105 = vst.msk [vmem:[#allocation2 + $0x28] sm:$0xff] %vm101, 0.0
    %106 = vst [vmem:[#allocation2 + $0x30] sm:$0xff] 0.0
    %107 = vst [vmem:[#allocation2 + $0x38] sm:$0xff] 0.0
    %108 = vst.msk [vmem:[#allocation2 + $0x40] sm:$0xff] %vm101, 0.0
    %109 = vst [vmem:[#allocation2 + $0x48] sm:$0xff] 0.0
    %110 = vst [vmem:[#allocation2 + $0x50] sm:$0xff] 0.0
    %111 = vst.msk [vmem:[#allocation2 + $0x58] sm:$0xff] %vm101, 0.0
    %112 = vst [vmem:[#allocation2 + $0x60] sm:$0xff] 0.0
    %113 = vst [vmem:[#allocation2 + $0x68] sm:$0xff] 0.0
    %114 = vst.msk [vmem:[#allocation2 + $0x70] sm:$0xff] %vm101, 0.0
    %115 = vst [vmem:[#allocation2 + $0x78] sm:$0xff] 0.0
    %116 = vst [vmem:[#allocation2 + $0x80] sm:$0xff] 0.0
    %117 = vst.msk [vmem:[#allocation2 + $0x88] sm:$0xff] %vm101, 0.0
    %118 = vst [vmem:[#allocation2 + $0x90] sm:$0xff] 0.0
    %119 = vst [vmem:[#allocation2 + $0x98] sm:$0xff] 0.0
    %120 = vst.msk [vmem:[#allocation2 + $0xa0] sm:$0xff] %vm101, 0.0
    %121 = vst [vmem:[#allocation2 + $0xa8] sm:$0xff] 0.0
    %122 = vst [vmem:[#allocation2 + $0xb0] sm:$0xff] 0.0
    %123 = vst.msk [vmem:[#allocation2 + $0xb8] sm:$0xff] %vm101, 0.0
    %124 = vst [vmem:[#allocation2 + $0xc0] sm:$0xff] 0.0
    %125 = vst [vmem:[#allocation2 + $0xc8] sm:$0xff] 0.0
    %126 = vst.msk [vmem:[#allocation2 + $0xd0] sm:$0xff] %vm101, 0.0
    %127 = vst [vmem:[#allocation2 + $0xd8] sm:$0xff] 0.0
    %128 = vst [vmem:[#allocation2 + $0xe0] sm:$0xff] 0.0
    %129 = vst.msk [vmem:[#allocation2 + $0xe8] sm:$0xff] %vm101, 0.0
    %130 = vst [vmem:[#allocation2 + $0xf0] sm:$0xff] 0.0
    %131 = vst [vmem:[#allocation2 + $0xf8] sm:$0xff] 0.0
    %132 = vst.msk [vmem:[#allocation2 + $0x100] sm:$0xff] %vm101, 0.0
    %133 = vst [vmem:[#allocation2 + $0x108] sm:$0xff] 0.0
    %134 = vst [vmem:[#allocation2 + $0x110] sm:$0xff] 0.0
    %135 = vst.msk [vmem:[#allocation2 + $0x118] sm:$0xff] %vm101, 0.0
    %136 = vst [vmem:[#allocation2 + $0x120] sm:$0xff] 0.0
    %137 = vst [vmem:[#allocation2 + $0x128] sm:$0xff] 0.0
    %138 = vst.msk [vmem:[#allocation2 + $0x130] sm:$0xff] %vm101, 0.0
    %139 = vst [vmem:[#allocation2 + $0x138] sm:$0xff] 0.0
    %140 = vst [vmem:[#allocation2 + $0x140] sm:$0xff] 0.0
    %141 = vst.msk [vmem:[#allocation2 + $0x148] sm:$0xff] %vm101, 0.0
    %142 = vst [vmem:[#allocation2 + $0x150] sm:$0xff] 0.0
    %143 = vst [vmem:[#allocation2 + $0x158] sm:$0xff] 0.0
    %144 = vst.msk [vmem:[#allocation2 + $0x160] sm:$0xff] %vm101, 0.0
    %145 = vst [vmem:[#allocation2 + $0x168] sm:$0xff] 0.0
    %146 = vst [vmem:[#allocation2 + $0x170] sm:$0xff] 0.0
    %147 = vst.msk [vmem:[#allocation2 + $0x178] sm:$0xff] %vm101, 0.0
    %v148 = vld [vmem:[%s0] sm:$0xff]
    %v149 = vld [vmem:[%s0 + $0x8] sm:$0xff]
    %v150 = vld [vmem:[%s0 + $0x10] sm:$0xff]
    %v151 = vld [vmem:[%s0 + $0x18] sm:$0xff]
    %v152 = vld [vmem:[%s0 + $0x20] sm:$0xff]
    %v153 = vld [vmem:[%s0 + $0x28] sm:$0xff]
    %v154 = vld [vmem:[%s0 + $0x30] sm:$0xff]
    %v155 = vld [vmem:[%s0 + $0x38] sm:$0xff]
    %vm164 = vcmask 1043456
    %v165 = vrot.slane %v148, 4
    %v166 = vrot.slane %v149, 4
    %v167 = vsel %vm164, %v165, %v166
    %v168 = vrot.slane %v150, 4
    %v169 = vsel %vm164, %v166, %v168
    %v170 = vrot.slane %v151, 4
    %v171 = vsel %vm164, %v168, %v170
    %v172 = vrot.slane %v152, 4
    %v173 = vsel %vm164, %v170, %v172
    %v174 = vrot.slane %v153, 4
    %v175 = vsel %vm164, %v172, %v174
    %v176 = vrot.slane %v154, 4
    %v177 = vsel %vm164, %v174, %v176
    %v178 = vrot.slane %v155, 4
    %v179 = vsel %vm164, %v176, %v178
    %vm188 = vcmask 261124
    %189 = vst.msk [vmem:[#allocation2] sm:$0xf0] %vm188, %v165
    %190 = vst.msk [vmem:[#allocation2 + $0x18] sm:$0xff] %vm101, %v167
    %191 = vst.msk [vmem:[#allocation2 + $0x30] sm:$0xff] %vm101, %v169
    %192 = vst.msk [vmem:[#allocation2 + $0x48] sm:$0xff] %vm101, %v171
    %193 = vst.msk [vmem:[#allocation2 + $0x60] sm:$0xff] %vm101, %v173
    %194 = vst.msk [vmem:[#allocation2 + $0x78] sm:$0xff] %vm101, %v175
    %195 = vst.msk [vmem:[#allocation2 + $0x90] sm:$0xff] %vm101, %v177
    %196 = vst.msk [vmem:[#allocation2 + $0xa8] sm:$0xff] %vm101, %v179
    %vm197 = vcmask 1042432
    %v198 = vrot.slane %v148, 5
    %v199 = vrot.slane %v149, 5
    %v200 = vsel %vm197, %v198, %v199
    %v201 = vrot.slane %v150, 5
    %v202 = vsel %vm197, %v199, %v201
    %v203 = vrot.slane %v151, 5
    %v204 = vsel %vm197, %v201, %v203
    %v205 = vrot.slane %v152, 5
    %v206 = vsel %vm197, %v203, %v205
    %v207 = vrot.slane %v153, 5
    %v208 = vsel %vm197, %v205, %v207
    %v209 = vrot.slane %v154, 5
    %v210 = vsel %vm197, %v207, %v209
    %v211 = vrot.slane %v155, 5
    %v212 = vsel %vm197, %v209, %v211
    %213 = vrot.lane.b32.xlu0 %v198, 32
    %v214 = vpop.permute.xlu0 %213
    %215 = vrot.lane.b32.xlu0 %v200, 32
    %v216 = vpop.permute.xlu0 %215
    %217 = vrot.lane.b32.xlu0 %v202, 32
    %v218 = vpop.permute.xlu0 %217
    %219 = vrot.lane.b32.xlu0 %v204, 32
    %v220 = vpop.permute.xlu0 %219
    %221 = vrot.lane.b32.xlu0 %v206, 32
    %v222 = vpop.permute.xlu0 %221
    %223 = vrot.lane.b32.xlu0 %v208, 32
    %v224 = vpop.permute.xlu0 %223
    %225 = vrot.lane.b32.xlu0 %v210, 32
    %v226 = vpop.permute.xlu0 %225
    %227 = vrot.lane.b32.xlu0 %v212, 32
    %v228 = vpop.permute.xlu0 %227
    %vm237 = vcmask 523523
    %238 = vst.msk [vmem:[#allocation2] sm:$0xf8] %vm237, %v214
    %vm239 = vcmask 523520
    %240 = vst.msk [vmem:[#allocation2 + $0x18] sm:$0xff] %vm239, %v216
    %241 = vst.msk [vmem:[#allocation2 + $0x30] sm:$0xff] %vm239, %v218
    %242 = vst.msk [vmem:[#allocation2 + $0x48] sm:$0xff] %vm239, %v220
    %243 = vst.msk [vmem:[#allocation2 + $0x60] sm:$0xff] %vm239, %v222
    %244 = vst.msk [vmem:[#allocation2 + $0x78] sm:$0xff] %vm239, %v224
    %245 = vst.msk [vmem:[#allocation2 + $0x90] sm:$0xff] %vm239, %v226
    %246 = vst.msk [vmem:[#allocation2 + $0xa8] sm:$0xff] %vm239, %v228
    %vm247 = vcmask 1041408
    %v248 = vrot.slane %v148, 6
    %v249 = vrot.slane %v149, 6
    %v250 = vsel %vm247, %v248, %v249
    %v251 = vrot.slane %v150, 6
    %v252 = vsel %vm247, %v249, %v251
    %v253 = vrot.slane %v151, 6
    %v254 = vsel %vm247, %v251, %v253
    %v255 = vrot.slane %v152, 6
    %v256 = vsel %vm247, %v253, %v255
    %v257 = vrot.slane %v153, 6
    %v258 = vsel %vm247, %v255, %v257
    %v259 = vrot.slane %v154, 6
    %v260 = vsel %vm247, %v257, %v259
    %v261 = vrot.slane %v155, 6
    %v262 = vsel %vm247, %v259, %v261
    %263 = vrot.lane.b32.xlu0 %v248, 64
    %v264 = vpop.permute.xlu0 %263
    %265 = vrot.lane.b32.xlu0 %v250, 64
    %v266 = vpop.permute.xlu0 %265
    %267 = vrot.lane.b32.xlu0 %v252, 64
    %v268 = vpop.permute.xlu0 %267
    %269 = vrot.lane.b32.xlu0 %v254, 64
    %v270 = vpop.permute.xlu0 %269
    %271 = vrot.lane.b32.xlu0 %v256, 64
    %v272 = vpop.permute.xlu0 %271
    %273 = vrot.lane.b32.xlu0 %v258, 64
    %v274 = vpop.permute.xlu0 %273
    %275 = vrot.lane.b32.xlu0 %v260, 64
    %v276 = vpop.permute.xlu0 %275
    %277 = vrot.lane.b32.xlu0 %v262, 64
    %v278 = vpop.permute.xlu0 %277
    %vm287 = vcmask 785922
    %288 = vst.msk [vmem:[#allocation2] sm:$0xfc] %vm287, %v264
    %vm289 = vcmask 785920
    %290 = vst.msk [vmem:[#allocation2 + $0x18] sm:$0xff] %vm289, %v266
    %291 = vst.msk [vmem:[#allocation2 + $0x30] sm:$0xff] %vm289, %v268
    %292 = vst.msk [vmem:[#allocation2 + $0x48] sm:$0xff] %vm289, %v270
    %293 = vst.msk [vmem:[#allocation2 + $0x60] sm:$0xff] %vm289, %v272
    %294 = vst.msk [vmem:[#allocation2 + $0x78] sm:$0xff] %vm289, %v274
    %295 = vst.msk [vmem:[#allocation2 + $0x90] sm:$0xff] %vm289, %v276
    %296 = vst.msk [vmem:[#allocation2 + $0xa8] sm:$0xff] %vm289, %v278
    %vm297 = vcmask 1040384
    %v298 = vrot.slane %v148, 7
    %v299 = vrot.slane %v149, 7
    %v300 = vsel %vm297, %v298, %v299
    %v301 = vrot.slane %v150, 7
    %v302 = vsel %vm297, %v299, %v301
    %v303 = vrot.slane %v151, 7
    %v304 = vsel %vm297, %v301, %v303
    %v305 = vrot.slane %v152, 7
    %v306 = vsel %vm297, %v303, %v305
    %v307 = vrot.slane %v153, 7
    %v308 = vsel %vm297, %v305, %v307
    %v309 = vrot.slane %v154, 7
    %v310 = vsel %vm297, %v307, %v309
    %v311 = vrot.slane %v155, 7
    %v312 = vsel %vm297, %v309, %v311
    %313 = vrot.lane.b32.xlu0 %v298, 96
    %v314 = vpop.permute.xlu0 %313
    %315 = vrot.lane.b32.xlu0 %v300, 96
    %v316 = vpop.permute.xlu0 %315
    %317 = vrot.lane.b32.xlu0 %v302, 96
    %v318 = vpop.permute.xlu0 %317
    %319 = vrot.lane.b32.xlu0 %v304, 96
    %v320 = vpop.permute.xlu0 %319
    %321 = vrot.lane.b32.xlu0 %v306, 96
    %v322 = vpop.permute.xlu0 %321
    %323 = vrot.lane.b32.xlu0 %v308, 96
    %v324 = vpop.permute.xlu0 %323
    %325 = vrot.lane.b32.xlu0 %v310, 96
    %v326 = vpop.permute.xlu0 %325
    %327 = vrot.lane.b32.xlu0 %v312, 96
    %v328 = vpop.permute.xlu0 %327
    %vm337 = vcmask 1048321
    %338 = vst.msk [vmem:[#allocation2] sm:$0xfe] %vm337, %v314
    %vm339 = vcmask 1048320
    %340 = vst.msk [vmem:[#allocation2 + $0x18] sm:$0xff] %vm339, %v316
    %341 = vst.msk [vmem:[#allocation2 + $0x30] sm:$0xff] %vm339, %v318
    %342 = vst.msk [vmem:[#allocation2 + $0x48] sm:$0xff] %vm339, %v320
    %343 = vst.msk [vmem:[#allocation2 + $0x60] sm:$0xff] %vm339, %v322
    %344 = vst.msk [vmem:[#allocation2 + $0x78] sm:$0xff] %vm339, %v324
    %345 = vst.msk [vmem:[#allocation2 + $0x90] sm:$0xff] %vm339, %v326
    %346 = vst.msk [vmem:[#allocation2 + $0xa8] sm:$0xff] %vm339, %v328
    %347 = vst.msk [vmem:[#allocation2 + $0x8] sm:$0xff] %vm101, %v148
    %348 = vst.msk [vmem:[#allocation2 + $0x20] sm:$0xff] %vm101, %v149
    %349 = vst.msk [vmem:[#allocation2 + $0x38] sm:$0xff] %vm101, %v150
    %350 = vst.msk [vmem:[#allocation2 + $0x50] sm:$0xff] %vm101, %v151
    %351 = vst.msk [vmem:[#allocation2 + $0x68] sm:$0xff] %vm101, %v152
    %352 = vst.msk [vmem:[#allocation2 + $0x80] sm:$0xff] %vm101, %v153
    %353 = vst.msk [vmem:[#allocation2 + $0x98] sm:$0xff] %vm101, %v154
    %354 = vst.msk [vmem:[#allocation2 + $0xb0] sm:$0xff] %vm101, %v155
    %vm355 = vcmask 1046528
    %v356 = vrot.slane %v148, 1
    %v357 = vrot.slane %v149, 1
    %v358 = vsel %vm355, %v356, %v357
    %v359 = vrot.slane %v150, 1
    %v360 = vsel %vm355, %v357, %v359
    %v361 = vrot.slane %v151, 1
    %v362 = vsel %vm355, %v359, %v361
    %v363 = vrot.slane %v152, 1
    %v364 = vsel %vm355, %v361, %v363
    %v365 = vrot.slane %v153, 1
    %v366 = vsel %vm355, %v363, %v365
    %v367 = vrot.slane %v154, 1
    %v368 = vsel %vm355, %v365, %v367
    %v369 = vrot.slane %v155, 1
    %v370 = vsel %vm355, %v367, %v369
    %371 = vrot.lane.b32.xlu0 %v358, 32
    %v372 = vpop.permute.xlu0 %371
    %373 = vrot.lane.b32.xlu0 %v360, 32
    %v374 = vpop.permute.xlu0 %373
    %375 = vrot.lane.b32.xlu0 %v362, 32
    %v376 = vpop.permute.xlu0 %375
    %377 = vrot.lane.b32.xlu0 %v364, 32
    %v378 = vpop.permute.xlu0 %377
    %379 = vrot.lane.b32.xlu0 %v366, 32
    %v380 = vpop.permute.xlu0 %379
    %381 = vrot.lane.b32.xlu0 %v368, 32
    %v382 = vpop.permute.xlu0 %381
    %383 = vrot.lane.b32.xlu0 %v370, 32
    %v384 = vpop.permute.xlu0 %383
    %385 = vrot.lane.b32.xlu0 %v369, 32
    %v386 = vpop.permute.xlu0 %385
    %395 = vst.msk [vmem:[#allocation2 + $0x8] sm:$0xff] %vm239, %v372
    %396 = vst.msk [vmem:[#allocation2 + $0x20] sm:$0xff] %vm239, %v374
    %397 = vst.msk [vmem:[#allocation2 + $0x38] sm:$0xff] %vm239, %v376
    %398 = vst.msk [vmem:[#allocation2 + $0x50] sm:$0xff] %vm239, %v378
    %399 = vst.msk [vmem:[#allocation2 + $0x68] sm:$0xff] %vm239, %v380
    %400 = vst.msk [vmem:[#allocation2 + $0x80] sm:$0xff] %vm239, %v382
    %401 = vst.msk [vmem:[#allocation2 + $0x98] sm:$0xff] %vm239, %v384
    %vm402 = vcmask 522496
    %403 = vst.msk [vmem:[#allocation2 + $0xb0] sm:$0x7f] %vm402, %v386
    %vm404 = vcmask 1045504
    %v405 = vrot.slane %v148, 2
    %v406 = vrot.slane %v149, 2
    %v407 = vsel %vm404, %v405, %v406
    %v408 = vrot.slane %v150, 2
    %v409 = vsel %vm404, %v406, %v408
    %v410 = vrot.slane %v151, 2
    %v411 = vsel %vm404, %v408, %v410
    %v412 = vrot.slane %v152, 2
    %v413 = vsel %vm404, %v410, %v412
    %v414 = vrot.slane %v153, 2
    %v415 = vsel %vm404, %v412, %v414
    %v416 = vrot.slane %v154, 2
    %v417 = vsel %vm404, %v414, %v416
    %v418 = vrot.slane %v155, 2
    %v419 = vsel %vm404, %v416, %v418
    %420 = vrot.lane.b32.xlu0 %v407, 64
    %v421 = vpop.permute.xlu0 %420
    %422 = vrot.lane.b32.xlu0 %v409, 64
    %v423 = vpop.permute.xlu0 %422
    %424 = vrot.lane.b32.xlu0 %v411, 64
    %v425 = vpop.permute.xlu0 %424
    %426 = vrot.lane.b32.xlu0 %v413, 64
    %v427 = vpop.permute.xlu0 %426
    %428 = vrot.lane.b32.xlu0 %v415, 64
    %v429 = vpop.permute.xlu0 %428
    %430 = vrot.lane.b32.xlu0 %v417, 64
    %v431 = vpop.permute.xlu0 %430
    %432 = vrot.lane.b32.xlu0 %v419, 64
    %v433 = vpop.permute.xlu0 %432
    %434 = vrot.lane.b32.xlu0 %v418, 64
    %v435 = vpop.permute.xlu0 %434
    %444 = vst.msk [vmem:[#allocation2 + $0x8] sm:$0xff] %vm289, %v421
    %445 = vst.msk [vmem:[#allocation2 + $0x20] sm:$0xff] %vm289, %v423
    %446 = vst.msk [vmem:[#allocation2 + $0x38] sm:$0xff] %vm289, %v425
    %447 = vst.msk [vmem:[#allocation2 + $0x50] sm:$0xff] %vm289, %v427
    %448 = vst.msk [vmem:[#allocation2 + $0x68] sm:$0xff] %vm289, %v429
    %449 = vst.msk [vmem:[#allocation2 + $0x80] sm:$0xff] %vm289, %v431
    %450 = vst.msk [vmem:[#allocation2 + $0x98] sm:$0xff] %vm289, %v433
    %vm451 = vcmask 783872
    %452 = vst.msk [vmem:[#allocation2 + $0xb0] sm:$0x3f] %vm451, %v435
    %vm453 = vcmask 1044480
    %v454 = vrot.slane %v148, 3
    %v455 = vrot.slane %v149, 3
    %v456 = vsel %vm453, %v454, %v455
    %v457 = vrot.slane %v150, 3
    %v458 = vsel %vm453, %v455, %v457
    %v459 = vrot.slane %v151, 3
    %v460 = vsel %vm453, %v457, %v459
    %v461 = vrot.slane %v152, 3
    %v462 = vsel %vm453, %v459, %v461
    %v463 = vrot.slane %v153, 3
    %v464 = vsel %vm453, %v461, %v463
    %v465 = vrot.slane %v154, 3
    %v466 = vsel %vm453, %v463, %v465
    %v467 = vrot.slane %v155, 3
    %v468 = vsel %vm453, %v465, %v467
    %469 = vrot.lane.b32.xlu0 %v456, 96
    %v470 = vpop.permute.xlu0 %469
    %471 = vrot.lane.b32.xlu0 %v458, 96
    %v472 = vpop.permute.xlu0 %471
    %473 = vrot.lane.b32.xlu0 %v460, 96
    %v474 = vpop.permute.xlu0 %473
    %475 = vrot.lane.b32.xlu0 %v462, 96
    %v476 = vpop.permute.xlu0 %475
    %477 = vrot.lane.b32.xlu0 %v464, 96
    %v478 = vpop.permute.xlu0 %477
    %479 = vrot.lane.b32.xlu0 %v466, 96
    %v480 = vpop.permute.xlu0 %479
    %481 = vrot.lane.b32.xlu0 %v468, 96
    %v482 = vpop.permute.xlu0 %481
    %483 = vrot.lane.b32.xlu0 %v467, 96
    %v484 = vpop.permute.xlu0 %483
    %493 = vst.msk [vmem:[#allocation2 + $0x8] sm:$0xff] %vm339, %v470
    %494 = vst.msk [vmem:[#allocation2 + $0x20] sm:$0xff] %vm339, %v472
    %495 = vst.msk [vmem:[#allocation2 + $0x38] sm:$0xff] %vm339, %v474
    %496 = vst.msk [vmem:[#allocation2 + $0x50] sm:$0xff] %vm339, %v476
    %497 = vst.msk [vmem:[#allocation2 + $0x68] sm:$0xff] %vm339, %v478
    %498 = vst.msk [vmem:[#allocation2 + $0x80] sm:$0xff] %vm339, %v480
    %499 = vst.msk [vmem:[#allocation2 + $0x98] sm:$0xff] %vm339, %v482
    %vm500 = vcmask 1045248
    %501 = vst.msk [vmem:[#allocation2 + $0xb0] sm:$0x1f] %vm500, %v484
    %503 = vst.msk [vmem:[#allocation2 + $0x10] sm:$0xff] %vm101, %v167
    %504 = vst.msk [vmem:[#allocation2 + $0x28] sm:$0xff] %vm101, %v169
    %505 = vst.msk [vmem:[#allocation2 + $0x40] sm:$0xff] %vm101, %v171
    %506 = vst.msk [vmem:[#allocation2 + $0x58] sm:$0xff] %vm101, %v173
    %507 = vst.msk [vmem:[#allocation2 + $0x70] sm:$0xff] %vm101, %v175
    %508 = vst.msk [vmem:[#allocation2 + $0x88] sm:$0xff] %vm101, %v177
    %509 = vst.msk [vmem:[#allocation2 + $0xa0] sm:$0xff] %vm101, %v179
    %vm510 = vcmask 257024
    %511 = vst.msk [vmem:[#allocation2 + $0xb8] sm:$0xf] %vm510, %v178
    %s512 = scalar_lea.vmem %s0, 64
    %v513 = vld [vmem:[%s512] sm:$0xff]
    %v514 = vld [vmem:[%s512 + $0x8] sm:$0xff]
    %v515 = vld [vmem:[%s512 + $0x10] sm:$0xff]
    %v516 = vld [vmem:[%s512 + $0x18] sm:$0xff]
    %v517 = vld [vmem:[%s512 + $0x20] sm:$0xff]
    %v518 = vld [vmem:[%s512 + $0x28] sm:$0xff]
    %v519 = vld [vmem:[%s512 + $0x30] sm:$0xff]
    %v520 = vld [vmem:[%s512 + $0x38] sm:$0xff]
    %v529 = vrot.slane %v513, 4
    %v530 = vrot.slane %v514, 4
    %v531 = vsel %vm164, %v529, %v530
    %v532 = vrot.slane %v515, 4
    %v533 = vsel %vm164, %v530, %v532
    %v534 = vrot.slane %v516, 4
    %v535 = vsel %vm164, %v532, %v534
    %v536 = vrot.slane %v517, 4
    %v537 = vsel %vm164, %v534, %v536
    %v538 = vrot.slane %v518, 4
    %v539 = vsel %vm164, %v536, %v538
    %v540 = vrot.slane %v519, 4
    %v541 = vsel %vm164, %v538, %v540
    %v542 = vrot.slane %v520, 4
    %v543 = vsel %vm164, %v540, %v542
    %552 = vst.msk [vmem:[#allocation2 + $0xc0] sm:$0xf0] %vm188, %v529
    %553 = vst.msk [vmem:[#allocation2 + $0xd8] sm:$0xff] %vm101, %v531
    %554 = vst.msk [vmem:[#allocation2 + $0xf0] sm:$0xff] %vm101, %v533
    %555 = vst.msk [vmem:[#allocation2 + $0x108] sm:$0xff] %vm101, %v535
    %556 = vst.msk [vmem:[#allocation2 + $0x120] sm:$0xff] %vm101, %v537
    %557 = vst.msk [vmem:[#allocation2 + $0x138] sm:$0xff] %vm101, %v539
    %558 = vst.msk [vmem:[#allocation2 + $0x150] sm:$0xff] %vm101, %v541
    %559 = vst.msk [vmem:[#allocation2 + $0x168] sm:$0xff] %vm101, %v543
    %v560 = vrot.slane %v513, 5
    %v561 = vrot.slane %v514, 5
    %v562 = vsel %vm197, %v560, %v561
    %v563 = vrot.slane %v515, 5
    %v564 = vsel %vm197, %v561, %v563
    %v565 = vrot.slane %v516, 5
    %v566 = vsel %vm197, %v563, %v565
    %v567 = vrot.slane %v517, 5
    %v568 = vsel %vm197, %v565, %v567
    %v569 = vrot.slane %v518, 5
    %v570 = vsel %vm197, %v567, %v569
    %v571 = vrot.slane %v519, 5
    %v572 = vsel %vm197, %v569, %v571
    %v573 = vrot.slane %v520, 5
    %v574 = vsel %vm197, %v571, %v573
    %575 = vrot.lane.b32.xlu0 %v560, 32
    %v576 = vpop.permute.xlu0 %575
    %577 = vrot.lane.b32.xlu0 %v562, 32
    %v578 = vpop.permute.xlu0 %577
    %579 = vrot.lane.b32.xlu0 %v564, 32
    %v580 = vpop.permute.xlu0 %579
    %581 = vrot.lane.b32.xlu0 %v566, 32
    %v582 = vpop.permute.xlu0 %581
    %583 = vrot.lane.b32.xlu0 %v568, 32
    %v584 = vpop.permute.xlu0 %583
    %585 = vrot.lane.b32.xlu0 %v570, 32
    %v586 = vpop.permute.xlu0 %585
    %587 = vrot.lane.b32.xlu0 %v572, 32
    %v588 = vpop.permute.xlu0 %587
    %589 = vrot.lane.b32.xlu0 %v574, 32
    %v590 = vpop.permute.xlu0 %589
    %599 = vst.msk [vmem:[#allocation2 + $0xc0] sm:$0xf8] %vm237, %v576
    %600 = vst.msk [vmem:[#allocation2 + $0xd8] sm:$0xff] %vm239, %v578
    %601 = vst.msk [vmem:[#allocation2 + $0xf0] sm:$0xff] %vm239, %v580
    %602 = vst.msk [vmem:[#allocation2 + $0x108] sm:$0xff] %vm239, %v582
    %603 = vst.msk [vmem:[#allocation2 + $0x120] sm:$0xff] %vm239, %v584
    %604 = vst.msk [vmem:[#allocation2 + $0x138] sm:$0xff] %vm239, %v586
    %605 = vst.msk [vmem:[#allocation2 + $0x150] sm:$0xff] %vm239, %v588
    %606 = vst.msk [vmem:[#allocation2 + $0x168] sm:$0xff] %vm239, %v590
    %v607 = vrot.slane %v513, 6
    %v608 = vrot.slane %v514, 6
    %v609 = vsel %vm247, %v607, %v608
    %v610 = vrot.slane %v515, 6
    %v611 = vsel %vm247, %v608, %v610
    %v612 = vrot.slane %v516, 6
    %v613 = vsel %vm247, %v610, %v612
    %v614 = vrot.slane %v517, 6
    %v615 = vsel %vm247, %v612, %v614
    %v616 = vrot.slane %v518, 6
    %v617 = vsel %vm247, %v614, %v616
    %v618 = vrot.slane %v519, 6
    %v619 = vsel %vm247, %v616, %v618
    %v620 = vrot.slane %v520, 6
    %v621 = vsel %vm247, %v618, %v620
    %622 = vrot.lane.b32.xlu0 %v607, 64
    %v623 = vpop.permute.xlu0 %622
    %624 = vrot.lane.b32.xlu0 %v609, 64
    %v625 = vpop.permute.xlu0 %624
    %626 = vrot.lane.b32.xlu0 %v611, 64
    %v627 = vpop.permute.xlu0 %626
    %628 = vrot.lane.b32.xlu0 %v613, 64
    %v629 = vpop.permute.xlu0 %628
    %630 = vrot.lane.b32.xlu0 %v615, 64
    %v631 = vpop.permute.xlu0 %630
    %632 = vrot.lane.b32.xlu0 %v617, 64
    %v633 = vpop.permute.xlu0 %632
    %634 = vrot.lane.b32.xlu0 %v619, 64
    %v635 = vpop.permute.xlu0 %634
    %636 = vrot.lane.b32.xlu0 %v621, 64
    %v637 = vpop.permute.xlu0 %636
    %646 = vst.msk [vmem:[#allocation2 + $0xc0] sm:$0xfc] %vm287, %v623
    %647 = vst.msk [vmem:[#allocation2 + $0xd8] sm:$0xff] %vm289, %v625
    %648 = vst.msk [vmem:[#allocation2 + $0xf0] sm:$0xff] %vm289, %v627
    %649 = vst.msk [vmem:[#allocation2 + $0x108] sm:$0xff] %vm289, %v629
    %650 = vst.msk [vmem:[#allocation2 + $0x120] sm:$0xff] %vm289, %v631
    %651 = vst.msk [vmem:[#allocation2 + $0x138] sm:$0xff] %vm289, %v633
    %652 = vst.msk [vmem:[#allocation2 + $0x150] sm:$0xff] %vm289, %v635
    %653 = vst.msk [vmem:[#allocation2 + $0x168] sm:$0xff] %vm289, %v637
    %v654 = vrot.slane %v513, 7
    %v655 = vrot.slane %v514, 7
    %v656 = vsel %vm297, %v654, %v655
    %v657 = vrot.slane %v515, 7
    %v658 = vsel %vm297, %v655, %v657
    %v659 = vrot.slane %v516, 7
    %v660 = vsel %vm297, %v657, %v659
    %v661 = vrot.slane %v517, 7
    %v662 = vsel %vm297, %v659, %v661
    %v663 = vrot.slane %v518, 7
    %v664 = vsel %vm297, %v661, %v663
    %v665 = vrot.slane %v519, 7
    %v666 = vsel %vm297, %v663, %v665
    %v667 = vrot.slane %v520, 7
    %v668 = vsel %vm297, %v665, %v667
    %669 = vrot.lane.b32.xlu0 %v654, 96
    %v670 = vpop.permute.xlu0 %669
    %671 = vrot.lane.b32.xlu0 %v656, 96
    %v672 = vpop.permute.xlu0 %671
    %673 = vrot.lane.b32.xlu0 %v658, 96
    %v674 = vpop.permute.xlu0 %673
    %675 = vrot.lane.b32.xlu0 %v660, 96
    %v676 = vpop.permute.xlu0 %675
    %677 = vrot.lane.b32.xlu0 %v662, 96
    %v678 = vpop.permute.xlu0 %677
    %679 = vrot.lane.b32.xlu0 %v664, 96
    %v680 = vpop.permute.xlu0 %679
    %681 = vrot.lane.b32.xlu0 %v666, 96
    %v682 = vpop.permute.xlu0 %681
    %683 = vrot.lane.b32.xlu0 %v668, 96
    %v684 = vpop.permute.xlu0 %683
    %693 = vst.msk [vmem:[#allocation2 + $0xc0] sm:$0xfe] %vm337, %v670
    %694 = vst.msk [vmem:[#allocation2 + $0xd8] sm:$0xff] %vm339, %v672
    %695 = vst.msk [vmem:[#allocation2 + $0xf0] sm:$0xff] %vm339, %v674
    %696 = vst.msk [vmem:[#allocation2 + $0x108] sm:$0xff] %vm339, %v676
    %697 = vst.msk [vmem:[#allocation2 + $0x120] sm:$0xff] %vm339, %v678
    %698 = vst.msk [vmem:[#allocation2 + $0x138] sm:$0xff] %vm339, %v680
    %699 = vst.msk [vmem:[#allocation2 + $0x150] sm:$0xff] %vm339, %v682
    %700 = vst.msk [vmem:[#allocation2 + $0x168] sm:$0xff] %vm339, %v684
    %701 = vst.msk [vmem:[#allocation2 + $0xc8] sm:$0xff] %vm101, %v513
    %702 = vst.msk [vmem:[#allocation2 + $0xe0] sm:$0xff] %vm101, %v514
    %703 = vst.msk [vmem:[#allocation2 + $0xf8] sm:$0xff] %vm101, %v515
    %704 = vst.msk [vmem:[#allocation2 + $0x110] sm:$0xff] %vm101, %v516
    %705 = vst.msk [vmem:[#allocation2 + $0x128] sm:$0xff] %vm101, %v517
    %706 = vst.msk [vmem:[#allocation2 + $0x140] sm:$0xff] %vm101, %v518
    %707 = vst.msk [vmem:[#allocation2 + $0x158] sm:$0xff] %vm101, %v519
    %708 = vst.msk [vmem:[#allocation2 + $0x170] sm:$0xff] %vm101, %v520
    %v709 = vrot.slane %v513, 1
    %v710 = vrot.slane %v514, 1
    %v711 = vsel %vm355, %v709, %v710
    %v712 = vrot.slane %v515, 1
    %v713 = vsel %vm355, %v710, %v712
    %v714 = vrot.slane %v516, 1
    %v715 = vsel %vm355, %v712, %v714
    %v716 = vrot.slane %v517, 1
    %v717 = vsel %vm355, %v714, %v716
    %v718 = vrot.slane %v518, 1
    %v719 = vsel %vm355, %v716, %v718
    %v720 = vrot.slane %v519, 1
    %v721 = vsel %vm355, %v718, %v720
    %v722 = vrot.slane %v520, 1
    %v723 = vsel %vm355, %v720, %v722
    %724 = vrot.lane.b32.xlu0 %v711, 32
    %v725 = vpop.permute.xlu0 %724
    %726 = vrot.lane.b32.xlu0 %v713, 32
    %v727 = vpop.permute.xlu0 %726
    %728 = vrot.lane.b32.xlu0 %v715, 32
    %v729 = vpop.permute.xlu0 %728
    %730 = vrot.lane.b32.xlu0 %v717, 32
    %v731 = vpop.permute.xlu0 %730
    %732 = vrot.lane.b32.xlu0 %v719, 32
    %v733 = vpop.permute.xlu0 %732
    %734 = vrot.lane.b32.xlu0 %v721, 32
    %v735 = vpop.permute.xlu0 %734
    %736 = vrot.lane.b32.xlu0 %v723, 32
    %v737 = vpop.permute.xlu0 %736
    %738 = vrot.lane.b32.xlu0 %v722, 32
    %v739 = vpop.permute.xlu0 %738
    %748 = vst.msk [vmem:[#allocation2 + $0xc8] sm:$0xff] %vm239, %v725
    %749 = vst.msk [vmem:[#allocation2 + $0xe0] sm:$0xff] %vm239, %v727
    %750 = vst.msk [vmem:[#allocation2 + $0xf8] sm:$0xff] %vm239, %v729
    %751 = vst.msk [vmem:[#allocation2 + $0x110] sm:$0xff] %vm239, %v731
    %752 = vst.msk [vmem:[#allocation2 + $0x128] sm:$0xff] %vm239, %v733
    %753 = vst.msk [vmem:[#allocation2 + $0x140] sm:$0xff] %vm239, %v735
    %754 = vst.msk [vmem:[#allocation2 + $0x158] sm:$0xff] %vm239, %v737
    %755 = vst.msk [vmem:[#allocation2 + $0x170] sm:$0x7f] %vm402, %v739
    %v756 = vrot.slane %v513, 2
    %v757 = vrot.slane %v514, 2
    %v758 = vsel %vm404, %v756, %v757
    %v759 = vrot.slane %v515, 2
    %v760 = vsel %vm404, %v757, %v759
    %v761 = vrot.slane %v516, 2
    %v762 = vsel %vm404, %v759, %v761
    %v763 = vrot.slane %v517, 2
    %v764 = vsel %vm404, %v761, %v763
    %v765 = vrot.slane %v518, 2
    %v766 = vsel %vm404, %v763, %v765
    %v767 = vrot.slane %v519, 2
    %v768 = vsel %vm404, %v765, %v767
    %v769 = vrot.slane %v520, 2
    %v770 = vsel %vm404, %v767, %v769
    %771 = vrot.lane.b32.xlu0 %v758, 64
    %v772 = vpop.permute.xlu0 %771
    %773 = vrot.lane.b32.xlu0 %v760, 64
    %v774 = vpop.permute.xlu0 %773
    %775 = vrot.lane.b32.xlu0 %v762, 64
    %v776 = vpop.permute.xlu0 %775
    %777 = vrot.lane.b32.xlu0 %v764, 64
    %v778 = vpop.permute.xlu0 %777
    %779 = vrot.lane.b32.xlu0 %v766, 64
    %v780 = vpop.permute.xlu0 %779
    %781 = vrot.lane.b32.xlu0 %v768, 64
    %v782 = vpop.permute.xlu0 %781
    %783 = vrot.lane.b32.xlu0 %v770, 64
    %v784 = vpop.permute.xlu0 %783
    %785 = vrot.lane.b32.xlu0 %v769, 64
    %v786 = vpop.permute.xlu0 %785
    %795 = vst.msk [vmem:[#allocation2 + $0xc8] sm:$0xff] %vm289, %v772
    %796 = vst.msk [vmem:[#allocation2 + $0xe0] sm:$0xff] %vm289, %v774
    %797 = vst.msk [vmem:[#allocation2 + $0xf8] sm:$0xff] %vm289, %v776
    %798 = vst.msk [vmem:[#allocation2 + $0x110] sm:$0xff] %vm289, %v778
    %799 = vst.msk [vmem:[#allocation2 + $0x128] sm:$0xff] %vm289, %v780
    %800 = vst.msk [vmem:[#allocation2 + $0x140] sm:$0xff] %vm289, %v782
    %801 = vst.msk [vmem:[#allocation2 + $0x158] sm:$0xff] %vm289, %v784
    %802 = vst.msk [vmem:[#allocation2 + $0x170] sm:$0x3f] %vm451, %v786
    %v803 = vrot.slane %v513, 3
    %v804 = vrot.slane %v514, 3
    %v805 = vsel %vm453, %v803, %v804
    %v806 = vrot.slane %v515, 3
    %v807 = vsel %vm453, %v804, %v806
    %v808 = vrot.slane %v516, 3
    %v809 = vsel %vm453, %v806, %v808
    %v810 = vrot.slane %v517, 3
    %v811 = vsel %vm453, %v808, %v810
    %v812 = vrot.slane %v518, 3
    %v813 = vsel %vm453, %v810, %v812
    %v814 = vrot.slane %v519, 3
    %v815 = vsel %vm453, %v812, %v814
    %v816 = vrot.slane %v520, 3
    %v817 = vsel %vm453, %v814, %v816
    %818 = vrot.lane.b32.xlu0 %v805, 96
    %v819 = vpop.permute.xlu0 %818
    %820 = vrot.lane.b32.xlu0 %v807, 96
    %v821 = vpop.permute.xlu0 %820
    %822 = vrot.lane.b32.xlu0 %v809, 96
    %v823 = vpop.permute.xlu0 %822
    %824 = vrot.lane.b32.xlu0 %v811, 96
    %v825 = vpop.permute.xlu0 %824
    %826 = vrot.lane.b32.xlu0 %v813, 96
    %v827 = vpop.permute.xlu0 %826
    %828 = vrot.lane.b32.xlu0 %v815, 96
    %v829 = vpop.permute.xlu0 %828
    %830 = vrot.lane.b32.xlu0 %v817, 96
    %v831 = vpop.permute.xlu0 %830
    %832 = vrot.lane.b32.xlu0 %v816, 96
    %v833 = vpop.permute.xlu0 %832
    %842 = vst.msk [vmem:[#allocation2 + $0xc8] sm:$0xff] %vm339, %v819
    %843 = vst.msk [vmem:[#allocation2 + $0xe0] sm:$0xff] %vm339, %v821
    %844 = vst.msk [vmem:[#allocation2 + $0xf8] sm:$0xff] %vm339, %v823
    %845 = vst.msk [vmem:[#allocation2 + $0x110] sm:$0xff] %vm339, %v825
    %846 = vst.msk [vmem:[#allocation2 + $0x128] sm:$0xff] %vm339, %v827
    %847 = vst.msk [vmem:[#allocation2 + $0x140] sm:$0xff] %vm339, %v829
    %848 = vst.msk [vmem:[#allocation2 + $0x158] sm:$0xff] %vm339, %v831
    %849 = vst.msk [vmem:[#allocation2 + $0x170] sm:$0x1f] %vm500, %v833
    %851 = vst.msk [vmem:[#allocation2 + $0xd0] sm:$0xff] %vm101, %v531
    %852 = vst.msk [vmem:[#allocation2 + $0xe8] sm:$0xff] %vm101, %v533
    %853 = vst.msk [vmem:[#allocation2 + $0x100] sm:$0xff] %vm101, %v535
    %854 = vst.msk [vmem:[#allocation2 + $0x118] sm:$0xff] %vm101, %v537
    %855 = vst.msk [vmem:[#allocation2 + $0x130] sm:$0xff] %vm101, %v539
    %856 = vst.msk [vmem:[#allocation2 + $0x148] sm:$0xff] %vm101, %v541
    %857 = vst.msk [vmem:[#allocation2 + $0x160] sm:$0xff] %vm101, %v543
    %858 = vst.msk [vmem:[#allocation2 + $0x178] sm:$0xf] %vm510, %v542
    %v859 = vld [vmem:[#allocation4] sm:$0xff]
    %v860 = vld [vmem:[#allocation4 + $0x8] sm:$0xf]
    %v861 = vld [vmem:[#allocation4 + $0xc] sm:$0xff]
    %v862 = vld [vmem:[#allocation4 + $0x14] sm:$0xf]
    %v863 = vld [vmem:[#allocation4 + $0x18] sm:$0xff]
    %v864 = vld [vmem:[#allocation4 + $0x20] sm:$0xf]
    %v865 = vld [vmem:[#allocation4 + $0x24] sm:$0xff]
    %v866 = vld [vmem:[#allocation4 + $0x2c] sm:$0xf]
    %v867 = vld [vmem:[#allocation4 + $0x30] sm:$0xff]
    %v868 = vld [vmem:[#allocation4 + $0x38] sm:$0xf]
    %v869 = vld [vmem:[#allocation4 + $0x3c] sm:$0xff]
    %v870 = vld [vmem:[#allocation4 + $0x44] sm:$0xf]
    %v871 = vld [vmem:[#allocation4 + $0x48] sm:$0xff]
    %v872 = vld [vmem:[#allocation4 + $0x50] sm:$0xf]
    %v873 = vld [vmem:[#allocation4 + $0x54] sm:$0xff]
    %v874 = vld [vmem:[#allocation4 + $0x5c] sm:$0xf]
    %v875 = vld [vmem:[#allocation7] sm:$0xff]
    %v876 = vld [vmem:[#allocation7 + $0x8] sm:$0xff]
    %v877 = vld [vmem:[#allocation7 + $0x10] sm:$0xff]
    %v878 = vld [vmem:[#allocation7 + $0x18] sm:$0xff]
    %v879 = vld [vmem:[#allocation7 + $0x20] sm:$0xff]
    %v880 = vld [vmem:[#allocation7 + $0x28] sm:$0xff]
    %v881 = vld [vmem:[#allocation7 + $0x30] sm:$0xff]
    %v882 = vld [vmem:[#allocation7 + $0x38] sm:$0xff]
    %v883 = vld [vmem:[#allocation2] sm:$0xff]
    %v884 = vld [vmem:[#allocation2 + $0x8] sm:$0xff]
    %v885 = vld [vmem:[#allocation2 + $0x10] sm:$0xff]
    %v886 = vld [vmem:[#allocation2 + $0x18] sm:$0xff]
    %v887 = vld [vmem:[#allocation2 + $0x20] sm:$0xff]
    %v888 = vld [vmem:[#allocation2 + $0x28] sm:$0xff]
    %v889 = vld [vmem:[#allocation2 + $0x30] sm:$0xff]
    %v890 = vld [vmem:[#allocation2 + $0x38] sm:$0xff]
    %v891 = vld [vmem:[#allocation2 + $0x40] sm:$0xff]
    %v892 = vld [vmem:[#allocation2 + $0x48] sm:$0xff]
    %v893 = vld [vmem:[#allocation2 + $0x50] sm:$0xff]
    %v894 = vld [vmem:[#allocation2 + $0x58] sm:$0xff]
    %v895 = vld [vmem:[#allocation2 + $0x60] sm:$0xff]
    %v896 = vld [vmem:[#allocation2 + $0x68] sm:$0xff]
    %v897 = vld [vmem:[#allocation2 + $0x70] sm:$0xff]
    %v898 = vld [vmem:[#allocation2 + $0x78] sm:$0xff]
    %v899 = vld [vmem:[#allocation2 + $0x80] sm:$0xff]
    %v900 = vld [vmem:[#allocation2 + $0x88] sm:$0xff]
    %v901 = vld [vmem:[#allocation2 + $0x90] sm:$0xff]
    %v902 = vld [vmem:[#allocation2 + $0x98] sm:$0xff]
    %v903 = vld [vmem:[#allocation2 + $0xa0] sm:$0xff]
    %v904 = vld [vmem:[#allocation2 + $0xa8] sm:$0xff]
    %v905 = vld [vmem:[#allocation2 + $0xb0] sm:$0xff]
    %v906 = vld [vmem:[#allocation2 + $0xb8] sm:$0xff]
    %v907 = vpack.c.bf16 %v886, %v883
    %v908 = vpack.c.bf16 %v887, %v884
    %v909 = vpack.c.bf16 %v888, %v885
    %v910 = vpack.c.bf16 %v892, %v889
    %v911 = vpack.c.bf16 %v893, %v890
    %v912 = vpack.c.bf16 %v894, %v891
    %v913 = vpack.c.bf16 %v898, %v895
    %v914 = vpack.c.bf16 %v899, %v896
    %v915 = vpack.c.bf16 %v900, %v897
    %v916 = vpack.c.bf16 %v904, %v901
    %v917 = vpack.c.bf16 %v905, %v902
    %v918 = vpack.c.bf16 %v906, %v903
    %920 = vset.pattern.permute.xlu0 0
    %921 = vperm.xlu0 %920, %v875
    %v922 = vpop.permute.xlu0 %921
    %925 = vset.pattern.permute.xlu0 0
    %926 = vperm.xlu0 %925, %v876
    %v927 = vpop.permute.xlu0 %926
    %930 = vset.pattern.permute.xlu0 0
    %931 = vperm.xlu0 %930, %v877
    %v932 = vpop.permute.xlu0 %931
    %935 = vset.pattern.permute.xlu0 0
    %936 = vperm.xlu0 %935, %v878
    %v937 = vpop.permute.xlu0 %936
    %940 = vset.pattern.permute.xlu0 0
    %941 = vperm.xlu0 %940, %v879
    %v942 = vpop.permute.xlu0 %941
    %945 = vset.pattern.permute.xlu0 0
    %946 = vperm.xlu0 %945, %v880
    %v947 = vpop.permute.xlu0 %946
    %950 = vset.pattern.permute.xlu0 0
    %951 = vperm.xlu0 %950, %v881
    %v952 = vpop.permute.xlu0 %951
    %955 = vset.pattern.permute.xlu0 0
    %956 = vperm.xlu0 %955, %v882
    %v957 = vpop.permute.xlu0 %956
    %v975 = vunpack.c.l.b16 %v859
    %v976 = vunpack.c.h.b16 %v859
    %v977 = vunpack.c.l.b16 %v860
    %v978 = vunpack.c.l.b16 %v861
    %v979 = vunpack.c.h.b16 %v861
    %v980 = vunpack.c.l.b16 %v862
    %v981 = vunpack.c.l.b16 %v863
    %v982 = vunpack.c.h.b16 %v863
    %v983 = vunpack.c.l.b16 %v864
    %v984 = vunpack.c.l.b16 %v865
    %v985 = vunpack.c.h.b16 %v865
    %v986 = vunpack.c.l.b16 %v866
    %v987 = vunpack.c.l.b16 %v867
    %v988 = vunpack.c.h.b16 %v867
    %v989 = vunpack.c.l.b16 %v868
    %v990 = vunpack.c.l.b16 %v869
    %v991 = vunpack.c.h.b16 %v869
    %v992 = vunpack.c.l.b16 %v870
    %v993 = vunpack.c.l.b16 %v871
    %v994 = vunpack.c.h.b16 %v871
    %v995 = vunpack.c.l.b16 %v872
    %v996 = vunpack.c.l.b16 %v873
    %v997 = vunpack.c.h.b16 %v873
    %v998 = vunpack.c.l.b16 %v874
    %v999 = vpack.c.b16 %v978, %v975
    %v1000 = vpack.c.b16 %v979, %v976
    %v1001 = vpack.c.b16 %v980, %v977
    %v1002 = vpack.c.b16 %v984, %v981
    %v1003 = vpack.c.b16 %v985, %v982
    %v1004 = vpack.c.b16 %v986, %v983
    %v1005 = vpack.c.b16 %v990, %v987
    %v1006 = vpack.c.b16 %v991, %v988
    %v1007 = vpack.c.b16 %v992, %v989
    %v1008 = vpack.c.b16 %v996, %v993
    %v1009 = vpack.c.b16 %v997, %v994
    %v1010 = vpack.c.b16 %v998, %v995
    %v1020 = vsel %vm101, %v1001, 0
    %v1023 = vsel %vm101, %v1004, 0
    %v1026 = vsel %vm101, %v1007, 0
    %v1029 = vsel %vm101, %v1010, 0
    %v1032 = vsel %vm101, %v909, 0
    %v1035 = vsel %vm101, %v912, 0
    %v1038 = vsel %vm101, %v915, 0
    %v1041 = vsel %vm101, %v918, 0
    %1043 = vmatprep.subr.bf16.mxu0 0
    %1044 = vmatpush1.bf16.xpose.msra.mxu0 0
    %1045 = vmatprep.subr.bf16.mxu0 0
    %1046 = vmatpush1.bf16.xpose.msra.mxu0 0
    %1047 = vmatprep.subr.bf16.mxu0 0
    %1048 = vmatpush1.bf16.xpose.msra.mxu0 0
    %1049 = vmatprep.subr.bf16.mxu0 0
    %1050 = vmatpush1.bf16.xpose.msra.mxu0 0
    %1051 = vmatprep.subr.bf16.mxu0 %v917
    %1052 = vmatpush1.bf16.xpose.msra.mxu0 %v916
    %1053 = vmatprep.subr.bf16.mxu0 %v914
    %1054 = vmatpush1.bf16.xpose.msra.mxu0 %v913
    %1055 = vmatprep.subr.bf16.mxu0 %v911
    %1056 = vmatpush1.bf16.xpose.msra.mxu0 %v910
    %1057 = vmatprep.subr.bf16.mxu0 %v908
    %1058 = vmatpush1.bf16.xpose.msra.mxu0 %v907
    %1059 = vmatprep.subr.bf16.mxu0 0
    %1060 = vmatpush2.bf16.xpose.msra.mxu0 0
    %1061 = vmatprep.subr.bf16.mxu0 0
    %1062 = vmatpush2.bf16.xpose.msra.mxu0 0
    %1063 = vmatprep.subr.bf16.mxu0 0
    %1064 = vmatpush2.bf16.xpose.msra.mxu0 0
    %1065 = vmatprep.subr.bf16.mxu0 0
    %1066 = vmatpush2.bf16.xpose.msra.mxu0 0
    %1067 = vmatprep.subr.bf16.mxu0 0
    %1068 = vmatpush2.bf16.xpose.msra.mxu0 0
    %1069 = vmatprep.subr.bf16.mxu0 0
    %1070 = vmatpush2.bf16.xpose.msra.mxu0 0
    %1071 = vmatprep.subr.bf16.mxu0 0
    %1072 = vmatpush2.bf16.xpose.msra.mxu0 0
    %1073 = vmatprep.subr.bf16.mxu0 0
    %1074 = vmatpush2.bf16.xpose.msra.mxu0 0
    %1075 = vmatprep.mubr.bf16.mxu0 %v1000
    %1076 = vmatmul.mubr.bf16.gmra.mxu0 %v999
    %v1077 = vpop.f32.mrf.mxu0
    %v1078 = vadd.f32 %v922, %v1077
    %v1079 = vpop.f32.mrf.mxu0
    %v1080 = vpop.f32.mrf.mxu0
    %v1081 = vadd.f32 %v927, %v1080
    %v1082 = vpop.f32.mrf.mxu0
    %1083 = vmatprep.mubr.bf16.mxu0 %v1003
    %1084 = vmatmul.mubr.bf16.gmra.mxu0 %v1002
    %v1085 = vpop.f32.mrf.mxu0
    %v1086 = vadd.f32 %v932, %v1085
    %v1087 = vpop.f32.mrf.mxu0
    %v1088 = vpop.f32.mrf.mxu0
    %v1089 = vadd.f32 %v937, %v1088
    %v1090 = vpop.f32.mrf.mxu0
    %1091 = vmatprep.mubr.bf16.mxu0 %v1006
    %1092 = vmatmul.mubr.bf16.gmra.mxu0 %v1005
    %v1093 = vpop.f32.mrf.mxu0
    %v1094 = vadd.f32 %v942, %v1093
    %v1095 = vpop.f32.mrf.mxu0
    %v1096 = vpop.f32.mrf.mxu0
    %v1097 = vadd.f32 %v947, %v1096
    %v1098 = vpop.f32.mrf.mxu0
    %1099 = vmatprep.mubr.bf16.mxu0 %v1009
    %1100 = vmatmul.mubr.bf16.gmra.mxu0 %v1008
    %v1101 = vpop.f32.mrf.mxu0
    %v1102 = vadd.f32 %v952, %v1101
    %v1103 = vpop.f32.mrf.mxu0
    %v1104 = vpop.f32.mrf.mxu0
    %v1105 = vadd.f32 %v957, %v1104
    %v1106 = vpop.f32.mrf.mxu0
    %1107 = vdwg.mxu0
    %1108 = vmatprep.subr.bf16.mxu0 0
    %1109 = vmatpush1.bf16.xpose.msra.mxu0 0
    %1110 = vmatprep.subr.bf16.mxu0 0
    %1111 = vmatpush1.bf16.xpose.msra.mxu0 0
    %1112 = vmatprep.subr.bf16.mxu0 0
    %1113 = vmatpush1.bf16.xpose.msra.mxu0 0
    %1114 = vmatprep.subr.bf16.mxu0 0
    %1115 = vmatpush1.bf16.xpose.msra.mxu0 0
    %1116 = vmatprep.subr.bf16.mxu0 0
    %1117 = vmatpush1.bf16.xpose.msra.mxu0 %v1041
    %1118 = vmatprep.subr.bf16.mxu0 0
    %1119 = vmatpush1.bf16.xpose.msra.mxu0 %v1038
    %1120 = vmatprep.subr.bf16.mxu0 0
    %1121 = vmatpush1.bf16.xpose.msra.mxu0 %v1035
    %1122 = vmatprep.subr.bf16.mxu0 0
    %1123 = vmatpush1.bf16.xpose.msra.mxu0 %v1032
    %1124 = vmatprep.subr.bf16.mxu0 0
    %1125 = vmatpush2.bf16.xpose.msra.mxu0 0
    %1126 = vmatprep.subr.bf16.mxu0 0
    %1127 = vmatpush2.bf16.xpose.msra.mxu0 0
    %1128 = vmatprep.subr.bf16.mxu0 0
    %1129 = vmatpush2.bf16.xpose.msra.mxu0 0
    %1130 = vmatprep.subr.bf16.mxu0 0
    %1131 = vmatpush2.bf16.xpose.msra.mxu0 0
    %1132 = vmatprep.subr.bf16.mxu0 0
    %1133 = vmatpush2.bf16.xpose.msra.mxu0 0
    %1134 = vmatprep.subr.bf16.mxu0 0
    %1135 = vmatpush2.bf16.xpose.msra.mxu0 0
    %1136 = vmatprep.subr.bf16.mxu0 0
    %1137 = vmatpush2.bf16.xpose.msra.mxu0 0
    %1138 = vmatprep.subr.bf16.mxu0 0
    %1139 = vmatpush2.bf16.xpose.msra.mxu0 0
    %1140 = vmatprep.mubr.bf16.mxu0 0
    %1141 = vmatmul.mubr.bf16.gmra.mxu0 %v1020
    %v1142 = vpop.f32.mrf.mxu0
    %v1143 = vadd.f32 %v1078, %v1142
    %v1144 = vpop.f32.mrf.mxu0
    %v1145 = vpop.f32.mrf.mxu0
    %v1146 = vadd.f32 %v1081, %v1145
    %v1147 = vpop.f32.mrf.mxu0
    %1148 = vmatprep.mubr.bf16.mxu0 0
    %1149 = vmatmul.mubr.bf16.gmra.mxu0 %v1023
    %v1150 = vpop.f32.mrf.mxu0
    %v1151 = vadd.f32 %v1086, %v1150
    %v1152 = vpop.f32.mrf.mxu0
    %v1153 = vpop.f32.mrf.mxu0
    %v1154 = vadd.f32 %v1089, %v1153
    %v1155 = vpop.f32.mrf.mxu0
    %1156 = vmatprep.mubr.bf16.mxu0 0
    %1157 = vmatmul.mubr.bf16.gmra.mxu0 %v1026
    %v1158 = vpop.f32.mrf.mxu0
    %v1159 = vadd.f32 %v1094, %v1158
    %v1160 = vpop.f32.mrf.mxu0
    %v1161 = vpop.f32.mrf.mxu0
    %v1162 = vadd.f32 %v1097, %v1161
    %v1163 = vpop.f32.mrf.mxu0
    %1164 = vmatprep.mubr.bf16.mxu0 0
    %1165 = vmatmul.mubr.bf16.gmra.mxu0 %v1029
    %v1166 = vpop.f32.mrf.mxu0
    %v1167 = vadd.f32 %v1102, %v1166
    %v1168 = vpop.f32.mrf.mxu0
    %v1169 = vpop.f32.mrf.mxu0
    %v1170 = vadd.f32 %v1105, %v1169
    %v1171 = vpop.f32.mrf.mxu0
    %1172 = vdwg.mxu0
    %v1173 = vld [vmem:[#allocation2 + $0xc0] sm:$0xff]
    %v1174 = vld [vmem:[#allocation2 + $0xc8] sm:$0xff]
    %v1175 = vld [vmem:[#allocation2 + $0xd0] sm:$0xff]
    %v1176 = vld [vmem:[#allocation2 + $0xd8] sm:$0xff]
    %v1177 = vld [vmem:[#allocation2 + $0xe0] sm:$0xff]
    %v1178 = vld [vmem:[#allocation2 + $0xe8] sm:$0xff]
    %v1179 = vld [vmem:[#allocation2 + $0xf0] sm:$0xff]
    %v1180 = vld [vmem:[#allocation2 + $0xf8] sm:$0xff]
    %v1181 = vld [vmem:[#allocation2 + $0x100] sm:$0xff]
    %v1182 = vld [vmem:[#allocation2 + $0x108] sm:$0xff]
    %v1183 = vld [vmem:[#allocation2 + $0x110] sm:$0xff]
    %v1184 = vld [vmem:[#allocation2 + $0x118] sm:$0xff]
    %v1185 = vld [vmem:[#allocation2 + $0x120] sm:$0xff]
    %v1186 = vld [vmem:[#allocation2 + $0x128] sm:$0xff]
    %v1187 = vld [vmem:[#allocation2 + $0x130] sm:$0xff]
    %v1188 = vld [vmem:[#allocation2 + $0x138] sm:$0xff]
    %v1189 = vld [vmem:[#allocation2 + $0x140] sm:$0xff]
    %v1190 = vld [vmem:[#allocation2 + $0x148] sm:$0xff]
    %v1191 = vld [vmem:[#allocation2 + $0x150] sm:$0xff]
    %v1192 = vld [vmem:[#allocation2 + $0x158] sm:$0xff]
    %v1193 = vld [vmem:[#allocation2 + $0x160] sm:$0xff]
    %v1194 = vld [vmem:[#allocation2 + $0x168] sm:$0xff]
    %v1195 = vld [vmem:[#allocation2 + $0x170] sm:$0xff]
    %v1196 = vld [vmem:[#allocation2 + $0x178] sm:$0xff]
    %v1197 = vpack.c.bf16 %v1176, %v1173
    %v1198 = vpack.c.bf16 %v1177, %v1174
    %v1199 = vpack.c.bf16 %v1178, %v1175
    %v1200 = vpack.c.bf16 %v1182, %v1179
    %v1201 = vpack.c.bf16 %v1183, %v1180
    %v1202 = vpack.c.bf16 %v1184, %v1181
    %v1203 = vpack.c.bf16 %v1188, %v1185
    %v1204 = vpack.c.bf16 %v1189, %v1186
    %v1205 = vpack.c.bf16 %v1190, %v1187
    %v1206 = vpack.c.bf16 %v1194, %v1191
    %v1207 = vpack.c.bf16 %v1195, %v1192
    %v1208 = vpack.c.bf16 %v1196, %v1193
    %v1210 = vsel %vm101, %v1199, 0
    %v1213 = vsel %vm101, %v1202, 0
    %v1216 = vsel %vm101, %v1205, 0
    %v1219 = vsel %vm101, %v1208, 0
    %1221 = vmatprep.subr.bf16.mxu0 0
    %1222 = vmatpush1.bf16.xpose.msra.mxu0 0
    %1223 = vmatprep.subr.bf16.mxu0 0
    %1224 = vmatpush1.bf16.xpose.msra.mxu0 0
    %1225 = vmatprep.subr.bf16.mxu0 0
    %1226 = vmatpush1.bf16.xpose.msra.mxu0 0
    %1227 = vmatprep.subr.bf16.mxu0 0
    %1228 = vmatpush1.bf16.xpose.msra.mxu0 0
    %1229 = vmatprep.subr.bf16.mxu0 %v1207
    %1230 = vmatpush1.bf16.xpose.msra.mxu0 %v1206
    %1231 = vmatprep.subr.bf16.mxu0 %v1204
    %1232 = vmatpush1.bf16.xpose.msra.mxu0 %v1203
    %1233 = vmatprep.subr.bf16.mxu0 %v1201
    %1234 = vmatpush1.bf16.xpose.msra.mxu0 %v1200
    %1235 = vmatprep.subr.bf16.mxu0 %v1198
    %1236 = vmatpush1.bf16.xpose.msra.mxu0 %v1197
    %1237 = vmatprep.subr.bf16.mxu0 0
    %1238 = vmatpush2.bf16.xpose.msra.mxu0 0
    %1239 = vmatprep.subr.bf16.mxu0 0
    %1240 = vmatpush2.bf16.xpose.msra.mxu0 0
    %1241 = vmatprep.subr.bf16.mxu0 0
    %1242 = vmatpush2.bf16.xpose.msra.mxu0 0
    %1243 = vmatprep.subr.bf16.mxu0 0
    %1244 = vmatpush2.bf16.xpose.msra.mxu0 0
    %1245 = vmatprep.subr.bf16.mxu0 0
    %1246 = vmatpush2.bf16.xpose.msra.mxu0 0
    %1247 = vmatprep.subr.bf16.mxu0 0
    %1248 = vmatpush2.bf16.xpose.msra.mxu0 0
    %1249 = vmatprep.subr.bf16.mxu0 0
    %1250 = vmatpush2.bf16.xpose.msra.mxu0 0
    %1251 = vmatprep.subr.bf16.mxu0 0
    %1252 = vmatpush2.bf16.xpose.msra.mxu0 0
    %1253 = vmatprep.mubr.bf16.mxu0 %v1000
    %1254 = vmatmul.mubr.bf16.gmra.mxu0 %v999
    %v1255 = vpop.f32.mrf.mxu0
    %v1256 = vadd.f32 %v922, %v1255
    %v1257 = vpop.f32.mrf.mxu0
    %v1258 = vpop.f32.mrf.mxu0
    %v1259 = vadd.f32 %v927, %v1258
    %v1260 = vpop.f32.mrf.mxu0
    %1261 = vmatprep.mubr.bf16.mxu0 %v1003
    %1262 = vmatmul.mubr.bf16.gmra.mxu0 %v1002
    %v1263 = vpop.f32.mrf.mxu0
    %v1264 = vadd.f32 %v932, %v1263
    %v1265 = vpop.f32.mrf.mxu0
    %v1266 = vpop.f32.mrf.mxu0
    %v1267 = vadd.f32 %v937, %v1266
    %v1268 = vpop.f32.mrf.mxu0
    %1269 = vmatprep.mubr.bf16.mxu0 %v1006
    %1270 = vmatmul.mubr.bf16.gmra.mxu0 %v1005
    %v1271 = vpop.f32.mrf.mxu0
    %v1272 = vadd.f32 %v942, %v1271
    %v1273 = vpop.f32.mrf.mxu0
    %v1274 = vpop.f32.mrf.mxu0
    %v1275 = vadd.f32 %v947, %v1274
    %v1276 = vpop.f32.mrf.mxu0
    %1277 = vmatprep.mubr.bf16.mxu0 %v1009
    %1278 = vmatmul.mubr.bf16.gmra.mxu0 %v1008
    %v1279 = vpop.f32.mrf.mxu0
    %v1280 = vadd.f32 %v952, %v1279
    %v1281 = vpop.f32.mrf.mxu0
    %v1282 = vpop.f32.mrf.mxu0
    %v1283 = vadd.f32 %v957, %v1282
    %v1284 = vpop.f32.mrf.mxu0
    %1285 = vdwg.mxu0
    %1286 = vmatprep.subr.bf16.mxu0 0
    %1287 = vmatpush1.bf16.xpose.msra.mxu0 0
    %1288 = vmatprep.subr.bf16.mxu0 0
    %1289 = vmatpush1.bf16.xpose.msra.mxu0 0
    %1290 = vmatprep.subr.bf16.mxu0 0
    %1291 = vmatpush1.bf16.xpose.msra.mxu0 0
    %1292 = vmatprep.subr.bf16.mxu0 0
    %1293 = vmatpush1.bf16.xpose.msra.mxu0 0
    %1294 = vmatprep.subr.bf16.mxu0 0
    %1295 = vmatpush1.bf16.xpose.msra.mxu0 %v1219
    %1296 = vmatprep.subr.bf16.mxu0 0
    %1297 = vmatpush1.bf16.xpose.msra.mxu0 %v1216
    %1298 = vmatprep.subr.bf16.mxu0 0
    %1299 = vmatpush1.bf16.xpose.msra.mxu0 %v1213
    %1300 = vmatprep.subr.bf16.mxu0 0
    %1301 = vmatpush1.bf16.xpose.msra.mxu0 %v1210
    %1302 = vmatprep.subr.bf16.mxu0 0
    %1303 = vmatpush2.bf16.xpose.msra.mxu0 0
    %1304 = vmatprep.subr.bf16.mxu0 0
    %1305 = vmatpush2.bf16.xpose.msra.mxu0 0
    %1306 = vmatprep.subr.bf16.mxu0 0
    %1307 = vmatpush2.bf16.xpose.msra.mxu0 0
    %1308 = vmatprep.subr.bf16.mxu0 0
    %1309 = vmatpush2.bf16.xpose.msra.mxu0 0
    %1310 = vmatprep.subr.bf16.mxu0 0
    %1311 = vmatpush2.bf16.xpose.msra.mxu0 0
    %1312 = vmatprep.subr.bf16.mxu0 0
    %1313 = vmatpush2.bf16.xpose.msra.mxu0 0
    %1314 = vmatprep.subr.bf16.mxu0 0
    %1315 = vmatpush2.bf16.xpose.msra.mxu0 0
    %1316 = vmatprep.subr.bf16.mxu0 0
    %1317 = vmatpush2.bf16.xpose.msra.mxu0 0
    %1318 = vmatprep.mubr.bf16.mxu0 0
    %1319 = vmatmul.mubr.bf16.gmra.mxu0 %v1020
    %v1320 = vpop.f32.mrf.mxu0
    %v1321 = vadd.f32 %v1256, %v1320
    %v1322 = vpop.f32.mrf.mxu0
    %v1323 = vpop.f32.mrf.mxu0
    %v1324 = vadd.f32 %v1259, %v1323
    %v1325 = vpop.f32.mrf.mxu0
    %1326 = vmatprep.mubr.bf16.mxu0 0
    %1327 = vmatmul.mubr.bf16.gmra.mxu0 %v1023
    %v1328 = vpop.f32.mrf.mxu0
    %v1329 = vadd.f32 %v1264, %v1328
    %v1330 = vpop.f32.mrf.mxu0
    %v1331 = vpop.f32.mrf.mxu0
    %v1332 = vadd.f32 %v1267, %v1331
    %v1333 = vpop.f32.mrf.mxu0
    %1334 = vmatprep.mubr.bf16.mxu0 0
    %1335 = vmatmul.mubr.bf16.gmra.mxu0 %v1026
    %v1336 = vpop.f32.mrf.mxu0
    %v1337 = vadd.f32 %v1272, %v1336
    %v1338 = vpop.f32.mrf.mxu0
    %v1339 = vpop.f32.mrf.mxu0
    %v1340 = vadd.f32 %v1275, %v1339
    %v1341 = vpop.f32.mrf.mxu0
    %1342 = vmatprep.mubr.bf16.mxu0 0
    %1343 = vmatmul.mubr.bf16.gmra.mxu0 %v1029
    %v1344 = vpop.f32.mrf.mxu0
    %v1345 = vadd.f32 %v1280, %v1344
    %v1346 = vpop.f32.mrf.mxu0
    %v1347 = vpop.f32.mrf.mxu0
    %v1348 = vadd.f32 %v1283, %v1347
    %v1349 = vpop.f32.mrf.mxu0
    %1350 = vdwg.mxu0
    %v1351 = vmax.f32 %v1143, 0.0
    %v1352 = vmax.f32 %v1146, 0.0
    %v1353 = vmax.f32 %v1151, 0.0
    %v1354 = vmax.f32 %v1154, 0.0
    %v1355 = vmax.f32 %v1159, 0.0
    %v1356 = vmax.f32 %v1162, 0.0
    %v1357 = vmax.f32 %v1167, 0.0
    %v1358 = vmax.f32 %v1170, 0.0
    %v1359 = vmax.f32 %v1321, 0.0
    %v1360 = vmax.f32 %v1324, 0.0
    %v1361 = vmax.f32 %v1329, 0.0
    %v1362 = vmax.f32 %v1332, 0.0
    %v1363 = vmax.f32 %v1337, 0.0
    %v1364 = vmax.f32 %v1340, 0.0
    %v1365 = vmax.f32 %v1345, 0.0
    %v1366 = vmax.f32 %v1348, 0.0
    %v1367 = vld [vmem:[%s3] sm:$0xff]
    %v1368 = vld [vmem:[%s3 + $0x8] sm:$0xff]
    %v1369 = vld [vmem:[%s3 + $0x10] sm:$0xff]
    %v1370 = vld [vmem:[%s3 + $0x18] sm:$0xff]
    %v1371 = vld [vmem:[%s3 + $0x20] sm:$0xff]
    %v1372 = vld [vmem:[%s3 + $0x28] sm:$0xff]
    %v1373 = vld [vmem:[%s3 + $0x30] sm:$0xff]
    %v1374 = vld [vmem:[%s3 + $0x38] sm:$0xff]
    %v1375 = vld [vmem:[#allocation9] sm:$0xf]
    %v1376 = vld [vmem:[#allocation9 + $0x4] sm:$0xf]
    %v1377 = vld [vmem:[#allocation9 + $0x8] sm:$0xf]
    %v1378 = vld [vmem:[#allocation9 + $0xc] sm:$0xf]
    %v1379 = vld [vmem:[#allocation9 + $0x10] sm:$0xf]
    %v1380 = vld [vmem:[#allocation9 + $0x14] sm:$0xf]
    %v1381 = vld [vmem:[#allocation9 + $0x18] sm:$0xf]
    %v1382 = vld [vmem:[#allocation9 + $0x1c] sm:$0xf]
    %v1383 = vld [vmem:[%s5] sm:$0xf]
    %v1384 = vld [vmem:[%s5 + $0x4] sm:$0xf]
    %v1385 = vld [vmem:[%s5 + $0x8] sm:$0xf]
    %v1386 = vld [vmem:[%s5 + $0xc] sm:$0xf]
    %v1387 = vld [vmem:[%s5 + $0x10] sm:$0xf]
    %v1388 = vld [vmem:[%s5 + $0x14] sm:$0xf]
    %v1389 = vld [vmem:[%s5 + $0x18] sm:$0xf]
    %v1390 = vld [vmem:[%s5 + $0x1c] sm:$0xf]
    %v1391 = vld [vmem:[#allocation10] sm:$0xf]
    %v1392 = vld [vmem:[#allocation10 + $0x4] sm:$0xf]
    %v1393 = vld [vmem:[#allocation10 + $0x8] sm:$0xf]
    %v1394 = vld [vmem:[#allocation10 + $0xc] sm:$0xf]
    %v1395 = vld [vmem:[#allocation12] sm:$0xff]
    %v1396 = vld [vmem:[#allocation12 + $0x8] sm:$0xff]
    %v1397 = vpack.c.bf16 %v1352, %v1351
    %v1398 = vpack.c.bf16 %v1354, %v1353
    %v1399 = vpack.c.bf16 %v1356, %v1355
    %v1400 = vpack.c.bf16 %v1358, %v1357
    %v1401 = vpack.c.bf16 %v1360, %v1359
    %v1402 = vpack.c.bf16 %v1362, %v1361
    %v1403 = vpack.c.bf16 %v1364, %v1363
    %v1404 = vpack.c.bf16 %v1366, %v1365
    %v1405 = vlaneseq
    %v1406 = vshrl.u32 %v1405, 7
    %v1407 = vsub.s32 0, %v1406
    %v1408 = vrot.slane %v1395, %v1407
    %v1409 = vlaneseq
    %v1410 = vshrl.u32 %v1409, 7
    %v1411 = vsub.s32 0, %v1410
    %v1412 = vrot.slane %v1396, %v1411
    %v1421 = vunpack.c.l.b16 %v1367
    %v1422 = vunpack.c.h.b16 %v1367
    %v1423 = vunpack.c.l.b16 %v1368
    %v1424 = vunpack.c.h.b16 %v1368
    %v1425 = vunpack.c.l.b16 %v1369
    %v1426 = vunpack.c.h.b16 %v1369
    %v1427 = vunpack.c.l.b16 %v1370
    %v1428 = vunpack.c.h.b16 %v1370
    %v1429 = vunpack.c.l.b16 %v1371
    %v1430 = vunpack.c.h.b16 %v1371
    %v1431 = vunpack.c.l.b16 %v1372
    %v1432 = vunpack.c.h.b16 %v1372
    %v1433 = vunpack.c.l.b16 %v1373
    %v1434 = vunpack.c.h.b16 %v1373
    %v1435 = vunpack.c.l.b16 %v1374
    %v1436 = vunpack.c.h.b16 %v1374
    %v1437 = vpack.c.b16 %v1423, %v1421
    %v1438 = vpack.c.b16 %v1424, %v1422
    %v1439 = vpack.c.b16 %v1427, %v1425
    %v1440 = vpack.c.b16 %v1428, %v1426
    %v1441 = vpack.c.b16 %v1431, %v1429
    %v1442 = vpack.c.b16 %v1432, %v1430
    %v1443 = vpack.c.b16 %v1435, %v1433
    %v1444 = vpack.c.b16 %v1436, %v1434
    %vm1453 = vcmask 523264
    %v1455 = vsel %vm1453, %v1397, 0
    %v1458 = vsel %vm1453, %v1398, 0
    %v1461 = vsel %vm1453, %v1399, 0
    %v1464 = vsel %vm1453, %v1400, 0
    %v1467 = vsel %vm1453, %v1401, 0
    %v1470 = vsel %vm1453, %v1402, 0
    %v1473 = vsel %vm1453, %v1403, 0
    %v1476 = vsel %vm1453, %v1404, 0
    %1478 = vmatprep.subr.bf16.mxu0 0
    %1479 = vmatpush1.bf16.msra.mxu0 0
    %1480 = vmatprep.subr.bf16.mxu0 0
    %1481 = vmatpush1.bf16.msra.mxu0 0
    %1482 = vmatprep.subr.bf16.mxu0 0
    %1483 = vmatpush1.bf16.msra.mxu0 0
    %1484 = vmatprep.subr.bf16.mxu0 0
    %1485 = vmatpush1.bf16.msra.mxu0 0
    %1486 = vmatprep.subr.bf16.mxu0 %v1444
    %1487 = vmatpush1.bf16.msra.mxu0 %v1443
    %1488 = vmatprep.subr.bf16.mxu0 %v1442
    %1489 = vmatpush1.bf16.msra.mxu0 %v1441
    %1490 = vmatprep.subr.bf16.mxu0 %v1440
    %1491 = vmatpush1.bf16.msra.mxu0 %v1439
    %1492 = vmatprep.subr.bf16.mxu0 %v1438
    %1493 = vmatpush1.bf16.msra.mxu0 %v1437
    %1494 = vmatprep.subr.bf16.mxu0 0
    %1495 = vmatpush2.bf16.msra.mxu0 0
    %1496 = vmatprep.subr.bf16.mxu0 0
    %1497 = vmatpush2.bf16.msra.mxu0 0
    %1498 = vmatprep.subr.bf16.mxu0 0
    %1499 = vmatpush2.bf16.msra.mxu0 0
    %1500 = vmatprep.subr.bf16.mxu0 0
    %1501 = vmatpush2.bf16.msra.mxu0 0
    %1502 = vmatprep.subr.bf16.mxu0 0
    %1503 = vmatpush2.bf16.msra.mxu0 0
    %1504 = vmatprep.subr.bf16.mxu0 0
    %1505 = vmatpush2.bf16.msra.mxu0 0
    %1506 = vmatprep.subr.bf16.mxu0 0
    %1507 = vmatpush2.bf16.msra.mxu0 0
    %1508 = vmatprep.subr.bf16.mxu0 0
    %1509 = vmatpush2.bf16.msra.mxu0 0
    %1510 = vmatprep.mubr.bf16.mxu0 0
    %1511 = vmatmul.mubr.bf16.gmra.mxu0 %v1455
    %v1512 = vpop.f32.mrf.mxu0
    %v1513 = vadd.f32 %v1408, %v1512
    %v1514 = vpop.f32.mrf.mxu0
    %v1515 = vadd.f32 %v1412, %v1514
    %v1516 = vpop.f32.mrf.mxu0
    %v1517 = vadd.f32 %v1408, %v1516
    %v1518 = vpop.f32.mrf.mxu0
    %v1519 = vadd.f32 %v1412, %v1518
    %1520 = vmatprep.mubr.bf16.mxu0 0
    %1521 = vmatmul.mubr.bf16.gmra.mxu0 %v1458
    %v1522 = vpop.f32.mrf.mxu0
    %v1523 = vadd.f32 %v1408, %v1522
    %v1524 = vpop.f32.mrf.mxu0
    %v1525 = vadd.f32 %v1412, %v1524
    %v1526 = vpop.f32.mrf.mxu0
    %v1527 = vadd.f32 %v1408, %v1526
    %v1528 = vpop.f32.mrf.mxu0
    %v1529 = vadd.f32 %v1412, %v1528
    %1530 = vmatprep.mubr.bf16.mxu0 0
    %1531 = vmatmul.mubr.bf16.gmra.mxu0 %v1461
    %v1532 = vpop.f32.mrf.mxu0
    %v1533 = vadd.f32 %v1408, %v1532
    %v1534 = vpop.f32.mrf.mxu0
    %v1535 = vadd.f32 %v1412, %v1534
    %v1536 = vpop.f32.mrf.mxu0
    %v1537 = vadd.f32 %v1408, %v1536
    %v1538 = vpop.f32.mrf.mxu0
    %v1539 = vadd.f32 %v1412, %v1538
    %1540 = vmatprep.mubr.bf16.mxu0 0
    %1541 = vmatmul.mubr.bf16.gmra.mxu0 %v1464
    %v1542 = vpop.f32.mrf.mxu0
    %v1543 = vadd.f32 %v1408, %v1542
    %v1544 = vpop.f32.mrf.mxu0
    %v1545 = vadd.f32 %v1412, %v1544
    %v1546 = vpop.f32.mrf.mxu0
    %v1547 = vadd.f32 %v1408, %v1546
    %v1548 = vpop.f32.mrf.mxu0
    %v1549 = vadd.f32 %v1412, %v1548
    %1550 = vmatprep.mubr.bf16.mxu0 0
    %1551 = vmatmul.mubr.bf16.gmra.mxu0 %v1467
    %v1552 = vpop.f32.mrf.mxu0
    %v1553 = vadd.f32 %v1408, %v1552
    %v1554 = vpop.f32.mrf.mxu0
    %v1555 = vadd.f32 %v1412, %v1554
    %v1556 = vpop.f32.mrf.mxu0
    %v1557 = vadd.f32 %v1408, %v1556
    %v1558 = vpop.f32.mrf.mxu0
    %v1559 = vadd.f32 %v1412, %v1558
    %1560 = vmatprep.mubr.bf16.mxu0 0
    %1561 = vmatmul.mubr.bf16.gmra.mxu0 %v1470
    %v1562 = vpop.f32.mrf.mxu0
    %v1563 = vadd.f32 %v1408, %v1562
    %v1564 = vpop.f32.mrf.mxu0
    %v1565 = vadd.f32 %v1412, %v1564
    %v1566 = vpop.f32.mrf.mxu0
    %v1567 = vadd.f32 %v1408, %v1566
    %v1568 = vpop.f32.mrf.mxu0
    %v1569 = vadd.f32 %v1412, %v1568
    %1570 = vmatprep.mubr.bf16.mxu0 0
    %1571 = vmatmul.mubr.bf16.gmra.mxu0 %v1473
    %v1572 = vpop.f32.mrf.mxu0
    %v1573 = vadd.f32 %v1408, %v1572
    %v1574 = vpop.f32.mrf.mxu0
    %v1575 = vadd.f32 %v1412, %v1574
    %v1576 = vpop.f32.mrf.mxu0
    %v1577 = vadd.f32 %v1408, %v1576
    %v1578 = vpop.f32.mrf.mxu0
    %v1579 = vadd.f32 %v1412, %v1578
    %1580 = vmatprep.mubr.bf16.mxu0 0
    %1581 = vmatmul.mubr.bf16.gmra.mxu0 %v1476
    %v1582 = vpop.f32.mrf.mxu0
    %v1583 = vadd.f32 %v1408, %v1582
    %v1584 = vpop.f32.mrf.mxu0
    %v1585 = vadd.f32 %v1412, %v1584
    %v1586 = vpop.f32.mrf.mxu0
    %v1587 = vadd.f32 %v1408, %v1586
    %v1588 = vpop.f32.mrf.mxu0
    %v1589 = vadd.f32 %v1412, %v1588
    %1590 = vdwg.mxu0
    %v1591 = vpack.c.bf16 %v1517, %v1513
    %v1592 = vpack.c.bf16 %v1519, %v1515
    %v1593 = vpack.c.bf16 %v1527, %v1523
    %v1594 = vpack.c.bf16 %v1529, %v1525
    %v1595 = vpack.c.bf16 %v1537, %v1533
    %v1596 = vpack.c.bf16 %v1539, %v1535
    %v1597 = vpack.c.bf16 %v1547, %v1543
    %v1598 = vpack.c.bf16 %v1549, %v1545
    %v1599 = vpack.c.bf16 %v1557, %v1553
    %v1600 = vpack.c.bf16 %v1559, %v1555
    %v1601 = vpack.c.bf16 %v1567, %v1563
    %v1602 = vpack.c.bf16 %v1569, %v1565
    %v1603 = vpack.c.bf16 %v1577, %v1573
    %v1604 = vpack.c.bf16 %v1579, %v1575
    %v1605 = vpack.c.bf16 %v1587, %v1583
    %v1606 = vpack.c.bf16 %v1589, %v1585
    %v1623 = vunpack.c.l.b16 %v1591
    %v1624 = vunpack.c.l.b16 %v1592
    %v1625 = vunpack.c.h.b16 %v1591
    %v1626 = vunpack.c.h.b16 %v1592
    %v1627 = vunpack.c.l.b16 %v1593
    %v1628 = vunpack.c.l.b16 %v1594
    %v1629 = vunpack.c.h.b16 %v1593
    %v1630 = vunpack.c.h.b16 %v1594
    %v1631 = vunpack.c.l.b16 %v1595
    %v1632 = vunpack.c.l.b16 %v1596
    %v1633 = vunpack.c.h.b16 %v1595
    %v1634 = vunpack.c.h.b16 %v1596
    %v1635 = vunpack.c.l.b16 %v1597
    %v1636 = vunpack.c.l.b16 %v1598
    %v1637 = vunpack.c.h.b16 %v1597
    %v1638 = vunpack.c.h.b16 %v1598
    %v1639 = vunpack.c.l.b16 %v1599
    %v1640 = vunpack.c.l.b16 %v1600
    %v1641 = vunpack.c.h.b16 %v1599
    %v1642 = vunpack.c.h.b16 %v1600
    %v1643 = vunpack.c.l.b16 %v1601
    %v1644 = vunpack.c.l.b16 %v1602
    %v1645 = vunpack.c.h.b16 %v1601
    %v1646 = vunpack.c.h.b16 %v1602
    %v1647 = vunpack.c.l.b16 %v1603
    %v1648 = vunpack.c.l.b16 %v1604
    %v1649 = vunpack.c.h.b16 %v1603
    %v1650 = vunpack.c.h.b16 %v1604
    %v1651 = vunpack.c.l.b16 %v1605
    %v1652 = vunpack.c.l.b16 %v1606
    %v1653 = vunpack.c.h.b16 %v1605
    %v1654 = vunpack.c.h.b16 %v1606
    %v1655 = vpack.c.b16 %v1624, %v1623
    %v1656 = vpack.c.b16 %v1626, %v1625
    %v1657 = vpack.c.b16 %v1628, %v1627
    %v1658 = vpack.c.b16 %v1630, %v1629
    %v1659 = vpack.c.b16 %v1632, %v1631
    %v1660 = vpack.c.b16 %v1634, %v1633
    %v1661 = vpack.c.b16 %v1636, %v1635
    %v1662 = vpack.c.b16 %v1638, %v1637
    %v1663 = vpack.c.b16 %v1640, %v1639
    %v1664 = vpack.c.b16 %v1642, %v1641
    %v1665 = vpack.c.b16 %v1644, %v1643
    %v1666 = vpack.c.b16 %v1646, %v1645
    %v1667 = vpack.c.b16 %v1648, %v1647
    %v1668 = vpack.c.b16 %v1650, %v1649
    %v1669 = vpack.c.b16 %v1652, %v1651
    %v1670 = vpack.c.b16 %v1654, %v1653
    %vm1687 = vcmask 523268
    %vm1688 = vmor %vm1687, %vm164
    %1689 = vst.msk [vmem:[#allocation3] sm:$0xff] %vm1688, %v1655
    %1690 = vst.msk [vmem:[#allocation3 + $0x8] sm:$0xff] %vm1688, %v1656
    %1691 = vst.msk [vmem:[#allocation3 + $0x10] sm:$0xff] %vm1688, %v1657
    %1692 = vst.msk [vmem:[#allocation3 + $0x18] sm:$0xff] %vm1688, %v1658
    %1693 = vst.msk [vmem:[#allocation3 + $0x20] sm:$0xff] %vm1688, %v1659
    %1694 = vst.msk [vmem:[#allocation3 + $0x28] sm:$0xff] %vm1688, %v1660
    %1695 = vst.msk [vmem:[#allocation3 + $0x30] sm:$0xff] %vm1688, %v1661
    %1696 = vst.msk [vmem:[#allocation3 + $0x38] sm:$0xff] %vm1688, %v1662
    %1697 = vst.msk [vmem:[#allocation3 + $0x40] sm:$0xff] %vm1688, %v1663
    %1698 = vst.msk [vmem:[#allocation3 + $0x48] sm:$0xff] %vm1688, %v1664
    %1699 = vst.msk [vmem:[#allocation3 + $0x50] sm:$0xff] %vm1688, %v1665
    %1700 = vst.msk [vmem:[#allocation3 + $0x58] sm:$0xff] %vm1688, %v1666
    %1701 = vst.msk [vmem:[#allocation3 + $0x60] sm:$0xff] %vm1688, %v1667
    %1702 = vst.msk [vmem:[#allocation3 + $0x68] sm:$0xff] %vm1688, %v1668
    %1703 = vst.msk [vmem:[#allocation3 + $0x70] sm:$0xff] %vm1688, %v1669
    %1704 = vst.msk [vmem:[#allocation3 + $0x78] sm:$0xff] %vm1688, %v1670
    %v1705 = vld [vmem:[#allocation3] sm:$0xf]
    %v1706 = vld [vmem:[#allocation3 + $0x8] sm:$0xf]
    %v1707 = vld [vmem:[#allocation3 + $0x10] sm:$0xf]
    %v1708 = vld [vmem:[#allocation3 + $0x18] sm:$0xf]
    %v1709 = vld [vmem:[#allocation3 + $0x20] sm:$0xf]
    %v1710 = vld [vmem:[#allocation3 + $0x28] sm:$0xf]
    %v1711 = vld [vmem:[#allocation3 + $0x30] sm:$0xf]
    %v1712 = vld [vmem:[#allocation3 + $0x38] sm:$0xf]
    %v1713 = vld [vmem:[#allocation3 + $0x4] sm:$0xf]
    %v1714 = vld [vmem:[#allocation3 + $0xc] sm:$0xf]
    %v1715 = vld [vmem:[#allocation3 + $0x14] sm:$0xf]
    %v1716 = vld [vmem:[#allocation3 + $0x1c] sm:$0xf]
    %v1717 = vld [vmem:[#allocation3 + $0x24] sm:$0xf]
    %v1718 = vld [vmem:[#allocation3 + $0x2c] sm:$0xf]
    %v1719 = vld [vmem:[#allocation3 + $0x34] sm:$0xf]
    %v1720 = vld [vmem:[#allocation3 + $0x3c] sm:$0xf]
    %v1729 = vunpack.c.l.b16 %v1705
    %v1730 = vunpack.c.l.b16 %v1706
    %v1731 = vunpack.c.l.b16 %v1707
    %v1732 = vunpack.c.l.b16 %v1708
    %v1733 = vunpack.c.l.b16 %v1709
    %v1734 = vunpack.c.l.b16 %v1710
    %v1735 = vunpack.c.l.b16 %v1711
    %v1736 = vunpack.c.l.b16 %v1712
    %v1737 = vpack.c.b16 %v1730, %v1729
    %v1738 = vpack.c.b16 %v1732, %v1731
    %v1739 = vpack.c.b16 %v1734, %v1733
    %v1740 = vpack.c.b16 %v1736, %v1735
    %1741 = vrot.lane.b32.xlu0 %v1737, 64
    %v1742 = vpop.permute.xlu0 %1741
    %1743 = vrot.lane.b32.xlu0 %v1738, 64
    %v1744 = vpop.permute.xlu0 %1743
    %1745 = vrot.lane.b32.xlu0 %v1739, 64
    %v1746 = vpop.permute.xlu0 %1745
    %1747 = vrot.lane.b32.xlu0 %v1740, 64
    %v1748 = vpop.permute.xlu0 %1747
    %vm1749 = vcmask 130048
    %v1751 = vsel %vm1749, %v1737, 0
    %v1754 = vsel %vm1749, %v1738, 0
    %v1757 = vsel %vm1749, %v1739, 0
    %v1760 = vsel %vm1749, %v1740, 0
    %v1763 = vsel %vm1749, %v1742, 0
    %v1766 = vsel %vm1749, %v1744, 0
    %v1769 = vsel %vm1749, %v1746, 0
    %v1772 = vsel %vm1749, %v1748, 0
    %1774 = vmatprep.subr.bf16.mxu0 0
    %1775 = vmatpush1.bf16.xpose.msra.mxu0 0
    %1776 = vmatprep.subr.bf16.mxu0 0
    %1777 = vmatpush1.bf16.xpose.msra.mxu0 0
    %1778 = vmatprep.subr.bf16.mxu0 0
    %1779 = vmatpush1.bf16.xpose.msra.mxu0 0
    %1780 = vmatprep.subr.bf16.mxu0 0
    %1781 = vmatpush1.bf16.xpose.msra.mxu0 0
    %1782 = vmatprep.subr.bf16.mxu0 0
    %1783 = vmatpush1.bf16.xpose.msra.mxu0 %v1772
    %1784 = vmatprep.subr.bf16.mxu0 0
    %1785 = vmatpush1.bf16.xpose.msra.mxu0 %v1769
    %1786 = vmatprep.subr.bf16.mxu0 0
    %1787 = vmatpush1.bf16.xpose.msra.mxu0 %v1766
    %1788 = vmatprep.subr.bf16.mxu0 0
    %1789 = vmatpush1.bf16.xpose.msra.mxu0 %v1763
    %1790 = vmatprep.subr.bf16.mxu0 0
    %1791 = vmatpush2.bf16.xpose.msra.mxu0 0
    %1792 = vmatprep.subr.bf16.mxu0 0
    %1793 = vmatpush2.bf16.xpose.msra.mxu0 0
    %1794 = vmatprep.subr.bf16.mxu0 0
    %1795 = vmatpush2.bf16.xpose.msra.mxu0 0
    %1796 = vmatprep.subr.bf16.mxu0 0
    %1797 = vmatpush2.bf16.xpose.msra.mxu0 0
    %1798 = vmatprep.subr.bf16.mxu0 0
    %1799 = vmatpush2.bf16.xpose.msra.mxu0 0
    %1800 = vmatprep.subr.bf16.mxu0 0
    %1801 = vmatpush2.bf16.xpose.msra.mxu0 0
    %1802 = vmatprep.subr.bf16.mxu0 0
    %1803 = vmatpush2.bf16.xpose.msra.mxu0 0
    %1804 = vmatprep.subr.bf16.mxu0 0
    %1805 = vmatpush2.bf16.xpose.msra.mxu0 0
    %1806 = vmatprep.mubr.bf16.mxu0 0
    %1807 = vmatmul.mubr.bf16.gmra.mxu0 %v1751
    %v1808 = vpop.f32.mrf.mxu0
    %v1809 = vadd.f32 0.0, %v1808
    %v1810 = vpop.f32.mrf.mxu0
    %v1811 = vpop.f32.mrf.mxu0
    %v1812 = vadd.f32 0.0, %v1811
    %v1813 = vpop.f32.mrf.mxu0
    %1814 = vmatprep.mubr.bf16.mxu0 0
    %1815 = vmatmul.mubr.bf16.gmra.mxu0 %v1754
    %v1816 = vpop.f32.mrf.mxu0
    %v1817 = vadd.f32 0.0, %v1816
    %v1818 = vpop.f32.mrf.mxu0
    %v1819 = vpop.f32.mrf.mxu0
    %v1820 = vadd.f32 0.0, %v1819
    %v1821 = vpop.f32.mrf.mxu0
    %1822 = vmatprep.mubr.bf16.mxu0 0
    %1823 = vmatmul.mubr.bf16.gmra.mxu0 %v1757
    %v1824 = vpop.f32.mrf.mxu0
    %v1825 = vadd.f32 0.0, %v1824
    %v1826 = vpop.f32.mrf.mxu0
    %v1827 = vpop.f32.mrf.mxu0
    %v1828 = vadd.f32 0.0, %v1827
    %v1829 = vpop.f32.mrf.mxu0
    %1830 = vmatprep.mubr.bf16.mxu0 0
    %1831 = vmatmul.mubr.bf16.gmra.mxu0 %v1760
    %v1832 = vpop.f32.mrf.mxu0
    %v1833 = vadd.f32 0.0, %v1832
    %v1834 = vpop.f32.mrf.mxu0
    %v1835 = vpop.f32.mrf.mxu0
    %v1836 = vadd.f32 0.0, %v1835
    %v1837 = vpop.f32.mrf.mxu0
    %1838 = vdwg.mxu0
    %v1839 = vmul.f32 %v1809, 0.25
    %v1840 = vmul.f32 %v1812, 0.25
    %v1841 = vmul.f32 %v1817, 0.25
    %v1842 = vmul.f32 %v1820, 0.25
    %v1843 = vmul.f32 %v1825, 0.25
    %v1844 = vmul.f32 %v1828, 0.25
    %v1845 = vmul.f32 %v1833, 0.25
    %v1846 = vmul.f32 %v1836, 0.25
    %v1847 = vsel %vm1453, %v1839, -inf
    %1848 = vmax.xlane.f32.xlu0 %v1847
    %v1849 = vpop.xlane.xlu0 %1848
    %v1850 = vsel %vm1453, %v1840, -inf
    %1851 = vmax.xlane.f32.xlu0 %v1850
    %v1852 = vpop.xlane.xlu0 %1851
    %v1853 = vsel %vm1453, %v1841, -inf
    %1854 = vmax.xlane.f32.xlu0 %v1853
    %v1855 = vpop.xlane.xlu0 %1854
    %v1856 = vsel %vm1453, %v1842, -inf
    %1857 = vmax.xlane.f32.xlu0 %v1856
    %v1858 = vpop.xlane.xlu0 %1857
    %v1859 = vsel %vm1453, %v1843, -inf
    %1860 = vmax.xlane.f32.xlu0 %v1859
    %v1861 = vpop.xlane.xlu0 %1860
    %v1862 = vsel %vm1453, %v1844, -inf
    %1863 = vmax.xlane.f32.xlu0 %v1862
    %v1864 = vpop.xlane.xlu0 %1863
    %v1865 = vsel %vm1453, %v1845, -inf
    %1866 = vmax.xlane.f32.xlu0 %v1865
    %v1867 = vpop.xlane.xlu0 %1866
    %v1868 = vsel %vm1453, %v1846, -inf
    %1869 = vmax.xlane.f32.xlu0 %v1868
    %v1870 = vpop.xlane.xlu0 %1869
    %v1871 = vsub.f32 %v1839, %v1849
    %v1872 = vsub.f32 %v1840, %v1852
    %v1873 = vsub.f32 %v1841, %v1855
    %v1874 = vsub.f32 %v1842, %v1858
    %v1875 = vsub.f32 %v1843, %v1861
    %v1876 = vsub.f32 %v1844, %v1864
    %v1877 = vsub.f32 %v1845, %v1867
    %v1878 = vsub.f32 %v1846, %v1870
    %v1879 = vmul.f32 %v1871, 1.442695
    %v1880 = vpow.pop %v1879
    %v1881 = vmul.f32 %v1872, 1.442695
    %v1882 = vpow.pop %v1881
    %v1883 = vmul.f32 %v1873, 1.442695
    %v1884 = vpow.pop %v1883
    %v1885 = vmul.f32 %v1874, 1.442695
    %v1886 = vpow.pop %v1885
    %v1887 = vmul.f32 %v1875, 1.442695
    %v1888 = vpow.pop %v1887
    %v1889 = vmul.f32 %v1876, 1.442695
    %v1890 = vpow.pop %v1889
    %v1891 = vmul.f32 %v1877, 1.442695
    %v1892 = vpow.pop %v1891
    %v1893 = vmul.f32 %v1878, 1.442695
    %v1894 = vpow.pop %v1893
    %v1895 = vsel %vm1453, %v1880, 0.0
    %1896 = vadd.xlane.f32.xlu0 %v1895
    %v1897 = vpop.xlane.xlu0 %1896
    %v1898 = vsel %vm1453, %v1882, 0.0
    %1899 = vadd.xlane.f32.xlu0 %v1898
    %v1900 = vpop.xlane.xlu0 %1899
    %v1901 = vsel %vm1453, %v1884, 0.0
    %1902 = vadd.xlane.f32.xlu0 %v1901
    %v1903 = vpop.xlane.xlu0 %1902
    %v1904 = vsel %vm1453, %v1886, 0.0
    %1905 = vadd.xlane.f32.xlu0 %v1904
    %v1906 = vpop.xlane.xlu0 %1905
    %v1907 = vsel %vm1453, %v1888, 0.0
    %1908 = vadd.xlane.f32.xlu0 %v1907
    %v1909 = vpop.xlane.xlu0 %1908
    %v1910 = vsel %vm1453, %v1890, 0.0
    %1911 = vadd.xlane.f32.xlu0 %v1910
    %v1912 = vpop.xlane.xlu0 %1911
    %v1913 = vsel %vm1453, %v1892, 0.0
    %1914 = vadd.xlane.f32.xlu0 %v1913
    %v1915 = vpop.xlane.xlu0 %1914
    %v1916 = vsel %vm1453, %v1894, 0.0
    %1917 = vadd.xlane.f32.xlu0 %v1916
    %v1918 = vpop.xlane.xlu0 %1917
    %v1919 = vrcp.pop %v1897
    %v1920 = vrcp.pop %v1900
    %v1921 = vrcp.pop %v1903
    %v1922 = vrcp.pop %v1906
    %v1923 = vrcp.pop %v1909
    %v1924 = vrcp.pop %v1912
    %v1925 = vrcp.pop %v1915
    %v1926 = vrcp.pop %v1918
    %v1927 = vmul.f32 %v1880, %v1919
    %v1928 = vmul.f32 %v1882, %v1920
    %v1929 = vmul.f32 %v1884, %v1921
    %v1930 = vmul.f32 %v1886, %v1922
    %v1931 = vmul.f32 %v1888, %v1923
    %v1932 = vmul.f32 %v1890, %v1924
    %v1933 = vmul.f32 %v1892, %v1925
    %v1934 = vmul.f32 %v1894, %v1926
    %v1935 = vpack.c.bf16 %v1928, %v1927
    %v1936 = vpack.c.bf16 %v1930, %v1929
    %v1937 = vpack.c.bf16 %v1932, %v1931
    %v1938 = vpack.c.bf16 %v1934, %v1933
    %v1947 = vunpack.c.l.b16 %v1713
    %v1948 = vunpack.c.l.b16 %v1714
    %v1949 = vunpack.c.l.b16 %v1715
    %v1950 = vunpack.c.l.b16 %v1716
    %v1951 = vunpack.c.l.b16 %v1717
    %v1952 = vunpack.c.l.b16 %v1718
    %v1953 = vunpack.c.l.b16 %v1719
    %v1954 = vunpack.c.l.b16 %v1720
    %v1955 = vpack.c.b16 %v1948, %v1947
    %v1956 = vpack.c.b16 %v1950, %v1949
    %v1957 = vpack.c.b16 %v1952, %v1951
    %v1958 = vpack.c.b16 %v1954, %v1953
    %v1964 = vsel %vm1453, %v1935, 0
    %v1967 = vsel %vm1453, %v1936, 0
    %v1970 = vsel %vm1453, %v1937, 0
    %v1973 = vsel %vm1453, %v1938, 0
    %1975 = vmatprep.subr.bf16.mxu0 0
    %1976 = vmatpush1.bf16.msra.mxu0 0
    %1977 = vmatprep.subr.bf16.mxu0 0
    %1978 = vmatpush1.bf16.msra.mxu0 0
    %1979 = vmatprep.subr.bf16.mxu0 0
    %1980 = vmatpush1.bf16.msra.mxu0 0
    %1981 = vmatprep.subr.bf16.mxu0 0
    %1982 = vmatpush1.bf16.msra.mxu0 0
    %1983 = vmatprep.subr.bf16.mxu0 0
    %1984 = vmatpush1.bf16.msra.mxu0 %v1958
    %1985 = vmatprep.subr.bf16.mxu0 0
    %1986 = vmatpush1.bf16.msra.mxu0 %v1957
    %1987 = vmatprep.subr.bf16.mxu0 0
    %1988 = vmatpush1.bf16.msra.mxu0 %v1956
    %1989 = vmatprep.subr.bf16.mxu0 0
    %1990 = vmatpush1.bf16.msra.mxu0 %v1955
    %1991 = vmatprep.subr.bf16.mxu0 0
    %1992 = vmatpush2.bf16.msra.mxu0 0
    %1993 = vmatprep.subr.bf16.mxu0 0
    %1994 = vmatpush2.bf16.msra.mxu0 0
    %1995 = vmatprep.subr.bf16.mxu0 0
    %1996 = vmatpush2.bf16.msra.mxu0 0
    %1997 = vmatprep.subr.bf16.mxu0 0
    %1998 = vmatpush2.bf16.msra.mxu0 0
    %1999 = vmatprep.subr.bf16.mxu0 0
    %2000 = vmatpush2.bf16.msra.mxu0 0
    %2001 = vmatprep.subr.bf16.mxu0 0
    %2002 = vmatpush2.bf16.msra.mxu0 0
    %2003 = vmatprep.subr.bf16.mxu0 0
    %2004 = vmatpush2.bf16.msra.mxu0 0
    %2005 = vmatprep.subr.bf16.mxu0 0
    %2006 = vmatpush2.bf16.msra.mxu0 0
    %2007 = vmatprep.mubr.bf16.mxu0 0
    %2008 = vmatmul.mubr.bf16.gmra.mxu0 %v1964
    %v2009 = vpop.f32.mrf.mxu0
    %v2010 = vadd.f32 0.0, %v2009
    %v2011 = vpop.f32.mrf.mxu0
    %v2012 = vpop.f32.mrf.mxu0
    %v2013 = vadd.f32 0.0, %v2012
    %v2014 = vpop.f32.mrf.mxu0
    %2015 = vmatprep.mubr.bf16.mxu0 0
    %2016 = vmatmul.mubr.bf16.gmra.mxu0 %v1967
    %v2017 = vpop.f32.mrf.mxu0
    %v2018 = vadd.f32 0.0, %v2017
    %v2019 = vpop.f32.mrf.mxu0
    %v2020 = vpop.f32.mrf.mxu0
    %v2021 = vadd.f32 0.0, %v2020
    %v2022 = vpop.f32.mrf.mxu0
    %2023 = vmatprep.mubr.bf16.mxu0 0
    %2024 = vmatmul.mubr.bf16.gmra.mxu0 %v1970
    %v2025 = vpop.f32.mrf.mxu0
    %v2026 = vadd.f32 0.0, %v2025
    %v2027 = vpop.f32.mrf.mxu0
    %v2028 = vpop.f32.mrf.mxu0
    %v2029 = vadd.f32 0.0, %v2028
    %v2030 = vpop.f32.mrf.mxu0
    %2031 = vmatprep.mubr.bf16.mxu0 0
    %2032 = vmatmul.mubr.bf16.gmra.mxu0 %v1973
    %v2033 = vpop.f32.mrf.mxu0
    %v2034 = vadd.f32 0.0, %v2033
    %v2035 = vpop.f32.mrf.mxu0
    %v2036 = vpop.f32.mrf.mxu0
    %v2037 = vadd.f32 0.0, %v2036
    %v2038 = vpop.f32.mrf.mxu0
    %2039 = vdwg.mxu0
    %2040 = vrot.lane.b32.xlu0 %v1737, 112
    %v2041 = vpop.permute.xlu0 %2040
    %2042 = vrot.lane.b32.xlu0 %v1738, 112
    %v2043 = vpop.permute.xlu0 %2042
    %2044 = vrot.lane.b32.xlu0 %v1739, 112
    %v2045 = vpop.permute.xlu0 %2044
    %2046 = vrot.lane.b32.xlu0 %v1740, 112
    %v2047 = vpop.permute.xlu0 %2046
    %2048 = vrot.lane.b32.xlu0 %v1737, 48
    %v2049 = vpop.permute.xlu0 %2048
    %2050 = vrot.lane.b32.xlu0 %v1738, 48
    %v2051 = vpop.permute.xlu0 %2050
    %2052 = vrot.lane.b32.xlu0 %v1739, 48
    %v2053 = vpop.permute.xlu0 %2052
    %2054 = vrot.lane.b32.xlu0 %v1740, 48
    %v2055 = vpop.permute.xlu0 %2054
    %v2057 = vsel %vm1749, %v2041, 0
    %v2060 = vsel %vm1749, %v2043, 0
    %v2063 = vsel %vm1749, %v2045, 0
    %v2066 = vsel %vm1749, %v2047, 0
    %v2069 = vsel %vm1749, %v2049, 0
    %v2072 = vsel %vm1749, %v2051, 0
    %v2075 = vsel %vm1749, %v2053, 0
    %v2078 = vsel %vm1749, %v2055, 0
    %2080 = vmatprep.subr.bf16.mxu0 0
    %2081 = vmatpush1.bf16.xpose.msra.mxu0 0
    %2082 = vmatprep.subr.bf16.mxu0 0
    %2083 = vmatpush1.bf16.xpose.msra.mxu0 0
    %2084 = vmatprep.subr.bf16.mxu0 0
    %2085 = vmatpush1.bf16.xpose.msra.mxu0 0
    %2086 = vmatprep.subr.bf16.mxu0 0
    %2087 = vmatpush1.bf16.xpose.msra.mxu0 0
    %2088 = vmatprep.subr.bf16.mxu0 0
    %2089 = vmatpush1.bf16.xpose.msra.mxu0 %v2078
    %2090 = vmatprep.subr.bf16.mxu0 0
    %2091 = vmatpush1.bf16.xpose.msra.mxu0 %v2075
    %2092 = vmatprep.subr.bf16.mxu0 0
    %2093 = vmatpush1.bf16.xpose.msra.mxu0 %v2072
    %2094 = vmatprep.subr.bf16.mxu0 0
    %2095 = vmatpush1.bf16.xpose.msra.mxu0 %v2069
    %2096 = vmatprep.subr.bf16.mxu0 0
    %2097 = vmatpush2.bf16.xpose.msra.mxu0 0
    %2098 = vmatprep.subr.bf16.mxu0 0
    %2099 = vmatpush2.bf16.xpose.msra.mxu0 0
    %2100 = vmatprep.subr.bf16.mxu0 0
    %2101 = vmatpush2.bf16.xpose.msra.mxu0 0
    %2102 = vmatprep.subr.bf16.mxu0 0
    %2103 = vmatpush2.bf16.xpose.msra.mxu0 0
    %2104 = vmatprep.subr.bf16.mxu0 0
    %2105 = vmatpush2.bf16.xpose.msra.mxu0 0
    %2106 = vmatprep.subr.bf16.mxu0 0
    %2107 = vmatpush2.bf16.xpose.msra.mxu0 0
    %2108 = vmatprep.subr.bf16.mxu0 0
    %2109 = vmatpush2.bf16.xpose.msra.mxu0 0
    %2110 = vmatprep.subr.bf16.mxu0 0
    %2111 = vmatpush2.bf16.xpose.msra.mxu0 0
    %2112 = vmatprep.mubr.bf16.mxu0 0
    %2113 = vmatmul.mubr.bf16.gmra.mxu0 %v2057
    %v2114 = vpop.f32.mrf.mxu0
    %v2115 = vadd.f32 0.0, %v2114
    %v2116 = vpop.f32.mrf.mxu0
    %v2117 = vpop.f32.mrf.mxu0
    %v2118 = vadd.f32 0.0, %v2117
    %v2119 = vpop.f32.mrf.mxu0
    %2120 = vmatprep.mubr.bf16.mxu0 0
    %2121 = vmatmul.mubr.bf16.gmra.mxu0 %v2060
    %v2122 = vpop.f32.mrf.mxu0
    %v2123 = vadd.f32 0.0, %v2122
    %v2124 = vpop.f32.mrf.mxu0
    %v2125 = vpop.f32.mrf.mxu0
    %v2126 = vadd.f32 0.0, %v2125
    %v2127 = vpop.f32.mrf.mxu0
    %2128 = vmatprep.mubr.bf16.mxu0 0
    %2129 = vmatmul.mubr.bf16.gmra.mxu0 %v2063
    %v2130 = vpop.f32.mrf.mxu0
    %v2131 = vadd.f32 0.0, %v2130
    %v2132 = vpop.f32.mrf.mxu0
    %v2133 = vpop.f32.mrf.mxu0
    %v2134 = vadd.f32 0.0, %v2133
    %v2135 = vpop.f32.mrf.mxu0
    %2136 = vmatprep.mubr.bf16.mxu0 0
    %2137 = vmatmul.mubr.bf16.gmra.mxu0 %v2066
    %v2138 = vpop.f32.mrf.mxu0
    %v2139 = vadd.f32 0.0, %v2138
    %v2140 = vpop.f32.mrf.mxu0
    %v2141 = vpop.f32.mrf.mxu0
    %v2142 = vadd.f32 0.0, %v2141
    %v2143 = vpop.f32.mrf.mxu0
    %2144 = vdwg.mxu0
    %v2145 = vmul.f32 %v2115, 0.25
    %v2146 = vmul.f32 %v2118, 0.25
    %v2147 = vmul.f32 %v2123, 0.25
    %v2148 = vmul.f32 %v2126, 0.25
    %v2149 = vmul.f32 %v2131, 0.25
    %v2150 = vmul.f32 %v2134, 0.25
    %v2151 = vmul.f32 %v2139, 0.25
    %v2152 = vmul.f32 %v2142, 0.25
    %v2153 = vsel %vm1453, %v2145, -inf
    %2154 = vmax.xlane.f32.xlu0 %v2153
    %v2155 = vpop.xlane.xlu0 %2154
    %v2156 = vsel %vm1453, %v2146, -inf
    %2157 = vmax.xlane.f32.xlu0 %v2156
    %v2158 = vpop.xlane.xlu0 %2157
    %v2159 = vsel %vm1453, %v2147, -inf
    %2160 = vmax.xlane.f32.xlu0 %v2159
    %v2161 = vpop.xlane.xlu0 %2160
    %v2162 = vsel %vm1453, %v2148, -inf
    %2163 = vmax.xlane.f32.xlu0 %v2162
    %v2164 = vpop.xlane.xlu0 %2163
    %v2165 = vsel %vm1453, %v2149, -inf
    %2166 = vmax.xlane.f32.xlu0 %v2165
    %v2167 = vpop.xlane.xlu0 %2166
    %v2168 = vsel %vm1453, %v2150, -inf
    %2169 = vmax.xlane.f32.xlu0 %v2168
    %v2170 = vpop.xlane.xlu0 %2169
    %v2171 = vsel %vm1453, %v2151, -inf
    %2172 = vmax.xlane.f32.xlu0 %v2171
    %v2173 = vpop.xlane.xlu0 %2172
    %v2174 = vsel %vm1453, %v2152, -inf
    %2175 = vmax.xlane.f32.xlu0 %v2174
    %v2176 = vpop.xlane.xlu0 %2175
    %v2177 = vsub.f32 %v2145, %v2155
    %v2178 = vsub.f32 %v2146, %v2158
    %v2179 = vsub.f32 %v2147, %v2161
    %v2180 = vsub.f32 %v2148, %v2164
    %v2181 = vsub.f32 %v2149, %v2167
    %v2182 = vsub.f32 %v2150, %v2170
    %v2183 = vsub.f32 %v2151, %v2173
    %v2184 = vsub.f32 %v2152, %v2176
    %v2185 = vmul.f32 %v2177, 1.442695
    %v2186 = vpow.pop %v2185
    %v2187 = vmul.f32 %v2178, 1.442695
    %v2188 = vpow.pop %v2187
    %v2189 = vmul.f32 %v2179, 1.442695
    %v2190 = vpow.pop %v2189
    %v2191 = vmul.f32 %v2180, 1.442695
    %v2192 = vpow.pop %v2191
    %v2193 = vmul.f32 %v2181, 1.442695
    %v2194 = vpow.pop %v2193
    %v2195 = vmul.f32 %v2182, 1.442695
    %v2196 = vpow.pop %v2195
    %v2197 = vmul.f32 %v2183, 1.442695
    %v2198 = vpow.pop %v2197
    %v2199 = vmul.f32 %v2184, 1.442695
    %v2200 = vpow.pop %v2199
    %v2201 = vsel %vm1453, %v2186, 0.0
    %2202 = vadd.xlane.f32.xlu0 %v2201
    %v2203 = vpop.xlane.xlu0 %2202
    %v2204 = vsel %vm1453, %v2188, 0.0
    %2205 = vadd.xlane.f32.xlu0 %v2204
    %v2206 = vpop.xlane.xlu0 %2205
    %v2207 = vsel %vm1453, %v2190, 0.0
    %2208 = vadd.xlane.f32.xlu0 %v2207
    %v2209 = vpop.xlane.xlu0 %2208
    %v2210 = vsel %vm1453, %v2192, 0.0
    %2211 = vadd.xlane.f32.xlu0 %v2210
    %v2212 = vpop.xlane.xlu0 %2211
    %v2213 = vsel %vm1453, %v2194, 0.0
    %2214 = vadd.xlane.f32.xlu0 %v2213
    %v2215 = vpop.xlane.xlu0 %2214
    %v2216 = vsel %vm1453, %v2196, 0.0
    %2217 = vadd.xlane.f32.xlu0 %v2216
    %v2218 = vpop.xlane.xlu0 %2217
    %v2219 = vsel %vm1453, %v2198, 0.0
    %2220 = vadd.xlane.f32.xlu0 %v2219
    %v2221 = vpop.xlane.xlu0 %2220
    %v2222 = vsel %vm1453, %v2200, 0.0
    %2223 = vadd.xlane.f32.xlu0 %v2222
    %v2224 = vpop.xlane.xlu0 %2223
    %v2225 = vrcp.pop %v2203
    %v2226 = vrcp.pop %v2206
    %v2227 = vrcp.pop %v2209
    %v2228 = vrcp.pop %v2212
    %v2229 = vrcp.pop %v2215
    %v2230 = vrcp.pop %v2218
    %v2231 = vrcp.pop %v2221
    %v2232 = vrcp.pop %v2224
    %v2233 = vmul.f32 %v2186, %v2225
    %v2234 = vmul.f32 %v2188, %v2226
    %v2235 = vmul.f32 %v2190, %v2227
    %v2236 = vmul.f32 %v2192, %v2228
    %v2237 = vmul.f32 %v2194, %v2229
    %v2238 = vmul.f32 %v2196, %v2230
    %v2239 = vmul.f32 %v2198, %v2231
    %v2240 = vmul.f32 %v2200, %v2232
    %v2241 = vpack.c.bf16 %v2234, %v2233
    %v2242 = vpack.c.bf16 %v2236, %v2235
    %v2243 = vpack.c.bf16 %v2238, %v2237
    %v2244 = vpack.c.bf16 %v2240, %v2239
    %2245 = vrot.lane.b32.xlu0 %v1955, 112
    %v2246 = vpop.permute.xlu0 %2245
    %2247 = vrot.lane.b32.xlu0 %v1956, 112
    %v2248 = vpop.permute.xlu0 %2247
    %2249 = vrot.lane.b32.xlu0 %v1957, 112
    %v2250 = vpop.permute.xlu0 %2249
    %2251 = vrot.lane.b32.xlu0 %v1958, 112
    %v2252 = vpop.permute.xlu0 %2251
    %v2258 = vsel %vm1453, %v2241, 0
    %v2261 = vsel %vm1453, %v2242, 0
    %v2264 = vsel %vm1453, %v2243, 0
    %v2267 = vsel %vm1453, %v2244, 0
    %2269 = vmatprep.subr.bf16.mxu0 0
    %2270 = vmatpush1.bf16.msra.mxu0 0
    %2271 = vmatprep.subr.bf16.mxu0 0
    %2272 = vmatpush1.bf16.msra.mxu0 0
    %2273 = vmatprep.subr.bf16.mxu0 0
    %2274 = vmatpush1.bf16.msra.mxu0 0
    %2275 = vmatprep.subr.bf16.mxu0 0
    %2276 = vmatpush1.bf16.msra.mxu0 0
    %2277 = vmatprep.subr.bf16.mxu0 0
    %2278 = vmatpush1.bf16.msra.mxu0 %v2252
    %2279 = vmatprep.subr.bf16.mxu0 0
    %2280 = vmatpush1.bf16.msra.mxu0 %v2250
    %2281 = vmatprep.subr.bf16.mxu0 0
    %2282 = vmatpush1.bf16.msra.mxu0 %v2248
    %2283 = vmatprep.subr.bf16.mxu0 0
    %2284 = vmatpush1.bf16.msra.mxu0 %v2246
    %2285 = vmatprep.subr.bf16.mxu0 0
    %2286 = vmatpush2.bf16.msra.mxu0 0
    %2287 = vmatprep.subr.bf16.mxu0 0
    %2288 = vmatpush2.bf16.msra.mxu0 0
    %2289 = vmatprep.subr.bf16.mxu0 0
    %2290 = vmatpush2.bf16.msra.mxu0 0
    %2291 = vmatprep.subr.bf16.mxu0 0
    %2292 = vmatpush2.bf16.msra.mxu0 0
    %2293 = vmatprep.subr.bf16.mxu0 0
    %2294 = vmatpush2.bf16.msra.mxu0 0
    %2295 = vmatprep.subr.bf16.mxu0 0
    %2296 = vmatpush2.bf16.msra.mxu0 0
    %2297 = vmatprep.subr.bf16.mxu0 0
    %2298 = vmatpush2.bf16.msra.mxu0 0
    %2299 = vmatprep.subr.bf16.mxu0 0
    %2300 = vmatpush2.bf16.msra.mxu0 0
    %2301 = vmatprep.mubr.bf16.mxu0 0
    %2302 = vmatmul.mubr.bf16.gmra.mxu0 %v2258
    %v2303 = vpop.f32.mrf.mxu0
    %v2304 = vadd.f32 0.0, %v2303
    %v2305 = vpop.f32.mrf.mxu0
    %v2306 = vpop.f32.mrf.mxu0
    %v2307 = vadd.f32 0.0, %v2306
    %v2308 = vpop.f32.mrf.mxu0
    %2309 = vmatprep.mubr.bf16.mxu0 0
    %2310 = vmatmul.mubr.bf16.gmra.mxu0 %v2261
    %v2311 = vpop.f32.mrf.mxu0
    %v2312 = vadd.f32 0.0, %v2311
    %v2313 = vpop.f32.mrf.mxu0
    %v2314 = vpop.f32.mrf.mxu0
    %v2315 = vadd.f32 0.0, %v2314
    %v2316 = vpop.f32.mrf.mxu0
    %2317 = vmatprep.mubr.bf16.mxu0 0
    %2318 = vmatmul.mubr.bf16.gmra.mxu0 %v2264
    %v2319 = vpop.f32.mrf.mxu0
    %v2320 = vadd.f32 0.0, %v2319
    %v2321 = vpop.f32.mrf.mxu0
    %v2322 = vpop.f32.mrf.mxu0
    %v2323 = vadd.f32 0.0, %v2322
    %v2324 = vpop.f32.mrf.mxu0
    %2325 = vmatprep.mubr.bf16.mxu0 0
    %2326 = vmatmul.mubr.bf16.gmra.mxu0 %v2267
    %v2327 = vpop.f32.mrf.mxu0
    %v2328 = vadd.f32 0.0, %v2327
    %v2329 = vpop.f32.mrf.mxu0
    %v2330 = vpop.f32.mrf.mxu0
    %v2331 = vadd.f32 0.0, %v2330
    %v2332 = vpop.f32.mrf.mxu0
    %2333 = vdwg.mxu0
    %2334 = vrot.lane.b32.xlu0 %v1737, 96
    %v2335 = vpop.permute.xlu0 %2334
    %2336 = vrot.lane.b32.xlu0 %v1738, 96
    %v2337 = vpop.permute.xlu0 %2336
    %2338 = vrot.lane.b32.xlu0 %v1739, 96
    %v2339 = vpop.permute.xlu0 %2338
    %2340 = vrot.lane.b32.xlu0 %v1740, 96
    %v2341 = vpop.permute.xlu0 %2340
    %2342 = vrot.lane.b32.xlu0 %v1737, 32
    %v2343 = vpop.permute.xlu0 %2342
    %2344 = vrot.lane.b32.xlu0 %v1738, 32
    %v2345 = vpop.permute.xlu0 %2344
    %2346 = vrot.lane.b32.xlu0 %v1739, 32
    %v2347 = vpop.permute.xlu0 %2346
    %2348 = vrot.lane.b32.xlu0 %v1740, 32
    %v2349 = vpop.permute.xlu0 %2348
    %v2351 = vsel %vm1749, %v2335, 0
    %v2354 = vsel %vm1749, %v2337, 0
    %v2357 = vsel %vm1749, %v2339, 0
    %v2360 = vsel %vm1749, %v2341, 0
    %v2363 = vsel %vm1749, %v2343, 0
    %v2366 = vsel %vm1749, %v2345, 0
    %v2369 = vsel %vm1749, %v2347, 0
    %v2372 = vsel %vm1749, %v2349, 0
    %2374 = vmatprep.subr.bf16.mxu0 0
    %2375 = vmatpush1.bf16.xpose.msra.mxu0 0
    %2376 = vmatprep.subr.bf16.mxu0 0
    %2377 = vmatpush1.bf16.xpose.msra.mxu0 0
    %2378 = vmatprep.subr.bf16.mxu0 0
    %2379 = vmatpush1.bf16.xpose.msra.mxu0 0
    %2380 = vmatprep.subr.bf16.mxu0 0
    %2381 = vmatpush1.bf16.xpose.msra.mxu0 0
    %2382 = vmatprep.subr.bf16.mxu0 0
    %2383 = vmatpush1.bf16.xpose.msra.mxu0 %v2372
    %2384 = vmatprep.subr.bf16.mxu0 0
    %2385 = vmatpush1.bf16.xpose.msra.mxu0 %v2369
    %2386 = vmatprep.subr.bf16.mxu0 0
    %2387 = vmatpush1.bf16.xpose.msra.mxu0 %v2366
    %2388 = vmatprep.subr.bf16.mxu0 0
    %2389 = vmatpush1.bf16.xpose.msra.mxu0 %v2363
    %2390 = vmatprep.subr.bf16.mxu0 0
    %2391 = vmatpush2.bf16.xpose.msra.mxu0 0
    %2392 = vmatprep.subr.bf16.mxu0 0
    %2393 = vmatpush2.bf16.xpose.msra.mxu0 0
    %2394 = vmatprep.subr.bf16.mxu0 0
    %2395 = vmatpush2.bf16.xpose.msra.mxu0 0
    %2396 = vmatprep.subr.bf16.mxu0 0
    %2397 = vmatpush2.bf16.xpose.msra.mxu0 0
    %2398 = vmatprep.subr.bf16.mxu0 0
    %2399 = vmatpush2.bf16.xpose.msra.mxu0 0
    %2400 = vmatprep.subr.bf16.mxu0 0
    %2401 = vmatpush2.bf16.xpose.msra.mxu0 0
    %2402 = vmatprep.subr.bf16.mxu0 0
    %2403 = vmatpush2.bf16.xpose.msra.mxu0 0
    %2404 = vmatprep.subr.bf16.mxu0 0
    %2405 = vmatpush2.bf16.xpose.msra.mxu0 0
    %2406 = vmatprep.mubr.bf16.mxu0 0
    %2407 = vmatmul.mubr.bf16.gmra.mxu0 %v2351
    %v2408 = vpop.f32.mrf.mxu0
    %v2409 = vadd.f32 0.0, %v2408
    %v2410 = vpop.f32.mrf.mxu0
    %v2411 = vpop.f32.mrf.mxu0
    %v2412 = vadd.f32 0.0, %v2411
    %v2413 = vpop.f32.mrf.mxu0
    %2414 = vmatprep.mubr.bf16.mxu0 0
    %2415 = vmatmul.mubr.bf16.gmra.mxu0 %v2354
    %v2416 = vpop.f32.mrf.mxu0
    %v2417 = vadd.f32 0.0, %v2416
    %v2418 = vpop.f32.mrf.mxu0
    %v2419 = vpop.f32.mrf.mxu0
    %v2420 = vadd.f32 0.0, %v2419
    %v2421 = vpop.f32.mrf.mxu0
    %2422 = vmatprep.mubr.bf16.mxu0 0
    %2423 = vmatmul.mubr.bf16.gmra.mxu0 %v2357
    %v2424 = vpop.f32.mrf.mxu0
    %v2425 = vadd.f32 0.0, %v2424
    %v2426 = vpop.f32.mrf.mxu0
    %v2427 = vpop.f32.mrf.mxu0
    %v2428 = vadd.f32 0.0, %v2427
    %v2429 = vpop.f32.mrf.mxu0
    %2430 = vmatprep.mubr.bf16.mxu0 0
    %2431 = vmatmul.mubr.bf16.gmra.mxu0 %v2360
    %v2432 = vpop.f32.mrf.mxu0
    %v2433 = vadd.f32 0.0, %v2432
    %v2434 = vpop.f32.mrf.mxu0
    %v2435 = vpop.f32.mrf.mxu0
    %v2436 = vadd.f32 0.0, %v2435
    %v2437 = vpop.f32.mrf.mxu0
    %2438 = vdwg.mxu0
    %v2439 = vmul.f32 %v2409, 0.25
    %v2440 = vmul.f32 %v2412, 0.25
    %v2441 = vmul.f32 %v2417, 0.25
    %v2442 = vmul.f32 %v2420, 0.25
    %v2443 = vmul.f32 %v2425, 0.25
    %v2444 = vmul.f32 %v2428, 0.25
    %v2445 = vmul.f32 %v2433, 0.25
    %v2446 = vmul.f32 %v2436, 0.25
    %v2447 = vsel %vm1453, %v2439, -inf
    %2448 = vmax.xlane.f32.xlu0 %v2447
    %v2449 = vpop.xlane.xlu0 %2448
    %v2450 = vsel %vm1453, %v2440, -inf
    %2451 = vmax.xlane.f32.xlu0 %v2450
    %v2452 = vpop.xlane.xlu0 %2451
    %v2453 = vsel %vm1453, %v2441, -inf
    %2454 = vmax.xlane.f32.xlu0 %v2453
    %v2455 = vpop.xlane.xlu0 %2454
    %v2456 = vsel %vm1453, %v2442, -inf
    %2457 = vmax.xlane.f32.xlu0 %v2456
    %v2458 = vpop.xlane.xlu0 %2457
    %v2459 = vsel %vm1453, %v2443, -inf
    %2460 = vmax.xlane.f32.xlu0 %v2459
    %v2461 = vpop.xlane.xlu0 %2460
    %v2462 = vsel %vm1453, %v2444, -inf
    %2463 = vmax.xlane.f32.xlu0 %v2462
    %v2464 = vpop.xlane.xlu0 %2463
    %v2465 = vsel %vm1453, %v2445, -inf
    %2466 = vmax.xlane.f32.xlu0 %v2465
    %v2467 = vpop.xlane.xlu0 %2466
    %v2468 = vsel %vm1453, %v2446, -inf
    %2469 = vmax.xlane.f32.xlu0 %v2468
    %v2470 = vpop.xlane.xlu0 %2469
    %v2471 = vsub.f32 %v2439, %v2449
    %v2472 = vsub.f32 %v2440, %v2452
    %v2473 = vsub.f32 %v2441, %v2455
    %v2474 = vsub.f32 %v2442, %v2458
    %v2475 = vsub.f32 %v2443, %v2461
    %v2476 = vsub.f32 %v2444, %v2464
    %v2477 = vsub.f32 %v2445, %v2467
    %v2478 = vsub.f32 %v2446, %v2470
    %v2479 = vmul.f32 %v2471, 1.442695
    %v2480 = vpow.pop %v2479
    %v2481 = vmul.f32 %v2472, 1.442695
    %v2482 = vpow.pop %v2481
    %v2483 = vmul.f32 %v2473, 1.442695
    %v2484 = vpow.pop %v2483
    %v2485 = vmul.f32 %v2474, 1.442695
    %v2486 = vpow.pop %v2485
    %v2487 = vmul.f32 %v2475, 1.442695
    %v2488 = vpow.pop %v2487
    %v2489 = vmul.f32 %v2476, 1.442695
    %v2490 = vpow.pop %v2489
    %v2491 = vmul.f32 %v2477, 1.442695
    %v2492 = vpow.pop %v2491
    %v2493 = vmul.f32 %v2478, 1.442695
    %v2494 = vpow.pop %v2493
    %v2495 = vsel %vm1453, %v2480, 0.0
    %2496 = vadd.xlane.f32.xlu0 %v2495
    %v2497 = vpop.xlane.xlu0 %2496
    %v2498 = vsel %vm1453, %v2482, 0.0
    %2499 = vadd.xlane.f32.xlu0 %v2498
    %v2500 = vpop.xlane.xlu0 %2499
    %v2501 = vsel %vm1453, %v2484, 0.0
    %2502 = vadd.xlane.f32.xlu0 %v2501
    %v2503 = vpop.xlane.xlu0 %2502
    %v2504 = vsel %vm1453, %v2486, 0.0
    %2505 = vadd.xlane.f32.xlu0 %v2504
    %v2506 = vpop.xlane.xlu0 %2505
    %v2507 = vsel %vm1453, %v2488, 0.0
    %2508 = vadd.xlane.f32.xlu0 %v2507
    %v2509 = vpop.xlane.xlu0 %2508
    %v2510 = vsel %vm1453, %v2490, 0.0
    %2511 = vadd.xlane.f32.xlu0 %v2510
    %v2512 = vpop.xlane.xlu0 %2511
    %v2513 = vsel %vm1453, %v2492, 0.0
    %2514 = vadd.xlane.f32.xlu0 %v2513
    %v2515 = vpop.xlane.xlu0 %2514
    %v2516 = vsel %vm1453, %v2494, 0.0
    %2517 = vadd.xlane.f32.xlu0 %v2516
    %v2518 = vpop.xlane.xlu0 %2517
    %v2519 = vrcp.pop %v2497
    %v2520 = vrcp.pop %v2500
    %v2521 = vrcp.pop %v2503
    %v2522 = vrcp.pop %v2506
    %v2523 = vrcp.pop %v2509
    %v2524 = vrcp.pop %v2512
    %v2525 = vrcp.pop %v2515
    %v2526 = vrcp.pop %v2518
    %v2527 = vmul.f32 %v2480, %v2519
    %v2528 = vmul.f32 %v2482, %v2520
    %v2529 = vmul.f32 %v2484, %v2521
    %v2530 = vmul.f32 %v2486, %v2522
    %v2531 = vmul.f32 %v2488, %v2523
    %v2532 = vmul.f32 %v2490, %v2524
    %v2533 = vmul.f32 %v2492, %v2525
    %v2534 = vmul.f32 %v2494, %v2526
    %v2535 = vpack.c.bf16 %v2528, %v2527
    %v2536 = vpack.c.bf16 %v2530, %v2529
    %v2537 = vpack.c.bf16 %v2532, %v2531
    %v2538 = vpack.c.bf16 %v2534, %v2533
    %2539 = vrot.lane.b32.xlu0 %v1955, 96
    %v2540 = vpop.permute.xlu0 %2539
    %2541 = vrot.lane.b32.xlu0 %v1956, 96
    %v2542 = vpop.permute.xlu0 %2541
    %2543 = vrot.lane.b32.xlu0 %v1957, 96
    %v2544 = vpop.permute.xlu0 %2543
    %2545 = vrot.lane.b32.xlu0 %v1958, 96
    %v2546 = vpop.permute.xlu0 %2545
    %v2552 = vsel %vm1453, %v2535, 0
    %v2555 = vsel %vm1453, %v2536, 0
    %v2558 = vsel %vm1453, %v2537, 0
    %v2561 = vsel %vm1453, %v2538, 0
    %2563 = vmatprep.subr.bf16.mxu0 0
    %2564 = vmatpush1.bf16.msra.mxu0 0
    %2565 = vmatprep.subr.bf16.mxu0 0
    %2566 = vmatpush1.bf16.msra.mxu0 0
    %2567 = vmatprep.subr.bf16.mxu0 0
    %2568 = vmatpush1.bf16.msra.mxu0 0
    %2569 = vmatprep.subr.bf16.mxu0 0
    %2570 = vmatpush1.bf16.msra.mxu0 0
    %2571 = vmatprep.subr.bf16.mxu0 0
    %2572 = vmatpush1.bf16.msra.mxu0 %v2546
    %2573 = vmatprep.subr.bf16.mxu0 0
    %2574 = vmatpush1.bf16.msra.mxu0 %v2544
    %2575 = vmatprep.subr.bf16.mxu0 0
    %2576 = vmatpush1.bf16.msra.mxu0 %v2542
    %2577 = vmatprep.subr.bf16.mxu0 0
    %2578 = vmatpush1.bf16.msra.mxu0 %v2540
    %2579 = vmatprep.subr.bf16.mxu0 0
    %2580 = vmatpush2.bf16.msra.mxu0 0
    %2581 = vmatprep.subr.bf16.mxu0 0
    %2582 = vmatpush2.bf16.msra.mxu0 0
    %2583 = vmatprep.subr.bf16.mxu0 0
    %2584 = vmatpush2.bf16.msra.mxu0 0
    %2585 = vmatprep.subr.bf16.mxu0 0
    %2586 = vmatpush2.bf16.msra.mxu0 0
    %2587 = vmatprep.subr.bf16.mxu0 0
    %2588 = vmatpush2.bf16.msra.mxu0 0
    %2589 = vmatprep.subr.bf16.mxu0 0
    %2590 = vmatpush2.bf16.msra.mxu0 0
    %2591 = vmatprep.subr.bf16.mxu0 0
    %2592 = vmatpush2.bf16.msra.mxu0 0
    %2593 = vmatprep.subr.bf16.mxu0 0
    %2594 = vmatpush2.bf16.msra.mxu0 0
    %2595 = vmatprep.mubr.bf16.mxu0 0
    %2596 = vmatmul.mubr.bf16.gmra.mxu0 %v2552
    %v2597 = vpop.f32.mrf.mxu0
    %v2598 = vadd.f32 0.0, %v2597
    %v2599 = vpop.f32.mrf.mxu0
    %v2600 = vpop.f32.mrf.mxu0
    %v2601 = vadd.f32 0.0, %v2600
    %v2602 = vpop.f32.mrf.mxu0
    %2603 = vmatprep.mubr.bf16.mxu0 0
    %2604 = vmatmul.mubr.bf16.gmra.mxu0 %v2555
    %v2605 = vpop.f32.mrf.mxu0
    %v2606 = vadd.f32 0.0, %v2605
    %v2607 = vpop.f32.mrf.mxu0
    %v2608 = vpop.f32.mrf.mxu0
    %v2609 = vadd.f32 0.0, %v2608
    %v2610 = vpop.f32.mrf.mxu0
    %2611 = vmatprep.mubr.bf16.mxu0 0
    %2612 = vmatmul.mubr.bf16.gmra.mxu0 %v2558
    %v2613 = vpop.f32.mrf.mxu0
    %v2614 = vadd.f32 0.0, %v2613
    %v2615 = vpop.f32.mrf.mxu0
    %v2616 = vpop.f32.mrf.mxu0
    %v2617 = vadd.f32 0.0, %v2616
    %v2618 = vpop.f32.mrf.mxu0
    %2619 = vmatprep.mubr.bf16.mxu0 0
    %2620 = vmatmul.mubr.bf16.gmra.mxu0 %v2561
    %v2621 = vpop.f32.mrf.mxu0
    %v2622 = vadd.f32 0.0, %v2621
    %v2623 = vpop.f32.mrf.mxu0
    %v2624 = vpop.f32.mrf.mxu0
    %v2625 = vadd.f32 0.0, %v2624
    %v2626 = vpop.f32.mrf.mxu0
    %2627 = vdwg.mxu0
    %2628 = vrot.lane.b32.xlu0 %v1737, 80
    %v2629 = vpop.permute.xlu0 %2628
    %2630 = vrot.lane.b32.xlu0 %v1738, 80
    %v2631 = vpop.permute.xlu0 %2630
    %2632 = vrot.lane.b32.xlu0 %v1739, 80
    %v2633 = vpop.permute.xlu0 %2632
    %2634 = vrot.lane.b32.xlu0 %v1740, 80
    %v2635 = vpop.permute.xlu0 %2634
    %2636 = vrot.lane.b32.xlu0 %v1737, 16
    %v2637 = vpop.permute.xlu0 %2636
    %2638 = vrot.lane.b32.xlu0 %v1738, 16
    %v2639 = vpop.permute.xlu0 %2638
    %2640 = vrot.lane.b32.xlu0 %v1739, 16
    %v2641 = vpop.permute.xlu0 %2640
    %2642 = vrot.lane.b32.xlu0 %v1740, 16
    %v2643 = vpop.permute.xlu0 %2642
    %v2645 = vsel %vm1749, %v2629, 0
    %v2648 = vsel %vm1749, %v2631, 0
    %v2651 = vsel %vm1749, %v2633, 0
    %v2654 = vsel %vm1749, %v2635, 0
    %v2657 = vsel %vm1749, %v2637, 0
    %v2660 = vsel %vm1749, %v2639, 0
    %v2663 = vsel %vm1749, %v2641, 0
    %v2666 = vsel %vm1749, %v2643, 0
    %2668 = vmatprep.subr.bf16.mxu0 0
    %2669 = vmatpush1.bf16.xpose.msra.mxu0 0
    %2670 = vmatprep.subr.bf16.mxu0 0
    %2671 = vmatpush1.bf16.xpose.msra.mxu0 0
    %2672 = vmatprep.subr.bf16.mxu0 0
    %2673 = vmatpush1.bf16.xpose.msra.mxu0 0
    %2674 = vmatprep.subr.bf16.mxu0 0
    %2675 = vmatpush1.bf16.xpose.msra.mxu0 0
    %2676 = vmatprep.subr.bf16.mxu0 0
    %2677 = vmatpush1.bf16.xpose.msra.mxu0 %v2666
    %2678 = vmatprep.subr.bf16.mxu0 0
    %2679 = vmatpush1.bf16.xpose.msra.mxu0 %v2663
    %2680 = vmatprep.subr.bf16.mxu0 0
    %2681 = vmatpush1.bf16.xpose.msra.mxu0 %v2660
    %2682 = vmatprep.subr.bf16.mxu0 0
    %2683 = vmatpush1.bf16.xpose.msra.mxu0 %v2657
    %2684 = vmatprep.subr.bf16.mxu0 0
    %2685 = vmatpush2.bf16.xpose.msra.mxu0 0
    %2686 = vmatprep.subr.bf16.mxu0 0
    %2687 = vmatpush2.bf16.xpose.msra.mxu0 0
    %2688 = vmatprep.subr.bf16.mxu0 0
    %2689 = vmatpush2.bf16.xpose.msra.mxu0 0
    %2690 = vmatprep.subr.bf16.mxu0 0
    %2691 = vmatpush2.bf16.xpose.msra.mxu0 0
    %2692 = vmatprep.subr.bf16.mxu0 0
    %2693 = vmatpush2.bf16.xpose.msra.mxu0 0
    %2694 = vmatprep.subr.bf16.mxu0 0
    %2695 = vmatpush2.bf16.xpose.msra.mxu0 0
    %2696 = vmatprep.subr.bf16.mxu0 0
    %2697 = vmatpush2.bf16.xpose.msra.mxu0 0
    %2698 = vmatprep.subr.bf16.mxu0 0
    %2699 = vmatpush2.bf16.xpose.msra.mxu0 0
    %2700 = vmatprep.mubr.bf16.mxu0 0
    %2701 = vmatmul.mubr.bf16.gmra.mxu0 %v2645
    %v2702 = vpop.f32.mrf.mxu0
    %v2703 = vadd.f32 0.0, %v2702
    %v2704 = vpop.f32.mrf.mxu0
    %v2705 = vpop.f32.mrf.mxu0
    %v2706 = vadd.f32 0.0, %v2705
    %v2707 = vpop.f32.mrf.mxu0
    %2708 = vmatprep.mubr.bf16.mxu0 0
    %2709 = vmatmul.mubr.bf16.gmra.mxu0 %v2648
    %v2710 = vpop.f32.mrf.mxu0
    %v2711 = vadd.f32 0.0, %v2710
    %v2712 = vpop.f32.mrf.mxu0
    %v2713 = vpop.f32.mrf.mxu0
    %v2714 = vadd.f32 0.0, %v2713
    %v2715 = vpop.f32.mrf.mxu0
    %2716 = vmatprep.mubr.bf16.mxu0 0
    %2717 = vmatmul.mubr.bf16.gmra.mxu0 %v2651
    %v2718 = vpop.f32.mrf.mxu0
    %v2719 = vadd.f32 0.0, %v2718
    %v2720 = vpop.f32.mrf.mxu0
    %v2721 = vpop.f32.mrf.mxu0
    %v2722 = vadd.f32 0.0, %v2721
    %v2723 = vpop.f32.mrf.mxu0
    %2724 = vmatprep.mubr.bf16.mxu0 0
    %2725 = vmatmul.mubr.bf16.gmra.mxu0 %v2654
    %v2726 = vpop.f32.mrf.mxu0
    %v2727 = vadd.f32 0.0, %v2726
    %v2728 = vpop.f32.mrf.mxu0
    %v2729 = vpop.f32.mrf.mxu0
    %v2730 = vadd.f32 0.0, %v2729
    %v2731 = vpop.f32.mrf.mxu0
    %2732 = vdwg.mxu0
    %v2733 = vmul.f32 %v2703, 0.25
    %v2734 = vmul.f32 %v2706, 0.25
    %v2735 = vmul.f32 %v2711, 0.25
    %v2736 = vmul.f32 %v2714, 0.25
    %v2737 = vmul.f32 %v2719, 0.25
    %v2738 = vmul.f32 %v2722, 0.25
    %v2739 = vmul.f32 %v2727, 0.25
    %v2740 = vmul.f32 %v2730, 0.25
    %v2741 = vsel %vm1453, %v2733, -inf
    %2742 = vmax.xlane.f32.xlu0 %v2741
    %v2743 = vpop.xlane.xlu0 %2742
    %v2744 = vsel %vm1453, %v2734, -inf
    %2745 = vmax.xlane.f32.xlu0 %v2744
    %v2746 = vpop.xlane.xlu0 %2745
    %v2747 = vsel %vm1453, %v2735, -inf
    %2748 = vmax.xlane.f32.xlu0 %v2747
    %v2749 = vpop.xlane.xlu0 %2748
    %v2750 = vsel %vm1453, %v2736, -inf
    %2751 = vmax.xlane.f32.xlu0 %v2750
    %v2752 = vpop.xlane.xlu0 %2751
    %v2753 = vsel %vm1453, %v2737, -inf
    %2754 = vmax.xlane.f32.xlu0 %v2753
    %v2755 = vpop.xlane.xlu0 %2754
    %v2756 = vsel %vm1453, %v2738, -inf
    %2757 = vmax.xlane.f32.xlu0 %v2756
    %v2758 = vpop.xlane.xlu0 %2757
    %v2759 = vsel %vm1453, %v2739, -inf
    %2760 = vmax.xlane.f32.xlu0 %v2759
    %v2761 = vpop.xlane.xlu0 %2760
    %v2762 = vsel %vm1453, %v2740, -inf
    %2763 = vmax.xlane.f32.xlu0 %v2762
    %v2764 = vpop.xlane.xlu0 %2763
    %v2765 = vsub.f32 %v2733, %v2743
    %v2766 = vsub.f32 %v2734, %v2746
    %v2767 = vsub.f32 %v2735, %v2749
    %v2768 = vsub.f32 %v2736, %v2752
    %v2769 = vsub.f32 %v2737, %v2755
    %v2770 = vsub.f32 %v2738, %v2758
    %v2771 = vsub.f32 %v2739, %v2761
    %v2772 = vsub.f32 %v2740, %v2764
    %v2773 = vmul.f32 %v2765, 1.442695
    %v2774 = vpow.pop %v2773
    %v2775 = vmul.f32 %v2766, 1.442695
    %v2776 = vpow.pop %v2775
    %v2777 = vmul.f32 %v2767, 1.442695
    %v2778 = vpow.pop %v2777
    %v2779 = vmul.f32 %v2768, 1.442695
    %v2780 = vpow.pop %v2779
    %v2781 = vmul.f32 %v2769, 1.442695
    %v2782 = vpow.pop %v2781
    %v2783 = vmul.f32 %v2770, 1.442695
    %v2784 = vpow.pop %v2783
    %v2785 = vmul.f32 %v2771, 1.442695
    %v2786 = vpow.pop %v2785
    %v2787 = vmul.f32 %v2772, 1.442695
    %v2788 = vpow.pop %v2787
    %v2789 = vsel %vm1453, %v2774, 0.0
    %2790 = vadd.xlane.f32.xlu0 %v2789
    %v2791 = vpop.xlane.xlu0 %2790
    %v2792 = vsel %vm1453, %v2776, 0.0
    %2793 = vadd.xlane.f32.xlu0 %v2792
    %v2794 = vpop.xlane.xlu0 %2793
    %v2795 = vsel %vm1453, %v2778, 0.0
    %2796 = vadd.xlane.f32.xlu0 %v2795
    %v2797 = vpop.xlane.xlu0 %2796
    %v2798 = vsel %vm1453, %v2780, 0.0
    %2799 = vadd.xlane.f32.xlu0 %v2798
    %v2800 = vpop.xlane.xlu0 %2799
    %v2801 = vsel %vm1453, %v2782, 0.0
    %2802 = vadd.xlane.f32.xlu0 %v2801
    %v2803 = vpop.xlane.xlu0 %2802
    %v2804 = vsel %vm1453, %v2784, 0.0
    %2805 = vadd.xlane.f32.xlu0 %v2804
    %v2806 = vpop.xlane.xlu0 %2805
    %v2807 = vsel %vm1453, %v2786, 0.0
    %2808 = vadd.xlane.f32.xlu0 %v2807
    %v2809 = vpop.xlane.xlu0 %2808
    %v2810 = vsel %vm1453, %v2788, 0.0
    %2811 = vadd.xlane.f32.xlu0 %v2810
    %v2812 = vpop.xlane.xlu0 %2811
    %v2813 = vrcp.pop %v2791
    %v2814 = vrcp.pop %v2794
    %v2815 = vrcp.pop %v2797
    %v2816 = vrcp.pop %v2800
    %v2817 = vrcp.pop %v2803
    %v2818 = vrcp.pop %v2806
    %v2819 = vrcp.pop %v2809
    %v2820 = vrcp.pop %v2812
    %v2821 = vmul.f32 %v2774, %v2813
    %v2822 = vmul.f32 %v2776, %v2814
    %v2823 = vmul.f32 %v2778, %v2815
    %v2824 = vmul.f32 %v2780, %v2816
    %v2825 = vmul.f32 %v2782, %v2817
    %v2826 = vmul.f32 %v2784, %v2818
    %v2827 = vmul.f32 %v2786, %v2819
    %v2828 = vmul.f32 %v2788, %v2820
    %v2829 = vpack.c.bf16 %v2822, %v2821
    %v2830 = vpack.c.bf16 %v2824, %v2823
    %v2831 = vpack.c.bf16 %v2826, %v2825
    %v2832 = vpack.c.bf16 %v2828, %v2827
    %2833 = vrot.lane.b32.xlu0 %v1955, 80
    %v2834 = vpop.permute.xlu0 %2833
    %2835 = vrot.lane.b32.xlu0 %v1956, 80
    %v2836 = vpop.permute.xlu0 %2835
    %2837 = vrot.lane.b32.xlu0 %v1957, 80
    %v2838 = vpop.permute.xlu0 %2837
    %2839 = vrot.lane.b32.xlu0 %v1958, 80
    %v2840 = vpop.permute.xlu0 %2839
    %v2846 = vsel %vm1453, %v2829, 0
    %v2849 = vsel %vm1453, %v2830, 0
    %v2852 = vsel %vm1453, %v2831, 0
    %v2855 = vsel %vm1453, %v2832, 0
    %2857 = vmatprep.subr.bf16.mxu0 0
    %2858 = vmatpush1.bf16.msra.mxu0 0
    %2859 = vmatprep.subr.bf16.mxu0 0
    %2860 = vmatpush1.bf16.msra.mxu0 0
    %2861 = vmatprep.subr.bf16.mxu0 0
    %2862 = vmatpush1.bf16.msra.mxu0 0
    %2863 = vmatprep.subr.bf16.mxu0 0
    %2864 = vmatpush1.bf16.msra.mxu0 0
    %2865 = vmatprep.subr.bf16.mxu0 0
    %2866 = vmatpush1.bf16.msra.mxu0 %v2840
    %2867 = vmatprep.subr.bf16.mxu0 0
    %2868 = vmatpush1.bf16.msra.mxu0 %v2838
    %2869 = vmatprep.subr.bf16.mxu0 0
    %2870 = vmatpush1.bf16.msra.mxu0 %v2836
    %2871 = vmatprep.subr.bf16.mxu0 0
    %2872 = vmatpush1.bf16.msra.mxu0 %v2834
    %2873 = vmatprep.subr.bf16.mxu0 0
    %2874 = vmatpush2.bf16.msra.mxu0 0
    %2875 = vmatprep.subr.bf16.mxu0 0
    %2876 = vmatpush2.bf16.msra.mxu0 0
    %2877 = vmatprep.subr.bf16.mxu0 0
    %2878 = vmatpush2.bf16.msra.mxu0 0
    %2879 = vmatprep.subr.bf16.mxu0 0
    %2880 = vmatpush2.bf16.msra.mxu0 0
    %2881 = vmatprep.subr.bf16.mxu0 0
    %2882 = vmatpush2.bf16.msra.mxu0 0
    %2883 = vmatprep.subr.bf16.mxu0 0
    %2884 = vmatpush2.bf16.msra.mxu0 0
    %2885 = vmatprep.subr.bf16.mxu0 0
    %2886 = vmatpush2.bf16.msra.mxu0 0
    %2887 = vmatprep.subr.bf16.mxu0 0
    %2888 = vmatpush2.bf16.msra.mxu0 0
    %2889 = vmatprep.mubr.bf16.mxu0 0
    %2890 = vmatmul.mubr.bf16.gmra.mxu0 %v2846
    %v2891 = vpop.f32.mrf.mxu0
    %v2892 = vadd.f32 0.0, %v2891
    %v2893 = vpop.f32.mrf.mxu0
    %v2894 = vpop.f32.mrf.mxu0
    %v2895 = vadd.f32 0.0, %v2894
    %v2896 = vpop.f32.mrf.mxu0
    %2897 = vmatprep.mubr.bf16.mxu0 0
    %2898 = vmatmul.mubr.bf16.gmra.mxu0 %v2849
    %v2899 = vpop.f32.mrf.mxu0
    %v2900 = vadd.f32 0.0, %v2899
    %v2901 = vpop.f32.mrf.mxu0
    %v2902 = vpop.f32.mrf.mxu0
    %v2903 = vadd.f32 0.0, %v2902
    %v2904 = vpop.f32.mrf.mxu0
    %2905 = vmatprep.mubr.bf16.mxu0 0
    %2906 = vmatmul.mubr.bf16.gmra.mxu0 %v2852
    %v2907 = vpop.f32.mrf.mxu0
    %v2908 = vadd.f32 0.0, %v2907
    %v2909 = vpop.f32.mrf.mxu0
    %v2910 = vpop.f32.mrf.mxu0
    %v2911 = vadd.f32 0.0, %v2910
    %v2912 = vpop.f32.mrf.mxu0
    %2913 = vmatprep.mubr.bf16.mxu0 0
    %2914 = vmatmul.mubr.bf16.gmra.mxu0 %v2855
    %v2915 = vpop.f32.mrf.mxu0
    %v2916 = vadd.f32 0.0, %v2915
    %v2917 = vpop.f32.mrf.mxu0
    %v2918 = vpop.f32.mrf.mxu0
    %v2919 = vadd.f32 0.0, %v2918
    %v2920 = vpop.f32.mrf.mxu0
    %2921 = vdwg.mxu0
    %2930 = vrot.lane.b32.xlu0 %v2304, 16
    %v2931 = vpop.permute.xlu0 %2930
    %2932 = vrot.lane.b32.xlu0 %v2307, 16
    %v2933 = vpop.permute.xlu0 %2932
    %2934 = vrot.lane.b32.xlu0 %v2312, 16
    %v2935 = vpop.permute.xlu0 %2934
    %2936 = vrot.lane.b32.xlu0 %v2315, 16
    %v2937 = vpop.permute.xlu0 %2936
    %2938 = vrot.lane.b32.xlu0 %v2320, 16
    %v2939 = vpop.permute.xlu0 %2938
    %2940 = vrot.lane.b32.xlu0 %v2323, 16
    %v2941 = vpop.permute.xlu0 %2940
    %2942 = vrot.lane.b32.xlu0 %v2328, 16
    %v2943 = vpop.permute.xlu0 %2942
    %2944 = vrot.lane.b32.xlu0 %v2331, 16
    %v2945 = vpop.permute.xlu0 %2944
    %2962 = vrot.lane.b32.xlu0 %v2598, 32
    %v2963 = vpop.permute.xlu0 %2962
    %2964 = vrot.lane.b32.xlu0 %v2601, 32
    %v2965 = vpop.permute.xlu0 %2964
    %2966 = vrot.lane.b32.xlu0 %v2606, 32
    %v2967 = vpop.permute.xlu0 %2966
    %2968 = vrot.lane.b32.xlu0 %v2609, 32
    %v2969 = vpop.permute.xlu0 %2968
    %2970 = vrot.lane.b32.xlu0 %v2614, 32
    %v2971 = vpop.permute.xlu0 %2970
    %2972 = vrot.lane.b32.xlu0 %v2617, 32
    %v2973 = vpop.permute.xlu0 %2972
    %2974 = vrot.lane.b32.xlu0 %v2622, 32
    %v2975 = vpop.permute.xlu0 %2974
    %2976 = vrot.lane.b32.xlu0 %v2625, 32
    %v2977 = vpop.permute.xlu0 %2976
    %2994 = vrot.lane.b32.xlu0 %v2892, 48
    %v2995 = vpop.permute.xlu0 %2994
    %2996 = vrot.lane.b32.xlu0 %v2895, 48
    %v2997 = vpop.permute.xlu0 %2996
    %2998 = vrot.lane.b32.xlu0 %v2900, 48
    %v2999 = vpop.permute.xlu0 %2998
    %3000 = vrot.lane.b32.xlu0 %v2903, 48
    %v3001 = vpop.permute.xlu0 %3000
    %3002 = vrot.lane.b32.xlu0 %v2908, 48
    %v3003 = vpop.permute.xlu0 %3002
    %3004 = vrot.lane.b32.xlu0 %v2911, 48
    %v3005 = vpop.permute.xlu0 %3004
    %3006 = vrot.lane.b32.xlu0 %v2916, 48
    %v3007 = vpop.permute.xlu0 %3006
    %3008 = vrot.lane.b32.xlu0 %v2919, 48
    %v3009 = vpop.permute.xlu0 %3008
    %v3018 = vsel %vm1749, %v2010, %v2931
    %v3019 = vsel %vm1749, %v2013, %v2933
    %v3020 = vsel %vm1749, %v2018, %v2935
    %v3021 = vsel %vm1749, %v2021, %v2937
    %v3022 = vsel %vm1749, %v2026, %v2939
    %v3023 = vsel %vm1749, %v2029, %v2941
    %v3024 = vsel %vm1749, %v2034, %v2943
    %v3025 = vsel %vm1749, %v2037, %v2945
    %v3026 = vsel %vm101, %v3018, %v2963
    %v3027 = vsel %vm101, %v3019, %v2965
    %v3028 = vsel %vm101, %v3020, %v2967
    %v3029 = vsel %vm101, %v3021, %v2969
    %v3030 = vsel %vm101, %v3022, %v2971
    %v3031 = vsel %vm101, %v3023, %v2973
    %v3032 = vsel %vm101, %v3024, %v2975
    %v3033 = vsel %vm101, %v3025, %v2977
    %vm3034 = vcmask 392192
    %v3035 = vsel %vm3034, %v3026, %v2995
    %v3036 = vsel %vm3034, %v3027, %v2997
    %v3037 = vsel %vm3034, %v3028, %v2999
    %v3038 = vsel %vm3034, %v3029, %v3001
    %v3039 = vsel %vm3034, %v3030, %v3003
    %v3040 = vsel %vm3034, %v3031, %v3005
    %v3041 = vsel %vm3034, %v3032, %v3007
    %v3042 = vsel %vm3034, %v3033, %v3009
    %v3043 = vld [vmem:[#allocation3 + $0x40] sm:$0xf]
    %v3044 = vld [vmem:[#allocation3 + $0x48] sm:$0xf]
    %v3045 = vld [vmem:[#allocation3 + $0x50] sm:$0xf]
    %v3046 = vld [vmem:[#allocation3 + $0x58] sm:$0xf]
    %v3047 = vld [vmem:[#allocation3 + $0x60] sm:$0xf]
    %v3048 = vld [vmem:[#allocation3 + $0x68] sm:$0xf]
    %v3049 = vld [vmem:[#allocation3 + $0x70] sm:$0xf]
    %v3050 = vld [vmem:[#allocation3 + $0x78] sm:$0xf]
    %v3051 = vld [vmem:[#allocation3 + $0x44] sm:$0xf]
    %v3052 = vld [vmem:[#allocation3 + $0x4c] sm:$0xf]
    %v3053 = vld [vmem:[#allocation3 + $0x54] sm:$0xf]
    %v3054 = vld [vmem:[#allocation3 + $0x5c] sm:$0xf]
    %v3055 = vld [vmem:[#allocation3 + $0x64] sm:$0xf]
    %v3056 = vld [vmem:[#allocation3 + $0x6c] sm:$0xf]
    %v3057 = vld [vmem:[#allocation3 + $0x74] sm:$0xf]
    %v3058 = vld [vmem:[#allocation3 + $0x7c] sm:$0xf]
    %v3067 = vunpack.c.l.b16 %v3043
    %v3068 = vunpack.c.l.b16 %v3044
    %v3069 = vunpack.c.l.b16 %v3045
    %v3070 = vunpack.c.l.b16 %v3046
    %v3071 = vunpack.c.l.b16 %v3047
    %v3072 = vunpack.c.l.b16 %v3048
    %v3073 = vunpack.c.l.b16 %v3049
    %v3074 = vunpack.c.l.b16 %v3050
    %v3075 = vpack.c.b16 %v3068, %v3067
    %v3076 = vpack.c.b16 %v3070, %v3069
    %v3077 = vpack.c.b16 %v3072, %v3071
    %v3078 = vpack.c.b16 %v3074, %v3073
    %3079 = vrot.lane.b32.xlu0 %v3075, 64
    %v3080 = vpop.permute.xlu0 %3079
    %3081 = vrot.lane.b32.xlu0 %v3076, 64
    %v3082 = vpop.permute.xlu0 %3081
    %3083 = vrot.lane.b32.xlu0 %v3077, 64
    %v3084 = vpop.permute.xlu0 %3083
    %3085 = vrot.lane.b32.xlu0 %v3078, 64
    %v3086 = vpop.permute.xlu0 %3085
    %v3088 = vsel %vm1749, %v3075, 0
    %v3091 = vsel %vm1749, %v3076, 0
    %v3094 = vsel %vm1749, %v3077, 0
    %v3097 = vsel %vm1749, %v3078, 0
    %v3100 = vsel %vm1749, %v3080, 0
    %v3103 = vsel %vm1749, %v3082, 0
    %v3106 = vsel %vm1749, %v3084, 0
    %v3109 = vsel %vm1749, %v3086, 0
    %3111 = vmatprep.subr.bf16.mxu0 0
    %3112 = vmatpush1.bf16.xpose.msra.mxu0 0
    %3113 = vmatprep.subr.bf16.mxu0 0
    %3114 = vmatpush1.bf16.xpose.msra.mxu0 0
    %3115 = vmatprep.subr.bf16.mxu0 0
    %3116 = vmatpush1.bf16.xpose.msra.mxu0 0
    %3117 = vmatprep.subr.bf16.mxu0 0
    %3118 = vmatpush1.bf16.xpose.msra.mxu0 0
    %3119 = vmatprep.subr.bf16.mxu0 0
    %3120 = vmatpush1.bf16.xpose.msra.mxu0 %v3109
    %3121 = vmatprep.subr.bf16.mxu0 0
    %3122 = vmatpush1.bf16.xpose.msra.mxu0 %v3106
    %3123 = vmatprep.subr.bf16.mxu0 0
    %3124 = vmatpush1.bf16.xpose.msra.mxu0 %v3103
    %3125 = vmatprep.subr.bf16.mxu0 0
    %3126 = vmatpush1.bf16.xpose.msra.mxu0 %v3100
    %3127 = vmatprep.subr.bf16.mxu0 0
    %3128 = vmatpush2.bf16.xpose.msra.mxu0 0
    %3129 = vmatprep.subr.bf16.mxu0 0
    %3130 = vmatpush2.bf16.xpose.msra.mxu0 0
    %3131 = vmatprep.subr.bf16.mxu0 0
    %3132 = vmatpush2.bf16.xpose.msra.mxu0 0
    %3133 = vmatprep.subr.bf16.mxu0 0
    %3134 = vmatpush2.bf16.xpose.msra.mxu0 0
    %3135 = vmatprep.subr.bf16.mxu0 0
    %3136 = vmatpush2.bf16.xpose.msra.mxu0 0
    %3137 = vmatprep.subr.bf16.mxu0 0
    %3138 = vmatpush2.bf16.xpose.msra.mxu0 0
    %3139 = vmatprep.subr.bf16.mxu0 0
    %3140 = vmatpush2.bf16.xpose.msra.mxu0 0
    %3141 = vmatprep.subr.bf16.mxu0 0
    %3142 = vmatpush2.bf16.xpose.msra.mxu0 0
    %3143 = vmatprep.mubr.bf16.mxu0 0
    %3144 = vmatmul.mubr.bf16.gmra.mxu0 %v3088
    %v3145 = vpop.f32.mrf.mxu0
    %v3146 = vadd.f32 0.0, %v3145
    %v3147 = vpop.f32.mrf.mxu0
    %v3148 = vpop.f32.mrf.mxu0
    %v3149 = vadd.f32 0.0, %v3148
    %v3150 = vpop.f32.mrf.mxu0
    %3151 = vmatprep.mubr.bf16.mxu0 0
    %3152 = vmatmul.mubr.bf16.gmra.mxu0 %v3091
    %v3153 = vpop.f32.mrf.mxu0
    %v3154 = vadd.f32 0.0, %v3153
    %v3155 = vpop.f32.mrf.mxu0
    %v3156 = vpop.f32.mrf.mxu0
    %v3157 = vadd.f32 0.0, %v3156
    %v3158 = vpop.f32.mrf.mxu0
    %3159 = vmatprep.mubr.bf16.mxu0 0
    %3160 = vmatmul.mubr.bf16.gmra.mxu0 %v3094
    %v3161 = vpop.f32.mrf.mxu0
    %v3162 = vadd.f32 0.0, %v3161
    %v3163 = vpop.f32.mrf.mxu0
    %v3164 = vpop.f32.mrf.mxu0
    %v3165 = vadd.f32 0.0, %v3164
    %v3166 = vpop.f32.mrf.mxu0
    %3167 = vmatprep.mubr.bf16.mxu0 0
    %3168 = vmatmul.mubr.bf16.gmra.mxu0 %v3097
    %v3169 = vpop.f32.mrf.mxu0
    %v3170 = vadd.f32 0.0, %v3169
    %v3171 = vpop.f32.mrf.mxu0
    %v3172 = vpop.f32.mrf.mxu0
    %v3173 = vadd.f32 0.0, %v3172
    %v3174 = vpop.f32.mrf.mxu0
    %3175 = vdwg.mxu0
    %v3176 = vmul.f32 %v3146, 0.25
    %v3177 = vmul.f32 %v3149, 0.25
    %v3178 = vmul.f32 %v3154, 0.25
    %v3179 = vmul.f32 %v3157, 0.25
    %v3180 = vmul.f32 %v3162, 0.25
    %v3181 = vmul.f32 %v3165, 0.25
    %v3182 = vmul.f32 %v3170, 0.25
    %v3183 = vmul.f32 %v3173, 0.25
    %v3184 = vsel %vm1453, %v3176, -inf
    %3185 = vmax.xlane.f32.xlu0 %v3184
    %v3186 = vpop.xlane.xlu0 %3185
    %v3187 = vsel %vm1453, %v3177, -inf
    %3188 = vmax.xlane.f32.xlu0 %v3187
    %v3189 = vpop.xlane.xlu0 %3188
    %v3190 = vsel %vm1453, %v3178, -inf
    %3191 = vmax.xlane.f32.xlu0 %v3190
    %v3192 = vpop.xlane.xlu0 %3191
    %v3193 = vsel %vm1453, %v3179, -inf
    %3194 = vmax.xlane.f32.xlu0 %v3193
    %v3195 = vpop.xlane.xlu0 %3194
    %v3196 = vsel %vm1453, %v3180, -inf
    %3197 = vmax.xlane.f32.xlu0 %v3196
    %v3198 = vpop.xlane.xlu0 %3197
    %v3199 = vsel %vm1453, %v3181, -inf
    %3200 = vmax.xlane.f32.xlu0 %v3199
    %v3201 = vpop.xlane.xlu0 %3200
    %v3202 = vsel %vm1453, %v3182, -inf
    %3203 = vmax.xlane.f32.xlu0 %v3202
    %v3204 = vpop.xlane.xlu0 %3203
    %v3205 = vsel %vm1453, %v3183, -inf
    %3206 = vmax.xlane.f32.xlu0 %v3205
    %v3207 = vpop.xlane.xlu0 %3206
    %v3208 = vsub.f32 %v3176, %v3186
    %v3209 = vsub.f32 %v3177, %v3189
    %v3210 = vsub.f32 %v3178, %v3192
    %v3211 = vsub.f32 %v3179, %v3195
    %v3212 = vsub.f32 %v3180, %v3198
    %v3213 = vsub.f32 %v3181, %v3201
    %v3214 = vsub.f32 %v3182, %v3204
    %v3215 = vsub.f32 %v3183, %v3207
    %v3216 = vmul.f32 %v3208, 1.442695
    %v3217 = vpow.pop %v3216
    %v3218 = vmul.f32 %v3209, 1.442695
    %v3219 = vpow.pop %v3218
    %v3220 = vmul.f32 %v3210, 1.442695
    %v3221 = vpow.pop %v3220
    %v3222 = vmul.f32 %v3211, 1.442695
    %v3223 = vpow.pop %v3222
    %v3224 = vmul.f32 %v3212, 1.442695
    %v3225 = vpow.pop %v3224
    %v3226 = vmul.f32 %v3213, 1.442695
    %v3227 = vpow.pop %v3226
    %v3228 = vmul.f32 %v3214, 1.442695
    %v3229 = vpow.pop %v3228
    %v3230 = vmul.f32 %v3215, 1.442695
    %v3231 = vpow.pop %v3230
    %v3232 = vsel %vm1453, %v3217, 0.0
    %3233 = vadd.xlane.f32.xlu0 %v3232
    %v3234 = vpop.xlane.xlu0 %3233
    %v3235 = vsel %vm1453, %v3219, 0.0
    %3236 = vadd.xlane.f32.xlu0 %v3235
    %v3237 = vpop.xlane.xlu0 %3236
    %v3238 = vsel %vm1453, %v3221, 0.0
    %3239 = vadd.xlane.f32.xlu0 %v3238
    %v3240 = vpop.xlane.xlu0 %3239
    %v3241 = vsel %vm1453, %v3223, 0.0
    %3242 = vadd.xlane.f32.xlu0 %v3241
    %v3243 = vpop.xlane.xlu0 %3242
    %v3244 = vsel %vm1453, %v3225, 0.0
    %3245 = vadd.xlane.f32.xlu0 %v3244
    %v3246 = vpop.xlane.xlu0 %3245
    %v3247 = vsel %vm1453, %v3227, 0.0
    %3248 = vadd.xlane.f32.xlu0 %v3247
    %v3249 = vpop.xlane.xlu0 %3248
    %v3250 = vsel %vm1453, %v3229, 0.0
    %3251 = vadd.xlane.f32.xlu0 %v3250
    %v3252 = vpop.xlane.xlu0 %3251
    %v3253 = vsel %vm1453, %v3231, 0.0
    %3254 = vadd.xlane.f32.xlu0 %v3253
    %v3255 = vpop.xlane.xlu0 %3254
    %v3256 = vrcp.pop %v3234
    %v3257 = vrcp.pop %v3237
    %v3258 = vrcp.pop %v3240
    %v3259 = vrcp.pop %v3243
    %v3260 = vrcp.pop %v3246
    %v3261 = vrcp.pop %v3249
    %v3262 = vrcp.pop %v3252
    %v3263 = vrcp.pop %v3255
    %v3264 = vmul.f32 %v3217, %v3256
    %v3265 = vmul.f32 %v3219, %v3257
    %v3266 = vmul.f32 %v3221, %v3258
    %v3267 = vmul.f32 %v3223, %v3259
    %v3268 = vmul.f32 %v3225, %v3260
    %v3269 = vmul.f32 %v3227, %v3261
    %v3270 = vmul.f32 %v3229, %v3262
    %v3271 = vmul.f32 %v3231, %v3263
    %v3272 = vpack.c.bf16 %v3265, %v3264
    %v3273 = vpack.c.bf16 %v3267, %v3266
    %v3274 = vpack.c.bf16 %v3269, %v3268
    %v3275 = vpack.c.bf16 %v3271, %v3270
    %v3284 = vunpack.c.l.b16 %v3051
    %v3285 = vunpack.c.l.b16 %v3052
    %v3286 = vunpack.c.l.b16 %v3053
    %v3287 = vunpack.c.l.b16 %v3054
    %v3288 = vunpack.c.l.b16 %v3055
    %v3289 = vunpack.c.l.b16 %v3056
    %v3290 = vunpack.c.l.b16 %v3057
    %v3291 = vunpack.c.l.b16 %v3058
    %v3292 = vpack.c.b16 %v3285, %v3284
    %v3293 = vpack.c.b16 %v3287, %v3286
    %v3294 = vpack.c.b16 %v3289, %v3288
    %v3295 = vpack.c.b16 %v3291, %v3290
    %v3301 = vsel %vm1453, %v3272, 0
    %v3304 = vsel %vm1453, %v3273, 0
    %v3307 = vsel %vm1453, %v3274, 0
    %v3310 = vsel %vm1453, %v3275, 0
    %3312 = vmatprep.subr.bf16.mxu0 0
    %3313 = vmatpush1.bf16.msra.mxu0 0
    %3314 = vmatprep.subr.bf16.mxu0 0
    %3315 = vmatpush1.bf16.msra.mxu0 0
    %3316 = vmatprep.subr.bf16.mxu0 0
    %3317 = vmatpush1.bf16.msra.mxu0 0
    %3318 = vmatprep.subr.bf16.mxu0 0
    %3319 = vmatpush1.bf16.msra.mxu0 0
    %3320 = vmatprep.subr.bf16.mxu0 0
    %3321 = vmatpush1.bf16.msra.mxu0 %v3295
    %3322 = vmatprep.subr.bf16.mxu0 0
    %3323 = vmatpush1.bf16.msra.mxu0 %v3294
    %3324 = vmatprep.subr.bf16.mxu0 0
    %3325 = vmatpush1.bf16.msra.mxu0 %v3293
    %3326 = vmatprep.subr.bf16.mxu0 0
    %3327 = vmatpush1.bf16.msra.mxu0 %v3292
    %3328 = vmatprep.subr.bf16.mxu0 0
    %3329 = vmatpush2.bf16.msra.mxu0 0
    %3330 = vmatprep.subr.bf16.mxu0 0
    %3331 = vmatpush2.bf16.msra.mxu0 0
    %3332 = vmatprep.subr.bf16.mxu0 0
    %3333 = vmatpush2.bf16.msra.mxu0 0
    %3334 = vmatprep.subr.bf16.mxu0 0
    %3335 = vmatpush2.bf16.msra.mxu0 0
    %3336 = vmatprep.subr.bf16.mxu0 0
    %3337 = vmatpush2.bf16.msra.mxu0 0
    %3338 = vmatprep.subr.bf16.mxu0 0
    %3339 = vmatpush2.bf16.msra.mxu0 0
    %3340 = vmatprep.subr.bf16.mxu0 0
    %3341 = vmatpush2.bf16.msra.mxu0 0
    %3342 = vmatprep.subr.bf16.mxu0 0
    %3343 = vmatpush2.bf16.msra.mxu0 0
    %3344 = vmatprep.mubr.bf16.mxu0 0
    %3345 = vmatmul.mubr.bf16.gmra.mxu0 %v3301
    %v3346 = vpop.f32.mrf.mxu0
    %v3347 = vadd.f32 0.0, %v3346
    %v3348 = vpop.f32.mrf.mxu0
    %v3349 = vpop.f32.mrf.mxu0
    %v3350 = vadd.f32 0.0, %v3349
    %v3351 = vpop.f32.mrf.mxu0
    %3352 = vmatprep.mubr.bf16.mxu0 0
    %3353 = vmatmul.mubr.bf16.gmra.mxu0 %v3304
    %v3354 = vpop.f32.mrf.mxu0
    %v3355 = vadd.f32 0.0, %v3354
    %v3356 = vpop.f32.mrf.mxu0
    %v3357 = vpop.f32.mrf.mxu0
    %v3358 = vadd.f32 0.0, %v3357
    %v3359 = vpop.f32.mrf.mxu0
    %3360 = vmatprep.mubr.bf16.mxu0 0
    %3361 = vmatmul.mubr.bf16.gmra.mxu0 %v3307
    %v3362 = vpop.f32.mrf.mxu0
    %v3363 = vadd.f32 0.0, %v3362
    %v3364 = vpop.f32.mrf.mxu0
    %v3365 = vpop.f32.mrf.mxu0
    %v3366 = vadd.f32 0.0, %v3365
    %v3367 = vpop.f32.mrf.mxu0
    %3368 = vmatprep.mubr.bf16.mxu0 0
    %3369 = vmatmul.mubr.bf16.gmra.mxu0 %v3310
    %v3370 = vpop.f32.mrf.mxu0
    %v3371 = vadd.f32 0.0, %v3370
    %v3372 = vpop.f32.mrf.mxu0
    %v3373 = vpop.f32.mrf.mxu0
    %v3374 = vadd.f32 0.0, %v3373
    %v3375 = vpop.f32.mrf.mxu0
    %3376 = vdwg.mxu0
    %3377 = vrot.lane.b32.xlu0 %v3075, 112
    %v3378 = vpop.permute.xlu0 %3377
    %3379 = vrot.lane.b32.xlu0 %v3076, 112
    %v3380 = vpop.permute.xlu0 %3379
    %3381 = vrot.lane.b32.xlu0 %v3077, 112
    %v3382 = vpop.permute.xlu0 %3381
    %3383 = vrot.lane.b32.xlu0 %v3078, 112
    %v3384 = vpop.permute.xlu0 %3383
    %3385 = vrot.lane.b32.xlu0 %v3075, 48
    %v3386 = vpop.permute.xlu0 %3385
    %3387 = vrot.lane.b32.xlu0 %v3076, 48
    %v3388 = vpop.permute.xlu0 %3387
    %3389 = vrot.lane.b32.xlu0 %v3077, 48
    %v3390 = vpop.permute.xlu0 %3389
    %3391 = vrot.lane.b32.xlu0 %v3078, 48
    %v3392 = vpop.permute.xlu0 %3391
    %v3394 = vsel %vm1749, %v3378, 0
    %v3397 = vsel %vm1749, %v3380, 0
    %v3400 = vsel %vm1749, %v3382, 0
    %v3403 = vsel %vm1749, %v3384, 0
    %v3406 = vsel %vm1749, %v3386, 0
    %v3409 = vsel %vm1749, %v3388, 0
    %v3412 = vsel %vm1749, %v3390, 0
    %v3415 = vsel %vm1749, %v3392, 0
    %3417 = vmatprep.subr.bf16.mxu0 0
    %3418 = vmatpush1.bf16.xpose.msra.mxu0 0
    %3419 = vmatprep.subr.bf16.mxu0 0
    %3420 = vmatpush1.bf16.xpose.msra.mxu0 0
    %3421 = vmatprep.subr.bf16.mxu0 0
    %3422 = vmatpush1.bf16.xpose.msra.mxu0 0
    %3423 = vmatprep.subr.bf16.mxu0 0
    %3424 = vmatpush1.bf16.xpose.msra.mxu0 0
    %3425 = vmatprep.subr.bf16.mxu0 0
    %3426 = vmatpush1.bf16.xpose.msra.mxu0 %v3415
    %3427 = vmatprep.subr.bf16.mxu0 0
    %3428 = vmatpush1.bf16.xpose.msra.mxu0 %v3412
    %3429 = vmatprep.subr.bf16.mxu0 0
    %3430 = vmatpush1.bf16.xpose.msra.mxu0 %v3409
    %3431 = vmatprep.subr.bf16.mxu0 0
    %3432 = vmatpush1.bf16.xpose.msra.mxu0 %v3406
    %3433 = vmatprep.subr.bf16.mxu0 0
    %3434 = vmatpush2.bf16.xpose.msra.mxu0 0
    %3435 = vmatprep.subr.bf16.mxu0 0
    %3436 = vmatpush2.bf16.xpose.msra.mxu0 0
    %3437 = vmatprep.subr.bf16.mxu0 0
    %3438 = vmatpush2.bf16.xpose.msra.mxu0 0
    %3439 = vmatprep.subr.bf16.mxu0 0
    %3440 = vmatpush2.bf16.xpose.msra.mxu0 0
    %3441 = vmatprep.subr.bf16.mxu0 0
    %3442 = vmatpush2.bf16.xpose.msra.mxu0 0
    %3443 = vmatprep.subr.bf16.mxu0 0
    %3444 = vmatpush2.bf16.xpose.msra.mxu0 0
    %3445 = vmatprep.subr.bf16.mxu0 0
    %3446 = vmatpush2.bf16.xpose.msra.mxu0 0
    %3447 = vmatprep.subr.bf16.mxu0 0
    %3448 = vmatpush2.bf16.xpose.msra.mxu0 0
    %3449 = vmatprep.mubr.bf16.mxu0 0
    %3450 = vmatmul.mubr.bf16.gmra.mxu0 %v3394
    %v3451 = vpop.f32.mrf.mxu0
    %v3452 = vadd.f32 0.0, %v3451
    %v3453 = vpop.f32.mrf.mxu0
    %v3454 = vpop.f32.mrf.mxu0
    %v3455 = vadd.f32 0.0, %v3454
    %v3456 = vpop.f32.mrf.mxu0
    %3457 = vmatprep.mubr.bf16.mxu0 0
    %3458 = vmatmul.mubr.bf16.gmra.mxu0 %v3397
    %v3459 = vpop.f32.mrf.mxu0
    %v3460 = vadd.f32 0.0, %v3459
    %v3461 = vpop.f32.mrf.mxu0
    %v3462 = vpop.f32.mrf.mxu0
    %v3463 = vadd.f32 0.0, %v3462
    %v3464 = vpop.f32.mrf.mxu0
    %3465 = vmatprep.mubr.bf16.mxu0 0
    %3466 = vmatmul.mubr.bf16.gmra.mxu0 %v3400
    %v3467 = vpop.f32.mrf.mxu0
    %v3468 = vadd.f32 0.0, %v3467
    %v3469 = vpop.f32.mrf.mxu0
    %v3470 = vpop.f32.mrf.mxu0
    %v3471 = vadd.f32 0.0, %v3470
    %v3472 = vpop.f32.mrf.mxu0
    %3473 = vmatprep.mubr.bf16.mxu0 0
    %3474 = vmatmul.mubr.bf16.gmra.mxu0 %v3403
    %v3475 = vpop.f32.mrf.mxu0
    %v3476 = vadd.f32 0.0, %v3475
    %v3477 = vpop.f32.mrf.mxu0
    %v3478 = vpop.f32.mrf.mxu0
    %v3479 = vadd.f32 0.0, %v3478
    %v3480 = vpop.f32.mrf.mxu0
    %3481 = vdwg.mxu0
    %v3482 = vmul.f32 %v3452, 0.25
    %v3483 = vmul.f32 %v3455, 0.25
    %v3484 = vmul.f32 %v3460, 0.25
    %v3485 = vmul.f32 %v3463, 0.25
    %v3486 = vmul.f32 %v3468, 0.25
    %v3487 = vmul.f32 %v3471, 0.25
    %v3488 = vmul.f32 %v3476, 0.25
    %v3489 = vmul.f32 %v3479, 0.25
    %v3490 = vsel %vm1453, %v3482, -inf
    %3491 = vmax.xlane.f32.xlu0 %v3490
    %v3492 = vpop.xlane.xlu0 %3491
    %v3493 = vsel %vm1453, %v3483, -inf
    %3494 = vmax.xlane.f32.xlu0 %v3493
    %v3495 = vpop.xlane.xlu0 %3494
    %v3496 = vsel %vm1453, %v3484, -inf
    %3497 = vmax.xlane.f32.xlu0 %v3496
    %v3498 = vpop.xlane.xlu0 %3497
    %v3499 = vsel %vm1453, %v3485, -inf
    %3500 = vmax.xlane.f32.xlu0 %v3499
    %v3501 = vpop.xlane.xlu0 %3500
    %v3502 = vsel %vm1453, %v3486, -inf
    %3503 = vmax.xlane.f32.xlu0 %v3502
    %v3504 = vpop.xlane.xlu0 %3503
    %v3505 = vsel %vm1453, %v3487, -inf
    %3506 = vmax.xlane.f32.xlu0 %v3505
    %v3507 = vpop.xlane.xlu0 %3506
    %v3508 = vsel %vm1453, %v3488, -inf
    %3509 = vmax.xlane.f32.xlu0 %v3508
    %v3510 = vpop.xlane.xlu0 %3509
    %v3511 = vsel %vm1453, %v3489, -inf
    %3512 = vmax.xlane.f32.xlu0 %v3511
    %v3513 = vpop.xlane.xlu0 %3512
    %v3514 = vsub.f32 %v3482, %v3492
    %v3515 = vsub.f32 %v3483, %v3495
    %v3516 = vsub.f32 %v3484, %v3498
    %v3517 = vsub.f32 %v3485, %v3501
    %v3518 = vsub.f32 %v3486, %v3504
    %v3519 = vsub.f32 %v3487, %v3507
    %v3520 = vsub.f32 %v3488, %v3510
    %v3521 = vsub.f32 %v3489, %v3513
    %v3522 = vmul.f32 %v3514, 1.442695
    %v3523 = vpow.pop %v3522
    %v3524 = vmul.f32 %v3515, 1.442695
    %v3525 = vpow.pop %v3524
    %v3526 = vmul.f32 %v3516, 1.442695
    %v3527 = vpow.pop %v3526
    %v3528 = vmul.f32 %v3517, 1.442695
    %v3529 = vpow.pop %v3528
    %v3530 = vmul.f32 %v3518, 1.442695
    %v3531 = vpow.pop %v3530
    %v3532 = vmul.f32 %v3519, 1.442695
    %v3533 = vpow.pop %v3532
    %v3534 = vmul.f32 %v3520, 1.442695
    %v3535 = vpow.pop %v3534
    %v3536 = vmul.f32 %v3521, 1.442695
    %v3537 = vpow.pop %v3536
    %v3538 = vsel %vm1453, %v3523, 0.0
    %3539 = vadd.xlane.f32.xlu0 %v3538
    %v3540 = vpop.xlane.xlu0 %3539
    %v3541 = vsel %vm1453, %v3525, 0.0
    %3542 = vadd.xlane.f32.xlu0 %v3541
    %v3543 = vpop.xlane.xlu0 %3542
    %v3544 = vsel %vm1453, %v3527, 0.0
    %3545 = vadd.xlane.f32.xlu0 %v3544
    %v3546 = vpop.xlane.xlu0 %3545
    %v3547 = vsel %vm1453, %v3529, 0.0
    %3548 = vadd.xlane.f32.xlu0 %v3547
    %v3549 = vpop.xlane.xlu0 %3548
    %v3550 = vsel %vm1453, %v3531, 0.0
    %3551 = vadd.xlane.f32.xlu0 %v3550
    %v3552 = vpop.xlane.xlu0 %3551
    %v3553 = vsel %vm1453, %v3533, 0.0
    %3554 = vadd.xlane.f32.xlu0 %v3553
    %v3555 = vpop.xlane.xlu0 %3554
    %v3556 = vsel %vm1453, %v3535, 0.0
    %3557 = vadd.xlane.f32.xlu0 %v3556
    %v3558 = vpop.xlane.xlu0 %3557
    %v3559 = vsel %vm1453, %v3537, 0.0
    %3560 = vadd.xlane.f32.xlu0 %v3559
    %v3561 = vpop.xlane.xlu0 %3560
    %v3562 = vrcp.pop %v3540
    %v3563 = vrcp.pop %v3543
    %v3564 = vrcp.pop %v3546
    %v3565 = vrcp.pop %v3549
    %v3566 = vrcp.pop %v3552
    %v3567 = vrcp.pop %v3555
    %v3568 = vrcp.pop %v3558
    %v3569 = vrcp.pop %v3561
    %v3570 = vmul.f32 %v3523, %v3562
    %v3571 = vmul.f32 %v3525, %v3563
    %v3572 = vmul.f32 %v3527, %v3564
    %v3573 = vmul.f32 %v3529, %v3565
    %v3574 = vmul.f32 %v3531, %v3566
    %v3575 = vmul.f32 %v3533, %v3567
    %v3576 = vmul.f32 %v3535, %v3568
    %v3577 = vmul.f32 %v3537, %v3569
    %v3578 = vpack.c.bf16 %v3571, %v3570
    %v3579 = vpack.c.bf16 %v3573, %v3572
    %v3580 = vpack.c.bf16 %v3575, %v3574
    %v3581 = vpack.c.bf16 %v3577, %v3576
    %3582 = vrot.lane.b32.xlu0 %v3292, 112
    %v3583 = vpop.permute.xlu0 %3582
    %3584 = vrot.lane.b32.xlu0 %v3293, 112
    %v3585 = vpop.permute.xlu0 %3584
    %3586 = vrot.lane.b32.xlu0 %v3294, 112
    %v3587 = vpop.permute.xlu0 %3586
    %3588 = vrot.lane.b32.xlu0 %v3295, 112
    %v3589 = vpop.permute.xlu0 %3588
    %v3595 = vsel %vm1453, %v3578, 0
    %v3598 = vsel %vm1453, %v3579, 0
    %v3601 = vsel %vm1453, %v3580, 0
    %v3604 = vsel %vm1453, %v3581, 0
    %3606 = vmatprep.subr.bf16.mxu0 0
    %3607 = vmatpush1.bf16.msra.mxu0 0
    %3608 = vmatprep.subr.bf16.mxu0 0
    %3609 = vmatpush1.bf16.msra.mxu0 0
    %3610 = vmatprep.subr.bf16.mxu0 0
    %3611 = vmatpush1.bf16.msra.mxu0 0
    %3612 = vmatprep.subr.bf16.mxu0 0
    %3613 = vmatpush1.bf16.msra.mxu0 0
    %3614 = vmatprep.subr.bf16.mxu0 0
    %3615 = vmatpush1.bf16.msra.mxu0 %v3589
    %3616 = vmatprep.subr.bf16.mxu0 0
    %3617 = vmatpush1.bf16.msra.mxu0 %v3587
    %3618 = vmatprep.subr.bf16.mxu0 0
    %3619 = vmatpush1.bf16.msra.mxu0 %v3585
    %3620 = vmatprep.subr.bf16.mxu0 0
    %3621 = vmatpush1.bf16.msra.mxu0 %v3583
    %3622 = vmatprep.subr.bf16.mxu0 0
    %3623 = vmatpush2.bf16.msra.mxu0 0
    %3624 = vmatprep.subr.bf16.mxu0 0
    %3625 = vmatpush2.bf16.msra.mxu0 0
    %3626 = vmatprep.subr.bf16.mxu0 0
    %3627 = vmatpush2.bf16.msra.mxu0 0
    %3628 = vmatprep.subr.bf16.mxu0 0
    %3629 = vmatpush2.bf16.msra.mxu0 0
    %3630 = vmatprep.subr.bf16.mxu0 0
    %3631 = vmatpush2.bf16.msra.mxu0 0
    %3632 = vmatprep.subr.bf16.mxu0 0
    %3633 = vmatpush2.bf16.msra.mxu0 0
    %3634 = vmatprep.subr.bf16.mxu0 0
    %3635 = vmatpush2.bf16.msra.mxu0 0
    %3636 = vmatprep.subr.bf16.mxu0 0
    %3637 = vmatpush2.bf16.msra.mxu0 0
    %3638 = vmatprep.mubr.bf16.mxu0 0
    %3639 = vmatmul.mubr.bf16.gmra.mxu0 %v3595
    %v3640 = vpop.f32.mrf.mxu0
    %v3641 = vadd.f32 0.0, %v3640
    %v3642 = vpop.f32.mrf.mxu0
    %v3643 = vpop.f32.mrf.mxu0
    %v3644 = vadd.f32 0.0, %v3643
    %v3645 = vpop.f32.mrf.mxu0
    %3646 = vmatprep.mubr.bf16.mxu0 0
    %3647 = vmatmul.mubr.bf16.gmra.mxu0 %v3598
    %v3648 = vpop.f32.mrf.mxu0
    %v3649 = vadd.f32 0.0, %v3648
    %v3650 = vpop.f32.mrf.mxu0
    %v3651 = vpop.f32.mrf.mxu0
    %v3652 = vadd.f32 0.0, %v3651
    %v3653 = vpop.f32.mrf.mxu0
    %3654 = vmatprep.mubr.bf16.mxu0 0
    %3655 = vmatmul.mubr.bf16.gmra.mxu0 %v3601
    %v3656 = vpop.f32.mrf.mxu0
    %v3657 = vadd.f32 0.0, %v3656
    %v3658 = vpop.f32.mrf.mxu0
    %v3659 = vpop.f32.mrf.mxu0
    %v3660 = vadd.f32 0.0, %v3659
    %v3661 = vpop.f32.mrf.mxu0
    %3662 = vmatprep.mubr.bf16.mxu0 0
    %3663 = vmatmul.mubr.bf16.gmra.mxu0 %v3604
    %v3664 = vpop.f32.mrf.mxu0
    %v3665 = vadd.f32 0.0, %v3664
    %v3666 = vpop.f32.mrf.mxu0
    %v3667 = vpop.f32.mrf.mxu0
    %v3668 = vadd.f32 0.0, %v3667
    %v3669 = vpop.f32.mrf.mxu0
    %3670 = vdwg.mxu0
    %3671 = vrot.lane.b32.xlu0 %v3075, 96
    %v3672 = vpop.permute.xlu0 %3671
    %3673 = vrot.lane.b32.xlu0 %v3076, 96
    %v3674 = vpop.permute.xlu0 %3673
    %3675 = vrot.lane.b32.xlu0 %v3077, 96
    %v3676 = vpop.permute.xlu0 %3675
    %3677 = vrot.lane.b32.xlu0 %v3078, 96
    %v3678 = vpop.permute.xlu0 %3677
    %3679 = vrot.lane.b32.xlu0 %v3075, 32
    %v3680 = vpop.permute.xlu0 %3679
    %3681 = vrot.lane.b32.xlu0 %v3076, 32
    %v3682 = vpop.permute.xlu0 %3681
    %3683 = vrot.lane.b32.xlu0 %v3077, 32
    %v3684 = vpop.permute.xlu0 %3683
    %3685 = vrot.lane.b32.xlu0 %v3078, 32
    %v3686 = vpop.permute.xlu0 %3685
    %v3688 = vsel %vm1749, %v3672, 0
    %v3691 = vsel %vm1749, %v3674, 0
    %v3694 = vsel %vm1749, %v3676, 0
    %v3697 = vsel %vm1749, %v3678, 0
    %v3700 = vsel %vm1749, %v3680, 0
    %v3703 = vsel %vm1749, %v3682, 0
    %v3706 = vsel %vm1749, %v3684, 0
    %v3709 = vsel %vm1749, %v3686, 0
    %3711 = vmatprep.subr.bf16.mxu0 0
    %3712 = vmatpush1.bf16.xpose.msra.mxu0 0
    %3713 = vmatprep.subr.bf16.mxu0 0
    %3714 = vmatpush1.bf16.xpose.msra.mxu0 0
    %3715 = vmatprep.subr.bf16.mxu0 0
    %3716 = vmatpush1.bf16.xpose.msra.mxu0 0
    %3717 = vmatprep.subr.bf16.mxu0 0
    %3718 = vmatpush1.bf16.xpose.msra.mxu0 0
    %3719 = vmatprep.subr.bf16.mxu0 0
    %3720 = vmatpush1.bf16.xpose.msra.mxu0 %v3709
    %3721 = vmatprep.subr.bf16.mxu0 0
    %3722 = vmatpush1.bf16.xpose.msra.mxu0 %v3706
    %3723 = vmatprep.subr.bf16.mxu0 0
    %3724 = vmatpush1.bf16.xpose.msra.mxu0 %v3703
    %3725 = vmatprep.subr.bf16.mxu0 0
    %3726 = vmatpush1.bf16.xpose.msra.mxu0 %v3700
    %3727 = vmatprep.subr.bf16.mxu0 0
    %3728 = vmatpush2.bf16.xpose.msra.mxu0 0
    %3729 = vmatprep.subr.bf16.mxu0 0
    %3730 = vmatpush2.bf16.xpose.msra.mxu0 0
    %3731 = vmatprep.subr.bf16.mxu0 0
    %3732 = vmatpush2.bf16.xpose.msra.mxu0 0
    %3733 = vmatprep.subr.bf16.mxu0 0
    %3734 = vmatpush2.bf16.xpose.msra.mxu0 0
    %3735 = vmatprep.subr.bf16.mxu0 0
    %3736 = vmatpush2.bf16.xpose.msra.mxu0 0
    %3737 = vmatprep.subr.bf16.mxu0 0
    %3738 = vmatpush2.bf16.xpose.msra.mxu0 0
    %3739 = vmatprep.subr.bf16.mxu0 0
    %3740 = vmatpush2.bf16.xpose.msra.mxu0 0
    %3741 = vmatprep.subr.bf16.mxu0 0
    %3742 = vmatpush2.bf16.xpose.msra.mxu0 0
    %3743 = vmatprep.mubr.bf16.mxu0 0
    %3744 = vmatmul.mubr.bf16.gmra.mxu0 %v3688
    %v3745 = vpop.f32.mrf.mxu0
    %v3746 = vadd.f32 0.0, %v3745
    %v3747 = vpop.f32.mrf.mxu0
    %v3748 = vpop.f32.mrf.mxu0
    %v3749 = vadd.f32 0.0, %v3748
    %v3750 = vpop.f32.mrf.mxu0
    %3751 = vmatprep.mubr.bf16.mxu0 0
    %3752 = vmatmul.mubr.bf16.gmra.mxu0 %v3691
    %v3753 = vpop.f32.mrf.mxu0
    %v3754 = vadd.f32 0.0, %v3753
    %v3755 = vpop.f32.mrf.mxu0
    %v3756 = vpop.f32.mrf.mxu0
    %v3757 = vadd.f32 0.0, %v3756
    %v3758 = vpop.f32.mrf.mxu0
    %3759 = vmatprep.mubr.bf16.mxu0 0
    %3760 = vmatmul.mubr.bf16.gmra.mxu0 %v3694
    %v3761 = vpop.f32.mrf.mxu0
    %v3762 = vadd.f32 0.0, %v3761
    %v3763 = vpop.f32.mrf.mxu0
    %v3764 = vpop.f32.mrf.mxu0
    %v3765 = vadd.f32 0.0, %v3764
    %v3766 = vpop.f32.mrf.mxu0
    %3767 = vmatprep.mubr.bf16.mxu0 0
    %3768 = vmatmul.mubr.bf16.gmra.mxu0 %v3697
    %v3769 = vpop.f32.mrf.mxu0
    %v3770 = vadd.f32 0.0, %v3769
    %v3771 = vpop.f32.mrf.mxu0
    %v3772 = vpop.f32.mrf.mxu0
    %v3773 = vadd.f32 0.0, %v3772
    %v3774 = vpop.f32.mrf.mxu0
    %3775 = vdwg.mxu0
    %v3776 = vmul.f32 %v3746, 0.25
    %v3777 = vmul.f32 %v3749, 0.25
    %v3778 = vmul.f32 %v3754, 0.25
    %v3779 = vmul.f32 %v3757, 0.25
    %v3780 = vmul.f32 %v3762, 0.25
    %v3781 = vmul.f32 %v3765, 0.25
    %v3782 = vmul.f32 %v3770, 0.25
    %v3783 = vmul.f32 %v3773, 0.25
    %v3784 = vsel %vm1453, %v3776, -inf
    %3785 = vmax.xlane.f32.xlu0 %v3784
    %v3786 = vpop.xlane.xlu0 %3785
    %v3787 = vsel %vm1453, %v3777, -inf
    %3788 = vmax.xlane.f32.xlu0 %v3787
    %v3789 = vpop.xlane.xlu0 %3788
    %v3790 = vsel %vm1453, %v3778, -inf
    %3791 = vmax.xlane.f32.xlu0 %v3790
    %v3792 = vpop.xlane.xlu0 %3791
    %v3793 = vsel %vm1453, %v3779, -inf
    %3794 = vmax.xlane.f32.xlu0 %v3793
    %v3795 = vpop.xlane.xlu0 %3794
    %v3796 = vsel %vm1453, %v3780, -inf
    %3797 = vmax.xlane.f32.xlu0 %v3796
    %v3798 = vpop.xlane.xlu0 %3797
    %v3799 = vsel %vm1453, %v3781, -inf
    %3800 = vmax.xlane.f32.xlu0 %v3799
    %v3801 = vpop.xlane.xlu0 %3800
    %v3802 = vsel %vm1453, %v3782, -inf
    %3803 = vmax.xlane.f32.xlu0 %v3802
    %v3804 = vpop.xlane.xlu0 %3803
    %v3805 = vsel %vm1453, %v3783, -inf
    %3806 = vmax.xlane.f32.xlu0 %v3805
    %v3807 = vpop.xlane.xlu0 %3806
    %v3808 = vsub.f32 %v3776, %v3786
    %v3809 = vsub.f32 %v3777, %v3789
    %v3810 = vsub.f32 %v3778, %v3792
    %v3811 = vsub.f32 %v3779, %v3795
    %v3812 = vsub.f32 %v3780, %v3798
    %v3813 = vsub.f32 %v3781, %v3801
    %v3814 = vsub.f32 %v3782, %v3804
    %v3815 = vsub.f32 %v3783, %v3807
    %v3816 = vmul.f32 %v3808, 1.442695
    %v3817 = vpow.pop %v3816
    %v3818 = vmul.f32 %v3809, 1.442695
    %v3819 = vpow.pop %v3818
    %v3820 = vmul.f32 %v3810, 1.442695
    %v3821 = vpow.pop %v3820
    %v3822 = vmul.f32 %v3811, 1.442695
    %v3823 = vpow.pop %v3822
    %v3824 = vmul.f32 %v3812, 1.442695
    %v3825 = vpow.pop %v3824
    %v3826 = vmul.f32 %v3813, 1.442695
    %v3827 = vpow.pop %v3826
    %v3828 = vmul.f32 %v3814, 1.442695
    %v3829 = vpow.pop %v3828
    %v3830 = vmul.f32 %v3815, 1.442695
    %v3831 = vpow.pop %v3830
    %v3832 = vsel %vm1453, %v3817, 0.0
    %3833 = vadd.xlane.f32.xlu0 %v3832
    %v3834 = vpop.xlane.xlu0 %3833
    %v3835 = vsel %vm1453, %v3819, 0.0
    %3836 = vadd.xlane.f32.xlu0 %v3835
    %v3837 = vpop.xlane.xlu0 %3836
    %v3838 = vsel %vm1453, %v3821, 0.0
    %3839 = vadd.xlane.f32.xlu0 %v3838
    %v3840 = vpop.xlane.xlu0 %3839
    %v3841 = vsel %vm1453, %v3823, 0.0
    %3842 = vadd.xlane.f32.xlu0 %v3841
    %v3843 = vpop.xlane.xlu0 %3842
    %v3844 = vsel %vm1453, %v3825, 0.0
    %3845 = vadd.xlane.f32.xlu0 %v3844
    %v3846 = vpop.xlane.xlu0 %3845
    %v3847 = vsel %vm1453, %v3827, 0.0
    %3848 = vadd.xlane.f32.xlu0 %v3847
    %v3849 = vpop.xlane.xlu0 %3848
    %v3850 = vsel %vm1453, %v3829, 0.0
    %3851 = vadd.xlane.f32.xlu0 %v3850
    %v3852 = vpop.xlane.xlu0 %3851
    %v3853 = vsel %vm1453, %v3831, 0.0
    %3854 = vadd.xlane.f32.xlu0 %v3853
    %v3855 = vpop.xlane.xlu0 %3854
    %v3856 = vrcp.pop %v3834
    %v3857 = vrcp.pop %v3837
    %v3858 = vrcp.pop %v3840
    %v3859 = vrcp.pop %v3843
    %v3860 = vrcp.pop %v3846
    %v3861 = vrcp.pop %v3849
    %v3862 = vrcp.pop %v3852
    %v3863 = vrcp.pop %v3855
    %v3864 = vmul.f32 %v3817, %v3856
    %v3865 = vmul.f32 %v3819, %v3857
    %v3866 = vmul.f32 %v3821, %v3858
    %v3867 = vmul.f32 %v3823, %v3859
    %v3868 = vmul.f32 %v3825, %v3860
    %v3869 = vmul.f32 %v3827, %v3861
    %v3870 = vmul.f32 %v3829, %v3862
    %v3871 = vmul.f32 %v3831, %v3863
    %v3872 = vpack.c.bf16 %v3865, %v3864
    %v3873 = vpack.c.bf16 %v3867, %v3866
    %v3874 = vpack.c.bf16 %v3869, %v3868
    %v3875 = vpack.c.bf16 %v3871, %v3870
    %3876 = vrot.lane.b32.xlu0 %v3292, 96
    %v3877 = vpop.permute.xlu0 %3876
    %3878 = vrot.lane.b32.xlu0 %v3293, 96
    %v3879 = vpop.permute.xlu0 %3878
    %3880 = vrot.lane.b32.xlu0 %v3294, 96
    %v3881 = vpop.permute.xlu0 %3880
    %3882 = vrot.lane.b32.xlu0 %v3295, 96
    %v3883 = vpop.permute.xlu0 %3882
    %v3889 = vsel %vm1453, %v3872, 0
    %v3892 = vsel %vm1453, %v3873, 0
    %v3895 = vsel %vm1453, %v3874, 0
    %v3898 = vsel %vm1453, %v3875, 0
    %3900 = vmatprep.subr.bf16.mxu0 0
    %3901 = vmatpush1.bf16.msra.mxu0 0
    %3902 = vmatprep.subr.bf16.mxu0 0
    %3903 = vmatpush1.bf16.msra.mxu0 0
    %3904 = vmatprep.subr.bf16.mxu0 0
    %3905 = vmatpush1.bf16.msra.mxu0 0
    %3906 = vmatprep.subr.bf16.mxu0 0
    %3907 = vmatpush1.bf16.msra.mxu0 0
    %3908 = vmatprep.subr.bf16.mxu0 0
    %3909 = vmatpush1.bf16.msra.mxu0 %v3883
    %3910 = vmatprep.subr.bf16.mxu0 0
    %3911 = vmatpush1.bf16.msra.mxu0 %v3881
    %3912 = vmatprep.subr.bf16.mxu0 0
    %3913 = vmatpush1.bf16.msra.mxu0 %v3879
    %3914 = vmatprep.subr.bf16.mxu0 0
    %3915 = vmatpush1.bf16.msra.mxu0 %v3877
    %3916 = vmatprep.subr.bf16.mxu0 0
    %3917 = vmatpush2.bf16.msra.mxu0 0
    %3918 = vmatprep.subr.bf16.mxu0 0
    %3919 = vmatpush2.bf16.msra.mxu0 0
    %3920 = vmatprep.subr.bf16.mxu0 0
    %3921 = vmatpush2.bf16.msra.mxu0 0
    %3922 = vmatprep.subr.bf16.mxu0 0
    %3923 = vmatpush2.bf16.msra.mxu0 0
    %3924 = vmatprep.subr.bf16.mxu0 0
    %3925 = vmatpush2.bf16.msra.mxu0 0
    %3926 = vmatprep.subr.bf16.mxu0 0
    %3927 = vmatpush2.bf16.msra.mxu0 0
    %3928 = vmatprep.subr.bf16.mxu0 0
    %3929 = vmatpush2.bf16.msra.mxu0 0
    %3930 = vmatprep.subr.bf16.mxu0 0
    %3931 = vmatpush2.bf16.msra.mxu0 0
    %3932 = vmatprep.mubr.bf16.mxu0 0
    %3933 = vmatmul.mubr.bf16.gmra.mxu0 %v3889
    %v3934 = vpop.f32.mrf.mxu0
    %v3935 = vadd.f32 0.0, %v3934
    %v3936 = vpop.f32.mrf.mxu0
    %v3937 = vpop.f32.mrf.mxu0
    %v3938 = vadd.f32 0.0, %v3937
    %v3939 = vpop.f32.mrf.mxu0
    %3940 = vmatprep.mubr.bf16.mxu0 0
    %3941 = vmatmul.mubr.bf16.gmra.mxu0 %v3892
    %v3942 = vpop.f32.mrf.mxu0
    %v3943 = vadd.f32 0.0, %v3942
    %v3944 = vpop.f32.mrf.mxu0
    %v3945 = vpop.f32.mrf.mxu0
    %v3946 = vadd.f32 0.0, %v3945
    %v3947 = vpop.f32.mrf.mxu0
    %3948 = vmatprep.mubr.bf16.mxu0 0
    %3949 = vmatmul.mubr.bf16.gmra.mxu0 %v3895
    %v3950 = vpop.f32.mrf.mxu0
    %v3951 = vadd.f32 0.0, %v3950
    %v3952 = vpop.f32.mrf.mxu0
    %v3953 = vpop.f32.mrf.mxu0
    %v3954 = vadd.f32 0.0, %v3953
    %v3955 = vpop.f32.mrf.mxu0
    %3956 = vmatprep.mubr.bf16.mxu0 0
    %3957 = vmatmul.mubr.bf16.gmra.mxu0 %v3898
    %v3958 = vpop.f32.mrf.mxu0
    %v3959 = vadd.f32 0.0, %v3958
    %v3960 = vpop.f32.mrf.mxu0
    %v3961 = vpop.f32.mrf.mxu0
    %v3962 = vadd.f32 0.0, %v3961
    %v3963 = vpop.f32.mrf.mxu0
    %3964 = vdwg.mxu0
    %3965 = vrot.lane.b32.xlu0 %v3075, 80
    %v3966 = vpop.permute.xlu0 %3965
    %3967 = vrot.lane.b32.xlu0 %v3076, 80
    %v3968 = vpop.permute.xlu0 %3967
    %3969 = vrot.lane.b32.xlu0 %v3077, 80
    %v3970 = vpop.permute.xlu0 %3969
    %3971 = vrot.lane.b32.xlu0 %v3078, 80
    %v3972 = vpop.permute.xlu0 %3971
    %3973 = vrot.lane.b32.xlu0 %v3075, 16
    %v3974 = vpop.permute.xlu0 %3973
    %3975 = vrot.lane.b32.xlu0 %v3076, 16
    %v3976 = vpop.permute.xlu0 %3975
    %3977 = vrot.lane.b32.xlu0 %v3077, 16
    %v3978 = vpop.permute.xlu0 %3977
    %3979 = vrot.lane.b32.xlu0 %v3078, 16
    %v3980 = vpop.permute.xlu0 %3979
    %v3982 = vsel %vm1749, %v3966, 0
    %v3985 = vsel %vm1749, %v3968, 0
    %v3988 = vsel %vm1749, %v3970, 0
    %v3991 = vsel %vm1749, %v3972, 0
    %v3994 = vsel %vm1749, %v3974, 0
    %v3997 = vsel %vm1749, %v3976, 0
    %v4000 = vsel %vm1749, %v3978, 0
    %v4003 = vsel %vm1749, %v3980, 0
    %4005 = vmatprep.subr.bf16.mxu0 0
    %4006 = vmatpush1.bf16.xpose.msra.mxu0 0
    %4007 = vmatprep.subr.bf16.mxu0 0
    %4008 = vmatpush1.bf16.xpose.msra.mxu0 0
    %4009 = vmatprep.subr.bf16.mxu0 0
    %4010 = vmatpush1.bf16.xpose.msra.mxu0 0
    %4011 = vmatprep.subr.bf16.mxu0 0
    %4012 = vmatpush1.bf16.xpose.msra.mxu0 0
    %4013 = vmatprep.subr.bf16.mxu0 0
    %4014 = vmatpush1.bf16.xpose.msra.mxu0 %v4003
    %4015 = vmatprep.subr.bf16.mxu0 0
    %4016 = vmatpush1.bf16.xpose.msra.mxu0 %v4000
    %4017 = vmatprep.subr.bf16.mxu0 0
    %4018 = vmatpush1.bf16.xpose.msra.mxu0 %v3997
    %4019 = vmatprep.subr.bf16.mxu0 0
    %4020 = vmatpush1.bf16.xpose.msra.mxu0 %v3994
    %4021 = vmatprep.subr.bf16.mxu0 0
    %4022 = vmatpush2.bf16.xpose.msra.mxu0 0
    %4023 = vmatprep.subr.bf16.mxu0 0
    %4024 = vmatpush2.bf16.xpose.msra.mxu0 0
    %4025 = vmatprep.subr.bf16.mxu0 0
    %4026 = vmatpush2.bf16.xpose.msra.mxu0 0
    %4027 = vmatprep.subr.bf16.mxu0 0
    %4028 = vmatpush2.bf16.xpose.msra.mxu0 0
    %4029 = vmatprep.subr.bf16.mxu0 0
    %4030 = vmatpush2.bf16.xpose.msra.mxu0 0
    %4031 = vmatprep.subr.bf16.mxu0 0
    %4032 = vmatpush2.bf16.xpose.msra.mxu0 0
    %4033 = vmatprep.subr.bf16.mxu0 0
    %4034 = vmatpush2.bf16.xpose.msra.mxu0 0
    %4035 = vmatprep.subr.bf16.mxu0 0
    %4036 = vmatpush2.bf16.xpose.msra.mxu0 0
    %4037 = vmatprep.mubr.bf16.mxu0 0
    %4038 = vmatmul.mubr.bf16.gmra.mxu0 %v3982
    %v4039 = vpop.f32.mrf.mxu0
    %v4040 = vadd.f32 0.0, %v4039
    %v4041 = vpop.f32.mrf.mxu0
    %v4042 = vpop.f32.mrf.mxu0
    %v4043 = vadd.f32 0.0, %v4042
    %v4044 = vpop.f32.mrf.mxu0
    %4045 = vmatprep.mubr.bf16.mxu0 0
    %4046 = vmatmul.mubr.bf16.gmra.mxu0 %v3985
    %v4047 = vpop.f32.mrf.mxu0
    %v4048 = vadd.f32 0.0, %v4047
    %v4049 = vpop.f32.mrf.mxu0
    %v4050 = vpop.f32.mrf.mxu0
    %v4051 = vadd.f32 0.0, %v4050
    %v4052 = vpop.f32.mrf.mxu0
    %4053 = vmatprep.mubr.bf16.mxu0 0
    %4054 = vmatmul.mubr.bf16.gmra.mxu0 %v3988
    %v4055 = vpop.f32.mrf.mxu0
    %v4056 = vadd.f32 0.0, %v4055
    %v4057 = vpop.f32.mrf.mxu0
    %v4058 = vpop.f32.mrf.mxu0
    %v4059 = vadd.f32 0.0, %v4058
    %v4060 = vpop.f32.mrf.mxu0
    %4061 = vmatprep.mubr.bf16.mxu0 0
    %4062 = vmatmul.mubr.bf16.gmra.mxu0 %v3991
    %v4063 = vpop.f32.mrf.mxu0
    %v4064 = vadd.f32 0.0, %v4063
    %v4065 = vpop.f32.mrf.mxu0
    %v4066 = vpop.f32.mrf.mxu0
    %v4067 = vadd.f32 0.0, %v4066
    %v4068 = vpop.f32.mrf.mxu0
    %4069 = vdwg.mxu0
    %v4070 = vmul.f32 %v4040, 0.25
    %v4071 = vmul.f32 %v4043, 0.25
    %v4072 = vmul.f32 %v4048, 0.25
    %v4073 = vmul.f32 %v4051, 0.25
    %v4074 = vmul.f32 %v4056, 0.25
    %v4075 = vmul.f32 %v4059, 0.25
    %v4076 = vmul.f32 %v4064, 0.25
    %v4077 = vmul.f32 %v4067, 0.25
    %v4078 = vsel %vm1453, %v4070, -inf
    %4079 = vmax.xlane.f32.xlu0 %v4078
    %v4080 = vpop.xlane.xlu0 %4079
    %v4081 = vsel %vm1453, %v4071, -inf
    %4082 = vmax.xlane.f32.xlu0 %v4081
    %v4083 = vpop.xlane.xlu0 %4082
    %v4084 = vsel %vm1453, %v4072, -inf
    %4085 = vmax.xlane.f32.xlu0 %v4084
    %v4086 = vpop.xlane.xlu0 %4085
    %v4087 = vsel %vm1453, %v4073, -inf
    %4088 = vmax.xlane.f32.xlu0 %v4087
    %v4089 = vpop.xlane.xlu0 %4088
    %v4090 = vsel %vm1453, %v4074, -inf
    %4091 = vmax.xlane.f32.xlu0 %v4090
    %v4092 = vpop.xlane.xlu0 %4091
    %v4093 = vsel %vm1453, %v4075, -inf
    %4094 = vmax.xlane.f32.xlu0 %v4093
    %v4095 = vpop.xlane.xlu0 %4094
    %v4096 = vsel %vm1453, %v4076, -inf
    %4097 = vmax.xlane.f32.xlu0 %v4096
    %v4098 = vpop.xlane.xlu0 %4097
    %v4099 = vsel %vm1453, %v4077, -inf
    %4100 = vmax.xlane.f32.xlu0 %v4099
    %v4101 = vpop.xlane.xlu0 %4100
    %v4102 = vsub.f32 %v4070, %v4080
    %v4103 = vsub.f32 %v4071, %v4083
    %v4104 = vsub.f32 %v4072, %v4086
    %v4105 = vsub.f32 %v4073, %v4089
    %v4106 = vsub.f32 %v4074, %v4092
    %v4107 = vsub.f32 %v4075, %v4095
    %v4108 = vsub.f32 %v4076, %v4098
    %v4109 = vsub.f32 %v4077, %v4101
    %v4110 = vmul.f32 %v4102, 1.442695
    %v4111 = vpow.pop %v4110
    %v4112 = vmul.f32 %v4103, 1.442695
    %v4113 = vpow.pop %v4112
    %v4114 = vmul.f32 %v4104, 1.442695
    %v4115 = vpow.pop %v4114
    %v4116 = vmul.f32 %v4105, 1.442695
    %v4117 = vpow.pop %v4116
    %v4118 = vmul.f32 %v4106, 1.442695
    %v4119 = vpow.pop %v4118
    %v4120 = vmul.f32 %v4107, 1.442695
    %v4121 = vpow.pop %v4120
    %v4122 = vmul.f32 %v4108, 1.442695
    %v4123 = vpow.pop %v4122
    %v4124 = vmul.f32 %v4109, 1.442695
    %v4125 = vpow.pop %v4124
    %v4126 = vsel %vm1453, %v4111, 0.0
    %4127 = vadd.xlane.f32.xlu0 %v4126
    %v4128 = vpop.xlane.xlu0 %4127
    %v4129 = vsel %vm1453, %v4113, 0.0
    %4130 = vadd.xlane.f32.xlu0 %v4129
    %v4131 = vpop.xlane.xlu0 %4130
    %v4132 = vsel %vm1453, %v4115, 0.0
    %4133 = vadd.xlane.f32.xlu0 %v4132
    %v4134 = vpop.xlane.xlu0 %4133
    %v4135 = vsel %vm1453, %v4117, 0.0
    %4136 = vadd.xlane.f32.xlu0 %v4135
    %v4137 = vpop.xlane.xlu0 %4136
    %v4138 = vsel %vm1453, %v4119, 0.0
    %4139 = vadd.xlane.f32.xlu0 %v4138
    %v4140 = vpop.xlane.xlu0 %4139
    %v4141 = vsel %vm1453, %v4121, 0.0
    %4142 = vadd.xlane.f32.xlu0 %v4141
    %v4143 = vpop.xlane.xlu0 %4142
    %v4144 = vsel %vm1453, %v4123, 0.0
    %4145 = vadd.xlane.f32.xlu0 %v4144
    %v4146 = vpop.xlane.xlu0 %4145
    %v4147 = vsel %vm1453, %v4125, 0.0
    %4148 = vadd.xlane.f32.xlu0 %v4147
    %v4149 = vpop.xlane.xlu0 %4148
    %v4150 = vrcp.pop %v4128
    %v4151 = vrcp.pop %v4131
    %v4152 = vrcp.pop %v4134
    %v4153 = vrcp.pop %v4137
    %v4154 = vrcp.pop %v4140
    %v4155 = vrcp.pop %v4143
    %v4156 = vrcp.pop %v4146
    %v4157 = vrcp.pop %v4149
    %v4158 = vmul.f32 %v4111, %v4150
    %v4159 = vmul.f32 %v4113, %v4151
    %v4160 = vmul.f32 %v4115, %v4152
    %v4161 = vmul.f32 %v4117, %v4153
    %v4162 = vmul.f32 %v4119, %v4154
    %v4163 = vmul.f32 %v4121, %v4155
    %v4164 = vmul.f32 %v4123, %v4156
    %v4165 = vmul.f32 %v4125, %v4157
    %v4166 = vpack.c.bf16 %v4159, %v4158
    %v4167 = vpack.c.bf16 %v4161, %v4160
    %v4168 = vpack.c.bf16 %v4163, %v4162
    %v4169 = vpack.c.bf16 %v4165, %v4164
    %4170 = vrot.lane.b32.xlu0 %v3292, 80
    %v4171 = vpop.permute.xlu0 %4170
    %4172 = vrot.lane.b32.xlu0 %v3293, 80
    %v4173 = vpop.permute.xlu0 %4172
    %4174 = vrot.lane.b32.xlu0 %v3294, 80
    %v4175 = vpop.permute.xlu0 %4174
    %4176 = vrot.lane.b32.xlu0 %v3295, 80
    %v4177 = vpop.permute.xlu0 %4176
    %v4183 = vsel %vm1453, %v4166, 0
    %v4186 = vsel %vm1453, %v4167, 0
    %v4189 = vsel %vm1453, %v4168, 0
    %v4192 = vsel %vm1453, %v4169, 0
    %4194 = vmatprep.subr.bf16.mxu0 0
    %4195 = vmatpush1.bf16.msra.mxu0 0
    %4196 = vmatprep.subr.bf16.mxu0 0
    %4197 = vmatpush1.bf16.msra.mxu0 0
    %4198 = vmatprep.subr.bf16.mxu0 0
    %4199 = vmatpush1.bf16.msra.mxu0 0
    %4200 = vmatprep.subr.bf16.mxu0 0
    %4201 = vmatpush1.bf16.msra.mxu0 0
    %4202 = vmatprep.subr.bf16.mxu0 0
    %4203 = vmatpush1.bf16.msra.mxu0 %v4177
    %4204 = vmatprep.subr.bf16.mxu0 0
    %4205 = vmatpush1.bf16.msra.mxu0 %v4175
    %4206 = vmatprep.subr.bf16.mxu0 0
    %4207 = vmatpush1.bf16.msra.mxu0 %v4173
    %4208 = vmatprep.subr.bf16.mxu0 0
    %4209 = vmatpush1.bf16.msra.mxu0 %v4171
    %4210 = vmatprep.subr.bf16.mxu0 0
    %4211 = vmatpush2.bf16.msra.mxu0 0
    %4212 = vmatprep.subr.bf16.mxu0 0
    %4213 = vmatpush2.bf16.msra.mxu0 0
    %4214 = vmatprep.subr.bf16.mxu0 0
    %4215 = vmatpush2.bf16.msra.mxu0 0
    %4216 = vmatprep.subr.bf16.mxu0 0
    %4217 = vmatpush2.bf16.msra.mxu0 0
    %4218 = vmatprep.subr.bf16.mxu0 0
    %4219 = vmatpush2.bf16.msra.mxu0 0
    %4220 = vmatprep.subr.bf16.mxu0 0
    %4221 = vmatpush2.bf16.msra.mxu0 0
    %4222 = vmatprep.subr.bf16.mxu0 0
    %4223 = vmatpush2.bf16.msra.mxu0 0
    %4224 = vmatprep.subr.bf16.mxu0 0
    %4225 = vmatpush2.bf16.msra.mxu0 0
    %4226 = vmatprep.mubr.bf16.mxu0 0
    %4227 = vmatmul.mubr.bf16.gmra.mxu0 %v4183
    %v4228 = vpop.f32.mrf.mxu0
    %v4229 = vadd.f32 0.0, %v4228
    %v4230 = vpop.f32.mrf.mxu0
    %v4231 = vpop.f32.mrf.mxu0
    %v4232 = vadd.f32 0.0, %v4231
    %v4233 = vpop.f32.mrf.mxu0
    %4234 = vmatprep.mubr.bf16.mxu0 0
    %4235 = vmatmul.mubr.bf16.gmra.mxu0 %v4186
    %v4236 = vpop.f32.mrf.mxu0
    %v4237 = vadd.f32 0.0, %v4236
    %v4238 = vpop.f32.mrf.mxu0
    %v4239 = vpop.f32.mrf.mxu0
    %v4240 = vadd.f32 0.0, %v4239
    %v4241 = vpop.f32.mrf.mxu0
    %4242 = vmatprep.mubr.bf16.mxu0 0
    %4243 = vmatmul.mubr.bf16.gmra.mxu0 %v4189
    %v4244 = vpop.f32.mrf.mxu0
    %v4245 = vadd.f32 0.0, %v4244
    %v4246 = vpop.f32.mrf.mxu0
    %v4247 = vpop.f32.mrf.mxu0
    %v4248 = vadd.f32 0.0, %v4247
    %v4249 = vpop.f32.mrf.mxu0
    %4250 = vmatprep.mubr.bf16.mxu0 0
    %4251 = vmatmul.mubr.bf16.gmra.mxu0 %v4192
    %v4252 = vpop.f32.mrf.mxu0
    %v4253 = vadd.f32 0.0, %v4252
    %v4254 = vpop.f32.mrf.mxu0
    %v4255 = vpop.f32.mrf.mxu0
    %v4256 = vadd.f32 0.0, %v4255
    %v4257 = vpop.f32.mrf.mxu0
    %4258 = vdwg.mxu0
    %4267 = vrot.lane.b32.xlu0 %v3641, 16
    %v4268 = vpop.permute.xlu0 %4267
    %4269 = vrot.lane.b32.xlu0 %v3644, 16
    %v4270 = vpop.permute.xlu0 %4269
    %4271 = vrot.lane.b32.xlu0 %v3649, 16
    %v4272 = vpop.permute.xlu0 %4271
    %4273 = vrot.lane.b32.xlu0 %v3652, 16
    %v4274 = vpop.permute.xlu0 %4273
    %4275 = vrot.lane.b32.xlu0 %v3657, 16
    %v4276 = vpop.permute.xlu0 %4275
    %4277 = vrot.lane.b32.xlu0 %v3660, 16
    %v4278 = vpop.permute.xlu0 %4277
    %4279 = vrot.lane.b32.xlu0 %v3665, 16
    %v4280 = vpop.permute.xlu0 %4279
    %4281 = vrot.lane.b32.xlu0 %v3668, 16
    %v4282 = vpop.permute.xlu0 %4281
    %4299 = vrot.lane.b32.xlu0 %v3935, 32
    %v4300 = vpop.permute.xlu0 %4299
    %4301 = vrot.lane.b32.xlu0 %v3938, 32
    %v4302 = vpop.permute.xlu0 %4301
    %4303 = vrot.lane.b32.xlu0 %v3943, 32
    %v4304 = vpop.permute.xlu0 %4303
    %4305 = vrot.lane.b32.xlu0 %v3946, 32
    %v4306 = vpop.permute.xlu0 %4305
    %4307 = vrot.lane.b32.xlu0 %v3951, 32
    %v4308 = vpop.permute.xlu0 %4307
    %4309 = vrot.lane.b32.xlu0 %v3954, 32
    %v4310 = vpop.permute.xlu0 %4309
    %4311 = vrot.lane.b32.xlu0 %v3959, 32
    %v4312 = vpop.permute.xlu0 %4311
    %4313 = vrot.lane.b32.xlu0 %v3962, 32
    %v4314 = vpop.permute.xlu0 %4313
    %4331 = vrot.lane.b32.xlu0 %v4229, 48
    %v4332 = vpop.permute.xlu0 %4331
    %4333 = vrot.lane.b32.xlu0 %v4232, 48
    %v4334 = vpop.permute.xlu0 %4333
    %4335 = vrot.lane.b32.xlu0 %v4237, 48
    %v4336 = vpop.permute.xlu0 %4335
    %4337 = vrot.lane.b32.xlu0 %v4240, 48
    %v4338 = vpop.permute.xlu0 %4337
    %4339 = vrot.lane.b32.xlu0 %v4245, 48
    %v4340 = vpop.permute.xlu0 %4339
    %4341 = vrot.lane.b32.xlu0 %v4248, 48
    %v4342 = vpop.permute.xlu0 %4341
    %4343 = vrot.lane.b32.xlu0 %v4253, 48
    %v4344 = vpop.permute.xlu0 %4343
    %4345 = vrot.lane.b32.xlu0 %v4256, 48
    %v4346 = vpop.permute.xlu0 %4345
    %v4355 = vsel %vm1749, %v3347, %v4268
    %v4356 = vsel %vm1749, %v3350, %v4270
    %v4357 = vsel %vm1749, %v3355, %v4272
    %v4358 = vsel %vm1749, %v3358, %v4274
    %v4359 = vsel %vm1749, %v3363, %v4276
    %v4360 = vsel %vm1749, %v3366, %v4278
    %v4361 = vsel %vm1749, %v3371, %v4280
    %v4362 = vsel %vm1749, %v3374, %v4282
    %v4363 = vsel %vm101, %v4355, %v4300
    %v4364 = vsel %vm101, %v4356, %v4302
    %v4365 = vsel %vm101, %v4357, %v4304
    %v4366 = vsel %vm101, %v4358, %v4306
    %v4367 = vsel %vm101, %v4359, %v4308
    %v4368 = vsel %vm101, %v4360, %v4310
    %v4369 = vsel %vm101, %v4361, %v4312
    %v4370 = vsel %vm101, %v4362, %v4314
    %v4371 = vsel %vm3034, %v4363, %v4332
    %v4372 = vsel %vm3034, %v4364, %v4334
    %v4373 = vsel %vm3034, %v4365, %v4336
    %v4374 = vsel %vm3034, %v4366, %v4338
    %v4375 = vsel %vm3034, %v4367, %v4340
    %v4376 = vsel %vm3034, %v4368, %v4342
    %v4377 = vsel %vm3034, %v4369, %v4344
    %v4378 = vsel %vm3034, %v4370, %v4346
    %v4379 = vpack.c.bf16 %v3036, %v3035
    %v4380 = vpack.c.bf16 %v3038, %v3037
    %v4381 = vpack.c.bf16 %v3040, %v3039
    %v4382 = vpack.c.bf16 %v3042, %v3041
    %v4383 = vpack.c.bf16 %v4372, %v4371
    %v4384 = vpack.c.bf16 %v4374, %v4373
    %v4385 = vpack.c.bf16 %v4376, %v4375
    %v4386 = vpack.c.bf16 %v4378, %v4377
    %v4387 = vlaneseq
    %v4388 = vshrl.u32 %v4387, 7
    %v4389 = vsub.s32 1, %v4388
    %v4390 = vrot.slane %v1395, %v4389
    %v4399 = vunpack.c.l.b16 %v1375
    %v4400 = vunpack.c.l.b16 %v1376
    %v4401 = vunpack.c.l.b16 %v1377
    %v4402 = vunpack.c.l.b16 %v1378
    %v4403 = vunpack.c.l.b16 %v1379
    %v4404 = vunpack.c.l.b16 %v1380
    %v4405 = vunpack.c.l.b16 %v1381
    %v4406 = vunpack.c.l.b16 %v1382
    %v4407 = vpack.c.b16 %v4400, %v4399
    %v4408 = vpack.c.b16 %v4402, %v4401
    %v4409 = vpack.c.b16 %v4404, %v4403
    %v4410 = vpack.c.b16 %v4406, %v4405
    %v4416 = vsel %vm1453, %v4379, 0
    %v4419 = vsel %vm1453, %v4380, 0
    %v4422 = vsel %vm1453, %v4381, 0
    %v4425 = vsel %vm1453, %v4382, 0
    %v4428 = vsel %vm1453, %v4383, 0
    %v4431 = vsel %vm1453, %v4384, 0
    %v4434 = vsel %vm1453, %v4385, 0
    %v4437 = vsel %vm1453, %v4386, 0
    %4439 = vmatprep.subr.bf16.mxu0 0
    %4440 = vmatpush1.bf16.msra.mxu0 0
    %4441 = vmatprep.subr.bf16.mxu0 0
    %4442 = vmatpush1.bf16.msra.mxu0 0
    %4443 = vmatprep.subr.bf16.mxu0 0
    %4444 = vmatpush1.bf16.msra.mxu0 0
    %4445 = vmatprep.subr.bf16.mxu0 0
    %4446 = vmatpush1.bf16.msra.mxu0 0
    %4447 = vmatprep.subr.bf16.mxu0 0
    %4448 = vmatpush1.bf16.msra.mxu0 %v4410
    %4449 = vmatprep.subr.bf16.mxu0 0
    %4450 = vmatpush1.bf16.msra.mxu0 %v4409
    %4451 = vmatprep.subr.bf16.mxu0 0
    %4452 = vmatpush1.bf16.msra.mxu0 %v4408
    %4453 = vmatprep.subr.bf16.mxu0 0
    %4454 = vmatpush1.bf16.msra.mxu0 %v4407
    %4455 = vmatprep.subr.bf16.mxu0 0
    %4456 = vmatpush2.bf16.msra.mxu0 0
    %4457 = vmatprep.subr.bf16.mxu0 0
    %4458 = vmatpush2.bf16.msra.mxu0 0
    %4459 = vmatprep.subr.bf16.mxu0 0
    %4460 = vmatpush2.bf16.msra.mxu0 0
    %4461 = vmatprep.subr.bf16.mxu0 0
    %4462 = vmatpush2.bf16.msra.mxu0 0
    %4463 = vmatprep.subr.bf16.mxu0 0
    %4464 = vmatpush2.bf16.msra.mxu0 0
    %4465 = vmatprep.subr.bf16.mxu0 0
    %4466 = vmatpush2.bf16.msra.mxu0 0
    %4467 = vmatprep.subr.bf16.mxu0 0
    %4468 = vmatpush2.bf16.msra.mxu0 0
    %4469 = vmatprep.subr.bf16.mxu0 0
    %4470 = vmatpush2.bf16.msra.mxu0 0
    %4471 = vmatprep.mubr.bf16.mxu0 0
    %4472 = vmatmul.mubr.bf16.gmra.mxu0 %v4416
    %v4473 = vpop.f32.mrf.mxu0
    %v4474 = vadd.f32 %v4390, %v4473
    %v4475 = vpop.f32.mrf.mxu0
    %v4476 = vpop.f32.mrf.mxu0
    %v4477 = vadd.f32 %v4390, %v4476
    %v4478 = vpop.f32.mrf.mxu0
    %4479 = vmatprep.mubr.bf16.mxu0 0
    %4480 = vmatmul.mubr.bf16.gmra.mxu0 %v4419
    %v4481 = vpop.f32.mrf.mxu0
    %v4482 = vadd.f32 %v4390, %v4481
    %v4483 = vpop.f32.mrf.mxu0
    %v4484 = vpop.f32.mrf.mxu0
    %v4485 = vadd.f32 %v4390, %v4484
    %v4486 = vpop.f32.mrf.mxu0
    %4487 = vmatprep.mubr.bf16.mxu0 0
    %4488 = vmatmul.mubr.bf16.gmra.mxu0 %v4422
    %v4489 = vpop.f32.mrf.mxu0
    %v4490 = vadd.f32 %v4390, %v4489
    %v4491 = vpop.f32.mrf.mxu0
    %v4492 = vpop.f32.mrf.mxu0
    %v4493 = vadd.f32 %v4390, %v4492
    %v4494 = vpop.f32.mrf.mxu0
    %4495 = vmatprep.mubr.bf16.mxu0 0
    %4496 = vmatmul.mubr.bf16.gmra.mxu0 %v4425
    %v4497 = vpop.f32.mrf.mxu0
    %v4498 = vadd.f32 %v4390, %v4497
    %v4499 = vpop.f32.mrf.mxu0
    %v4500 = vpop.f32.mrf.mxu0
    %v4501 = vadd.f32 %v4390, %v4500
    %v4502 = vpop.f32.mrf.mxu0
    %4503 = vmatprep.mubr.bf16.mxu0 0
    %4504 = vmatmul.mubr.bf16.gmra.mxu0 %v4428
    %v4505 = vpop.f32.mrf.mxu0
    %v4506 = vadd.f32 %v4390, %v4505
    %v4507 = vpop.f32.mrf.mxu0
    %v4508 = vpop.f32.mrf.mxu0
    %v4509 = vadd.f32 %v4390, %v4508
    %v4510 = vpop.f32.mrf.mxu0
    %4511 = vmatprep.mubr.bf16.mxu0 0
    %4512 = vmatmul.mubr.bf16.gmra.mxu0 %v4431
    %v4513 = vpop.f32.mrf.mxu0
    %v4514 = vadd.f32 %v4390, %v4513
    %v4515 = vpop.f32.mrf.mxu0
    %v4516 = vpop.f32.mrf.mxu0
    %v4517 = vadd.f32 %v4390, %v4516
    %v4518 = vpop.f32.mrf.mxu0
    %4519 = vmatprep.mubr.bf16.mxu0 0
    %4520 = vmatmul.mubr.bf16.gmra.mxu0 %v4434
    %v4521 = vpop.f32.mrf.mxu0
    %v4522 = vadd.f32 %v4390, %v4521
    %v4523 = vpop.f32.mrf.mxu0
    %v4524 = vpop.f32.mrf.mxu0
    %v4525 = vadd.f32 %v4390, %v4524
    %v4526 = vpop.f32.mrf.mxu0
    %4527 = vmatprep.mubr.bf16.mxu0 0
    %4528 = vmatmul.mubr.bf16.gmra.mxu0 %v4437
    %v4529 = vpop.f32.mrf.mxu0
    %v4530 = vadd.f32 %v4390, %v4529
    %v4531 = vpop.f32.mrf.mxu0
    %v4532 = vpop.f32.mrf.mxu0
    %v4533 = vadd.f32 %v4390, %v4532
    %v4534 = vpop.f32.mrf.mxu0
    %4535 = vdwg.mxu0
    %v4536 = vadd.f32 %v1351, %v4474
    %v4537 = vadd.f32 %v1352, %v4477
    %v4538 = vadd.f32 %v1353, %v4482
    %v4539 = vadd.f32 %v1354, %v4485
    %v4540 = vadd.f32 %v1355, %v4490
    %v4541 = vadd.f32 %v1356, %v4493
    %v4542 = vadd.f32 %v1357, %v4498
    %v4543 = vadd.f32 %v1358, %v4501
    %v4544 = vadd.f32 %v1359, %v4506
    %v4545 = vadd.f32 %v1360, %v4509
    %v4546 = vadd.f32 %v1361, %v4514
    %v4547 = vadd.f32 %v1362, %v4517
    %v4548 = vadd.f32 %v1363, %v4522
    %v4549 = vadd.f32 %v1364, %v4525
    %v4550 = vadd.f32 %v1365, %v4530
    %v4551 = vadd.f32 %v1366, %v4533
    %v4552 = vsel %vm1453, %v4536, 0.0
    %4553 = vadd.xlane.f32.xlu0 %v4552
    %v4554 = vpop.xlane.xlu0 %4553
    %v4555 = vsel %vm1453, %v4537, 0.0
    %4556 = vadd.xlane.f32.xlu0 %v4555
    %v4557 = vpop.xlane.xlu0 %4556
    %v4558 = vsel %vm1453, %v4538, 0.0
    %4559 = vadd.xlane.f32.xlu0 %v4558
    %v4560 = vpop.xlane.xlu0 %4559
    %v4561 = vsel %vm1453, %v4539, 0.0
    %4562 = vadd.xlane.f32.xlu0 %v4561
    %v4563 = vpop.xlane.xlu0 %4562
    %v4564 = vsel %vm1453, %v4540, 0.0
    %4565 = vadd.xlane.f32.xlu0 %v4564
    %v4566 = vpop.xlane.xlu0 %4565
    %v4567 = vsel %vm1453, %v4541, 0.0
    %4568 = vadd.xlane.f32.xlu0 %v4567
    %v4569 = vpop.xlane.xlu0 %4568
    %v4570 = vsel %vm1453, %v4542, 0.0
    %4571 = vadd.xlane.f32.xlu0 %v4570
    %v4572 = vpop.xlane.xlu0 %4571
    %v4573 = vsel %vm1453, %v4543, 0.0
    %4574 = vadd.xlane.f32.xlu0 %v4573
    %v4575 = vpop.xlane.xlu0 %4574
    %v4576 = vsel %vm1453, %v4544, 0.0
    %4577 = vadd.xlane.f32.xlu0 %v4576
    %v4578 = vpop.xlane.xlu0 %4577
    %v4579 = vsel %vm1453, %v4545, 0.0
    %4580 = vadd.xlane.f32.xlu0 %v4579
    %v4581 = vpop.xlane.xlu0 %4580
    %v4582 = vsel %vm1453, %v4546, 0.0
    %4583 = vadd.xlane.f32.xlu0 %v4582
    %v4584 = vpop.xlane.xlu0 %4583
    %v4585 = vsel %vm1453, %v4547, 0.0
    %4586 = vadd.xlane.f32.xlu0 %v4585
    %v4587 = vpop.xlane.xlu0 %4586
    %v4588 = vsel %vm1453, %v4548, 0.0
    %4589 = vadd.xlane.f32.xlu0 %v4588
    %v4590 = vpop.xlane.xlu0 %4589
    %v4591 = vsel %vm1453, %v4549, 0.0
    %4592 = vadd.xlane.f32.xlu0 %v4591
    %v4593 = vpop.xlane.xlu0 %4592
    %v4594 = vsel %vm1453, %v4550, 0.0
    %4595 = vadd.xlane.f32.xlu0 %v4594
    %v4596 = vpop.xlane.xlu0 %4595
    %v4597 = vsel %vm1453, %v4551, 0.0
    %4598 = vadd.xlane.f32.xlu0 %v4597
    %v4599 = vpop.xlane.xlu0 %4598
    %v4600 = vrcp.pop 64.0
    %v4601 = vmul.f32 %v4554, %v4600
    %v4602 = vmul.f32 %v4557, %v4600
    %v4603 = vmul.f32 %v4560, %v4600
    %v4604 = vmul.f32 %v4563, %v4600
    %v4605 = vmul.f32 %v4566, %v4600
    %v4606 = vmul.f32 %v4569, %v4600
    %v4607 = vmul.f32 %v4572, %v4600
    %v4608 = vmul.f32 %v4575, %v4600
    %v4609 = vmul.f32 %v4578, %v4600
    %v4610 = vmul.f32 %v4581, %v4600
    %v4611 = vmul.f32 %v4584, %v4600
    %v4612 = vmul.f32 %v4587, %v4600
    %v4613 = vmul.f32 %v4590, %v4600
    %v4614 = vmul.f32 %v4593, %v4600
    %v4615 = vmul.f32 %v4596, %v4600
    %v4616 = vmul.f32 %v4599, %v4600
    %v4617 = vsub.f32 %v4536, %v4601
    %v4618 = vsub.f32 %v4537, %v4602
    %v4619 = vsub.f32 %v4538, %v4603
    %v4620 = vsub.f32 %v4539, %v4604
    %v4621 = vsub.f32 %v4540, %v4605
    %v4622 = vsub.f32 %v4541, %v4606
    %v4623 = vsub.f32 %v4542, %v4607
    %v4624 = vsub.f32 %v4543, %v4608
    %v4625 = vsub.f32 %v4544, %v4609
    %v4626 = vsub.f32 %v4545, %v4610
    %v4627 = vsub.f32 %v4546, %v4611
    %v4628 = vsub.f32 %v4547, %v4612
    %v4629 = vsub.f32 %v4548, %v4613
    %v4630 = vsub.f32 %v4549, %v4614
    %v4631 = vsub.f32 %v4550, %v4615
    %v4632 = vsub.f32 %v4551, %v4616
    %v4633 = vmul.f32 %v4617, %v4617
    %v4634 = vmul.f32 %v4618, %v4618
    %v4635 = vmul.f32 %v4619, %v4619
    %v4636 = vmul.f32 %v4620, %v4620
    %v4637 = vmul.f32 %v4621, %v4621
    %v4638 = vmul.f32 %v4622, %v4622
    %v4639 = vmul.f32 %v4623, %v4623
    %v4640 = vmul.f32 %v4624, %v4624
    %v4641 = vmul.f32 %v4625, %v4625
    %v4642 = vmul.f32 %v4626, %v4626
    %v4643 = vmul.f32 %v4627, %v4627
    %v4644 = vmul.f32 %v4628, %v4628
    %v4645 = vmul.f32 %v4629, %v4629
    %v4646 = vmul.f32 %v4630, %v4630
    %v4647 = vmul.f32 %v4631, %v4631
    %v4648 = vmul.f32 %v4632, %v4632
    %v4649 = vsel %vm1453, %v4633, 0.0
    %4650 = vadd.xlane.f32.xlu0 %v4649
    %v4651 = vpop.xlane.xlu0 %4650
    %v4652 = vsel %vm1453, %v4634, 0.0
    %4653 = vadd.xlane.f32.xlu0 %v4652
    %v4654 = vpop.xlane.xlu0 %4653
    %v4655 = vsel %vm1453, %v4635, 0.0
    %4656 = vadd.xlane.f32.xlu0 %v4655
    %v4657 = vpop.xlane.xlu0 %4656
    %v4658 = vsel %vm1453, %v4636, 0.0
    %4659 = vadd.xlane.f32.xlu0 %v4658
    %v4660 = vpop.xlane.xlu0 %4659
    %v4661 = vsel %vm1453, %v4637, 0.0
    %4662 = vadd.xlane.f32.xlu0 %v4661
    %v4663 = vpop.xlane.xlu0 %4662
    %v4664 = vsel %vm1453, %v4638, 0.0
    %4665 = vadd.xlane.f32.xlu0 %v4664
    %v4666 = vpop.xlane.xlu0 %4665
    %v4667 = vsel %vm1453, %v4639, 0.0
    %4668 = vadd.xlane.f32.xlu0 %v4667
    %v4669 = vpop.xlane.xlu0 %4668
    %v4670 = vsel %vm1453, %v4640, 0.0
    %4671 = vadd.xlane.f32.xlu0 %v4670
    %v4672 = vpop.xlane.xlu0 %4671
    %v4673 = vsel %vm1453, %v4641, 0.0
    %4674 = vadd.xlane.f32.xlu0 %v4673
    %v4675 = vpop.xlane.xlu0 %4674
    %v4676 = vsel %vm1453, %v4642, 0.0
    %4677 = vadd.xlane.f32.xlu0 %v4676
    %v4678 = vpop.xlane.xlu0 %4677
    %v4679 = vsel %vm1453, %v4643, 0.0
    %4680 = vadd.xlane.f32.xlu0 %v4679
    %v4681 = vpop.xlane.xlu0 %4680
    %v4682 = vsel %vm1453, %v4644, 0.0
    %4683 = vadd.xlane.f32.xlu0 %v4682
    %v4684 = vpop.xlane.xlu0 %4683
    %v4685 = vsel %vm1453, %v4645, 0.0
    %4686 = vadd.xlane.f32.xlu0 %v4685
    %v4687 = vpop.xlane.xlu0 %4686
    %v4688 = vsel %vm1453, %v4646, 0.0
    %4689 = vadd.xlane.f32.xlu0 %v4688
    %v4690 = vpop.xlane.xlu0 %4689
    %v4691 = vsel %vm1453, %v4647, 0.0
    %4692 = vadd.xlane.f32.xlu0 %v4691
    %v4693 = vpop.xlane.xlu0 %4692
    %v4694 = vsel %vm1453, %v4648, 0.0
    %4695 = vadd.xlane.f32.xlu0 %v4694
    %v4696 = vpop.xlane.xlu0 %4695
    %v4697 = vmul.f32 %v4651, %v4600
    %v4698 = vmul.f32 %v4654, %v4600
    %v4699 = vmul.f32 %v4657, %v4600
    %v4700 = vmul.f32 %v4660, %v4600
    %v4701 = vmul.f32 %v4663, %v4600
    %v4702 = vmul.f32 %v4666, %v4600
    %v4703 = vmul.f32 %v4669, %v4600
    %v4704 = vmul.f32 %v4672, %v4600
    %v4705 = vmul.f32 %v4675, %v4600
    %v4706 = vmul.f32 %v4678, %v4600
    %v4707 = vmul.f32 %v4681, %v4600
    %v4708 = vmul.f32 %v4684, %v4600
    %v4709 = vmul.f32 %v4687, %v4600
    %v4710 = vmul.f32 %v4690, %v4600
    %v4711 = vmul.f32 %v4693, %v4600
    %v4712 = vmul.f32 %v4696, %v4600
    %v4713 = vadd.f32 %v4697, 1e-05
    %v4714 = vadd.f32 %v4698, 1e-05
    %v4715 = vadd.f32 %v4699, 1e-05
    %v4716 = vadd.f32 %v4700, 1e-05
    %v4717 = vadd.f32 %v4701, 1e-05
    %v4718 = vadd.f32 %v4702, 1e-05
    %v4719 = vadd.f32 %v4703, 1e-05
    %v4720 = vadd.f32 %v4704, 1e-05
    %v4721 = vadd.f32 %v4705, 1e-05
    %v4722 = vadd.f32 %v4706, 1e-05
    %v4723 = vadd.f32 %v4707, 1e-05
    %v4724 = vadd.f32 %v4708, 1e-05
    %v4725 = vadd.f32 %v4709, 1e-05
    %v4726 = vadd.f32 %v4710, 1e-05
    %v4727 = vadd.f32 %v4711, 1e-05
    %v4728 = vadd.f32 %v4712, 1e-05
    %v4729 = vrsqrt.pop %v4713
    %v4730 = vrsqrt.pop %v4714
    %v4731 = vrsqrt.pop %v4715
    %v4732 = vrsqrt.pop %v4716
    %v4733 = vrsqrt.pop %v4717
    %v4734 = vrsqrt.pop %v4718
    %v4735 = vrsqrt.pop %v4719
    %v4736 = vrsqrt.pop %v4720
    %v4737 = vrsqrt.pop %v4721
    %v4738 = vrsqrt.pop %v4722
    %v4739 = vrsqrt.pop %v4723
    %v4740 = vrsqrt.pop %v4724
    %v4741 = vrsqrt.pop %v4725
    %v4742 = vrsqrt.pop %v4726
    %v4743 = vrsqrt.pop %v4727
    %v4744 = vrsqrt.pop %v4728
    %v4745 = vmul.f32 %v4617, %v4729
    %v4746 = vmul.f32 %v4618, %v4730
    %v4747 = vmul.f32 %v4619, %v4731
    %v4748 = vmul.f32 %v4620, %v4732
    %v4749 = vmul.f32 %v4621, %v4733
    %v4750 = vmul.f32 %v4622, %v4734
    %v4751 = vmul.f32 %v4623, %v4735
    %v4752 = vmul.f32 %v4624, %v4736
    %v4753 = vmul.f32 %v4625, %v4737
    %v4754 = vmul.f32 %v4626, %v4738
    %v4755 = vmul.f32 %v4627, %v4739
    %v4756 = vmul.f32 %v4628, %v4740
    %v4757 = vmul.f32 %v4629, %v4741
    %v4758 = vmul.f32 %v4630, %v4742
    %v4759 = vmul.f32 %v4631, %v4743
    %v4760 = vmul.f32 %v4632, %v4744
    %v4761 = vlaneseq
    %v4762 = vshrl.u32 %v4761, 7
    %v4763 = vsub.s32 4, %v4762
    %v4764 = vrot.slane %v1395, %v4763
    %v4765 = vmul.f32 %v4745, %v4764
    %v4766 = vmul.f32 %v4746, %v4764
    %v4767 = vmul.f32 %v4747, %v4764
    %v4768 = vmul.f32 %v4748, %v4764
    %v4769 = vmul.f32 %v4749, %v4764
    %v4770 = vmul.f32 %v4750, %v4764
    %v4771 = vmul.f32 %v4751, %v4764
    %v4772 = vmul.f32 %v4752, %v4764
    %v4773 = vmul.f32 %v4753, %v4764
    %v4774 = vmul.f32 %v4754, %v4764
    %v4775 = vmul.f32 %v4755, %v4764
    %v4776 = vmul.f32 %v4756, %v4764
    %v4777 = vmul.f32 %v4757, %v4764
    %v4778 = vmul.f32 %v4758, %v4764
    %v4779 = vmul.f32 %v4759, %v4764
    %v4780 = vmul.f32 %v4760, %v4764
    %v4781 = vlaneseq
    %v4782 = vshrl.u32 %v4781, 7
    %v4783 = vsub.s32 5, %v4782
    %v4784 = vrot.slane %v1395, %v4783
    %v4785 = vadd.f32 %v4765, %v4784
    %v4786 = vadd.f32 %v4766, %v4784
    %v4787 = vadd.f32 %v4767, %v4784
    %v4788 = vadd.f32 %v4768, %v4784
    %v4789 = vadd.f32 %v4769, %v4784
    %v4790 = vadd.f32 %v4770, %v4784
    %v4791 = vadd.f32 %v4771, %v4784
    %v4792 = vadd.f32 %v4772, %v4784
    %v4793 = vadd.f32 %v4773, %v4784
    %v4794 = vadd.f32 %v4774, %v4784
    %v4795 = vadd.f32 %v4775, %v4784
    %v4796 = vadd.f32 %v4776, %v4784
    %v4797 = vadd.f32 %v4777, %v4784
    %v4798 = vadd.f32 %v4778, %v4784
    %v4799 = vadd.f32 %v4779, %v4784
    %v4800 = vadd.f32 %v4780, %v4784
    %v4801 = vpack.c.bf16 %v4786, %v4785
    %v4802 = vpack.c.bf16 %v4788, %v4787
    %v4803 = vpack.c.bf16 %v4790, %v4789
    %v4804 = vpack.c.bf16 %v4792, %v4791
    %v4805 = vpack.c.bf16 %v4794, %v4793
    %v4806 = vpack.c.bf16 %v4796, %v4795
    %v4807 = vpack.c.bf16 %v4798, %v4797
    %v4808 = vpack.c.bf16 %v4800, %v4799
    %v4809 = vlaneseq
    %v4810 = vshrl.u32 %v4809, 7
    %v4811 = vsub.s32 2, %v4810
    %v4812 = vrot.slane %v1395, %v4811
    %v4821 = vunpack.c.l.b16 %v1383
    %v4822 = vunpack.c.l.b16 %v1384
    %v4823 = vunpack.c.l.b16 %v1385
    %v4824 = vunpack.c.l.b16 %v1386
    %v4825 = vunpack.c.l.b16 %v1387
    %v4826 = vunpack.c.l.b16 %v1388
    %v4827 = vunpack.c.l.b16 %v1389
    %v4828 = vunpack.c.l.b16 %v1390
    %v4829 = vpack.c.b16 %v4822, %v4821
    %v4830 = vpack.c.b16 %v4824, %v4823
    %v4831 = vpack.c.b16 %v4826, %v4825
    %v4832 = vpack.c.b16 %v4828, %v4827
    %v4838 = vsel %vm1453, %v4801, 0
    %v4841 = vsel %vm1453, %v4802, 0
    %v4844 = vsel %vm1453, %v4803, 0
    %v4847 = vsel %vm1453, %v4804, 0
    %v4850 = vsel %vm1453, %v4805, 0
    %v4853 = vsel %vm1453, %v4806, 0
    %v4856 = vsel %vm1453, %v4807, 0
    %v4859 = vsel %vm1453, %v4808, 0
    %4861 = vmatprep.subr.bf16.mxu0 0
    %4862 = vmatpush1.bf16.msra.mxu0 0
    %4863 = vmatprep.subr.bf16.mxu0 0
    %4864 = vmatpush1.bf16.msra.mxu0 0
    %4865 = vmatprep.subr.bf16.mxu0 0
    %4866 = vmatpush1.bf16.msra.mxu0 0
    %4867 = vmatprep.subr.bf16.mxu0 0
    %4868 = vmatpush1.bf16.msra.mxu0 0
    %4869 = vmatprep.subr.bf16.mxu0 0
    %4870 = vmatpush1.bf16.msra.mxu0 %v4832
    %4871 = vmatprep.subr.bf16.mxu0 0
    %4872 = vmatpush1.bf16.msra.mxu0 %v4831
    %4873 = vmatprep.subr.bf16.mxu0 0
    %4874 = vmatpush1.bf16.msra.mxu0 %v4830
    %4875 = vmatprep.subr.bf16.mxu0 0
    %4876 = vmatpush1.bf16.msra.mxu0 %v4829
    %4877 = vmatprep.subr.bf16.mxu0 0
    %4878 = vmatpush2.bf16.msra.mxu0 0
    %4879 = vmatprep.subr.bf16.mxu0 0
    %4880 = vmatpush2.bf16.msra.mxu0 0
    %4881 = vmatprep.subr.bf16.mxu0 0
    %4882 = vmatpush2.bf16.msra.mxu0 0
    %4883 = vmatprep.subr.bf16.mxu0 0
    %4884 = vmatpush2.bf16.msra.mxu0 0
    %4885 = vmatprep.subr.bf16.mxu0 0
    %4886 = vmatpush2.bf16.msra.mxu0 0
    %4887 = vmatprep.subr.bf16.mxu0 0
    %4888 = vmatpush2.bf16.msra.mxu0 0
    %4889 = vmatprep.subr.bf16.mxu0 0
    %4890 = vmatpush2.bf16.msra.mxu0 0
    %4891 = vmatprep.subr.bf16.mxu0 0
    %4892 = vmatpush2.bf16.msra.mxu0 0
    %4893 = vmatprep.mubr.bf16.mxu0 0
    %4894 = vmatmul.mubr.bf16.gmra.mxu0 %v4838
    %v4895 = vpop.f32.mrf.mxu0
    %v4896 = vadd.f32 %v4812, %v4895
    %v4897 = vpop.f32.mrf.mxu0
    %v4898 = vpop.f32.mrf.mxu0
    %v4899 = vadd.f32 %v4812, %v4898
    %v4900 = vpop.f32.mrf.mxu0
    %4901 = vmatprep.mubr.bf16.mxu0 0
    %4902 = vmatmul.mubr.bf16.gmra.mxu0 %v4841
    %v4903 = vpop.f32.mrf.mxu0
    %v4904 = vadd.f32 %v4812, %v4903
    %v4905 = vpop.f32.mrf.mxu0
    %v4906 = vpop.f32.mrf.mxu0
    %v4907 = vadd.f32 %v4812, %v4906
    %v4908 = vpop.f32.mrf.mxu0
    %4909 = vmatprep.mubr.bf16.mxu0 0
    %4910 = vmatmul.mubr.bf16.gmra.mxu0 %v4844
    %v4911 = vpop.f32.mrf.mxu0
    %v4912 = vadd.f32 %v4812, %v4911
    %v4913 = vpop.f32.mrf.mxu0
    %v4914 = vpop.f32.mrf.mxu0
    %v4915 = vadd.f32 %v4812, %v4914
    %v4916 = vpop.f32.mrf.mxu0
    %4917 = vmatprep.mubr.bf16.mxu0 0
    %4918 = vmatmul.mubr.bf16.gmra.mxu0 %v4847
    %v4919 = vpop.f32.mrf.mxu0
    %v4920 = vadd.f32 %v4812, %v4919
    %v4921 = vpop.f32.mrf.mxu0
    %v4922 = vpop.f32.mrf.mxu0
    %v4923 = vadd.f32 %v4812, %v4922
    %v4924 = vpop.f32.mrf.mxu0
    %4925 = vmatprep.mubr.bf16.mxu0 0
    %4926 = vmatmul.mubr.bf16.gmra.mxu0 %v4850
    %v4927 = vpop.f32.mrf.mxu0
    %v4928 = vadd.f32 %v4812, %v4927
    %v4929 = vpop.f32.mrf.mxu0
    %v4930 = vpop.f32.mrf.mxu0
    %v4931 = vadd.f32 %v4812, %v4930
    %v4932 = vpop.f32.mrf.mxu0
    %4933 = vmatprep.mubr.bf16.mxu0 0
    %4934 = vmatmul.mubr.bf16.gmra.mxu0 %v4853
    %v4935 = vpop.f32.mrf.mxu0
    %v4936 = vadd.f32 %v4812, %v4935
    %v4937 = vpop.f32.mrf.mxu0
    %v4938 = vpop.f32.mrf.mxu0
    %v4939 = vadd.f32 %v4812, %v4938
    %v4940 = vpop.f32.mrf.mxu0
    %4941 = vmatprep.mubr.bf16.mxu0 0
    %4942 = vmatmul.mubr.bf16.gmra.mxu0 %v4856
    %v4943 = vpop.f32.mrf.mxu0
    %v4944 = vadd.f32 %v4812, %v4943
    %v4945 = vpop.f32.mrf.mxu0
    %v4946 = vpop.f32.mrf.mxu0
    %v4947 = vadd.f32 %v4812, %v4946
    %v4948 = vpop.f32.mrf.mxu0
    %4949 = vmatprep.mubr.bf16.mxu0 0
    %4950 = vmatmul.mubr.bf16.gmra.mxu0 %v4859
    %v4951 = vpop.f32.mrf.mxu0
    %v4952 = vadd.f32 %v4812, %v4951
    %v4953 = vpop.f32.mrf.mxu0
    %v4954 = vpop.f32.mrf.mxu0
    %v4955 = vadd.f32 %v4812, %v4954
    %v4956 = vpop.f32.mrf.mxu0
    %4957 = vdwg.mxu0
    %v4958 = vmax.f32 %v4896, 0.0
    %v4959 = vmax.f32 %v4899, 0.0
    %v4960 = vmax.f32 %v4904, 0.0
    %v4961 = vmax.f32 %v4907, 0.0
    %v4962 = vmax.f32 %v4912, 0.0
    %v4963 = vmax.f32 %v4915, 0.0
    %v4964 = vmax.f32 %v4920, 0.0
    %v4965 = vmax.f32 %v4923, 0.0
    %v4966 = vmax.f32 %v4928, 0.0
    %v4967 = vmax.f32 %v4931, 0.0
    %v4968 = vmax.f32 %v4936, 0.0
    %v4969 = vmax.f32 %v4939, 0.0
    %v4970 = vmax.f32 %v4944, 0.0
    %v4971 = vmax.f32 %v4947, 0.0
    %v4972 = vmax.f32 %v4952, 0.0
    %v4973 = vmax.f32 %v4955, 0.0
    %v4974 = vpack.c.bf16 %v4959, %v4958
    %v4975 = vpack.c.bf16 %v4961, %v4960
    %v4976 = vpack.c.bf16 %v4963, %v4962
    %v4977 = vpack.c.bf16 %v4965, %v4964
    %v4978 = vpack.c.bf16 %v4967, %v4966
    %v4979 = vpack.c.bf16 %v4969, %v4968
    %v4980 = vpack.c.bf16 %v4971, %v4970
    %v4981 = vpack.c.bf16 %v4973, %v4972
    %v4982 = vlaneseq
    %v4983 = vshrl.u32 %v4982, 7
    %v4984 = vsub.s32 3, %v4983
    %v4985 = vrot.slane %v1395, %v4984
    %v4990 = vunpack.c.l.b16 %v1391
    %v4991 = vunpack.c.l.b16 %v1392
    %v4992 = vunpack.c.l.b16 %v1393
    %v4993 = vunpack.c.l.b16 %v1394
    %v4994 = vpack.c.b16 %v4991, %v4990
    %v4995 = vpack.c.b16 %v4993, %v4992
    %v4999 = vsel %vm101, %v4974, 0
    %v5002 = vsel %vm101, %v4975, 0
    %v5005 = vsel %vm101, %v4976, 0
    %v5008 = vsel %vm101, %v4977, 0
    %v5011 = vsel %vm101, %v4978, 0
    %v5014 = vsel %vm101, %v4979, 0
    %v5017 = vsel %vm101, %v4980, 0
    %v5020 = vsel %vm101, %v4981, 0
    %5022 = vmatprep.subr.bf16.mxu0 0
    %5023 = vmatpush1.bf16.msra.mxu0 0
    %5024 = vmatprep.subr.bf16.mxu0 0
    %5025 = vmatpush1.bf16.msra.mxu0 0
    %5026 = vmatprep.subr.bf16.mxu0 0
    %5027 = vmatpush1.bf16.msra.mxu0 0
    %5028 = vmatprep.subr.bf16.mxu0 0
    %5029 = vmatpush1.bf16.msra.mxu0 0
    %5030 = vmatprep.subr.bf16.mxu0 0
    %5031 = vmatpush1.bf16.msra.mxu0 0
    %5032 = vmatprep.subr.bf16.mxu0 0
    %5033 = vmatpush1.bf16.msra.mxu0 0
    %5034 = vmatprep.subr.bf16.mxu0 0
    %5035 = vmatpush1.bf16.msra.mxu0 %v4995
    %5036 = vmatprep.subr.bf16.mxu0 0
    %5037 = vmatpush1.bf16.msra.mxu0 %v4994
    %5038 = vmatprep.subr.bf16.mxu0 0
    %5039 = vmatpush2.bf16.msra.mxu0 0
    %5040 = vmatprep.subr.bf16.mxu0 0
    %5041 = vmatpush2.bf16.msra.mxu0 0
    %5042 = vmatprep.subr.bf16.mxu0 0
    %5043 = vmatpush2.bf16.msra.mxu0 0
    %5044 = vmatprep.subr.bf16.mxu0 0
    %5045 = vmatpush2.bf16.msra.mxu0 0
    %5046 = vmatprep.subr.bf16.mxu0 0
    %5047 = vmatpush2.bf16.msra.mxu0 0
    %5048 = vmatprep.subr.bf16.mxu0 0
    %5049 = vmatpush2.bf16.msra.mxu0 0
    %5050 = vmatprep.subr.bf16.mxu0 0
    %5051 = vmatpush2.bf16.msra.mxu0 0
    %5052 = vmatprep.subr.bf16.mxu0 0
    %5053 = vmatpush2.bf16.msra.mxu0 0
    %5054 = vmatprep.mubr.bf16.mxu0 0
    %5055 = vmatmul.mubr.bf16.gmra.mxu0 %v4999
    %v5056 = vpop.f32.mrf.mxu0
    %v5057 = vadd.f32 %v4985, %v5056
    %v5058 = vpop.f32.mrf.mxu0
    %v5059 = vpop.f32.mrf.mxu0
    %v5060 = vadd.f32 %v4985, %v5059
    %v5061 = vpop.f32.mrf.mxu0
    %5062 = vmatprep.mubr.bf16.mxu0 0
    %5063 = vmatmul.mubr.bf16.gmra.mxu0 %v5002
    %v5064 = vpop.f32.mrf.mxu0
    %v5065 = vadd.f32 %v4985, %v5064
    %v5066 = vpop.f32.mrf.mxu0
    %v5067 = vpop.f32.mrf.mxu0
    %v5068 = vadd.f32 %v4985, %v5067
    %v5069 = vpop.f32.mrf.mxu0
    %5070 = vmatprep.mubr.bf16.mxu0 0
    %5071 = vmatmul.mubr.bf16.gmra.mxu0 %v5005
    %v5072 = vpop.f32.mrf.mxu0
    %v5073 = vadd.f32 %v4985, %v5072
    %v5074 = vpop.f32.mrf.mxu0
    %v5075 = vpop.f32.mrf.mxu0
    %v5076 = vadd.f32 %v4985, %v5075
    %v5077 = vpop.f32.mrf.mxu0
    %5078 = vmatprep.mubr.bf16.mxu0 0
    %5079 = vmatmul.mubr.bf16.gmra.mxu0 %v5008
    %v5080 = vpop.f32.mrf.mxu0
    %v5081 = vadd.f32 %v4985, %v5080
    %v5082 = vpop.f32.mrf.mxu0
    %v5083 = vpop.f32.mrf.mxu0
    %v5084 = vadd.f32 %v4985, %v5083
    %v5085 = vpop.f32.mrf.mxu0
    %5086 = vmatprep.mubr.bf16.mxu0 0
    %5087 = vmatmul.mubr.bf16.gmra.mxu0 %v5011
    %v5088 = vpop.f32.mrf.mxu0
    %v5089 = vadd.f32 %v4985, %v5088
    %v5090 = vpop.f32.mrf.mxu0
    %v5091 = vpop.f32.mrf.mxu0
    %v5092 = vadd.f32 %v4985, %v5091
    %v5093 = vpop.f32.mrf.mxu0
    %5094 = vmatprep.mubr.bf16.mxu0 0
    %5095 = vmatmul.mubr.bf16.gmra.mxu0 %v5014
    %v5096 = vpop.f32.mrf.mxu0
    %v5097 = vadd.f32 %v4985, %v5096
    %v5098 = vpop.f32.mrf.mxu0
    %v5099 = vpop.f32.mrf.mxu0
    %v5100 = vadd.f32 %v4985, %v5099
    %v5101 = vpop.f32.mrf.mxu0
    %5102 = vmatprep.mubr.bf16.mxu0 0
    %5103 = vmatmul.mubr.bf16.gmra.mxu0 %v5017
    %v5104 = vpop.f32.mrf.mxu0
    %v5105 = vadd.f32 %v4985, %v5104
    %v5106 = vpop.f32.mrf.mxu0
    %v5107 = vpop.f32.mrf.mxu0
    %v5108 = vadd.f32 %v4985, %v5107
    %v5109 = vpop.f32.mrf.mxu0
    %5110 = vmatprep.mubr.bf16.mxu0 0
    %5111 = vmatmul.mubr.bf16.gmra.mxu0 %v5020
    %v5112 = vpop.f32.mrf.mxu0
    %v5113 = vadd.f32 %v4985, %v5112
    %v5114 = vpop.f32.mrf.mxu0
    %v5115 = vpop.f32.mrf.mxu0
    %v5116 = vadd.f32 %v4985, %v5115
    %v5117 = vpop.f32.mrf.mxu0
    %5118 = vdwg.mxu0
    %v5119 = vadd.f32 %v4785, %v5057
    %v5120 = vadd.f32 %v4786, %v5060
    %v5121 = vadd.f32 %v4787, %v5065
    %v5122 = vadd.f32 %v4788, %v5068
    %v5123 = vadd.f32 %v4789, %v5073
    %v5124 = vadd.f32 %v4790, %v5076
    %v5125 = vadd.f32 %v4791, %v5081
    %v5126 = vadd.f32 %v4792, %v5084
    %v5127 = vadd.f32 %v4793, %v5089
    %v5128 = vadd.f32 %v4794, %v5092
    %v5129 = vadd.f32 %v4795, %v5097
    %v5130 = vadd.f32 %v4796, %v5100
    %v5131 = vadd.f32 %v4797, %v5105
    %v5132 = vadd.f32 %v4798, %v5108
    %v5133 = vadd.f32 %v4799, %v5113
    %v5134 = vadd.f32 %v4800, %v5116
    %v5135 = vsel %vm1453, %v5119, 0.0
    %5136 = vadd.xlane.f32.xlu0 %v5135
    %v5137 = vpop.xlane.xlu0 %5136
    %v5138 = vsel %vm1453, %v5120, 0.0
    %5139 = vadd.xlane.f32.xlu0 %v5138
    %v5140 = vpop.xlane.xlu0 %5139
    %v5141 = vsel %vm1453, %v5121, 0.0
    %5142 = vadd.xlane.f32.xlu0 %v5141
    %v5143 = vpop.xlane.xlu0 %5142
    %v5144 = vsel %vm1453, %v5122, 0.0
    %5145 = vadd.xlane.f32.xlu0 %v5144
    %v5146 = vpop.xlane.xlu0 %5145
    %v5147 = vsel %vm1453, %v5123, 0.0
    %5148 = vadd.xlane.f32.xlu0 %v5147
    %v5149 = vpop.xlane.xlu0 %5148
    %v5150 = vsel %vm1453, %v5124, 0.0
    %5151 = vadd.xlane.f32.xlu0 %v5150
    %v5152 = vpop.xlane.xlu0 %5151
    %v5153 = vsel %vm1453, %v5125, 0.0
    %5154 = vadd.xlane.f32.xlu0 %v5153
    %v5155 = vpop.xlane.xlu0 %5154
    %v5156 = vsel %vm1453, %v5126, 0.0
    %5157 = vadd.xlane.f32.xlu0 %v5156
    %v5158 = vpop.xlane.xlu0 %5157
    %v5159 = vsel %vm1453, %v5127, 0.0
    %5160 = vadd.xlane.f32.xlu0 %v5159
    %v5161 = vpop.xlane.xlu0 %5160
    %v5162 = vsel %vm1453, %v5128, 0.0
    %5163 = vadd.xlane.f32.xlu0 %v5162
    %v5164 = vpop.xlane.xlu0 %5163
    %v5165 = vsel %vm1453, %v5129, 0.0
    %5166 = vadd.xlane.f32.xlu0 %v5165
    %v5167 = vpop.xlane.xlu0 %5166
    %v5168 = vsel %vm1453, %v5130, 0.0
    %5169 = vadd.xlane.f32.xlu0 %v5168
    %v5170 = vpop.xlane.xlu0 %5169
    %v5171 = vsel %vm1453, %v5131, 0.0
    %5172 = vadd.xlane.f32.xlu0 %v5171
    %v5173 = vpop.xlane.xlu0 %5172
    %v5174 = vsel %vm1453, %v5132, 0.0
    %5175 = vadd.xlane.f32.xlu0 %v5174
    %v5176 = vpop.xlane.xlu0 %5175
    %v5177 = vsel %vm1453, %v5133, 0.0
    %5178 = vadd.xlane.f32.xlu0 %v5177
    %v5179 = vpop.xlane.xlu0 %5178
    %v5180 = vsel %vm1453, %v5134, 0.0
    %5181 = vadd.xlane.f32.xlu0 %v5180
    %v5182 = vpop.xlane.xlu0 %5181
    %v5183 = vmul.f32 %v5137, %v4600
    %v5184 = vmul.f32 %v5140, %v4600
    %v5185 = vmul.f32 %v5143, %v4600
    %v5186 = vmul.f32 %v5146, %v4600
    %v5187 = vmul.f32 %v5149, %v4600
    %v5188 = vmul.f32 %v5152, %v4600
    %v5189 = vmul.f32 %v5155, %v4600
    %v5190 = vmul.f32 %v5158, %v4600
    %v5191 = vmul.f32 %v5161, %v4600
    %v5192 = vmul.f32 %v5164, %v4600
    %v5193 = vmul.f32 %v5167, %v4600
    %v5194 = vmul.f32 %v5170, %v4600
    %v5195 = vmul.f32 %v5173, %v4600
    %v5196 = vmul.f32 %v5176, %v4600
    %v5197 = vmul.f32 %v5179, %v4600
    %v5198 = vmul.f32 %v5182, %v4600
    %v5199 = vsub.f32 %v5119, %v5183
    %v5200 = vsub.f32 %v5120, %v5184
    %v5201 = vsub.f32 %v5121, %v5185
    %v5202 = vsub.f32 %v5122, %v5186
    %v5203 = vsub.f32 %v5123, %v5187
    %v5204 = vsub.f32 %v5124, %v5188
    %v5205 = vsub.f32 %v5125, %v5189
    %v5206 = vsub.f32 %v5126, %v5190
    %v5207 = vsub.f32 %v5127, %v5191
    %v5208 = vsub.f32 %v5128, %v5192
    %v5209 = vsub.f32 %v5129, %v5193
    %v5210 = vsub.f32 %v5130, %v5194
    %v5211 = vsub.f32 %v5131, %v5195
    %v5212 = vsub.f32 %v5132, %v5196
    %v5213 = vsub.f32 %v5133, %v5197
    %v5214 = vsub.f32 %v5134, %v5198
    %v5215 = vmul.f32 %v5199, %v5199
    %v5216 = vmul.f32 %v5200, %v5200
    %v5217 = vmul.f32 %v5201, %v5201
    %v5218 = vmul.f32 %v5202, %v5202
    %v5219 = vmul.f32 %v5203, %v5203
    %v5220 = vmul.f32 %v5204, %v5204
    %v5221 = vmul.f32 %v5205, %v5205
    %v5222 = vmul.f32 %v5206, %v5206
    %v5223 = vmul.f32 %v5207, %v5207
    %v5224 = vmul.f32 %v5208, %v5208
    %v5225 = vmul.f32 %v5209, %v5209
    %v5226 = vmul.f32 %v5210, %v5210
    %v5227 = vmul.f32 %v5211, %v5211
    %v5228 = vmul.f32 %v5212, %v5212
    %v5229 = vmul.f32 %v5213, %v5213
    %v5230 = vmul.f32 %v5214, %v5214
    %v5231 = vsel %vm1453, %v5215, 0.0
    %5232 = vadd.xlane.f32.xlu0 %v5231
    %v5233 = vpop.xlane.xlu0 %5232
    %v5234 = vsel %vm1453, %v5216, 0.0
    %5235 = vadd.xlane.f32.xlu0 %v5234
    %v5236 = vpop.xlane.xlu0 %5235
    %v5237 = vsel %vm1453, %v5217, 0.0
    %5238 = vadd.xlane.f32.xlu0 %v5237
    %v5239 = vpop.xlane.xlu0 %5238
    %v5240 = vsel %vm1453, %v5218, 0.0
    %5241 = vadd.xlane.f32.xlu0 %v5240
    %v5242 = vpop.xlane.xlu0 %5241
    %v5243 = vsel %vm1453, %v5219, 0.0
    %5244 = vadd.xlane.f32.xlu0 %v5243
    %v5245 = vpop.xlane.xlu0 %5244
    %v5246 = vsel %vm1453, %v5220, 0.0
    %5247 = vadd.xlane.f32.xlu0 %v5246
    %v5248 = vpop.xlane.xlu0 %5247
    %v5249 = vsel %vm1453, %v5221, 0.0
    %5250 = vadd.xlane.f32.xlu0 %v5249
    %v5251 = vpop.xlane.xlu0 %5250
    %v5252 = vsel %vm1453, %v5222, 0.0
    %5253 = vadd.xlane.f32.xlu0 %v5252
    %v5254 = vpop.xlane.xlu0 %5253
    %v5255 = vsel %vm1453, %v5223, 0.0
    %5256 = vadd.xlane.f32.xlu0 %v5255
    %v5257 = vpop.xlane.xlu0 %5256
    %v5258 = vsel %vm1453, %v5224, 0.0
    %5259 = vadd.xlane.f32.xlu0 %v5258
    %v5260 = vpop.xlane.xlu0 %5259
    %v5261 = vsel %vm1453, %v5225, 0.0
    %5262 = vadd.xlane.f32.xlu0 %v5261
    %v5263 = vpop.xlane.xlu0 %5262
    %v5264 = vsel %vm1453, %v5226, 0.0
    %5265 = vadd.xlane.f32.xlu0 %v5264
    %v5266 = vpop.xlane.xlu0 %5265
    %v5267 = vsel %vm1453, %v5227, 0.0
    %5268 = vadd.xlane.f32.xlu0 %v5267
    %v5269 = vpop.xlane.xlu0 %5268
    %v5270 = vsel %vm1453, %v5228, 0.0
    %5271 = vadd.xlane.f32.xlu0 %v5270
    %v5272 = vpop.xlane.xlu0 %5271
    %v5273 = vsel %vm1453, %v5229, 0.0
    %5274 = vadd.xlane.f32.xlu0 %v5273
    %v5275 = vpop.xlane.xlu0 %5274
    %v5276 = vsel %vm1453, %v5230, 0.0
    %5277 = vadd.xlane.f32.xlu0 %v5276
    %v5278 = vpop.xlane.xlu0 %5277
    %v5279 = vmul.f32 %v5233, %v4600
    %v5280 = vmul.f32 %v5236, %v4600
    %v5281 = vmul.f32 %v5239, %v4600
    %v5282 = vmul.f32 %v5242, %v4600
    %v5283 = vmul.f32 %v5245, %v4600
    %v5284 = vmul.f32 %v5248, %v4600
    %v5285 = vmul.f32 %v5251, %v4600
    %v5286 = vmul.f32 %v5254, %v4600
    %v5287 = vmul.f32 %v5257, %v4600
    %v5288 = vmul.f32 %v5260, %v4600
    %v5289 = vmul.f32 %v5263, %v4600
    %v5290 = vmul.f32 %v5266, %v4600
    %v5291 = vmul.f32 %v5269, %v4600
    %v5292 = vmul.f32 %v5272, %v4600
    %v5293 = vmul.f32 %v5275, %v4600
    %v5294 = vmul.f32 %v5278, %v4600
    %v5295 = vadd.f32 %v5279, 1e-05
    %v5296 = vadd.f32 %v5280, 1e-05
    %v5297 = vadd.f32 %v5281, 1e-05
    %v5298 = vadd.f32 %v5282, 1e-05
    %v5299 = vadd.f32 %v5283, 1e-05
    %v5300 = vadd.f32 %v5284, 1e-05
    %v5301 = vadd.f32 %v5285, 1e-05
    %v5302 = vadd.f32 %v5286, 1e-05
    %v5303 = vadd.f32 %v5287, 1e-05
    %v5304 = vadd.f32 %v5288, 1e-05
    %v5305 = vadd.f32 %v5289, 1e-05
    %v5306 = vadd.f32 %v5290, 1e-05
    %v5307 = vadd.f32 %v5291, 1e-05
    %v5308 = vadd.f32 %v5292, 1e-05
    %v5309 = vadd.f32 %v5293, 1e-05
    %v5310 = vadd.f32 %v5294, 1e-05
    %v5311 = vrsqrt.pop %v5295
    %v5312 = vrsqrt.pop %v5296
    %v5313 = vrsqrt.pop %v5297
    %v5314 = vrsqrt.pop %v5298
    %v5315 = vrsqrt.pop %v5299
    %v5316 = vrsqrt.pop %v5300
    %v5317 = vrsqrt.pop %v5301
    %v5318 = vrsqrt.pop %v5302
    %v5319 = vrsqrt.pop %v5303
    %v5320 = vrsqrt.pop %v5304
    %v5321 = vrsqrt.pop %v5305
    %v5322 = vrsqrt.pop %v5306
    %v5323 = vrsqrt.pop %v5307
    %v5324 = vrsqrt.pop %v5308
    %v5325 = vrsqrt.pop %v5309
    %v5326 = vrsqrt.pop %v5310
    %v5327 = vmul.f32 %v5199, %v5311
    %v5328 = vmul.f32 %v5200, %v5312
    %v5329 = vmul.f32 %v5201, %v5313
    %v5330 = vmul.f32 %v5202, %v5314
    %v5331 = vmul.f32 %v5203, %v5315
    %v5332 = vmul.f32 %v5204, %v5316
    %v5333 = vmul.f32 %v5205, %v5317
    %v5334 = vmul.f32 %v5206, %v5318
    %v5335 = vmul.f32 %v5207, %v5319
    %v5336 = vmul.f32 %v5208, %v5320
    %v5337 = vmul.f32 %v5209, %v5321
    %v5338 = vmul.f32 %v5210, %v5322
    %v5339 = vmul.f32 %v5211, %v5323
    %v5340 = vmul.f32 %v5212, %v5324
    %v5341 = vmul.f32 %v5213, %v5325
    %v5342 = vmul.f32 %v5214, %v5326
    %v5343 = vlaneseq
    %v5344 = vshrl.u32 %v5343, 7
    %v5345 = vsub.s32 6, %v5344
    %v5346 = vrot.slane %v1395, %v5345
    %v5347 = vmul.f32 %v5327, %v5346
    %v5348 = vmul.f32 %v5328, %v5346
    %v5349 = vmul.f32 %v5329, %v5346
    %v5350 = vmul.f32 %v5330, %v5346
    %v5351 = vmul.f32 %v5331, %v5346
    %v5352 = vmul.f32 %v5332, %v5346
    %v5353 = vmul.f32 %v5333, %v5346
    %v5354 = vmul.f32 %v5334, %v5346
    %v5355 = vmul.f32 %v5335, %v5346
    %v5356 = vmul.f32 %v5336, %v5346
    %v5357 = vmul.f32 %v5337, %v5346
    %v5358 = vmul.f32 %v5338, %v5346
    %v5359 = vmul.f32 %v5339, %v5346
    %v5360 = vmul.f32 %v5340, %v5346
    %v5361 = vmul.f32 %v5341, %v5346
    %v5362 = vmul.f32 %v5342, %v5346
    %v5363 = vlaneseq
    %v5364 = vshrl.u32 %v5363, 7
    %v5365 = vsub.s32 7, %v5364
    %v5366 = vrot.slane %v1395, %v5365
    %v5367 = vadd.f32 %v5347, %v5366
    %v5368 = vadd.f32 %v5348, %v5366
    %v5369 = vadd.f32 %v5349, %v5366
    %v5370 = vadd.f32 %v5350, %v5366
    %v5371 = vadd.f32 %v5351, %v5366
    %v5372 = vadd.f32 %v5352, %v5366
    %v5373 = vadd.f32 %v5353, %v5366
    %v5374 = vadd.f32 %v5354, %v5366
    %v5375 = vadd.f32 %v5355, %v5366
    %v5376 = vadd.f32 %v5356, %v5366
    %v5377 = vadd.f32 %v5357, %v5366
    %v5378 = vadd.f32 %v5358, %v5366
    %v5379 = vadd.f32 %v5359, %v5366
    %v5380 = vadd.f32 %v5360, %v5366
    %v5381 = vadd.f32 %v5361, %v5366
    %v5382 = vadd.f32 %v5362, %v5366
    %s5383 = scalar_lea.vmem %s3, 64
    %v5384 = vld [vmem:[%s5383] sm:$0xff]
    %v5385 = vld [vmem:[%s5383 + $0x8] sm:$0xff]
    %v5386 = vld [vmem:[%s5383 + $0x10] sm:$0xff]
    %v5387 = vld [vmem:[%s5383 + $0x18] sm:$0xff]
    %v5388 = vld [vmem:[%s5383 + $0x20] sm:$0xff]
    %v5389 = vld [vmem:[%s5383 + $0x28] sm:$0xff]
    %v5390 = vld [vmem:[%s5383 + $0x30] sm:$0xff]
    %v5391 = vld [vmem:[%s5383 + $0x38] sm:$0xff]
    %s5392 = scalar_lea.vmem [#allocation9], 32
    %v5393 = vld [vmem:[%s5392] sm:$0xf]
    %v5394 = vld [vmem:[%s5392 + $0x4] sm:$0xf]
    %v5395 = vld [vmem:[%s5392 + $0x8] sm:$0xf]
    %v5396 = vld [vmem:[%s5392 + $0xc] sm:$0xf]
    %v5397 = vld [vmem:[%s5392 + $0x10] sm:$0xf]
    %v5398 = vld [vmem:[%s5392 + $0x14] sm:$0xf]
    %v5399 = vld [vmem:[%s5392 + $0x18] sm:$0xf]
    %v5400 = vld [vmem:[%s5392 + $0x1c] sm:$0xf]
    %s5401 = scalar_lea.vmem %s5, 32
    %v5402 = vld [vmem:[%s5401] sm:$0xf]
    %v5403 = vld [vmem:[%s5401 + $0x4] sm:$0xf]
    %v5404 = vld [vmem:[%s5401 + $0x8] sm:$0xf]
    %v5405 = vld [vmem:[%s5401 + $0xc] sm:$0xf]
    %v5406 = vld [vmem:[%s5401 + $0x10] sm:$0xf]
    %v5407 = vld [vmem:[%s5401 + $0x14] sm:$0xf]
    %v5408 = vld [vmem:[%s5401 + $0x18] sm:$0xf]
    %v5409 = vld [vmem:[%s5401 + $0x1c] sm:$0xf]
    %s5410 = scalar_lea.vmem [#allocation10], 16
    %v5411 = vld [vmem:[%s5410] sm:$0xf]
    %v5412 = vld [vmem:[%s5410 + $0x4] sm:$0xf]
    %v5413 = vld [vmem:[%s5410 + $0x8] sm:$0xf]
    %v5414 = vld [vmem:[%s5410 + $0xc] sm:$0xf]
    %s5415 = scalar_lea.vmem [#allocation12], 16
    %v5416 = vld [vmem:[%s5415] sm:$0xff]
    %v5417 = vld [vmem:[%s5415 + $0x8] sm:$0xff]
    %v5418 = vpack.c.bf16 %v5368, %v5367
    %v5419 = vpack.c.bf16 %v5370, %v5369
    %v5420 = vpack.c.bf16 %v5372, %v5371
    %v5421 = vpack.c.bf16 %v5374, %v5373
    %v5422 = vpack.c.bf16 %v5376, %v5375
    %v5423 = vpack.c.bf16 %v5378, %v5377
    %v5424 = vpack.c.bf16 %v5380, %v5379
    %v5425 = vpack.c.bf16 %v5382, %v5381
    %v5426 = vlaneseq
    %v5427 = vshrl.u32 %v5426, 7
    %v5428 = vsub.s32 0, %v5427
    %v5429 = vrot.slane %v5416, %v5428
    %v5430 = vlaneseq
    %v5431 = vshrl.u32 %v5430, 7
    %v5432 = vsub.s32 0, %v5431
    %v5433 = vrot.slane %v5417, %v5432
    %v5442 = vunpack.c.l.b16 %v5384
    %v5443 = vunpack.c.h.b16 %v5384
    %v5444 = vunpack.c.l.b16 %v5385
    %v5445 = vunpack.c.h.b16 %v5385
    %v5446 = vunpack.c.l.b16 %v5386
    %v5447 = vunpack.c.h.b16 %v5386
    %v5448 = vunpack.c.l.b16 %v5387
    %v5449 = vunpack.c.h.b16 %v5387
    %v5450 = vunpack.c.l.b16 %v5388
    %v5451 = vunpack.c.h.b16 %v5388
    %v5452 = vunpack.c.l.b16 %v5389
    %v5453 = vunpack.c.h.b16 %v5389
    %v5454 = vunpack.c.l.b16 %v5390
    %v5455 = vunpack.c.h.b16 %v5390
    %v5456 = vunpack.c.l.b16 %v5391
    %v5457 = vunpack.c.h.b16 %v5391
    %v5458 = vpack.c.b16 %v5444, %v5442
    %v5459 = vpack.c.b16 %v5445, %v5443
    %v5460 = vpack.c.b16 %v5448, %v5446
    %v5461 = vpack.c.b16 %v5449, %v5447
    %v5462 = vpack.c.b16 %v5452, %v5450
    %v5463 = vpack.c.b16 %v5453, %v5451
    %v5464 = vpack.c.b16 %v5456, %v5454
    %v5465 = vpack.c.b16 %v5457, %v5455
    %v5475 = vsel %vm1453, %v5418, 0
    %v5478 = vsel %vm1453, %v5419, 0
    %v5481 = vsel %vm1453, %v5420, 0
    %v5484 = vsel %vm1453, %v5421, 0
    %v5487 = vsel %vm1453, %v5422, 0
    %v5490 = vsel %vm1453, %v5423, 0
    %v5493 = vsel %vm1453, %v5424, 0
    %v5496 = vsel %vm1453, %v5425, 0
    %5498 = vmatprep.subr.bf16.mxu0 0
    %5499 = vmatpush1.bf16.msra.mxu0 0
    %5500 = vmatprep.subr.bf16.mxu0 0
    %5501 = vmatpush1.bf16.msra.mxu0 0
    %5502 = vmatprep.subr.bf16.mxu0 0
    %5503 = vmatpush1.bf16.msra.mxu0 0
    %5504 = vmatprep.subr.bf16.mxu0 0
    %5505 = vmatpush1.bf16.msra.mxu0 0
    %5506 = vmatprep.subr.bf16.mxu0 %v5465
    %5507 = vmatpush1.bf16.msra.mxu0 %v5464
    %5508 = vmatprep.subr.bf16.mxu0 %v5463
    %5509 = vmatpush1.bf16.msra.mxu0 %v5462
    %5510 = vmatprep.subr.bf16.mxu0 %v5461
    %5511 = vmatpush1.bf16.msra.mxu0 %v5460
    %5512 = vmatprep.subr.bf16.mxu0 %v5459
    %5513 = vmatpush1.bf16.msra.mxu0 %v5458
    %5514 = vmatprep.subr.bf16.mxu0 0
    %5515 = vmatpush2.bf16.msra.mxu0 0
    %5516 = vmatprep.subr.bf16.mxu0 0
    %5517 = vmatpush2.bf16.msra.mxu0 0
    %5518 = vmatprep.subr.bf16.mxu0 0
    %5519 = vmatpush2.bf16.msra.mxu0 0
    %5520 = vmatprep.subr.bf16.mxu0 0
    %5521 = vmatpush2.bf16.msra.mxu0 0
    %5522 = vmatprep.subr.bf16.mxu0 0
    %5523 = vmatpush2.bf16.msra.mxu0 0
    %5524 = vmatprep.subr.bf16.mxu0 0
    %5525 = vmatpush2.bf16.msra.mxu0 0
    %5526 = vmatprep.subr.bf16.mxu0 0
    %5527 = vmatpush2.bf16.msra.mxu0 0
    %5528 = vmatprep.subr.bf16.mxu0 0
    %5529 = vmatpush2.bf16.msra.mxu0 0
    %5530 = vmatprep.mubr.bf16.mxu0 0
    %5531 = vmatmul.mubr.bf16.gmra.mxu0 %v5475
    %v5532 = vpop.f32.mrf.mxu0
    %v5533 = vadd.f32 %v5429, %v5532
    %v5534 = vpop.f32.mrf.mxu0
    %v5535 = vadd.f32 %v5433, %v5534
    %v5536 = vpop.f32.mrf.mxu0
    %v5537 = vadd.f32 %v5429, %v5536
    %v5538 = vpop.f32.mrf.mxu0
    %v5539 = vadd.f32 %v5433, %v5538
    %5540 = vmatprep.mubr.bf16.mxu0 0
    %5541 = vmatmul.mubr.bf16.gmra.mxu0 %v5478
    %v5542 = vpop.f32.mrf.mxu0
    %v5543 = vadd.f32 %v5429, %v5542
    %v5544 = vpop.f32.mrf.mxu0
    %v5545 = vadd.f32 %v5433, %v5544
    %v5546 = vpop.f32.mrf.mxu0
    %v5547 = vadd.f32 %v5429, %v5546
    %v5548 = vpop.f32.mrf.mxu0
    %v5549 = vadd.f32 %v5433, %v5548
    %5550 = vmatprep.mubr.bf16.mxu0 0
    %5551 = vmatmul.mubr.bf16.gmra.mxu0 %v5481
    %v5552 = vpop.f32.mrf.mxu0
    %v5553 = vadd.f32 %v5429, %v5552
    %v5554 = vpop.f32.mrf.mxu0
    %v5555 = vadd.f32 %v5433, %v5554
    %v5556 = vpop.f32.mrf.mxu0
    %v5557 = vadd.f32 %v5429, %v5556
    %v5558 = vpop.f32.mrf.mxu0
    %v5559 = vadd.f32 %v5433, %v5558
    %5560 = vmatprep.mubr.bf16.mxu0 0
    %5561 = vmatmul.mubr.bf16.gmra.mxu0 %v5484
    %v5562 = vpop.f32.mrf.mxu0
    %v5563 = vadd.f32 %v5429, %v5562
    %v5564 = vpop.f32.mrf.mxu0
    %v5565 = vadd.f32 %v5433, %v5564
    %v5566 = vpop.f32.mrf.mxu0
    %v5567 = vadd.f32 %v5429, %v5566
    %v5568 = vpop.f32.mrf.mxu0
    %v5569 = vadd.f32 %v5433, %v5568
    %5570 = vmatprep.mubr.bf16.mxu0 0
    %5571 = vmatmul.mubr.bf16.gmra.mxu0 %v5487
    %v5572 = vpop.f32.mrf.mxu0
    %v5573 = vadd.f32 %v5429, %v5572
    %v5574 = vpop.f32.mrf.mxu0
    %v5575 = vadd.f32 %v5433, %v5574
    %v5576 = vpop.f32.mrf.mxu0
    %v5577 = vadd.f32 %v5429, %v5576
    %v5578 = vpop.f32.mrf.mxu0
    %v5579 = vadd.f32 %v5433, %v5578
    %5580 = vmatprep.mubr.bf16.mxu0 0
    %5581 = vmatmul.mubr.bf16.gmra.mxu0 %v5490
    %v5582 = vpop.f32.mrf.mxu0
    %v5583 = vadd.f32 %v5429, %v5582
    %v5584 = vpop.f32.mrf.mxu0
    %v5585 = vadd.f32 %v5433, %v5584
    %v5586 = vpop.f32.mrf.mxu0
    %v5587 = vadd.f32 %v5429, %v5586
    %v5588 = vpop.f32.mrf.mxu0
    %v5589 = vadd.f32 %v5433, %v5588
    %5590 = vmatprep.mubr.bf16.mxu0 0
    %5591 = vmatmul.mubr.bf16.gmra.mxu0 %v5493
    %v5592 = vpop.f32.mrf.mxu0
    %v5593 = vadd.f32 %v5429, %v5592
    %v5594 = vpop.f32.mrf.mxu0
    %v5595 = vadd.f32 %v5433, %v5594
    %v5596 = vpop.f32.mrf.mxu0
    %v5597 = vadd.f32 %v5429, %v5596
    %v5598 = vpop.f32.mrf.mxu0
    %v5599 = vadd.f32 %v5433, %v5598
    %5600 = vmatprep.mubr.bf16.mxu0 0
    %5601 = vmatmul.mubr.bf16.gmra.mxu0 %v5496
    %v5602 = vpop.f32.mrf.mxu0
    %v5603 = vadd.f32 %v5429, %v5602
    %v5604 = vpop.f32.mrf.mxu0
    %v5605 = vadd.f32 %v5433, %v5604
    %v5606 = vpop.f32.mrf.mxu0
    %v5607 = vadd.f32 %v5429, %v5606
    %v5608 = vpop.f32.mrf.mxu0
    %v5609 = vadd.f32 %v5433, %v5608
    %5610 = vdwg.mxu0
    %v5611 = vpack.c.bf16 %v5537, %v5533
    %v5612 = vpack.c.bf16 %v5539, %v5535
    %v5613 = vpack.c.bf16 %v5547, %v5543
    %v5614 = vpack.c.bf16 %v5549, %v5545
    %v5615 = vpack.c.bf16 %v5557, %v5553
    %v5616 = vpack.c.bf16 %v5559, %v5555
    %v5617 = vpack.c.bf16 %v5567, %v5563
    %v5618 = vpack.c.bf16 %v5569, %v5565
    %v5619 = vpack.c.bf16 %v5577, %v5573
    %v5620 = vpack.c.bf16 %v5579, %v5575
    %v5621 = vpack.c.bf16 %v5587, %v5583
    %v5622 = vpack.c.bf16 %v5589, %v5585
    %v5623 = vpack.c.bf16 %v5597, %v5593
    %v5624 = vpack.c.bf16 %v5599, %v5595
    %v5625 = vpack.c.bf16 %v5607, %v5603
    %v5626 = vpack.c.bf16 %v5609, %v5605
    %v5643 = vunpack.c.l.b16 %v5611
    %v5644 = vunpack.c.l.b16 %v5612
    %v5645 = vunpack.c.h.b16 %v5611
    %v5646 = vunpack.c.h.b16 %v5612
    %v5647 = vunpack.c.l.b16 %v5613
    %v5648 = vunpack.c.l.b16 %v5614
    %v5649 = vunpack.c.h.b16 %v5613
    %v5650 = vunpack.c.h.b16 %v5614
    %v5651 = vunpack.c.l.b16 %v5615
    %v5652 = vunpack.c.l.b16 %v5616
    %v5653 = vunpack.c.h.b16 %v5615
    %v5654 = vunpack.c.h.b16 %v5616
    %v5655 = vunpack.c.l.b16 %v5617
    %v5656 = vunpack.c.l.b16 %v5618
    %v5657 = vunpack.c.h.b16 %v5617
    %v5658 = vunpack.c.h.b16 %v5618
    %v5659 = vunpack.c.l.b16 %v5619
    %v5660 = vunpack.c.l.b16 %v5620
    %v5661 = vunpack.c.h.b16 %v5619
    %v5662 = vunpack.c.h.b16 %v5620
    %v5663 = vunpack.c.l.b16 %v5621
    %v5664 = vunpack.c.l.b16 %v5622
    %v5665 = vunpack.c.h.b16 %v5621
    %v5666 = vunpack.c.h.b16 %v5622
    %v5667 = vunpack.c.l.b16 %v5623
    %v5668 = vunpack.c.l.b16 %v5624
    %v5669 = vunpack.c.h.b16 %v5623
    %v5670 = vunpack.c.h.b16 %v5624
    %v5671 = vunpack.c.l.b16 %v5625
    %v5672 = vunpack.c.l.b16 %v5626
    %v5673 = vunpack.c.h.b16 %v5625
    %v5674 = vunpack.c.h.b16 %v5626
    %v5675 = vpack.c.b16 %v5644, %v5643
    %v5676 = vpack.c.b16 %v5646, %v5645
    %v5677 = vpack.c.b16 %v5648, %v5647
    %v5678 = vpack.c.b16 %v5650, %v5649
    %v5679 = vpack.c.b16 %v5652, %v5651
    %v5680 = vpack.c.b16 %v5654, %v5653
    %v5681 = vpack.c.b16 %v5656, %v5655
    %v5682 = vpack.c.b16 %v5658, %v5657
    %v5683 = vpack.c.b16 %v5660, %v5659
    %v5684 = vpack.c.b16 %v5662, %v5661
    %v5685 = vpack.c.b16 %v5664, %v5663
    %v5686 = vpack.c.b16 %v5666, %v5665
    %v5687 = vpack.c.b16 %v5668, %v5667
    %v5688 = vpack.c.b16 %v5670, %v5669
    %v5689 = vpack.c.b16 %v5672, %v5671
    %v5690 = vpack.c.b16 %v5674, %v5673
    %5707 = vst.msk [vmem:[#allocation3] sm:$0xff] %vm1688, %v5675
    %5708 = vst.msk [vmem:[#allocation3 + $0x8] sm:$0xff] %vm1688, %v5676
    %5709 = vst.msk [vmem:[#allocation3 + $0x10] sm:$0xff] %vm1688, %v5677
    %5710 = vst.msk [vmem:[#allocation3 + $0x18] sm:$0xff] %vm1688, %v5678
    %5711 = vst.msk [vmem:[#allocation3 + $0x20] sm:$0xff] %vm1688, %v5679
    %5712 = vst.msk [vmem:[#allocation3 + $0x28] sm:$0xff] %vm1688, %v5680
    %5713 = vst.msk [vmem:[#allocation3 + $0x30] sm:$0xff] %vm1688, %v5681
    %5714 = vst.msk [vmem:[#allocation3 + $0x38] sm:$0xff] %vm1688, %v5682
    %5715 = vst.msk [vmem:[#allocation3 + $0x40] sm:$0xff] %vm1688, %v5683
    %5716 = vst.msk [vmem:[#allocation3 + $0x48] sm:$0xff] %vm1688, %v5684
    %5717 = vst.msk [vmem:[#allocation3 + $0x50] sm:$0xff] %vm1688, %v5685
    %5718 = vst.msk [vmem:[#allocation3 + $0x58] sm:$0xff] %vm1688, %v5686
    %5719 = vst.msk [vmem:[#allocation3 + $0x60] sm:$0xff] %vm1688, %v5687
    %5720 = vst.msk [vmem:[#allocation3 + $0x68] sm:$0xff] %vm1688, %v5688
    %5721 = vst.msk [vmem:[#allocation3 + $0x70] sm:$0xff] %vm1688, %v5689
    %5722 = vst.msk [vmem:[#allocation3 + $0x78] sm:$0xff] %vm1688, %v5690
    %v5723 = vld [vmem:[#allocation3] sm:$0xf]
    %v5724 = vld [vmem:[#allocation3 + $0x8] sm:$0xf]
    %v5725 = vld [vmem:[#allocation3 + $0x10] sm:$0xf]
    %v5726 = vld [vmem:[#allocation3 + $0x18] sm:$0xf]
    %v5727 = vld [vmem:[#allocation3 + $0x20] sm:$0xf]
    %v5728 = vld [vmem:[#allocation3 + $0x28] sm:$0xf]
    %v5729 = vld [vmem:[#allocation3 + $0x30] sm:$0xf]
    %v5730 = vld [vmem:[#allocation3 + $0x38] sm:$0xf]
    %v5731 = vld [vmem:[#allocation3 + $0x4] sm:$0xf]
    %v5732 = vld [vmem:[#allocation3 + $0xc] sm:$0xf]
    %v5733 = vld [vmem:[#allocation3 + $0x14] sm:$0xf]
    %v5734 = vld [vmem:[#allocation3 + $0x1c] sm:$0xf]
    %v5735 = vld [vmem:[#allocation3 + $0x24] sm:$0xf]
    %v5736 = vld [vmem:[#allocation3 + $0x2c] sm:$0xf]
    %v5737 = vld [vmem:[#allocation3 + $0x34] sm:$0xf]
    %v5738 = vld [vmem:[#allocation3 + $0x3c] sm:$0xf]
    %v5747 = vunpack.c.l.b16 %v5723
    %v5748 = vunpack.c.l.b16 %v5724
    %v5749 = vunpack.c.l.b16 %v5725
    %v5750 = vunpack.c.l.b16 %v5726
    %v5751 = vunpack.c.l.b16 %v5727
    %v5752 = vunpack.c.l.b16 %v5728
    %v5753 = vunpack.c.l.b16 %v5729
    %v5754 = vunpack.c.l.b16 %v5730
    %v5755 = vpack.c.b16 %v5748, %v5747
    %v5756 = vpack.c.b16 %v5750, %v5749
    %v5757 = vpack.c.b16 %v5752, %v5751
    %v5758 = vpack.c.b16 %v5754, %v5753
    %5759 = vrot.lane.b32.xlu0 %v5755, 64
    %v5760 = vpop.permute.xlu0 %5759
    %5761 = vrot.lane.b32.xlu0 %v5756, 64
    %v5762 = vpop.permute.xlu0 %5761
    %5763 = vrot.lane.b32.xlu0 %v5757, 64
    %v5764 = vpop.permute.xlu0 %5763
    %5765 = vrot.lane.b32.xlu0 %v5758, 64
    %v5766 = vpop.permute.xlu0 %5765
    %v5768 = vsel %vm1749, %v5755, 0
    %v5771 = vsel %vm1749, %v5756, 0
    %v5774 = vsel %vm1749, %v5757, 0
    %v5777 = vsel %vm1749, %v5758, 0
    %v5780 = vsel %vm1749, %v5760, 0
    %v5783 = vsel %vm1749, %v5762, 0
    %v5786 = vsel %vm1749, %v5764, 0
    %v5789 = vsel %vm1749, %v5766, 0
    %5791 = vmatprep.subr.bf16.mxu0 0
    %5792 = vmatpush1.bf16.xpose.msra.mxu0 0
    %5793 = vmatprep.subr.bf16.mxu0 0
    %5794 = vmatpush1.bf16.xpose.msra.mxu0 0
    %5795 = vmatprep.subr.bf16.mxu0 0
    %5796 = vmatpush1.bf16.xpose.msra.mxu0 0
    %5797 = vmatprep.subr.bf16.mxu0 0
    %5798 = vmatpush1.bf16.xpose.msra.mxu0 0
    %5799 = vmatprep.subr.bf16.mxu0 0
    %5800 = vmatpush1.bf16.xpose.msra.mxu0 %v5789
    %5801 = vmatprep.subr.bf16.mxu0 0
    %5802 = vmatpush1.bf16.xpose.msra.mxu0 %v5786
    %5803 = vmatprep.subr.bf16.mxu0 0
    %5804 = vmatpush1.bf16.xpose.msra.mxu0 %v5783
    %5805 = vmatprep.subr.bf16.mxu0 0
    %5806 = vmatpush1.bf16.xpose.msra.mxu0 %v5780
    %5807 = vmatprep.subr.bf16.mxu0 0
    %5808 = vmatpush2.bf16.xpose.msra.mxu0 0
    %5809 = vmatprep.subr.bf16.mxu0 0
    %5810 = vmatpush2.bf16.xpose.msra.mxu0 0
    %5811 = vmatprep.subr.bf16.mxu0 0
    %5812 = vmatpush2.bf16.xpose.msra.mxu0 0
    %5813 = vmatprep.subr.bf16.mxu0 0
    %5814 = vmatpush2.bf16.xpose.msra.mxu0 0
    %5815 = vmatprep.subr.bf16.mxu0 0
    %5816 = vmatpush2.bf16.xpose.msra.mxu0 0
    %5817 = vmatprep.subr.bf16.mxu0 0
    %5818 = vmatpush2.bf16.xpose.msra.mxu0 0
    %5819 = vmatprep.subr.bf16.mxu0 0
    %5820 = vmatpush2.bf16.xpose.msra.mxu0 0
    %5821 = vmatprep.subr.bf16.mxu0 0
    %5822 = vmatpush2.bf16.xpose.msra.mxu0 0
    %5823 = vmatprep.mubr.bf16.mxu0 0
    %5824 = vmatmul.mubr.bf16.gmra.mxu0 %v5768
    %v5825 = vpop.f32.mrf.mxu0
    %v5826 = vadd.f32 0.0, %v5825
    %v5827 = vpop.f32.mrf.mxu0
    %v5828 = vpop.f32.mrf.mxu0
    %v5829 = vadd.f32 0.0, %v5828
    %v5830 = vpop.f32.mrf.mxu0
    %5831 = vmatprep.mubr.bf16.mxu0 0
    %5832 = vmatmul.mubr.bf16.gmra.mxu0 %v5771
    %v5833 = vpop.f32.mrf.mxu0
    %v5834 = vadd.f32 0.0, %v5833
    %v5835 = vpop.f32.mrf.mxu0
    %v5836 = vpop.f32.mrf.mxu0
    %v5837 = vadd.f32 0.0, %v5836
    %v5838 = vpop.f32.mrf.mxu0
    %5839 = vmatprep.mubr.bf16.mxu0 0
    %5840 = vmatmul.mubr.bf16.gmra.mxu0 %v5774
    %v5841 = vpop.f32.mrf.mxu0
    %v5842 = vadd.f32 0.0, %v5841
    %v5843 = vpop.f32.mrf.mxu0
    %v5844 = vpop.f32.mrf.mxu0
    %v5845 = vadd.f32 0.0, %v5844
    %v5846 = vpop.f32.mrf.mxu0
    %5847 = vmatprep.mubr.bf16.mxu0 0
    %5848 = vmatmul.mubr.bf16.gmra.mxu0 %v5777
    %v5849 = vpop.f32.mrf.mxu0
    %v5850 = vadd.f32 0.0, %v5849
    %v5851 = vpop.f32.mrf.mxu0
    %v5852 = vpop.f32.mrf.mxu0
    %v5853 = vadd.f32 0.0, %v5852
    %v5854 = vpop.f32.mrf.mxu0
    %5855 = vdwg.mxu0
    %v5856 = vmul.f32 %v5826, 0.25
    %v5857 = vmul.f32 %v5829, 0.25
    %v5858 = vmul.f32 %v5834, 0.25
    %v5859 = vmul.f32 %v5837, 0.25
    %v5860 = vmul.f32 %v5842, 0.25
    %v5861 = vmul.f32 %v5845, 0.25
    %v5862 = vmul.f32 %v5850, 0.25
    %v5863 = vmul.f32 %v5853, 0.25
    %v5864 = vsel %vm1453, %v5856, -inf
    %5865 = vmax.xlane.f32.xlu0 %v5864
    %v5866 = vpop.xlane.xlu0 %5865
    %v5867 = vsel %vm1453, %v5857, -inf
    %5868 = vmax.xlane.f32.xlu0 %v5867
    %v5869 = vpop.xlane.xlu0 %5868
    %v5870 = vsel %vm1453, %v5858, -inf
    %5871 = vmax.xlane.f32.xlu0 %v5870
    %v5872 = vpop.xlane.xlu0 %5871
    %v5873 = vsel %vm1453, %v5859, -inf
    %5874 = vmax.xlane.f32.xlu0 %v5873
    %v5875 = vpop.xlane.xlu0 %5874
    %v5876 = vsel %vm1453, %v5860, -inf
    %5877 = vmax.xlane.f32.xlu0 %v5876
    %v5878 = vpop.xlane.xlu0 %5877
    %v5879 = vsel %vm1453, %v5861, -inf
    %5880 = vmax.xlane.f32.xlu0 %v5879
    %v5881 = vpop.xlane.xlu0 %5880
    %v5882 = vsel %vm1453, %v5862, -inf
    %5883 = vmax.xlane.f32.xlu0 %v5882
    %v5884 = vpop.xlane.xlu0 %5883
    %v5885 = vsel %vm1453, %v5863, -inf
    %5886 = vmax.xlane.f32.xlu0 %v5885
    %v5887 = vpop.xlane.xlu0 %5886
    %v5888 = vsub.f32 %v5856, %v5866
    %v5889 = vsub.f32 %v5857, %v5869
    %v5890 = vsub.f32 %v5858, %v5872
    %v5891 = vsub.f32 %v5859, %v5875
    %v5892 = vsub.f32 %v5860, %v5878
    %v5893 = vsub.f32 %v5861, %v5881
    %v5894 = vsub.f32 %v5862, %v5884
    %v5895 = vsub.f32 %v5863, %v5887
    %v5896 = vmul.f32 %v5888, 1.442695
    %v5897 = vpow.pop %v5896
    %v5898 = vmul.f32 %v5889, 1.442695
    %v5899 = vpow.pop %v5898
    %v5900 = vmul.f32 %v5890, 1.442695
    %v5901 = vpow.pop %v5900
    %v5902 = vmul.f32 %v5891, 1.442695
    %v5903 = vpow.pop %v5902
    %v5904 = vmul.f32 %v5892, 1.442695
    %v5905 = vpow.pop %v5904
    %v5906 = vmul.f32 %v5893, 1.442695
    %v5907 = vpow.pop %v5906
    %v5908 = vmul.f32 %v5894, 1.442695
    %v5909 = vpow.pop %v5908
    %v5910 = vmul.f32 %v5895, 1.442695
    %v5911 = vpow.pop %v5910
    %v5912 = vsel %vm1453, %v5897, 0.0
    %5913 = vadd.xlane.f32.xlu0 %v5912
    %v5914 = vpop.xlane.xlu0 %5913
    %v5915 = vsel %vm1453, %v5899, 0.0
    %5916 = vadd.xlane.f32.xlu0 %v5915
    %v5917 = vpop.xlane.xlu0 %5916
    %v5918 = vsel %vm1453, %v5901, 0.0
    %5919 = vadd.xlane.f32.xlu0 %v5918
    %v5920 = vpop.xlane.xlu0 %5919
    %v5921 = vsel %vm1453, %v5903, 0.0
    %5922 = vadd.xlane.f32.xlu0 %v5921
    %v5923 = vpop.xlane.xlu0 %5922
    %v5924 = vsel %vm1453, %v5905, 0.0
    %5925 = vadd.xlane.f32.xlu0 %v5924
    %v5926 = vpop.xlane.xlu0 %5925
    %v5927 = vsel %vm1453, %v5907, 0.0
    %5928 = vadd.xlane.f32.xlu0 %v5927
    %v5929 = vpop.xlane.xlu0 %5928
    %v5930 = vsel %vm1453, %v5909, 0.0
    %5931 = vadd.xlane.f32.xlu0 %v5930
    %v5932 = vpop.xlane.xlu0 %5931
    %v5933 = vsel %vm1453, %v5911, 0.0
    %5934 = vadd.xlane.f32.xlu0 %v5933
    %v5935 = vpop.xlane.xlu0 %5934
    %v5936 = vrcp.pop %v5914
    %v5937 = vrcp.pop %v5917
    %v5938 = vrcp.pop %v5920
    %v5939 = vrcp.pop %v5923
    %v5940 = vrcp.pop %v5926
    %v5941 = vrcp.pop %v5929
    %v5942 = vrcp.pop %v5932
    %v5943 = vrcp.pop %v5935
    %v5944 = vmul.f32 %v5897, %v5936
    %v5945 = vmul.f32 %v5899, %v5937
    %v5946 = vmul.f32 %v5901, %v5938
    %v5947 = vmul.f32 %v5903, %v5939
    %v5948 = vmul.f32 %v5905, %v5940
    %v5949 = vmul.f32 %v5907, %v5941
    %v5950 = vmul.f32 %v5909, %v5942
    %v5951 = vmul.f32 %v5911, %v5943
    %v5952 = vpack.c.bf16 %v5945, %v5944
    %v5953 = vpack.c.bf16 %v5947, %v5946
    %v5954 = vpack.c.bf16 %v5949, %v5948
    %v5955 = vpack.c.bf16 %v5951, %v5950
    %v5964 = vunpack.c.l.b16 %v5731
    %v5965 = vunpack.c.l.b16 %v5732
    %v5966 = vunpack.c.l.b16 %v5733
    %v5967 = vunpack.c.l.b16 %v5734
    %v5968 = vunpack.c.l.b16 %v5735
    %v5969 = vunpack.c.l.b16 %v5736
    %v5970 = vunpack.c.l.b16 %v5737
    %v5971 = vunpack.c.l.b16 %v5738
    %v5972 = vpack.c.b16 %v5965, %v5964
    %v5973 = vpack.c.b16 %v5967, %v5966
    %v5974 = vpack.c.b16 %v5969, %v5968
    %v5975 = vpack.c.b16 %v5971, %v5970
    %v5981 = vsel %vm1453, %v5952, 0
    %v5984 = vsel %vm1453, %v5953, 0
    %v5987 = vsel %vm1453, %v5954, 0
    %v5990 = vsel %vm1453, %v5955, 0
    %5992 = vmatprep.subr.bf16.mxu0 0
    %5993 = vmatpush1.bf16.msra.mxu0 0
    %5994 = vmatprep.subr.bf16.mxu0 0
    %5995 = vmatpush1.bf16.msra.mxu0 0
    %5996 = vmatprep.subr.bf16.mxu0 0
    %5997 = vmatpush1.bf16.msra.mxu0 0
    %5998 = vmatprep.subr.bf16.mxu0 0
    %5999 = vmatpush1.bf16.msra.mxu0 0
    %6000 = vmatprep.subr.bf16.mxu0 0
    %6001 = vmatpush1.bf16.msra.mxu0 %v5975
    %6002 = vmatprep.subr.bf16.mxu0 0
    %6003 = vmatpush1.bf16.msra.mxu0 %v5974
    %6004 = vmatprep.subr.bf16.mxu0 0
    %6005 = vmatpush1.bf16.msra.mxu0 %v5973
    %6006 = vmatprep.subr.bf16.mxu0 0
    %6007 = vmatpush1.bf16.msra.mxu0 %v5972
    %6008 = vmatprep.subr.bf16.mxu0 0
    %6009 = vmatpush2.bf16.msra.mxu0 0
    %6010 = vmatprep.subr.bf16.mxu0 0
    %6011 = vmatpush2.bf16.msra.mxu0 0
    %6012 = vmatprep.subr.bf16.mxu0 0
    %6013 = vmatpush2.bf16.msra.mxu0 0
    %6014 = vmatprep.subr.bf16.mxu0 0
    %6015 = vmatpush2.bf16.msra.mxu0 0
    %6016 = vmatprep.subr.bf16.mxu0 0
    %6017 = vmatpush2.bf16.msra.mxu0 0
    %6018 = vmatprep.subr.bf16.mxu0 0
    %6019 = vmatpush2.bf16.msra.mxu0 0
    %6020 = vmatprep.subr.bf16.mxu0 0
    %6021 = vmatpush2.bf16.msra.mxu0 0
    %6022 = vmatprep.subr.bf16.mxu0 0
    %6023 = vmatpush2.bf16.msra.mxu0 0
    %6024 = vmatprep.mubr.bf16.mxu0 0
    %6025 = vmatmul.mubr.bf16.gmra.mxu0 %v5981
    %v6026 = vpop.f32.mrf.mxu0
    %v6027 = vadd.f32 0.0, %v6026
    %v6028 = vpop.f32.mrf.mxu0
    %v6029 = vpop.f32.mrf.mxu0
    %v6030 = vadd.f32 0.0, %v6029
    %v6031 = vpop.f32.mrf.mxu0
    %6032 = vmatprep.mubr.bf16.mxu0 0
    %6033 = vmatmul.mubr.bf16.gmra.mxu0 %v5984
    %v6034 = vpop.f32.mrf.mxu0
    %v6035 = vadd.f32 0.0, %v6034
    %v6036 = vpop.f32.mrf.mxu0
    %v6037 = vpop.f32.mrf.mxu0
    %v6038 = vadd.f32 0.0, %v6037
    %v6039 = vpop.f32.mrf.mxu0
    %6040 = vmatprep.mubr.bf16.mxu0 0
    %6041 = vmatmul.mubr.bf16.gmra.mxu0 %v5987
    %v6042 = vpop.f32.mrf.mxu0
    %v6043 = vadd.f32 0.0, %v6042
    %v6044 = vpop.f32.mrf.mxu0
    %v6045 = vpop.f32.mrf.mxu0
    %v6046 = vadd.f32 0.0, %v6045
    %v6047 = vpop.f32.mrf.mxu0
    %6048 = vmatprep.mubr.bf16.mxu0 0
    %6049 = vmatmul.mubr.bf16.gmra.mxu0 %v5990
    %v6050 = vpop.f32.mrf.mxu0
    %v6051 = vadd.f32 0.0, %v6050
    %v6052 = vpop.f32.mrf.mxu0
    %v6053 = vpop.f32.mrf.mxu0
    %v6054 = vadd.f32 0.0, %v6053
    %v6055 = vpop.f32.mrf.mxu0
    %6056 = vdwg.mxu0
    %6057 = vrot.lane.b32.xlu0 %v5755, 112
    %v6058 = vpop.permute.xlu0 %6057
    %6059 = vrot.lane.b32.xlu0 %v5756, 112
    %v6060 = vpop.permute.xlu0 %6059
    %6061 = vrot.lane.b32.xlu0 %v5757, 112
    %v6062 = vpop.permute.xlu0 %6061
    %6063 = vrot.lane.b32.xlu0 %v5758, 112
    %v6064 = vpop.permute.xlu0 %6063
    %6065 = vrot.lane.b32.xlu0 %v5755, 48
    %v6066 = vpop.permute.xlu0 %6065
    %6067 = vrot.lane.b32.xlu0 %v5756, 48
    %v6068 = vpop.permute.xlu0 %6067
    %6069 = vrot.lane.b32.xlu0 %v5757, 48
    %v6070 = vpop.permute.xlu0 %6069
    %6071 = vrot.lane.b32.xlu0 %v5758, 48
    %v6072 = vpop.permute.xlu0 %6071
    %v6074 = vsel %vm1749, %v6058, 0
    %v6077 = vsel %vm1749, %v6060, 0
    %v6080 = vsel %vm1749, %v6062, 0
    %v6083 = vsel %vm1749, %v6064, 0
    %v6086 = vsel %vm1749, %v6066, 0
    %v6089 = vsel %vm1749, %v6068, 0
    %v6092 = vsel %vm1749, %v6070, 0
    %v6095 = vsel %vm1749, %v6072, 0
    %6097 = vmatprep.subr.bf16.mxu0 0
    %6098 = vmatpush1.bf16.xpose.msra.mxu0 0
    %6099 = vmatprep.subr.bf16.mxu0 0
    %6100 = vmatpush1.bf16.xpose.msra.mxu0 0
    %6101 = vmatprep.subr.bf16.mxu0 0
    %6102 = vmatpush1.bf16.xpose.msra.mxu0 0
    %6103 = vmatprep.subr.bf16.mxu0 0
    %6104 = vmatpush1.bf16.xpose.msra.mxu0 0
    %6105 = vmatprep.subr.bf16.mxu0 0
    %6106 = vmatpush1.bf16.xpose.msra.mxu0 %v6095
    %6107 = vmatprep.subr.bf16.mxu0 0
    %6108 = vmatpush1.bf16.xpose.msra.mxu0 %v6092
    %6109 = vmatprep.subr.bf16.mxu0 0
    %6110 = vmatpush1.bf16.xpose.msra.mxu0 %v6089
    %6111 = vmatprep.subr.bf16.mxu0 0
    %6112 = vmatpush1.bf16.xpose.msra.mxu0 %v6086
    %6113 = vmatprep.subr.bf16.mxu0 0
    %6114 = vmatpush2.bf16.xpose.msra.mxu0 0
    %6115 = vmatprep.subr.bf16.mxu0 0
    %6116 = vmatpush2.bf16.xpose.msra.mxu0 0
    %6117 = vmatprep.subr.bf16.mxu0 0
    %6118 = vmatpush2.bf16.xpose.msra.mxu0 0
    %6119 = vmatprep.subr.bf16.mxu0 0
    %6120 = vmatpush2.bf16.xpose.msra.mxu0 0
    %6121 = vmatprep.subr.bf16.mxu0 0
    %6122 = vmatpush2.bf16.xpose.msra.mxu0 0
    %6123 = vmatprep.subr.bf16.mxu0 0
    %6124 = vmatpush2.bf16.xpose.msra.mxu0 0
    %6125 = vmatprep.subr.bf16.mxu0 0
    %6126 = vmatpush2.bf16.xpose.msra.mxu0 0
    %6127 = vmatprep.subr.bf16.mxu0 0
    %6128 = vmatpush2.bf16.xpose.msra.mxu0 0
    %6129 = vmatprep.mubr.bf16.mxu0 0
    %6130 = vmatmul.mubr.bf16.gmra.mxu0 %v6074
    %v6131 = vpop.f32.mrf.mxu0
    %v6132 = vadd.f32 0.0, %v6131
    %v6133 = vpop.f32.mrf.mxu0
    %v6134 = vpop.f32.mrf.mxu0
    %v6135 = vadd.f32 0.0, %v6134
    %v6136 = vpop.f32.mrf.mxu0
    %6137 = vmatprep.mubr.bf16.mxu0 0
    %6138 = vmatmul.mubr.bf16.gmra.mxu0 %v6077
    %v6139 = vpop.f32.mrf.mxu0
    %v6140 = vadd.f32 0.0, %v6139
    %v6141 = vpop.f32.mrf.mxu0
    %v6142 = vpop.f32.mrf.mxu0
    %v6143 = vadd.f32 0.0, %v6142
    %v6144 = vpop.f32.mrf.mxu0
    %6145 = vmatprep.mubr.bf16.mxu0 0
    %6146 = vmatmul.mubr.bf16.gmra.mxu0 %v6080
    %v6147 = vpop.f32.mrf.mxu0
    %v6148 = vadd.f32 0.0, %v6147
    %v6149 = vpop.f32.mrf.mxu0
    %v6150 = vpop.f32.mrf.mxu0
    %v6151 = vadd.f32 0.0, %v6150
    %v6152 = vpop.f32.mrf.mxu0
    %6153 = vmatprep.mubr.bf16.mxu0 0
    %6154 = vmatmul.mubr.bf16.gmra.mxu0 %v6083
    %v6155 = vpop.f32.mrf.mxu0
    %v6156 = vadd.f32 0.0, %v6155
    %v6157 = vpop.f32.mrf.mxu0
    %v6158 = vpop.f32.mrf.mxu0
    %v6159 = vadd.f32 0.0, %v6158
    %v6160 = vpop.f32.mrf.mxu0
    %6161 = vdwg.mxu0
    %v6162 = vmul.f32 %v6132, 0.25
    %v6163 = vmul.f32 %v6135, 0.25
    %v6164 = vmul.f32 %v6140, 0.25
    %v6165 = vmul.f32 %v6143, 0.25
    %v6166 = vmul.f32 %v6148, 0.25
    %v6167 = vmul.f32 %v6151, 0.25
    %v6168 = vmul.f32 %v6156, 0.25
    %v6169 = vmul.f32 %v6159, 0.25
    %v6170 = vsel %vm1453, %v6162, -inf
    %6171 = vmax.xlane.f32.xlu0 %v6170
    %v6172 = vpop.xlane.xlu0 %6171
    %v6173 = vsel %vm1453, %v6163, -inf
    %6174 = vmax.xlane.f32.xlu0 %v6173
    %v6175 = vpop.xlane.xlu0 %6174
    %v6176 = vsel %vm1453, %v6164, -inf
    %6177 = vmax.xlane.f32.xlu0 %v6176
    %v6178 = vpop.xlane.xlu0 %6177
    %v6179 = vsel %vm1453, %v6165, -inf
    %6180 = vmax.xlane.f32.xlu0 %v6179
    %v6181 = vpop.xlane.xlu0 %6180
    %v6182 = vsel %vm1453, %v6166, -inf
    %6183 = vmax.xlane.f32.xlu0 %v6182
    %v6184 = vpop.xlane.xlu0 %6183
    %v6185 = vsel %vm1453, %v6167, -inf
    %6186 = vmax.xlane.f32.xlu0 %v6185
    %v6187 = vpop.xlane.xlu0 %6186
    %v6188 = vsel %vm1453, %v6168, -inf
    %6189 = vmax.xlane.f32.xlu0 %v6188
    %v6190 = vpop.xlane.xlu0 %6189
    %v6191 = vsel %vm1453, %v6169, -inf
    %6192 = vmax.xlane.f32.xlu0 %v6191
    %v6193 = vpop.xlane.xlu0 %6192
    %v6194 = vsub.f32 %v6162, %v6172
    %v6195 = vsub.f32 %v6163, %v6175
    %v6196 = vsub.f32 %v6164, %v6178
    %v6197 = vsub.f32 %v6165, %v6181
    %v6198 = vsub.f32 %v6166, %v6184
    %v6199 = vsub.f32 %v6167, %v6187
    %v6200 = vsub.f32 %v6168, %v6190
    %v6201 = vsub.f32 %v6169, %v6193
    %v6202 = vmul.f32 %v6194, 1.442695
    %v6203 = vpow.pop %v6202
    %v6204 = vmul.f32 %v6195, 1.442695
    %v6205 = vpow.pop %v6204
    %v6206 = vmul.f32 %v6196, 1.442695
    %v6207 = vpow.pop %v6206
    %v6208 = vmul.f32 %v6197, 1.442695
    %v6209 = vpow.pop %v6208
    %v6210 = vmul.f32 %v6198, 1.442695
    %v6211 = vpow.pop %v6210
    %v6212 = vmul.f32 %v6199, 1.442695
    %v6213 = vpow.pop %v6212
    %v6214 = vmul.f32 %v6200, 1.442695
    %v6215 = vpow.pop %v6214
    %v6216 = vmul.f32 %v6201, 1.442695
    %v6217 = vpow.pop %v6216
    %v6218 = vsel %vm1453, %v6203, 0.0
    %6219 = vadd.xlane.f32.xlu0 %v6218
    %v6220 = vpop.xlane.xlu0 %6219
    %v6221 = vsel %vm1453, %v6205, 0.0
    %6222 = vadd.xlane.f32.xlu0 %v6221
    %v6223 = vpop.xlane.xlu0 %6222
    %v6224 = vsel %vm1453, %v6207, 0.0
    %6225 = vadd.xlane.f32.xlu0 %v6224
    %v6226 = vpop.xlane.xlu0 %6225
    %v6227 = vsel %vm1453, %v6209, 0.0
    %6228 = vadd.xlane.f32.xlu0 %v6227
    %v6229 = vpop.xlane.xlu0 %6228
    %v6230 = vsel %vm1453, %v6211, 0.0
    %6231 = vadd.xlane.f32.xlu0 %v6230
    %v6232 = vpop.xlane.xlu0 %6231
    %v6233 = vsel %vm1453, %v6213, 0.0
    %6234 = vadd.xlane.f32.xlu0 %v6233
    %v6235 = vpop.xlane.xlu0 %6234
    %v6236 = vsel %vm1453, %v6215, 0.0
    %6237 = vadd.xlane.f32.xlu0 %v6236
    %v6238 = vpop.xlane.xlu0 %6237
    %v6239 = vsel %vm1453, %v6217, 0.0
    %6240 = vadd.xlane.f32.xlu0 %v6239
    %v6241 = vpop.xlane.xlu0 %6240
    %v6242 = vrcp.pop %v6220
    %v6243 = vrcp.pop %v6223
    %v6244 = vrcp.pop %v6226
    %v6245 = vrcp.pop %v6229
    %v6246 = vrcp.pop %v6232
    %v6247 = vrcp.pop %v6235
    %v6248 = vrcp.pop %v6238
    %v6249 = vrcp.pop %v6241
    %v6250 = vmul.f32 %v6203, %v6242
    %v6251 = vmul.f32 %v6205, %v6243
    %v6252 = vmul.f32 %v6207, %v6244
    %v6253 = vmul.f32 %v6209, %v6245
    %v6254 = vmul.f32 %v6211, %v6246
    %v6255 = vmul.f32 %v6213, %v6247
    %v6256 = vmul.f32 %v6215, %v6248
    %v6257 = vmul.f32 %v6217, %v6249
    %v6258 = vpack.c.bf16 %v6251, %v6250
    %v6259 = vpack.c.bf16 %v6253, %v6252
    %v6260 = vpack.c.bf16 %v6255, %v6254
    %v6261 = vpack.c.bf16 %v6257, %v6256
    %6262 = vrot.lane.b32.xlu0 %v5972, 112
    %v6263 = vpop.permute.xlu0 %6262
    %6264 = vrot.lane.b32.xlu0 %v5973, 112
    %v6265 = vpop.permute.xlu0 %6264
    %6266 = vrot.lane.b32.xlu0 %v5974, 112
    %v6267 = vpop.permute.xlu0 %6266
    %6268 = vrot.lane.b32.xlu0 %v5975, 112
    %v6269 = vpop.permute.xlu0 %6268
    %v6275 = vsel %vm1453, %v6258, 0
    %v6278 = vsel %vm1453, %v6259, 0
    %v6281 = vsel %vm1453, %v6260, 0
    %v6284 = vsel %vm1453, %v6261, 0
    %6286 = vmatprep.subr.bf16.mxu0 0
    %6287 = vmatpush1.bf16.msra.mxu0 0
    %6288 = vmatprep.subr.bf16.mxu0 0
    %6289 = vmatpush1.bf16.msra.mxu0 0
    %6290 = vmatprep.subr.bf16.mxu0 0
    %6291 = vmatpush1.bf16.msra.mxu0 0
    %6292 = vmatprep.subr.bf16.mxu0 0
    %6293 = vmatpush1.bf16.msra.mxu0 0
    %6294 = vmatprep.subr.bf16.mxu0 0
    %6295 = vmatpush1.bf16.msra.mxu0 %v6269
    %6296 = vmatprep.subr.bf16.mxu0 0
    %6297 = vmatpush1.bf16.msra.mxu0 %v6267
    %6298 = vmatprep.subr.bf16.mxu0 0
    %6299 = vmatpush1.bf16.msra.mxu0 %v6265
    %6300 = vmatprep.subr.bf16.mxu0 0
    %6301 = vmatpush1.bf16.msra.mxu0 %v6263
    %6302 = vmatprep.subr.bf16.mxu0 0
    %6303 = vmatpush2.bf16.msra.mxu0 0
    %6304 = vmatprep.subr.bf16.mxu0 0
    %6305 = vmatpush2.bf16.msra.mxu0 0
    %6306 = vmatprep.subr.bf16.mxu0 0
    %6307 = vmatpush2.bf16.msra.mxu0 0
    %6308 = vmatprep.subr.bf16.mxu0 0
    %6309 = vmatpush2.bf16.msra.mxu0 0
    %6310 = vmatprep.subr.bf16.mxu0 0
    %6311 = vmatpush2.bf16.msra.mxu0 0
    %6312 = vmatprep.subr.bf16.mxu0 0
    %6313 = vmatpush2.bf16.msra.mxu0 0
    %6314 = vmatprep.subr.bf16.mxu0 0
    %6315 = vmatpush2.bf16.msra.mxu0 0
    %6316 = vmatprep.subr.bf16.mxu0 0
    %6317 = vmatpush2.bf16.msra.mxu0 0
    %6318 = vmatprep.mubr.bf16.mxu0 0
    %6319 = vmatmul.mubr.bf16.gmra.mxu0 %v6275
    %v6320 = vpop.f32.mrf.mxu0
    %v6321 = vadd.f32 0.0, %v6320
    %v6322 = vpop.f32.mrf.mxu0
    %v6323 = vpop.f32.mrf.mxu0
    %v6324 = vadd.f32 0.0, %v6323
    %v6325 = vpop.f32.mrf.mxu0
    %6326 = vmatprep.mubr.bf16.mxu0 0
    %6327 = vmatmul.mubr.bf16.gmra.mxu0 %v6278
    %v6328 = vpop.f32.mrf.mxu0
    %v6329 = vadd.f32 0.0, %v6328
    %v6330 = vpop.f32.mrf.mxu0
    %v6331 = vpop.f32.mrf.mxu0
    %v6332 = vadd.f32 0.0, %v6331
    %v6333 = vpop.f32.mrf.mxu0
    %6334 = vmatprep.mubr.bf16.mxu0 0
    %6335 = vmatmul.mubr.bf16.gmra.mxu0 %v6281
    %v6336 = vpop.f32.mrf.mxu0
    %v6337 = vadd.f32 0.0, %v6336
    %v6338 = vpop.f32.mrf.mxu0
    %v6339 = vpop.f32.mrf.mxu0
    %v6340 = vadd.f32 0.0, %v6339
    %v6341 = vpop.f32.mrf.mxu0
    %6342 = vmatprep.mubr.bf16.mxu0 0
    %6343 = vmatmul.mubr.bf16.gmra.mxu0 %v6284
    %v6344 = vpop.f32.mrf.mxu0
    %v6345 = vadd.f32 0.0, %v6344
    %v6346 = vpop.f32.mrf.mxu0
    %v6347 = vpop.f32.mrf.mxu0
    %v6348 = vadd.f32 0.0, %v6347
    %v6349 = vpop.f32.mrf.mxu0
    %6350 = vdwg.mxu0
    %6351 = vrot.lane.b32.xlu0 %v5755, 96
    %v6352 = vpop.permute.xlu0 %6351
    %6353 = vrot.lane.b32.xlu0 %v5756, 96
    %v6354 = vpop.permute.xlu0 %6353
    %6355 = vrot.lane.b32.xlu0 %v5757, 96
    %v6356 = vpop.permute.xlu0 %6355
    %6357 = vrot.lane.b32.xlu0 %v5758, 96
    %v6358 = vpop.permute.xlu0 %6357
    %6359 = vrot.lane.b32.xlu0 %v5755, 32
    %v6360 = vpop.permute.xlu0 %6359
    %6361 = vrot.lane.b32.xlu0 %v5756, 32
    %v6362 = vpop.permute.xlu0 %6361
    %6363 = vrot.lane.b32.xlu0 %v5757, 32
    %v6364 = vpop.permute.xlu0 %6363
    %6365 = vrot.lane.b32.xlu0 %v5758, 32
    %v6366 = vpop.permute.xlu0 %6365
    %v6368 = vsel %vm1749, %v6352, 0
    %v6371 = vsel %vm1749, %v6354, 0
    %v6374 = vsel %vm1749, %v6356, 0
    %v6377 = vsel %vm1749, %v6358, 0
    %v6380 = vsel %vm1749, %v6360, 0
    %v6383 = vsel %vm1749, %v6362, 0
    %v6386 = vsel %vm1749, %v6364, 0
    %v6389 = vsel %vm1749, %v6366, 0
    %6391 = vmatprep.subr.bf16.mxu0 0
    %6392 = vmatpush1.bf16.xpose.msra.mxu0 0
    %6393 = vmatprep.subr.bf16.mxu0 0
    %6394 = vmatpush1.bf16.xpose.msra.mxu0 0
    %6395 = vmatprep.subr.bf16.mxu0 0
    %6396 = vmatpush1.bf16.xpose.msra.mxu0 0
    %6397 = vmatprep.subr.bf16.mxu0 0
    %6398 = vmatpush1.bf16.xpose.msra.mxu0 0
    %6399 = vmatprep.subr.bf16.mxu0 0
    %6400 = vmatpush1.bf16.xpose.msra.mxu0 %v6389
    %6401 = vmatprep.subr.bf16.mxu0 0
    %6402 = vmatpush1.bf16.xpose.msra.mxu0 %v6386
    %6403 = vmatprep.subr.bf16.mxu0 0
    %6404 = vmatpush1.bf16.xpose.msra.mxu0 %v6383
    %6405 = vmatprep.subr.bf16.mxu0 0
    %6406 = vmatpush1.bf16.xpose.msra.mxu0 %v6380
    %6407 = vmatprep.subr.bf16.mxu0 0
    %6408 = vmatpush2.bf16.xpose.msra.mxu0 0
    %6409 = vmatprep.subr.bf16.mxu0 0
    %6410 = vmatpush2.bf16.xpose.msra.mxu0 0
    %6411 = vmatprep.subr.bf16.mxu0 0
    %6412 = vmatpush2.bf16.xpose.msra.mxu0 0
    %6413 = vmatprep.subr.bf16.mxu0 0
    %6414 = vmatpush2.bf16.xpose.msra.mxu0 0
    %6415 = vmatprep.subr.bf16.mxu0 0
    %6416 = vmatpush2.bf16.xpose.msra.mxu0 0
    %6417 = vmatprep.subr.bf16.mxu0 0
    %6418 = vmatpush2.bf16.xpose.msra.mxu0 0
    %6419 = vmatprep.subr.bf16.mxu0 0
    %6420 = vmatpush2.bf16.xpose.msra.mxu0 0
    %6421 = vmatprep.subr.bf16.mxu0 0
    %6422 = vmatpush2.bf16.xpose.msra.mxu0 0
    %6423 = vmatprep.mubr.bf16.mxu0 0
    %6424 = vmatmul.mubr.bf16.gmra.mxu0 %v6368
    %v6425 = vpop.f32.mrf.mxu0
    %v6426 = vadd.f32 0.0, %v6425
    %v6427 = vpop.f32.mrf.mxu0
    %v6428 = vpop.f32.mrf.mxu0
    %v6429 = vadd.f32 0.0, %v6428
    %v6430 = vpop.f32.mrf.mxu0
    %6431 = vmatprep.mubr.bf16.mxu0 0
    %6432 = vmatmul.mubr.bf16.gmra.mxu0 %v6371
    %v6433 = vpop.f32.mrf.mxu0
    %v6434 = vadd.f32 0.0, %v6433
    %v6435 = vpop.f32.mrf.mxu0
    %v6436 = vpop.f32.mrf.mxu0
    %v6437 = vadd.f32 0.0, %v6436
    %v6438 = vpop.f32.mrf.mxu0
    %6439 = vmatprep.mubr.bf16.mxu0 0
    %6440 = vmatmul.mubr.bf16.gmra.mxu0 %v6374
    %v6441 = vpop.f32.mrf.mxu0
    %v6442 = vadd.f32 0.0, %v6441
    %v6443 = vpop.f32.mrf.mxu0
    %v6444 = vpop.f32.mrf.mxu0
    %v6445 = vadd.f32 0.0, %v6444
    %v6446 = vpop.f32.mrf.mxu0
    %6447 = vmatprep.mubr.bf16.mxu0 0
    %6448 = vmatmul.mubr.bf16.gmra.mxu0 %v6377
    %v6449 = vpop.f32.mrf.mxu0
    %v6450 = vadd.f32 0.0, %v6449
    %v6451 = vpop.f32.mrf.mxu0
    %v6452 = vpop.f32.mrf.mxu0
    %v6453 = vadd.f32 0.0, %v6452
    %v6454 = vpop.f32.mrf.mxu0
    %6455 = vdwg.mxu0
    %v6456 = vmul.f32 %v6426, 0.25
    %v6457 = vmul.f32 %v6429, 0.25
    %v6458 = vmul.f32 %v6434, 0.25
    %v6459 = vmul.f32 %v6437, 0.25
    %v6460 = vmul.f32 %v6442, 0.25
    %v6461 = vmul.f32 %v6445, 0.25
    %v6462 = vmul.f32 %v6450, 0.25
    %v6463 = vmul.f32 %v6453, 0.25
    %v6464 = vsel %vm1453, %v6456, -inf
    %6465 = vmax.xlane.f32.xlu0 %v6464
    %v6466 = vpop.xlane.xlu0 %6465
    %v6467 = vsel %vm1453, %v6457, -inf
    %6468 = vmax.xlane.f32.xlu0 %v6467
    %v6469 = vpop.xlane.xlu0 %6468
    %v6470 = vsel %vm1453, %v6458, -inf
    %6471 = vmax.xlane.f32.xlu0 %v6470
    %v6472 = vpop.xlane.xlu0 %6471
    %v6473 = vsel %vm1453, %v6459, -inf
    %6474 = vmax.xlane.f32.xlu0 %v6473
    %v6475 = vpop.xlane.xlu0 %6474
    %v6476 = vsel %vm1453, %v6460, -inf
    %6477 = vmax.xlane.f32.xlu0 %v6476
    %v6478 = vpop.xlane.xlu0 %6477
    %v6479 = vsel %vm1453, %v6461, -inf
    %6480 = vmax.xlane.f32.xlu0 %v6479
    %v6481 = vpop.xlane.xlu0 %6480
    %v6482 = vsel %vm1453, %v6462, -inf
    %6483 = vmax.xlane.f32.xlu0 %v6482
    %v6484 = vpop.xlane.xlu0 %6483
    %v6485 = vsel %vm1453, %v6463, -inf
    %6486 = vmax.xlane.f32.xlu0 %v6485
    %v6487 = vpop.xlane.xlu0 %6486
    %v6488 = vsub.f32 %v6456, %v6466
    %v6489 = vsub.f32 %v6457, %v6469
    %v6490 = vsub.f32 %v6458, %v6472
    %v6491 = vsub.f32 %v6459, %v6475
    %v6492 = vsub.f32 %v6460, %v6478
    %v6493 = vsub.f32 %v6461, %v6481
    %v6494 = vsub.f32 %v6462, %v6484
    %v6495 = vsub.f32 %v6463, %v6487
    %v6496 = vmul.f32 %v6488, 1.442695
    %v6497 = vpow.pop %v6496
    %v6498 = vmul.f32 %v6489, 1.442695
    %v6499 = vpow.pop %v6498
    %v6500 = vmul.f32 %v6490, 1.442695
    %v6501 = vpow.pop %v6500
    %v6502 = vmul.f32 %v6491, 1.442695
    %v6503 = vpow.pop %v6502
    %v6504 = vmul.f32 %v6492, 1.442695
    %v6505 = vpow.pop %v6504
    %v6506 = vmul.f32 %v6493, 1.442695
    %v6507 = vpow.pop %v6506
    %v6508 = vmul.f32 %v6494, 1.442695
    %v6509 = vpow.pop %v6508
    %v6510 = vmul.f32 %v6495, 1.442695
    %v6511 = vpow.pop %v6510
    %v6512 = vsel %vm1453, %v6497, 0.0
    %6513 = vadd.xlane.f32.xlu0 %v6512
    %v6514 = vpop.xlane.xlu0 %6513
    %v6515 = vsel %vm1453, %v6499, 0.0
    %6516 = vadd.xlane.f32.xlu0 %v6515
    %v6517 = vpop.xlane.xlu0 %6516
    %v6518 = vsel %vm1453, %v6501, 0.0
    %6519 = vadd.xlane.f32.xlu0 %v6518
    %v6520 = vpop.xlane.xlu0 %6519
    %v6521 = vsel %vm1453, %v6503, 0.0
    %6522 = vadd.xlane.f32.xlu0 %v6521
    %v6523 = vpop.xlane.xlu0 %6522
    %v6524 = vsel %vm1453, %v6505, 0.0
    %6525 = vadd.xlane.f32.xlu0 %v6524
    %v6526 = vpop.xlane.xlu0 %6525
    %v6527 = vsel %vm1453, %v6507, 0.0
    %6528 = vadd.xlane.f32.xlu0 %v6527
    %v6529 = vpop.xlane.xlu0 %6528
    %v6530 = vsel %vm1453, %v6509, 0.0
    %6531 = vadd.xlane.f32.xlu0 %v6530
    %v6532 = vpop.xlane.xlu0 %6531
    %v6533 = vsel %vm1453, %v6511, 0.0
    %6534 = vadd.xlane.f32.xlu0 %v6533
    %v6535 = vpop.xlane.xlu0 %6534
    %v6536 = vrcp.pop %v6514
    %v6537 = vrcp.pop %v6517
    %v6538 = vrcp.pop %v6520
    %v6539 = vrcp.pop %v6523
    %v6540 = vrcp.pop %v6526
    %v6541 = vrcp.pop %v6529
    %v6542 = vrcp.pop %v6532
    %v6543 = vrcp.pop %v6535
    %v6544 = vmul.f32 %v6497, %v6536
    %v6545 = vmul.f32 %v6499, %v6537
    %v6546 = vmul.f32 %v6501, %v6538
    %v6547 = vmul.f32 %v6503, %v6539
    %v6548 = vmul.f32 %v6505, %v6540
    %v6549 = vmul.f32 %v6507, %v6541
    %v6550 = vmul.f32 %v6509, %v6542
    %v6551 = vmul.f32 %v6511, %v6543
    %v6552 = vpack.c.bf16 %v6545, %v6544
    %v6553 = vpack.c.bf16 %v6547, %v6546
    %v6554 = vpack.c.bf16 %v6549, %v6548
    %v6555 = vpack.c.bf16 %v6551, %v6550
    %6556 = vrot.lane.b32.xlu0 %v5972, 96
    %v6557 = vpop.permute.xlu0 %6556
    %6558 = vrot.lane.b32.xlu0 %v5973, 96
    %v6559 = vpop.permute.xlu0 %6558
    %6560 = vrot.lane.b32.xlu0 %v5974, 96
    %v6561 = vpop.permute.xlu0 %6560
    %6562 = vrot.lane.b32.xlu0 %v5975, 96
    %v6563 = vpop.permute.xlu0 %6562
    %v6569 = vsel %vm1453, %v6552, 0
    %v6572 = vsel %vm1453, %v6553, 0
    %v6575 = vsel %vm1453, %v6554, 0
    %v6578 = vsel %vm1453, %v6555, 0
    %6580 = vmatprep.subr.bf16.mxu0 0
    %6581 = vmatpush1.bf16.msra.mxu0 0
    %6582 = vmatprep.subr.bf16.mxu0 0
    %6583 = vmatpush1.bf16.msra.mxu0 0
    %6584 = vmatprep.subr.bf16.mxu0 0
    %6585 = vmatpush1.bf16.msra.mxu0 0
    %6586 = vmatprep.subr.bf16.mxu0 0
    %6587 = vmatpush1.bf16.msra.mxu0 0
    %6588 = vmatprep.subr.bf16.mxu0 0
    %6589 = vmatpush1.bf16.msra.mxu0 %v6563
    %6590 = vmatprep.subr.bf16.mxu0 0
    %6591 = vmatpush1.bf16.msra.mxu0 %v6561
    %6592 = vmatprep.subr.bf16.mxu0 0
    %6593 = vmatpush1.bf16.msra.mxu0 %v6559
    %6594 = vmatprep.subr.bf16.mxu0 0
    %6595 = vmatpush1.bf16.msra.mxu0 %v6557
    %6596 = vmatprep.subr.bf16.mxu0 0
    %6597 = vmatpush2.bf16.msra.mxu0 0
    %6598 = vmatprep.subr.bf16.mxu0 0
    %6599 = vmatpush2.bf16.msra.mxu0 0
    %6600 = vmatprep.subr.bf16.mxu0 0
    %6601 = vmatpush2.bf16.msra.mxu0 0
    %6602 = vmatprep.subr.bf16.mxu0 0
    %6603 = vmatpush2.bf16.msra.mxu0 0
    %6604 = vmatprep.subr.bf16.mxu0 0
    %6605 = vmatpush2.bf16.msra.mxu0 0
    %6606 = vmatprep.subr.bf16.mxu0 0
    %6607 = vmatpush2.bf16.msra.mxu0 0
    %6608 = vmatprep.subr.bf16.mxu0 0
    %6609 = vmatpush2.bf16.msra.mxu0 0
    %6610 = vmatprep.subr.bf16.mxu0 0
    %6611 = vmatpush2.bf16.msra.mxu0 0
    %6612 = vmatprep.mubr.bf16.mxu0 0
    %6613 = vmatmul.mubr.bf16.gmra.mxu0 %v6569
    %v6614 = vpop.f32.mrf.mxu0
    %v6615 = vadd.f32 0.0, %v6614
    %v6616 = vpop.f32.mrf.mxu0
    %v6617 = vpop.f32.mrf.mxu0
    %v6618 = vadd.f32 0.0, %v6617
    %v6619 = vpop.f32.mrf.mxu0
    %6620 = vmatprep.mubr.bf16.mxu0 0
    %6621 = vmatmul.mubr.bf16.gmra.mxu0 %v6572
    %v6622 = vpop.f32.mrf.mxu0
    %v6623 = vadd.f32 0.0, %v6622
    %v6624 = vpop.f32.mrf.mxu0
    %v6625 = vpop.f32.mrf.mxu0
    %v6626 = vadd.f32 0.0, %v6625
    %v6627 = vpop.f32.mrf.mxu0
    %6628 = vmatprep.mubr.bf16.mxu0 0
    %6629 = vmatmul.mubr.bf16.gmra.mxu0 %v6575
    %v6630 = vpop.f32.mrf.mxu0
    %v6631 = vadd.f32 0.0, %v6630
    %v6632 = vpop.f32.mrf.mxu0
    %v6633 = vpop.f32.mrf.mxu0
    %v6634 = vadd.f32 0.0, %v6633
    %v6635 = vpop.f32.mrf.mxu0
    %6636 = vmatprep.mubr.bf16.mxu0 0
    %6637 = vmatmul.mubr.bf16.gmra.mxu0 %v6578
    %v6638 = vpop.f32.mrf.mxu0
    %v6639 = vadd.f32 0.0, %v6638
    %v6640 = vpop.f32.mrf.mxu0
    %v6641 = vpop.f32.mrf.mxu0
    %v6642 = vadd.f32 0.0, %v6641
    %v6643 = vpop.f32.mrf.mxu0
    %6644 = vdwg.mxu0
    %6645 = vrot.lane.b32.xlu0 %v5755, 80
    %v6646 = vpop.permute.xlu0 %6645
    %6647 = vrot.lane.b32.xlu0 %v5756, 80
    %v6648 = vpop.permute.xlu0 %6647
    %6649 = vrot.lane.b32.xlu0 %v5757, 80
    %v6650 = vpop.permute.xlu0 %6649
    %6651 = vrot.lane.b32.xlu0 %v5758, 80
    %v6652 = vpop.permute.xlu0 %6651
    %6653 = vrot.lane.b32.xlu0 %v5755, 16
    %v6654 = vpop.permute.xlu0 %6653
    %6655 = vrot.lane.b32.xlu0 %v5756, 16
    %v6656 = vpop.permute.xlu0 %6655
    %6657 = vrot.lane.b32.xlu0 %v5757, 16
    %v6658 = vpop.permute.xlu0 %6657
    %6659 = vrot.lane.b32.xlu0 %v5758, 16
    %v6660 = vpop.permute.xlu0 %6659
    %v6662 = vsel %vm1749, %v6646, 0
    %v6665 = vsel %vm1749, %v6648, 0
    %v6668 = vsel %vm1749, %v6650, 0
    %v6671 = vsel %vm1749, %v6652, 0
    %v6674 = vsel %vm1749, %v6654, 0
    %v6677 = vsel %vm1749, %v6656, 0
    %v6680 = vsel %vm1749, %v6658, 0
    %v6683 = vsel %vm1749, %v6660, 0
    %6685 = vmatprep.subr.bf16.mxu0 0
    %6686 = vmatpush1.bf16.xpose.msra.mxu0 0
    %6687 = vmatprep.subr.bf16.mxu0 0
    %6688 = vmatpush1.bf16.xpose.msra.mxu0 0
    %6689 = vmatprep.subr.bf16.mxu0 0
    %6690 = vmatpush1.bf16.xpose.msra.mxu0 0
    %6691 = vmatprep.subr.bf16.mxu0 0
    %6692 = vmatpush1.bf16.xpose.msra.mxu0 0
    %6693 = vmatprep.subr.bf16.mxu0 0
    %6694 = vmatpush1.bf16.xpose.msra.mxu0 %v6683
    %6695 = vmatprep.subr.bf16.mxu0 0
    %6696 = vmatpush1.bf16.xpose.msra.mxu0 %v6680
    %6697 = vmatprep.subr.bf16.mxu0 0
    %6698 = vmatpush1.bf16.xpose.msra.mxu0 %v6677
    %6699 = vmatprep.subr.bf16.mxu0 0
    %6700 = vmatpush1.bf16.xpose.msra.mxu0 %v6674
    %6701 = vmatprep.subr.bf16.mxu0 0
    %6702 = vmatpush2.bf16.xpose.msra.mxu0 0
    %6703 = vmatprep.subr.bf16.mxu0 0
    %6704 = vmatpush2.bf16.xpose.msra.mxu0 0
    %6705 = vmatprep.subr.bf16.mxu0 0
    %6706 = vmatpush2.bf16.xpose.msra.mxu0 0
    %6707 = vmatprep.subr.bf16.mxu0 0
    %6708 = vmatpush2.bf16.xpose.msra.mxu0 0
    %6709 = vmatprep.subr.bf16.mxu0 0
    %6710 = vmatpush2.bf16.xpose.msra.mxu0 0
    %6711 = vmatprep.subr.bf16.mxu0 0
    %6712 = vmatpush2.bf16.xpose.msra.mxu0 0
    %6713 = vmatprep.subr.bf16.mxu0 0
    %6714 = vmatpush2.bf16.xpose.msra.mxu0 0
    %6715 = vmatprep.subr.bf16.mxu0 0
    %6716 = vmatpush2.bf16.xpose.msra.mxu0 0
    %6717 = vmatprep.mubr.bf16.mxu0 0
    %6718 = vmatmul.mubr.bf16.gmra.mxu0 %v6662
    %v6719 = vpop.f32.mrf.mxu0
    %v6720 = vadd.f32 0.0, %v6719
    %v6721 = vpop.f32.mrf.mxu0
    %v6722 = vpop.f32.mrf.mxu0
    %v6723 = vadd.f32 0.0, %v6722
    %v6724 = vpop.f32.mrf.mxu0
    %6725 = vmatprep.mubr.bf16.mxu0 0
    %6726 = vmatmul.mubr.bf16.gmra.mxu0 %v6665
    %v6727 = vpop.f32.mrf.mxu0
    %v6728 = vadd.f32 0.0, %v6727
    %v6729 = vpop.f32.mrf.mxu0
    %v6730 = vpop.f32.mrf.mxu0
    %v6731 = vadd.f32 0.0, %v6730
    %v6732 = vpop.f32.mrf.mxu0
    %6733 = vmatprep.mubr.bf16.mxu0 0
    %6734 = vmatmul.mubr.bf16.gmra.mxu0 %v6668
    %v6735 = vpop.f32.mrf.mxu0
    %v6736 = vadd.f32 0.0, %v6735
    %v6737 = vpop.f32.mrf.mxu0
    %v6738 = vpop.f32.mrf.mxu0
    %v6739 = vadd.f32 0.0, %v6738
    %v6740 = vpop.f32.mrf.mxu0
    %6741 = vmatprep.mubr.bf16.mxu0 0
    %6742 = vmatmul.mubr.bf16.gmra.mxu0 %v6671
    %v6743 = vpop.f32.mrf.mxu0
    %v6744 = vadd.f32 0.0, %v6743
    %v6745 = vpop.f32.mrf.mxu0
    %v6746 = vpop.f32.mrf.mxu0
    %v6747 = vadd.f32 0.0, %v6746
    %v6748 = vpop.f32.mrf.mxu0
    %6749 = vdwg.mxu0
    %v6750 = vmul.f32 %v6720, 0.25
    %v6751 = vmul.f32 %v6723, 0.25
    %v6752 = vmul.f32 %v6728, 0.25
    %v6753 = vmul.f32 %v6731, 0.25
    %v6754 = vmul.f32 %v6736, 0.25
    %v6755 = vmul.f32 %v6739, 0.25
    %v6756 = vmul.f32 %v6744, 0.25
    %v6757 = vmul.f32 %v6747, 0.25
    %v6758 = vsel %vm1453, %v6750, -inf
    %6759 = vmax.xlane.f32.xlu0 %v6758
    %v6760 = vpop.xlane.xlu0 %6759
    %v6761 = vsel %vm1453, %v6751, -inf
    %6762 = vmax.xlane.f32.xlu0 %v6761
    %v6763 = vpop.xlane.xlu0 %6762
    %v6764 = vsel %vm1453, %v6752, -inf
    %6765 = vmax.xlane.f32.xlu0 %v6764
    %v6766 = vpop.xlane.xlu0 %6765
    %v6767 = vsel %vm1453, %v6753, -inf
    %6768 = vmax.xlane.f32.xlu0 %v6767
    %v6769 = vpop.xlane.xlu0 %6768
    %v6770 = vsel %vm1453, %v6754, -inf
    %6771 = vmax.xlane.f32.xlu0 %v6770
    %v6772 = vpop.xlane.xlu0 %6771
    %v6773 = vsel %vm1453, %v6755, -inf
    %6774 = vmax.xlane.f32.xlu0 %v6773
    %v6775 = vpop.xlane.xlu0 %6774
    %v6776 = vsel %vm1453, %v6756, -inf
    %6777 = vmax.xlane.f32.xlu0 %v6776
    %v6778 = vpop.xlane.xlu0 %6777
    %v6779 = vsel %vm1453, %v6757, -inf
    %6780 = vmax.xlane.f32.xlu0 %v6779
    %v6781 = vpop.xlane.xlu0 %6780
    %v6782 = vsub.f32 %v6750, %v6760
    %v6783 = vsub.f32 %v6751, %v6763
    %v6784 = vsub.f32 %v6752, %v6766
    %v6785 = vsub.f32 %v6753, %v6769
    %v6786 = vsub.f32 %v6754, %v6772
    %v6787 = vsub.f32 %v6755, %v6775
    %v6788 = vsub.f32 %v6756, %v6778
    %v6789 = vsub.f32 %v6757, %v6781
    %v6790 = vmul.f32 %v6782, 1.442695
    %v6791 = vpow.pop %v6790
    %v6792 = vmul.f32 %v6783, 1.442695
    %v6793 = vpow.pop %v6792
    %v6794 = vmul.f32 %v6784, 1.442695
    %v6795 = vpow.pop %v6794
    %v6796 = vmul.f32 %v6785, 1.442695
    %v6797 = vpow.pop %v6796
    %v6798 = vmul.f32 %v6786, 1.442695
    %v6799 = vpow.pop %v6798
    %v6800 = vmul.f32 %v6787, 1.442695
    %v6801 = vpow.pop %v6800
    %v6802 = vmul.f32 %v6788, 1.442695
    %v6803 = vpow.pop %v6802
    %v6804 = vmul.f32 %v6789, 1.442695
    %v6805 = vpow.pop %v6804
    %v6806 = vsel %vm1453, %v6791, 0.0
    %6807 = vadd.xlane.f32.xlu0 %v6806
    %v6808 = vpop.xlane.xlu0 %6807
    %v6809 = vsel %vm1453, %v6793, 0.0
    %6810 = vadd.xlane.f32.xlu0 %v6809
    %v6811 = vpop.xlane.xlu0 %6810
    %v6812 = vsel %vm1453, %v6795, 0.0
    %6813 = vadd.xlane.f32.xlu0 %v6812
    %v6814 = vpop.xlane.xlu0 %6813
    %v6815 = vsel %vm1453, %v6797, 0.0
    %6816 = vadd.xlane.f32.xlu0 %v6815
    %v6817 = vpop.xlane.xlu0 %6816
    %v6818 = vsel %vm1453, %v6799, 0.0
    %6819 = vadd.xlane.f32.xlu0 %v6818
    %v6820 = vpop.xlane.xlu0 %6819
    %v6821 = vsel %vm1453, %v6801, 0.0
    %6822 = vadd.xlane.f32.xlu0 %v6821
    %v6823 = vpop.xlane.xlu0 %6822
    %v6824 = vsel %vm1453, %v6803, 0.0
    %6825 = vadd.xlane.f32.xlu0 %v6824
    %v6826 = vpop.xlane.xlu0 %6825
    %v6827 = vsel %vm1453, %v6805, 0.0
    %6828 = vadd.xlane.f32.xlu0 %v6827
    %v6829 = vpop.xlane.xlu0 %6828
    %v6830 = vrcp.pop %v6808
    %v6831 = vrcp.pop %v6811
    %v6832 = vrcp.pop %v6814
    %v6833 = vrcp.pop %v6817
    %v6834 = vrcp.pop %v6820
    %v6835 = vrcp.pop %v6823
    %v6836 = vrcp.pop %v6826
    %v6837 = vrcp.pop %v6829
    %v6838 = vmul.f32 %v6791, %v6830
    %v6839 = vmul.f32 %v6793, %v6831
    %v6840 = vmul.f32 %v6795, %v6832
    %v6841 = vmul.f32 %v6797, %v6833
    %v6842 = vmul.f32 %v6799, %v6834
    %v6843 = vmul.f32 %v6801, %v6835
    %v6844 = vmul.f32 %v6803, %v6836
    %v6845 = vmul.f32 %v6805, %v6837
    %v6846 = vpack.c.bf16 %v6839, %v6838
    %v6847 = vpack.c.bf16 %v6841, %v6840
    %v6848 = vpack.c.bf16 %v6843, %v6842
    %v6849 = vpack.c.bf16 %v6845, %v6844
    %6850 = vrot.lane.b32.xlu0 %v5972, 80
    %v6851 = vpop.permute.xlu0 %6850
    %6852 = vrot.lane.b32.xlu0 %v5973, 80
    %v6853 = vpop.permute.xlu0 %6852
    %6854 = vrot.lane.b32.xlu0 %v5974, 80
    %v6855 = vpop.permute.xlu0 %6854
    %6856 = vrot.lane.b32.xlu0 %v5975, 80
    %v6857 = vpop.permute.xlu0 %6856
    %v6863 = vsel %vm1453, %v6846, 0
    %v6866 = vsel %vm1453, %v6847, 0
    %v6869 = vsel %vm1453, %v6848, 0
    %v6872 = vsel %vm1453, %v6849, 0
    %6874 = vmatprep.subr.bf16.mxu0 0
    %6875 = vmatpush1.bf16.msra.mxu0 0
    %6876 = vmatprep.subr.bf16.mxu0 0
    %6877 = vmatpush1.bf16.msra.mxu0 0
    %6878 = vmatprep.subr.bf16.mxu0 0
    %6879 = vmatpush1.bf16.msra.mxu0 0
    %6880 = vmatprep.subr.bf16.mxu0 0
    %6881 = vmatpush1.bf16.msra.mxu0 0
    %6882 = vmatprep.subr.bf16.mxu0 0
    %6883 = vmatpush1.bf16.msra.mxu0 %v6857
    %6884 = vmatprep.subr.bf16.mxu0 0
    %6885 = vmatpush1.bf16.msra.mxu0 %v6855
    %6886 = vmatprep.subr.bf16.mxu0 0
    %6887 = vmatpush1.bf16.msra.mxu0 %v6853
    %6888 = vmatprep.subr.bf16.mxu0 0
    %6889 = vmatpush1.bf16.msra.mxu0 %v6851
    %6890 = vmatprep.subr.bf16.mxu0 0
    %6891 = vmatpush2.bf16.msra.mxu0 0
    %6892 = vmatprep.subr.bf16.mxu0 0
    %6893 = vmatpush2.bf16.msra.mxu0 0
    %6894 = vmatprep.subr.bf16.mxu0 0
    %6895 = vmatpush2.bf16.msra.mxu0 0
    %6896 = vmatprep.subr.bf16.mxu0 0
    %6897 = vmatpush2.bf16.msra.mxu0 0
    %6898 = vmatprep.subr.bf16.mxu0 0
    %6899 = vmatpush2.bf16.msra.mxu0 0
    %6900 = vmatprep.subr.bf16.mxu0 0
    %6901 = vmatpush2.bf16.msra.mxu0 0
    %6902 = vmatprep.subr.bf16.mxu0 0
    %6903 = vmatpush2.bf16.msra.mxu0 0
    %6904 = vmatprep.subr.bf16.mxu0 0
    %6905 = vmatpush2.bf16.msra.mxu0 0
    %6906 = vmatprep.mubr.bf16.mxu0 0
    %6907 = vmatmul.mubr.bf16.gmra.mxu0 %v6863
    %v6908 = vpop.f32.mrf.mxu0
    %v6909 = vadd.f32 0.0, %v6908
    %v6910 = vpop.f32.mrf.mxu0
    %v6911 = vpop.f32.mrf.mxu0
    %v6912 = vadd.f32 0.0, %v6911
    %v6913 = vpop.f32.mrf.mxu0
    %6914 = vmatprep.mubr.bf16.mxu0 0
    %6915 = vmatmul.mubr.bf16.gmra.mxu0 %v6866
    %v6916 = vpop.f32.mrf.mxu0
    %v6917 = vadd.f32 0.0, %v6916
    %v6918 = vpop.f32.mrf.mxu0
    %v6919 = vpop.f32.mrf.mxu0
    %v6920 = vadd.f32 0.0, %v6919
    %v6921 = vpop.f32.mrf.mxu0
    %6922 = vmatprep.mubr.bf16.mxu0 0
    %6923 = vmatmul.mubr.bf16.gmra.mxu0 %v6869
    %v6924 = vpop.f32.mrf.mxu0
    %v6925 = vadd.f32 0.0, %v6924
    %v6926 = vpop.f32.mrf.mxu0
    %v6927 = vpop.f32.mrf.mxu0
    %v6928 = vadd.f32 0.0, %v6927
    %v6929 = vpop.f32.mrf.mxu0
    %6930 = vmatprep.mubr.bf16.mxu0 0
    %6931 = vmatmul.mubr.bf16.gmra.mxu0 %v6872
    %v6932 = vpop.f32.mrf.mxu0
    %v6933 = vadd.f32 0.0, %v6932
    %v6934 = vpop.f32.mrf.mxu0
    %v6935 = vpop.f32.mrf.mxu0
    %v6936 = vadd.f32 0.0, %v6935
    %v6937 = vpop.f32.mrf.mxu0
    %6938 = vdwg.mxu0
    %6947 = vrot.lane.b32.xlu0 %v6321, 16
    %v6948 = vpop.permute.xlu0 %6947
    %6949 = vrot.lane.b32.xlu0 %v6324, 16
    %v6950 = vpop.permute.xlu0 %6949
    %6951 = vrot.lane.b32.xlu0 %v6329, 16
    %v6952 = vpop.permute.xlu0 %6951
    %6953 = vrot.lane.b32.xlu0 %v6332, 16
    %v6954 = vpop.permute.xlu0 %6953
    %6955 = vrot.lane.b32.xlu0 %v6337, 16
    %v6956 = vpop.permute.xlu0 %6955
    %6957 = vrot.lane.b32.xlu0 %v6340, 16
    %v6958 = vpop.permute.xlu0 %6957
    %6959 = vrot.lane.b32.xlu0 %v6345, 16
    %v6960 = vpop.permute.xlu0 %6959
    %6961 = vrot.lane.b32.xlu0 %v6348, 16
    %v6962 = vpop.permute.xlu0 %6961
    %6979 = vrot.lane.b32.xlu0 %v6615, 32
    %v6980 = vpop.permute.xlu0 %6979
    %6981 = vrot.lane.b32.xlu0 %v6618, 32
    %v6982 = vpop.permute.xlu0 %6981
    %6983 = vrot.lane.b32.xlu0 %v6623, 32
    %v6984 = vpop.permute.xlu0 %6983
    %6985 = vrot.lane.b32.xlu0 %v6626, 32
    %v6986 = vpop.permute.xlu0 %6985
    %6987 = vrot.lane.b32.xlu0 %v6631, 32
    %v6988 = vpop.permute.xlu0 %6987
    %6989 = vrot.lane.b32.xlu0 %v6634, 32
    %v6990 = vpop.permute.xlu0 %6989
    %6991 = vrot.lane.b32.xlu0 %v6639, 32
    %v6992 = vpop.permute.xlu0 %6991
    %6993 = vrot.lane.b32.xlu0 %v6642, 32
    %v6994 = vpop.permute.xlu0 %6993
    %7011 = vrot.lane.b32.xlu0 %v6909, 48
    %v7012 = vpop.permute.xlu0 %7011
    %7013 = vrot.lane.b32.xlu0 %v6912, 48
    %v7014 = vpop.permute.xlu0 %7013
    %7015 = vrot.lane.b32.xlu0 %v6917, 48
    %v7016 = vpop.permute.xlu0 %7015
    %7017 = vrot.lane.b32.xlu0 %v6920, 48
    %v7018 = vpop.permute.xlu0 %7017
    %7019 = vrot.lane.b32.xlu0 %v6925, 48
    %v7020 = vpop.permute.xlu0 %7019
    %7021 = vrot.lane.b32.xlu0 %v6928, 48
    %v7022 = vpop.permute.xlu0 %7021
    %7023 = vrot.lane.b32.xlu0 %v6933, 48
    %v7024 = vpop.permute.xlu0 %7023
    %7025 = vrot.lane.b32.xlu0 %v6936, 48
    %v7026 = vpop.permute.xlu0 %7025
    %v7035 = vsel %vm1749, %v6027, %v6948
    %v7036 = vsel %vm1749, %v6030, %v6950
    %v7037 = vsel %vm1749, %v6035, %v6952
    %v7038 = vsel %vm1749, %v6038, %v6954
    %v7039 = vsel %vm1749, %v6043, %v6956
    %v7040 = vsel %vm1749, %v6046, %v6958
    %v7041 = vsel %vm1749, %v6051, %v6960
    %v7042 = vsel %vm1749, %v6054, %v6962
    %v7043 = vsel %vm101, %v7035, %v6980
    %v7044 = vsel %vm101, %v7036, %v6982
    %v7045 = vsel %vm101, %v7037, %v6984
    %v7046 = vsel %vm101, %v7038, %v6986
    %v7047 = vsel %vm101, %v7039, %v6988
    %v7048 = vsel %vm101, %v7040, %v6990
    %v7049 = vsel %vm101, %v7041, %v6992
    %v7050 = vsel %vm101, %v7042, %v6994
    %v7051 = vsel %vm3034, %v7043, %v7012
    %v7052 = vsel %vm3034, %v7044, %v7014
    %v7053 = vsel %vm3034, %v7045, %v7016
    %v7054 = vsel %vm3034, %v7046, %v7018
    %v7055 = vsel %vm3034, %v7047, %v7020
    %v7056 = vsel %vm3034, %v7048, %v7022
    %v7057 = vsel %vm3034, %v7049, %v7024
    %v7058 = vsel %vm3034, %v7050, %v7026
    %v7059 = vld [vmem:[#allocation3 + $0x40] sm:$0xf]
    %v7060 = vld [vmem:[#allocation3 + $0x48] sm:$0xf]
    %v7061 = vld [vmem:[#allocation3 + $0x50] sm:$0xf]
    %v7062 = vld [vmem:[#allocation3 + $0x58] sm:$0xf]
    %v7063 = vld [vmem:[#allocation3 + $0x60] sm:$0xf]
    %v7064 = vld [vmem:[#allocation3 + $0x68] sm:$0xf]
    %v7065 = vld [vmem:[#allocation3 + $0x70] sm:$0xf]
    %v7066 = vld [vmem:[#allocation3 + $0x78] sm:$0xf]
    %v7067 = vld [vmem:[#allocation3 + $0x44] sm:$0xf]
    %v7068 = vld [vmem:[#allocation3 + $0x4c] sm:$0xf]
    %v7069 = vld [vmem:[#allocation3 + $0x54] sm:$0xf]
    %v7070 = vld [vmem:[#allocation3 + $0x5c] sm:$0xf]
    %v7071 = vld [vmem:[#allocation3 + $0x64] sm:$0xf]
    %v7072 = vld [vmem:[#allocation3 + $0x6c] sm:$0xf]
    %v7073 = vld [vmem:[#allocation3 + $0x74] sm:$0xf]
    %v7074 = vld [vmem:[#allocation3 + $0x7c] sm:$0xf]
    %v7083 = vunpack.c.l.b16 %v7059
    %v7084 = vunpack.c.l.b16 %v7060
    %v7085 = vunpack.c.l.b16 %v7061
    %v7086 = vunpack.c.l.b16 %v7062
    %v7087 = vunpack.c.l.b16 %v7063
    %v7088 = vunpack.c.l.b16 %v7064
    %v7089 = vunpack.c.l.b16 %v7065
    %v7090 = vunpack.c.l.b16 %v7066
    %v7091 = vpack.c.b16 %v7084, %v7083
    %v7092 = vpack.c.b16 %v7086, %v7085
    %v7093 = vpack.c.b16 %v7088, %v7087
    %v7094 = vpack.c.b16 %v7090, %v7089
    %7095 = vrot.lane.b32.xlu0 %v7091, 64
    %v7096 = vpop.permute.xlu0 %7095
    %7097 = vrot.lane.b32.xlu0 %v7092, 64
    %v7098 = vpop.permute.xlu0 %7097
    %7099 = vrot.lane.b32.xlu0 %v7093, 64
    %v7100 = vpop.permute.xlu0 %7099
    %7101 = vrot.lane.b32.xlu0 %v7094, 64
    %v7102 = vpop.permute.xlu0 %7101
    %v7104 = vsel %vm1749, %v7091, 0
    %v7107 = vsel %vm1749, %v7092, 0
    %v7110 = vsel %vm1749, %v7093, 0
    %v7113 = vsel %vm1749, %v7094, 0
    %v7116 = vsel %vm1749, %v7096, 0
    %v7119 = vsel %vm1749, %v7098, 0
    %v7122 = vsel %vm1749, %v7100, 0
    %v7125 = vsel %vm1749, %v7102, 0
    %7127 = vmatprep.subr.bf16.mxu0 0
    %7128 = vmatpush1.bf16.xpose.msra.mxu0 0
    %7129 = vmatprep.subr.bf16.mxu0 0
    %7130 = vmatpush1.bf16.xpose.msra.mxu0 0
    %7131 = vmatprep.subr.bf16.mxu0 0
    %7132 = vmatpush1.bf16.xpose.msra.mxu0 0
    %7133 = vmatprep.subr.bf16.mxu0 0
    %7134 = vmatpush1.bf16.xpose.msra.mxu0 0
    %7135 = vmatprep.subr.bf16.mxu0 0
    %7136 = vmatpush1.bf16.xpose.msra.mxu0 %v7125
    %7137 = vmatprep.subr.bf16.mxu0 0
    %7138 = vmatpush1.bf16.xpose.msra.mxu0 %v7122
    %7139 = vmatprep.subr.bf16.mxu0 0
    %7140 = vmatpush1.bf16.xpose.msra.mxu0 %v7119
    %7141 = vmatprep.subr.bf16.mxu0 0
    %7142 = vmatpush1.bf16.xpose.msra.mxu0 %v7116
    %7143 = vmatprep.subr.bf16.mxu0 0
    %7144 = vmatpush2.bf16.xpose.msra.mxu0 0
    %7145 = vmatprep.subr.bf16.mxu0 0
    %7146 = vmatpush2.bf16.xpose.msra.mxu0 0
    %7147 = vmatprep.subr.bf16.mxu0 0
    %7148 = vmatpush2.bf16.xpose.msra.mxu0 0
    %7149 = vmatprep.subr.bf16.mxu0 0
    %7150 = vmatpush2.bf16.xpose.msra.mxu0 0
    %7151 = vmatprep.subr.bf16.mxu0 0
    %7152 = vmatpush2.bf16.xpose.msra.mxu0 0
    %7153 = vmatprep.subr.bf16.mxu0 0
    %7154 = vmatpush2.bf16.xpose.msra.mxu0 0
    %7155 = vmatprep.subr.bf16.mxu0 0
    %7156 = vmatpush2.bf16.xpose.msra.mxu0 0
    %7157 = vmatprep.subr.bf16.mxu0 0
    %7158 = vmatpush2.bf16.xpose.msra.mxu0 0
    %7159 = vmatprep.mubr.bf16.mxu0 0
    %7160 = vmatmul.mubr.bf16.gmra.mxu0 %v7104
    %v7161 = vpop.f32.mrf.mxu0
    %v7162 = vadd.f32 0.0, %v7161
    %v7163 = vpop.f32.mrf.mxu0
    %v7164 = vpop.f32.mrf.mxu0
    %v7165 = vadd.f32 0.0, %v7164
    %v7166 = vpop.f32.mrf.mxu0
    %7167 = vmatprep.mubr.bf16.mxu0 0
    %7168 = vmatmul.mubr.bf16.gmra.mxu0 %v7107
    %v7169 = vpop.f32.mrf.mxu0
    %v7170 = vadd.f32 0.0, %v7169
    %v7171 = vpop.f32.mrf.mxu0
    %v7172 = vpop.f32.mrf.mxu0
    %v7173 = vadd.f32 0.0, %v7172
    %v7174 = vpop.f32.mrf.mxu0
    %7175 = vmatprep.mubr.bf16.mxu0 0
    %7176 = vmatmul.mubr.bf16.gmra.mxu0 %v7110
    %v7177 = vpop.f32.mrf.mxu0
    %v7178 = vadd.f32 0.0, %v7177
    %v7179 = vpop.f32.mrf.mxu0
    %v7180 = vpop.f32.mrf.mxu0
    %v7181 = vadd.f32 0.0, %v7180
    %v7182 = vpop.f32.mrf.mxu0
    %7183 = vmatprep.mubr.bf16.mxu0 0
    %7184 = vmatmul.mubr.bf16.gmra.mxu0 %v7113
    %v7185 = vpop.f32.mrf.mxu0
    %v7186 = vadd.f32 0.0, %v7185
    %v7187 = vpop.f32.mrf.mxu0
    %v7188 = vpop.f32.mrf.mxu0
    %v7189 = vadd.f32 0.0, %v7188
    %v7190 = vpop.f32.mrf.mxu0
    %7191 = vdwg.mxu0
    %v7192 = vmul.f32 %v7162, 0.25
    %v7193 = vmul.f32 %v7165, 0.25
    %v7194 = vmul.f32 %v7170, 0.25
    %v7195 = vmul.f32 %v7173, 0.25
    %v7196 = vmul.f32 %v7178, 0.25
    %v7197 = vmul.f32 %v7181, 0.25
    %v7198 = vmul.f32 %v7186, 0.25
    %v7199 = vmul.f32 %v7189, 0.25
    %v7200 = vsel %vm1453, %v7192, -inf
    %7201 = vmax.xlane.f32.xlu0 %v7200
    %v7202 = vpop.xlane.xlu0 %7201
    %v7203 = vsel %vm1453, %v7193, -inf
    %7204 = vmax.xlane.f32.xlu0 %v7203
    %v7205 = vpop.xlane.xlu0 %7204
    %v7206 = vsel %vm1453, %v7194, -inf
    %7207 = vmax.xlane.f32.xlu0 %v7206
    %v7208 = vpop.xlane.xlu0 %7207
    %v7209 = vsel %vm1453, %v7195, -inf
    %7210 = vmax.xlane.f32.xlu0 %v7209
    %v7211 = vpop.xlane.xlu0 %7210
    %v7212 = vsel %vm1453, %v7196, -inf
    %7213 = vmax.xlane.f32.xlu0 %v7212
    %v7214 = vpop.xlane.xlu0 %7213
    %v7215 = vsel %vm1453, %v7197, -inf
    %7216 = vmax.xlane.f32.xlu0 %v7215
    %v7217 = vpop.xlane.xlu0 %7216
    %v7218 = vsel %vm1453, %v7198, -inf
    %7219 = vmax.xlane.f32.xlu0 %v7218
    %v7220 = vpop.xlane.xlu0 %7219
    %v7221 = vsel %vm1453, %v7199, -inf
    %7222 = vmax.xlane.f32.xlu0 %v7221
    %v7223 = vpop.xlane.xlu0 %7222
    %v7224 = vsub.f32 %v7192, %v7202
    %v7225 = vsub.f32 %v7193, %v7205
    %v7226 = vsub.f32 %v7194, %v7208
    %v7227 = vsub.f32 %v7195, %v7211
    %v7228 = vsub.f32 %v7196, %v7214
    %v7229 = vsub.f32 %v7197, %v7217
    %v7230 = vsub.f32 %v7198, %v7220
    %v7231 = vsub.f32 %v7199, %v7223
    %v7232 = vmul.f32 %v7224, 1.442695
    %v7233 = vpow.pop %v7232
    %v7234 = vmul.f32 %v7225, 1.442695
    %v7235 = vpow.pop %v7234
    %v7236 = vmul.f32 %v7226, 1.442695
    %v7237 = vpow.pop %v7236
    %v7238 = vmul.f32 %v7227, 1.442695
    %v7239 = vpow.pop %v7238
    %v7240 = vmul.f32 %v7228, 1.442695
    %v7241 = vpow.pop %v7240
    %v7242 = vmul.f32 %v7229, 1.442695
    %v7243 = vpow.pop %v7242
    %v7244 = vmul.f32 %v7230, 1.442695
    %v7245 = vpow.pop %v7244
    %v7246 = vmul.f32 %v7231, 1.442695
    %v7247 = vpow.pop %v7246
    %v7248 = vsel %vm1453, %v7233, 0.0
    %7249 = vadd.xlane.f32.xlu0 %v7248
    %v7250 = vpop.xlane.xlu0 %7249
    %v7251 = vsel %vm1453, %v7235, 0.0
    %7252 = vadd.xlane.f32.xlu0 %v7251
    %v7253 = vpop.xlane.xlu0 %7252
    %v7254 = vsel %vm1453, %v7237, 0.0
    %7255 = vadd.xlane.f32.xlu0 %v7254
    %v7256 = vpop.xlane.xlu0 %7255
    %v7257 = vsel %vm1453, %v7239, 0.0
    %7258 = vadd.xlane.f32.xlu0 %v7257
    %v7259 = vpop.xlane.xlu0 %7258
    %v7260 = vsel %vm1453, %v7241, 0.0
    %7261 = vadd.xlane.f32.xlu0 %v7260
    %v7262 = vpop.xlane.xlu0 %7261
    %v7263 = vsel %vm1453, %v7243, 0.0
    %7264 = vadd.xlane.f32.xlu0 %v7263
    %v7265 = vpop.xlane.xlu0 %7264
    %v7266 = vsel %vm1453, %v7245, 0.0
    %7267 = vadd.xlane.f32.xlu0 %v7266
    %v7268 = vpop.xlane.xlu0 %7267
    %v7269 = vsel %vm1453, %v7247, 0.0
    %7270 = vadd.xlane.f32.xlu0 %v7269
    %v7271 = vpop.xlane.xlu0 %7270
    %v7272 = vrcp.pop %v7250
    %v7273 = vrcp.pop %v7253
    %v7274 = vrcp.pop %v7256
    %v7275 = vrcp.pop %v7259
    %v7276 = vrcp.pop %v7262
    %v7277 = vrcp.pop %v7265
    %v7278 = vrcp.pop %v7268
    %v7279 = vrcp.pop %v7271
    %v7280 = vmul.f32 %v7233, %v7272
    %v7281 = vmul.f32 %v7235, %v7273
    %v7282 = vmul.f32 %v7237, %v7274
    %v7283 = vmul.f32 %v7239, %v7275
    %v7284 = vmul.f32 %v7241, %v7276
    %v7285 = vmul.f32 %v7243, %v7277
    %v7286 = vmul.f32 %v7245, %v7278
    %v7287 = vmul.f32 %v7247, %v7279
    %v7288 = vpack.c.bf16 %v7281, %v7280
    %v7289 = vpack.c.bf16 %v7283, %v7282
    %v7290 = vpack.c.bf16 %v7285, %v7284
    %v7291 = vpack.c.bf16 %v7287, %v7286
    %v7300 = vunpack.c.l.b16 %v7067
    %v7301 = vunpack.c.l.b16 %v7068
    %v7302 = vunpack.c.l.b16 %v7069
    %v7303 = vunpack.c.l.b16 %v7070
    %v7304 = vunpack.c.l.b16 %v7071
    %v7305 = vunpack.c.l.b16 %v7072
    %v7306 = vunpack.c.l.b16 %v7073
    %v7307 = vunpack.c.l.b16 %v7074
    %v7308 = vpack.c.b16 %v7301, %v7300
    %v7309 = vpack.c.b16 %v7303, %v7302
    %v7310 = vpack.c.b16 %v7305, %v7304
    %v7311 = vpack.c.b16 %v7307, %v7306
    %v7317 = vsel %vm1453, %v7288, 0
    %v7320 = vsel %vm1453, %v7289, 0
    %v7323 = vsel %vm1453, %v7290, 0
    %v7326 = vsel %vm1453, %v7291, 0
    %7328 = vmatprep.subr.bf16.mxu0 0
    %7329 = vmatpush1.bf16.msra.mxu0 0
    %7330 = vmatprep.subr.bf16.mxu0 0
    %7331 = vmatpush1.bf16.msra.mxu0 0
    %7332 = vmatprep.subr.bf16.mxu0 0
    %7333 = vmatpush1.bf16.msra.mxu0 0
    %7334 = vmatprep.subr.bf16.mxu0 0
    %7335 = vmatpush1.bf16.msra.mxu0 0
    %7336 = vmatprep.subr.bf16.mxu0 0
    %7337 = vmatpush1.bf16.msra.mxu0 %v7311
    %7338 = vmatprep.subr.bf16.mxu0 0
    %7339 = vmatpush1.bf16.msra.mxu0 %v7310
    %7340 = vmatprep.subr.bf16.mxu0 0
    %7341 = vmatpush1.bf16.msra.mxu0 %v7309
    %7342 = vmatprep.subr.bf16.mxu0 0
    %7343 = vmatpush1.bf16.msra.mxu0 %v7308
    %7344 = vmatprep.subr.bf16.mxu0 0
    %7345 = vmatpush2.bf16.msra.mxu0 0
    %7346 = vmatprep.subr.bf16.mxu0 0
    %7347 = vmatpush2.bf16.msra.mxu0 0
    %7348 = vmatprep.subr.bf16.mxu0 0
    %7349 = vmatpush2.bf16.msra.mxu0 0
    %7350 = vmatprep.subr.bf16.mxu0 0
    %7351 = vmatpush2.bf16.msra.mxu0 0
    %7352 = vmatprep.subr.bf16.mxu0 0
    %7353 = vmatpush2.bf16.msra.mxu0 0
    %7354 = vmatprep.subr.bf16.mxu0 0
    %7355 = vmatpush2.bf16.msra.mxu0 0
    %7356 = vmatprep.subr.bf16.mxu0 0
    %7357 = vmatpush2.bf16.msra.mxu0 0
    %7358 = vmatprep.subr.bf16.mxu0 0
    %7359 = vmatpush2.bf16.msra.mxu0 0
    %7360 = vmatprep.mubr.bf16.mxu0 0
    %7361 = vmatmul.mubr.bf16.gmra.mxu0 %v7317
    %v7362 = vpop.f32.mrf.mxu0
    %v7363 = vadd.f32 0.0, %v7362
    %v7364 = vpop.f32.mrf.mxu0
    %v7365 = vpop.f32.mrf.mxu0
    %v7366 = vadd.f32 0.0, %v7365
    %v7367 = vpop.f32.mrf.mxu0
    %7368 = vmatprep.mubr.bf16.mxu0 0
    %7369 = vmatmul.mubr.bf16.gmra.mxu0 %v7320
    %v7370 = vpop.f32.mrf.mxu0
    %v7371 = vadd.f32 0.0, %v7370
    %v7372 = vpop.f32.mrf.mxu0
    %v7373 = vpop.f32.mrf.mxu0
    %v7374 = vadd.f32 0.0, %v7373
    %v7375 = vpop.f32.mrf.mxu0
    %7376 = vmatprep.mubr.bf16.mxu0 0
    %7377 = vmatmul.mubr.bf16.gmra.mxu0 %v7323
    %v7378 = vpop.f32.mrf.mxu0
    %v7379 = vadd.f32 0.0, %v7378
    %v7380 = vpop.f32.mrf.mxu0
    %v7381 = vpop.f32.mrf.mxu0
    %v7382 = vadd.f32 0.0, %v7381
    %v7383 = vpop.f32.mrf.mxu0
    %7384 = vmatprep.mubr.bf16.mxu0 0
    %7385 = vmatmul.mubr.bf16.gmra.mxu0 %v7326
    %v7386 = vpop.f32.mrf.mxu0
    %v7387 = vadd.f32 0.0, %v7386
    %v7388 = vpop.f32.mrf.mxu0
    %v7389 = vpop.f32.mrf.mxu0
    %v7390 = vadd.f32 0.0, %v7389
    %v7391 = vpop.f32.mrf.mxu0
    %7392 = vdwg.mxu0
    %7393 = vrot.lane.b32.xlu0 %v7091, 112
    %v7394 = vpop.permute.xlu0 %7393
    %7395 = vrot.lane.b32.xlu0 %v7092, 112
    %v7396 = vpop.permute.xlu0 %7395
    %7397 = vrot.lane.b32.xlu0 %v7093, 112
    %v7398 = vpop.permute.xlu0 %7397
    %7399 = vrot.lane.b32.xlu0 %v7094, 112
    %v7400 = vpop.permute.xlu0 %7399
    %7401 = vrot.lane.b32.xlu0 %v7091, 48
    %v7402 = vpop.permute.xlu0 %7401
    %7403 = vrot.lane.b32.xlu0 %v7092, 48
    %v7404 = vpop.permute.xlu0 %7403
    %7405 = vrot.lane.b32.xlu0 %v7093, 48
    %v7406 = vpop.permute.xlu0 %7405
    %7407 = vrot.lane.b32.xlu0 %v7094, 48
    %v7408 = vpop.permute.xlu0 %7407
    %v7410 = vsel %vm1749, %v7394, 0
    %v7413 = vsel %vm1749, %v7396, 0
    %v7416 = vsel %vm1749, %v7398, 0
    %v7419 = vsel %vm1749, %v7400, 0
    %v7422 = vsel %vm1749, %v7402, 0
    %v7425 = vsel %vm1749, %v7404, 0
    %v7428 = vsel %vm1749, %v7406, 0
    %v7431 = vsel %vm1749, %v7408, 0
    %7433 = vmatprep.subr.bf16.mxu0 0
    %7434 = vmatpush1.bf16.xpose.msra.mxu0 0
    %7435 = vmatprep.subr.bf16.mxu0 0
    %7436 = vmatpush1.bf16.xpose.msra.mxu0 0
    %7437 = vmatprep.subr.bf16.mxu0 0
    %7438 = vmatpush1.bf16.xpose.msra.mxu0 0
    %7439 = vmatprep.subr.bf16.mxu0 0
    %7440 = vmatpush1.bf16.xpose.msra.mxu0 0
    %7441 = vmatprep.subr.bf16.mxu0 0
    %7442 = vmatpush1.bf16.xpose.msra.mxu0 %v7431
    %7443 = vmatprep.subr.bf16.mxu0 0
    %7444 = vmatpush1.bf16.xpose.msra.mxu0 %v7428
    %7445 = vmatprep.subr.bf16.mxu0 0
    %7446 = vmatpush1.bf16.xpose.msra.mxu0 %v7425
    %7447 = vmatprep.subr.bf16.mxu0 0
    %7448 = vmatpush1.bf16.xpose.msra.mxu0 %v7422
    %7449 = vmatprep.subr.bf16.mxu0 0
    %7450 = vmatpush2.bf16.xpose.msra.mxu0 0
    %7451 = vmatprep.subr.bf16.mxu0 0
    %7452 = vmatpush2.bf16.xpose.msra.mxu0 0
    %7453 = vmatprep.subr.bf16.mxu0 0
    %7454 = vmatpush2.bf16.xpose.msra.mxu0 0
    %7455 = vmatprep.subr.bf16.mxu0 0
    %7456 = vmatpush2.bf16.xpose.msra.mxu0 0
    %7457 = vmatprep.subr.bf16.mxu0 0
    %7458 = vmatpush2.bf16.xpose.msra.mxu0 0
    %7459 = vmatprep.subr.bf16.mxu0 0
    %7460 = vmatpush2.bf16.xpose.msra.mxu0 0
    %7461 = vmatprep.subr.bf16.mxu0 0
    %7462 = vmatpush2.bf16.xpose.msra.mxu0 0
    %7463 = vmatprep.subr.bf16.mxu0 0
    %7464 = vmatpush2.bf16.xpose.msra.mxu0 0
    %7465 = vmatprep.mubr.bf16.mxu0 0
    %7466 = vmatmul.mubr.bf16.gmra.mxu0 %v7410
    %v7467 = vpop.f32.mrf.mxu0
    %v7468 = vadd.f32 0.0, %v7467
    %v7469 = vpop.f32.mrf.mxu0
    %v7470 = vpop.f32.mrf.mxu0
    %v7471 = vadd.f32 0.0, %v7470
    %v7472 = vpop.f32.mrf.mxu0
    %7473 = vmatprep.mubr.bf16.mxu0 0
    %7474 = vmatmul.mubr.bf16.gmra.mxu0 %v7413
    %v7475 = vpop.f32.mrf.mxu0
    %v7476 = vadd.f32 0.0, %v7475
    %v7477 = vpop.f32.mrf.mxu0
    %v7478 = vpop.f32.mrf.mxu0
    %v7479 = vadd.f32 0.0, %v7478
    %v7480 = vpop.f32.mrf.mxu0
    %7481 = vmatprep.mubr.bf16.mxu0 0
    %7482 = vmatmul.mubr.bf16.gmra.mxu0 %v7416
    %v7483 = vpop.f32.mrf.mxu0
    %v7484 = vadd.f32 0.0, %v7483
    %v7485 = vpop.f32.mrf.mxu0
    %v7486 = vpop.f32.mrf.mxu0
    %v7487 = vadd.f32 0.0, %v7486
    %v7488 = vpop.f32.mrf.mxu0
    %7489 = vmatprep.mubr.bf16.mxu0 0
    %7490 = vmatmul.mubr.bf16.gmra.mxu0 %v7419
    %v7491 = vpop.f32.mrf.mxu0
    %v7492 = vadd.f32 0.0, %v7491
    %v7493 = vpop.f32.mrf.mxu0
    %v7494 = vpop.f32.mrf.mxu0
    %v7495 = vadd.f32 0.0, %v7494
    %v7496 = vpop.f32.mrf.mxu0
    %7497 = vdwg.mxu0
    %v7498 = vmul.f32 %v7468, 0.25
    %v7499 = vmul.f32 %v7471, 0.25
    %v7500 = vmul.f32 %v7476, 0.25
    %v7501 = vmul.f32 %v7479, 0.25
    %v7502 = vmul.f32 %v7484, 0.25
    %v7503 = vmul.f32 %v7487, 0.25
    %v7504 = vmul.f32 %v7492, 0.25
    %v7505 = vmul.f32 %v7495, 0.25
    %v7506 = vsel %vm1453, %v7498, -inf
    %7507 = vmax.xlane.f32.xlu0 %v7506
    %v7508 = vpop.xlane.xlu0 %7507
    %v7509 = vsel %vm1453, %v7499, -inf
    %7510 = vmax.xlane.f32.xlu0 %v7509
    %v7511 = vpop.xlane.xlu0 %7510
    %v7512 = vsel %vm1453, %v7500, -inf
    %7513 = vmax.xlane.f32.xlu0 %v7512
    %v7514 = vpop.xlane.xlu0 %7513
    %v7515 = vsel %vm1453, %v7501, -inf
    %7516 = vmax.xlane.f32.xlu0 %v7515
    %v7517 = vpop.xlane.xlu0 %7516
    %v7518 = vsel %vm1453, %v7502, -inf
    %7519 = vmax.xlane.f32.xlu0 %v7518
    %v7520 = vpop.xlane.xlu0 %7519
    %v7521 = vsel %vm1453, %v7503, -inf
    %7522 = vmax.xlane.f32.xlu0 %v7521
    %v7523 = vpop.xlane.xlu0 %7522
    %v7524 = vsel %vm1453, %v7504, -inf
    %7525 = vmax.xlane.f32.xlu0 %v7524
    %v7526 = vpop.xlane.xlu0 %7525
    %v7527 = vsel %vm1453, %v7505, -inf
    %7528 = vmax.xlane.f32.xlu0 %v7527
    %v7529 = vpop.xlane.xlu0 %7528
    %v7530 = vsub.f32 %v7498, %v7508
    %v7531 = vsub.f32 %v7499, %v7511
    %v7532 = vsub.f32 %v7500, %v7514
    %v7533 = vsub.f32 %v7501, %v7517
    %v7534 = vsub.f32 %v7502, %v7520
    %v7535 = vsub.f32 %v7503, %v7523
    %v7536 = vsub.f32 %v7504, %v7526
    %v7537 = vsub.f32 %v7505, %v7529
    %v7538 = vmul.f32 %v7530, 1.442695
    %v7539 = vpow.pop %v7538
    %v7540 = vmul.f32 %v7531, 1.442695
    %v7541 = vpow.pop %v7540
    %v7542 = vmul.f32 %v7532, 1.442695
    %v7543 = vpow.pop %v7542
    %v7544 = vmul.f32 %v7533, 1.442695
    %v7545 = vpow.pop %v7544
    %v7546 = vmul.f32 %v7534, 1.442695
    %v7547 = vpow.pop %v7546
    %v7548 = vmul.f32 %v7535, 1.442695
    %v7549 = vpow.pop %v7548
    %v7550 = vmul.f32 %v7536, 1.442695
    %v7551 = vpow.pop %v7550
    %v7552 = vmul.f32 %v7537, 1.442695
    %v7553 = vpow.pop %v7552
    %v7554 = vsel %vm1453, %v7539, 0.0
    %7555 = vadd.xlane.f32.xlu0 %v7554
    %v7556 = vpop.xlane.xlu0 %7555
    %v7557 = vsel %vm1453, %v7541, 0.0
    %7558 = vadd.xlane.f32.xlu0 %v7557
    %v7559 = vpop.xlane.xlu0 %7558
    %v7560 = vsel %vm1453, %v7543, 0.0
    %7561 = vadd.xlane.f32.xlu0 %v7560
    %v7562 = vpop.xlane.xlu0 %7561
    %v7563 = vsel %vm1453, %v7545, 0.0
    %7564 = vadd.xlane.f32.xlu0 %v7563
    %v7565 = vpop.xlane.xlu0 %7564
    %v7566 = vsel %vm1453, %v7547, 0.0
    %7567 = vadd.xlane.f32.xlu0 %v7566
    %v7568 = vpop.xlane.xlu0 %7567
    %v7569 = vsel %vm1453, %v7549, 0.0
    %7570 = vadd.xlane.f32.xlu0 %v7569
    %v7571 = vpop.xlane.xlu0 %7570
    %v7572 = vsel %vm1453, %v7551, 0.0
    %7573 = vadd.xlane.f32.xlu0 %v7572
    %v7574 = vpop.xlane.xlu0 %7573
    %v7575 = vsel %vm1453, %v7553, 0.0
    %7576 = vadd.xlane.f32.xlu0 %v7575
    %v7577 = vpop.xlane.xlu0 %7576
    %v7578 = vrcp.pop %v7556
    %v7579 = vrcp.pop %v7559
    %v7580 = vrcp.pop %v7562
    %v7581 = vrcp.pop %v7565
    %v7582 = vrcp.pop %v7568
    %v7583 = vrcp.pop %v7571
    %v7584 = vrcp.pop %v7574
    %v7585 = vrcp.pop %v7577
    %v7586 = vmul.f32 %v7539, %v7578
    %v7587 = vmul.f32 %v7541, %v7579
    %v7588 = vmul.f32 %v7543, %v7580
    %v7589 = vmul.f32 %v7545, %v7581
    %v7590 = vmul.f32 %v7547, %v7582
    %v7591 = vmul.f32 %v7549, %v7583
    %v7592 = vmul.f32 %v7551, %v7584
    %v7593 = vmul.f32 %v7553, %v7585
    %v7594 = vpack.c.bf16 %v7587, %v7586
    %v7595 = vpack.c.bf16 %v7589, %v7588
    %v7596 = vpack.c.bf16 %v7591, %v7590
    %v7597 = vpack.c.bf16 %v7593, %v7592
    %7598 = vrot.lane.b32.xlu0 %v7308, 112
    %v7599 = vpop.permute.xlu0 %7598
    %7600 = vrot.lane.b32.xlu0 %v7309, 112
    %v7601 = vpop.permute.xlu0 %7600
    %7602 = vrot.lane.b32.xlu0 %v7310, 112
    %v7603 = vpop.permute.xlu0 %7602
    %7604 = vrot.lane.b32.xlu0 %v7311, 112
    %v7605 = vpop.permute.xlu0 %7604
    %v7611 = vsel %vm1453, %v7594, 0
    %v7614 = vsel %vm1453, %v7595, 0
    %v7617 = vsel %vm1453, %v7596, 0
    %v7620 = vsel %vm1453, %v7597, 0
    %7622 = vmatprep.subr.bf16.mxu0 0
    %7623 = vmatpush1.bf16.msra.mxu0 0
    %7624 = vmatprep.subr.bf16.mxu0 0
    %7625 = vmatpush1.bf16.msra.mxu0 0
    %7626 = vmatprep.subr.bf16.mxu0 0
    %7627 = vmatpush1.bf16.msra.mxu0 0
    %7628 = vmatprep.subr.bf16.mxu0 0
    %7629 = vmatpush1.bf16.msra.mxu0 0
    %7630 = vmatprep.subr.bf16.mxu0 0
    %7631 = vmatpush1.bf16.msra.mxu0 %v7605
    %7632 = vmatprep.subr.bf16.mxu0 0
    %7633 = vmatpush1.bf16.msra.mxu0 %v7603
    %7634 = vmatprep.subr.bf16.mxu0 0
    %7635 = vmatpush1.bf16.msra.mxu0 %v7601
    %7636 = vmatprep.subr.bf16.mxu0 0
    %7637 = vmatpush1.bf16.msra.mxu0 %v7599
    %7638 = vmatprep.subr.bf16.mxu0 0
    %7639 = vmatpush2.bf16.msra.mxu0 0
    %7640 = vmatprep.subr.bf16.mxu0 0
    %7641 = vmatpush2.bf16.msra.mxu0 0
    %7642 = vmatprep.subr.bf16.mxu0 0
    %7643 = vmatpush2.bf16.msra.mxu0 0
    %7644 = vmatprep.subr.bf16.mxu0 0
    %7645 = vmatpush2.bf16.msra.mxu0 0
    %7646 = vmatprep.subr.bf16.mxu0 0
    %7647 = vmatpush2.bf16.msra.mxu0 0
    %7648 = vmatprep.subr.bf16.mxu0 0
    %7649 = vmatpush2.bf16.msra.mxu0 0
    %7650 = vmatprep.subr.bf16.mxu0 0
    %7651 = vmatpush2.bf16.msra.mxu0 0
    %7652 = vmatprep.subr.bf16.mxu0 0
    %7653 = vmatpush2.bf16.msra.mxu0 0
    %7654 = vmatprep.mubr.bf16.mxu0 0
    %7655 = vmatmul.mubr.bf16.gmra.mxu0 %v7611
    %v7656 = vpop.f32.mrf.mxu0
    %v7657 = vadd.f32 0.0, %v7656
    %v7658 = vpop.f32.mrf.mxu0
    %v7659 = vpop.f32.mrf.mxu0
    %v7660 = vadd.f32 0.0, %v7659
    %v7661 = vpop.f32.mrf.mxu0
    %7662 = vmatprep.mubr.bf16.mxu0 0
    %7663 = vmatmul.mubr.bf16.gmra.mxu0 %v7614
    %v7664 = vpop.f32.mrf.mxu0
    %v7665 = vadd.f32 0.0, %v7664
    %v7666 = vpop.f32.mrf.mxu0
    %v7667 = vpop.f32.mrf.mxu0
    %v7668 = vadd.f32 0.0, %v7667
    %v7669 = vpop.f32.mrf.mxu0
    %7670 = vmatprep.mubr.bf16.mxu0 0
    %7671 = vmatmul.mubr.bf16.gmra.mxu0 %v7617
    %v7672 = vpop.f32.mrf.mxu0
    %v7673 = vadd.f32 0.0, %v7672
    %v7674 = vpop.f32.mrf.mxu0
    %v7675 = vpop.f32.mrf.mxu0
    %v7676 = vadd.f32 0.0, %v7675
    %v7677 = vpop.f32.mrf.mxu0
    %7678 = vmatprep.mubr.bf16.mxu0 0
    %7679 = vmatmul.mubr.bf16.gmra.mxu0 %v7620
    %v7680 = vpop.f32.mrf.mxu0
    %v7681 = vadd.f32 0.0, %v7680
    %v7682 = vpop.f32.mrf.mxu0
    %v7683 = vpop.f32.mrf.mxu0
    %v7684 = vadd.f32 0.0, %v7683
    %v7685 = vpop.f32.mrf.mxu0
    %7686 = vdwg.mxu0
    %7687 = vrot.lane.b32.xlu0 %v7091, 96
    %v7688 = vpop.permute.xlu0 %7687
    %7689 = vrot.lane.b32.xlu0 %v7092, 96
    %v7690 = vpop.permute.xlu0 %7689
    %7691 = vrot.lane.b32.xlu0 %v7093, 96
    %v7692 = vpop.permute.xlu0 %7691
    %7693 = vrot.lane.b32.xlu0 %v7094, 96
    %v7694 = vpop.permute.xlu0 %7693
    %7695 = vrot.lane.b32.xlu0 %v7091, 32
    %v7696 = vpop.permute.xlu0 %7695
    %7697 = vrot.lane.b32.xlu0 %v7092, 32
    %v7698 = vpop.permute.xlu0 %7697
    %7699 = vrot.lane.b32.xlu0 %v7093, 32
    %v7700 = vpop.permute.xlu0 %7699
    %7701 = vrot.lane.b32.xlu0 %v7094, 32
    %v7702 = vpop.permute.xlu0 %7701
    %v7704 = vsel %vm1749, %v7688, 0
    %v7707 = vsel %vm1749, %v7690, 0
    %v7710 = vsel %vm1749, %v7692, 0
    %v7713 = vsel %vm1749, %v7694, 0
    %v7716 = vsel %vm1749, %v7696, 0
    %v7719 = vsel %vm1749, %v7698, 0
    %v7722 = vsel %vm1749, %v7700, 0
    %v7725 = vsel %vm1749, %v7702, 0
    %7727 = vmatprep.subr.bf16.mxu0 0
    %7728 = vmatpush1.bf16.xpose.msra.mxu0 0
    %7729 = vmatprep.subr.bf16.mxu0 0
    %7730 = vmatpush1.bf16.xpose.msra.mxu0 0
    %7731 = vmatprep.subr.bf16.mxu0 0
    %7732 = vmatpush1.bf16.xpose.msra.mxu0 0
    %7733 = vmatprep.subr.bf16.mxu0 0
    %7734 = vmatpush1.bf16.xpose.msra.mxu0 0
    %7735 = vmatprep.subr.bf16.mxu0 0
    %7736 = vmatpush1.bf16.xpose.msra.mxu0 %v7725
    %7737 = vmatprep.subr.bf16.mxu0 0
    %7738 = vmatpush1.bf16.xpose.msra.mxu0 %v7722
    %7739 = vmatprep.subr.bf16.mxu0 0
    %7740 = vmatpush1.bf16.xpose.msra.mxu0 %v7719
    %7741 = vmatprep.subr.bf16.mxu0 0
    %7742 = vmatpush1.bf16.xpose.msra.mxu0 %v7716
    %7743 = vmatprep.subr.bf16.mxu0 0
    %7744 = vmatpush2.bf16.xpose.msra.mxu0 0
    %7745 = vmatprep.subr.bf16.mxu0 0
    %7746 = vmatpush2.bf16.xpose.msra.mxu0 0
    %7747 = vmatprep.subr.bf16.mxu0 0
    %7748 = vmatpush2.bf16.xpose.msra.mxu0 0
    %7749 = vmatprep.subr.bf16.mxu0 0
    %7750 = vmatpush2.bf16.xpose.msra.mxu0 0
    %7751 = vmatprep.subr.bf16.mxu0 0
    %7752 = vmatpush2.bf16.xpose.msra.mxu0 0
    %7753 = vmatprep.subr.bf16.mxu0 0
    %7754 = vmatpush2.bf16.xpose.msra.mxu0 0
    %7755 = vmatprep.subr.bf16.mxu0 0
    %7756 = vmatpush2.bf16.xpose.msra.mxu0 0
    %7757 = vmatprep.subr.bf16.mxu0 0
    %7758 = vmatpush2.bf16.xpose.msra.mxu0 0
    %7759 = vmatprep.mubr.bf16.mxu0 0
    %7760 = vmatmul.mubr.bf16.gmra.mxu0 %v7704
    %v7761 = vpop.f32.mrf.mxu0
    %v7762 = vadd.f32 0.0, %v7761
    %v7763 = vpop.f32.mrf.mxu0
    %v7764 = vpop.f32.mrf.mxu0
    %v7765 = vadd.f32 0.0, %v7764
    %v7766 = vpop.f32.mrf.mxu0
    %7767 = vmatprep.mubr.bf16.mxu0 0
    %7768 = vmatmul.mubr.bf16.gmra.mxu0 %v7707
    %v7769 = vpop.f32.mrf.mxu0
    %v7770 = vadd.f32 0.0, %v7769
    %v7771 = vpop.f32.mrf.mxu0
    %v7772 = vpop.f32.mrf.mxu0
    %v7773 = vadd.f32 0.0, %v7772
    %v7774 = vpop.f32.mrf.mxu0
    %7775 = vmatprep.mubr.bf16.mxu0 0
    %7776 = vmatmul.mubr.bf16.gmra.mxu0 %v7710
    %v7777 = vpop.f32.mrf.mxu0
    %v7778 = vadd.f32 0.0, %v7777
    %v7779 = vpop.f32.mrf.mxu0
    %v7780 = vpop.f32.mrf.mxu0
    %v7781 = vadd.f32 0.0, %v7780
    %v7782 = vpop.f32.mrf.mxu0
    %7783 = vmatprep.mubr.bf16.mxu0 0
    %7784 = vmatmul.mubr.bf16.gmra.mxu0 %v7713
    %v7785 = vpop.f32.mrf.mxu0
    %v7786 = vadd.f32 0.0, %v7785
    %v7787 = vpop.f32.mrf.mxu0
    %v7788 = vpop.f32.mrf.mxu0
    %v7789 = vadd.f32 0.0, %v7788
    %v7790 = vpop.f32.mrf.mxu0
    %7791 = vdwg.mxu0
    %v7792 = vmul.f32 %v7762, 0.25
    %v7793 = vmul.f32 %v7765, 0.25
    %v7794 = vmul.f32 %v7770, 0.25
    %v7795 = vmul.f32 %v7773, 0.25
    %v7796 = vmul.f32 %v7778, 0.25
    %v7797 = vmul.f32 %v7781, 0.25
    %v7798 = vmul.f32 %v7786, 0.25
    %v7799 = vmul.f32 %v7789, 0.25
    %v7800 = vsel %vm1453, %v7792, -inf
    %7801 = vmax.xlane.f32.xlu0 %v7800
    %v7802 = vpop.xlane.xlu0 %7801
    %v7803 = vsel %vm1453, %v7793, -inf
    %7804 = vmax.xlane.f32.xlu0 %v7803
    %v7805 = vpop.xlane.xlu0 %7804
    %v7806 = vsel %vm1453, %v7794, -inf
    %7807 = vmax.xlane.f32.xlu0 %v7806
    %v7808 = vpop.xlane.xlu0 %7807
    %v7809 = vsel %vm1453, %v7795, -inf
    %7810 = vmax.xlane.f32.xlu0 %v7809
    %v7811 = vpop.xlane.xlu0 %7810
    %v7812 = vsel %vm1453, %v7796, -inf
    %7813 = vmax.xlane.f32.xlu0 %v7812
    %v7814 = vpop.xlane.xlu0 %7813
    %v7815 = vsel %vm1453, %v7797, -inf
    %7816 = vmax.xlane.f32.xlu0 %v7815
    %v7817 = vpop.xlane.xlu0 %7816
    %v7818 = vsel %vm1453, %v7798, -inf
    %7819 = vmax.xlane.f32.xlu0 %v7818
    %v7820 = vpop.xlane.xlu0 %7819
    %v7821 = vsel %vm1453, %v7799, -inf
    %7822 = vmax.xlane.f32.xlu0 %v7821
    %v7823 = vpop.xlane.xlu0 %7822
    %v7824 = vsub.f32 %v7792, %v7802
    %v7825 = vsub.f32 %v7793, %v7805
    %v7826 = vsub.f32 %v7794, %v7808
    %v7827 = vsub.f32 %v7795, %v7811
    %v7828 = vsub.f32 %v7796, %v7814
    %v7829 = vsub.f32 %v7797, %v7817
    %v7830 = vsub.f32 %v7798, %v7820
    %v7831 = vsub.f32 %v7799, %v7823
    %v7832 = vmul.f32 %v7824, 1.442695
    %v7833 = vpow.pop %v7832
    %v7834 = vmul.f32 %v7825, 1.442695
    %v7835 = vpow.pop %v7834
    %v7836 = vmul.f32 %v7826, 1.442695
    %v7837 = vpow.pop %v7836
    %v7838 = vmul.f32 %v7827, 1.442695
    %v7839 = vpow.pop %v7838
    %v7840 = vmul.f32 %v7828, 1.442695
    %v7841 = vpow.pop %v7840
    %v7842 = vmul.f32 %v7829, 1.442695
    %v7843 = vpow.pop %v7842
    %v7844 = vmul.f32 %v7830, 1.442695
    %v7845 = vpow.pop %v7844
    %v7846 = vmul.f32 %v7831, 1.442695
    %v7847 = vpow.pop %v7846
    %v7848 = vsel %vm1453, %v7833, 0.0
    %7849 = vadd.xlane.f32.xlu0 %v7848
    %v7850 = vpop.xlane.xlu0 %7849
    %v7851 = vsel %vm1453, %v7835, 0.0
    %7852 = vadd.xlane.f32.xlu0 %v7851
    %v7853 = vpop.xlane.xlu0 %7852
    %v7854 = vsel %vm1453, %v7837, 0.0
    %7855 = vadd.xlane.f32.xlu0 %v7854
    %v7856 = vpop.xlane.xlu0 %7855
    %v7857 = vsel %vm1453, %v7839, 0.0
    %7858 = vadd.xlane.f32.xlu0 %v7857
    %v7859 = vpop.xlane.xlu0 %7858
    %v7860 = vsel %vm1453, %v7841, 0.0
    %7861 = vadd.xlane.f32.xlu0 %v7860
    %v7862 = vpop.xlane.xlu0 %7861
    %v7863 = vsel %vm1453, %v7843, 0.0
    %7864 = vadd.xlane.f32.xlu0 %v7863
    %v7865 = vpop.xlane.xlu0 %7864
    %v7866 = vsel %vm1453, %v7845, 0.0
    %7867 = vadd.xlane.f32.xlu0 %v7866
    %v7868 = vpop.xlane.xlu0 %7867
    %v7869 = vsel %vm1453, %v7847, 0.0
    %7870 = vadd.xlane.f32.xlu0 %v7869
    %v7871 = vpop.xlane.xlu0 %7870
    %v7872 = vrcp.pop %v7850
    %v7873 = vrcp.pop %v7853
    %v7874 = vrcp.pop %v7856
    %v7875 = vrcp.pop %v7859
    %v7876 = vrcp.pop %v7862
    %v7877 = vrcp.pop %v7865
    %v7878 = vrcp.pop %v7868
    %v7879 = vrcp.pop %v7871
    %v7880 = vmul.f32 %v7833, %v7872
    %v7881 = vmul.f32 %v7835, %v7873
    %v7882 = vmul.f32 %v7837, %v7874
    %v7883 = vmul.f32 %v7839, %v7875
    %v7884 = vmul.f32 %v7841, %v7876
    %v7885 = vmul.f32 %v7843, %v7877
    %v7886 = vmul.f32 %v7845, %v7878
    %v7887 = vmul.f32 %v7847, %v7879
    %v7888 = vpack.c.bf16 %v7881, %v7880
    %v7889 = vpack.c.bf16 %v7883, %v7882
    %v7890 = vpack.c.bf16 %v7885, %v7884
    %v7891 = vpack.c.bf16 %v7887, %v7886
    %7892 = vrot.lane.b32.xlu0 %v7308, 96
    %v7893 = vpop.permute.xlu0 %7892
    %7894 = vrot.lane.b32.xlu0 %v7309, 96
    %v7895 = vpop.permute.xlu0 %7894
    %7896 = vrot.lane.b32.xlu0 %v7310, 96
    %v7897 = vpop.permute.xlu0 %7896
    %7898 = vrot.lane.b32.xlu0 %v7311, 96
    %v7899 = vpop.permute.xlu0 %7898
    %v7905 = vsel %vm1453, %v7888, 0
    %v7908 = vsel %vm1453, %v7889, 0
    %v7911 = vsel %vm1453, %v7890, 0
    %v7914 = vsel %vm1453, %v7891, 0
    %7916 = vmatprep.subr.bf16.mxu0 0
    %7917 = vmatpush1.bf16.msra.mxu0 0
    %7918 = vmatprep.subr.bf16.mxu0 0
    %7919 = vmatpush1.bf16.msra.mxu0 0
    %7920 = vmatprep.subr.bf16.mxu0 0
    %7921 = vmatpush1.bf16.msra.mxu0 0
    %7922 = vmatprep.subr.bf16.mxu0 0
    %7923 = vmatpush1.bf16.msra.mxu0 0
    %7924 = vmatprep.subr.bf16.mxu0 0
    %7925 = vmatpush1.bf16.msra.mxu0 %v7899
    %7926 = vmatprep.subr.bf16.mxu0 0
    %7927 = vmatpush1.bf16.msra.mxu0 %v7897
    %7928 = vmatprep.subr.bf16.mxu0 0
    %7929 = vmatpush1.bf16.msra.mxu0 %v7895
    %7930 = vmatprep.subr.bf16.mxu0 0
    %7931 = vmatpush1.bf16.msra.mxu0 %v7893
    %7932 = vmatprep.subr.bf16.mxu0 0
    %7933 = vmatpush2.bf16.msra.mxu0 0
    %7934 = vmatprep.subr.bf16.mxu0 0
    %7935 = vmatpush2.bf16.msra.mxu0 0
    %7936 = vmatprep.subr.bf16.mxu0 0
    %7937 = vmatpush2.bf16.msra.mxu0 0
    %7938 = vmatprep.subr.bf16.mxu0 0
    %7939 = vmatpush2.bf16.msra.mxu0 0
    %7940 = vmatprep.subr.bf16.mxu0 0
    %7941 = vmatpush2.bf16.msra.mxu0 0
    %7942 = vmatprep.subr.bf16.mxu0 0
    %7943 = vmatpush2.bf16.msra.mxu0 0
    %7944 = vmatprep.subr.bf16.mxu0 0
    %7945 = vmatpush2.bf16.msra.mxu0 0
    %7946 = vmatprep.subr.bf16.mxu0 0
    %7947 = vmatpush2.bf16.msra.mxu0 0
    %7948 = vmatprep.mubr.bf16.mxu0 0
    %7949 = vmatmul.mubr.bf16.gmra.mxu0 %v7905
    %v7950 = vpop.f32.mrf.mxu0
    %v7951 = vadd.f32 0.0, %v7950
    %v7952 = vpop.f32.mrf.mxu0
    %v7953 = vpop.f32.mrf.mxu0
    %v7954 = vadd.f32 0.0, %v7953
    %v7955 = vpop.f32.mrf.mxu0
    %7956 = vmatprep.mubr.bf16.mxu0 0
    %7957 = vmatmul.mubr.bf16.gmra.mxu0 %v7908
    %v7958 = vpop.f32.mrf.mxu0
    %v7959 = vadd.f32 0.0, %v7958
    %v7960 = vpop.f32.mrf.mxu0
    %v7961 = vpop.f32.mrf.mxu0
    %v7962 = vadd.f32 0.0, %v7961
    %v7963 = vpop.f32.mrf.mxu0
    %7964 = vmatprep.mubr.bf16.mxu0 0
    %7965 = vmatmul.mubr.bf16.gmra.mxu0 %v7911
    %v7966 = vpop.f32.mrf.mxu0
    %v7967 = vadd.f32 0.0, %v7966
    %v7968 = vpop.f32.mrf.mxu0
    %v7969 = vpop.f32.mrf.mxu0
    %v7970 = vadd.f32 0.0, %v7969
    %v7971 = vpop.f32.mrf.mxu0
    %7972 = vmatprep.mubr.bf16.mxu0 0
    %7973 = vmatmul.mubr.bf16.gmra.mxu0 %v7914
    %v7974 = vpop.f32.mrf.mxu0
    %v7975 = vadd.f32 0.0, %v7974
    %v7976 = vpop.f32.mrf.mxu0
    %v7977 = vpop.f32.mrf.mxu0
    %v7978 = vadd.f32 0.0, %v7977
    %v7979 = vpop.f32.mrf.mxu0
    %7980 = vdwg.mxu0
    %7981 = vrot.lane.b32.xlu0 %v7091, 80
    %v7982 = vpop.permute.xlu0 %7981
    %7983 = vrot.lane.b32.xlu0 %v7092, 80
    %v7984 = vpop.permute.xlu0 %7983
    %7985 = vrot.lane.b32.xlu0 %v7093, 80
    %v7986 = vpop.permute.xlu0 %7985
    %7987 = vrot.lane.b32.xlu0 %v7094, 80
    %v7988 = vpop.permute.xlu0 %7987
    %7989 = vrot.lane.b32.xlu0 %v7091, 16
    %v7990 = vpop.permute.xlu0 %7989
    %7991 = vrot.lane.b32.xlu0 %v7092, 16
    %v7992 = vpop.permute.xlu0 %7991
    %7993 = vrot.lane.b32.xlu0 %v7093, 16
    %v7994 = vpop.permute.xlu0 %7993
    %7995 = vrot.lane.b32.xlu0 %v7094, 16
    %v7996 = vpop.permute.xlu0 %7995
    %v7998 = vsel %vm1749, %v7982, 0
    %v8001 = vsel %vm1749, %v7984, 0
    %v8004 = vsel %vm1749, %v7986, 0
    %v8007 = vsel %vm1749, %v7988, 0
    %v8010 = vsel %vm1749, %v7990, 0
    %v8013 = vsel %vm1749, %v7992, 0
    %v8016 = vsel %vm1749, %v7994, 0
    %v8019 = vsel %vm1749, %v7996, 0
    %8021 = vmatprep.subr.bf16.mxu0 0
    %8022 = vmatpush1.bf16.xpose.msra.mxu0 0
    %8023 = vmatprep.subr.bf16.mxu0 0
    %8024 = vmatpush1.bf16.xpose.msra.mxu0 0
    %8025 = vmatprep.subr.bf16.mxu0 0
    %8026 = vmatpush1.bf16.xpose.msra.mxu0 0
    %8027 = vmatprep.subr.bf16.mxu0 0
    %8028 = vmatpush1.bf16.xpose.msra.mxu0 0
    %8029 = vmatprep.subr.bf16.mxu0 0
    %8030 = vmatpush1.bf16.xpose.msra.mxu0 %v8019
    %8031 = vmatprep.subr.bf16.mxu0 0
    %8032 = vmatpush1.bf16.xpose.msra.mxu0 %v8016
    %8033 = vmatprep.subr.bf16.mxu0 0
    %8034 = vmatpush1.bf16.xpose.msra.mxu0 %v8013
    %8035 = vmatprep.subr.bf16.mxu0 0
    %8036 = vmatpush1.bf16.xpose.msra.mxu0 %v8010
    %8037 = vmatprep.subr.bf16.mxu0 0
    %8038 = vmatpush2.bf16.xpose.msra.mxu0 0
    %8039 = vmatprep.subr.bf16.mxu0 0
    %8040 = vmatpush2.bf16.xpose.msra.mxu0 0
    %8041 = vmatprep.subr.bf16.mxu0 0
    %8042 = vmatpush2.bf16.xpose.msra.mxu0 0
    %8043 = vmatprep.subr.bf16.mxu0 0
    %8044 = vmatpush2.bf16.xpose.msra.mxu0 0
    %8045 = vmatprep.subr.bf16.mxu0 0
    %8046 = vmatpush2.bf16.xpose.msra.mxu0 0
    %8047 = vmatprep.subr.bf16.mxu0 0
    %8048 = vmatpush2.bf16.xpose.msra.mxu0 0
    %8049 = vmatprep.subr.bf16.mxu0 0
    %8050 = vmatpush2.bf16.xpose.msra.mxu0 0
    %8051 = vmatprep.subr.bf16.mxu0 0
    %8052 = vmatpush2.bf16.xpose.msra.mxu0 0
    %8053 = vmatprep.mubr.bf16.mxu0 0
    %8054 = vmatmul.mubr.bf16.gmra.mxu0 %v7998
    %v8055 = vpop.f32.mrf.mxu0
    %v8056 = vadd.f32 0.0, %v8055
    %v8057 = vpop.f32.mrf.mxu0
    %v8058 = vpop.f32.mrf.mxu0
    %v8059 = vadd.f32 0.0, %v8058
    %v8060 = vpop.f32.mrf.mxu0
    %8061 = vmatprep.mubr.bf16.mxu0 0
    %8062 = vmatmul.mubr.bf16.gmra.mxu0 %v8001
    %v8063 = vpop.f32.mrf.mxu0
    %v8064 = vadd.f32 0.0, %v8063
    %v8065 = vpop.f32.mrf.mxu0
    %v8066 = vpop.f32.mrf.mxu0
    %v8067 = vadd.f32 0.0, %v8066
    %v8068 = vpop.f32.mrf.mxu0
    %8069 = vmatprep.mubr.bf16.mxu0 0
    %8070 = vmatmul.mubr.bf16.gmra.mxu0 %v8004
    %v8071 = vpop.f32.mrf.mxu0
    %v8072 = vadd.f32 0.0, %v8071
    %v8073 = vpop.f32.mrf.mxu0
    %v8074 = vpop.f32.mrf.mxu0
    %v8075 = vadd.f32 0.0, %v8074
    %v8076 = vpop.f32.mrf.mxu0
    %8077 = vmatprep.mubr.bf16.mxu0 0
    %8078 = vmatmul.mubr.bf16.gmra.mxu0 %v8007
    %v8079 = vpop.f32.mrf.mxu0
    %v8080 = vadd.f32 0.0, %v8079
    %v8081 = vpop.f32.mrf.mxu0
    %v8082 = vpop.f32.mrf.mxu0
    %v8083 = vadd.f32 0.0, %v8082
    %v8084 = vpop.f32.mrf.mxu0
    %8085 = vdwg.mxu0
    %v8086 = vmul.f32 %v8056, 0.25
    %v8087 = vmul.f32 %v8059, 0.25
    %v8088 = vmul.f32 %v8064, 0.25
    %v8089 = vmul.f32 %v8067, 0.25
    %v8090 = vmul.f32 %v8072, 0.25
    %v8091 = vmul.f32 %v8075, 0.25
    %v8092 = vmul.f32 %v8080, 0.25
    %v8093 = vmul.f32 %v8083, 0.25
    %v8094 = vsel %vm1453, %v8086, -inf
    %8095 = vmax.xlane.f32.xlu0 %v8094
    %v8096 = vpop.xlane.xlu0 %8095
    %v8097 = vsel %vm1453, %v8087, -inf
    %8098 = vmax.xlane.f32.xlu0 %v8097
    %v8099 = vpop.xlane.xlu0 %8098
    %v8100 = vsel %vm1453, %v8088, -inf
    %8101 = vmax.xlane.f32.xlu0 %v8100
    %v8102 = vpop.xlane.xlu0 %8101
    %v8103 = vsel %vm1453, %v8089, -inf
    %8104 = vmax.xlane.f32.xlu0 %v8103
    %v8105 = vpop.xlane.xlu0 %8104
    %v8106 = vsel %vm1453, %v8090, -inf
    %8107 = vmax.xlane.f32.xlu0 %v8106
    %v8108 = vpop.xlane.xlu0 %8107
    %v8109 = vsel %vm1453, %v8091, -inf
    %8110 = vmax.xlane.f32.xlu0 %v8109
    %v8111 = vpop.xlane.xlu0 %8110
    %v8112 = vsel %vm1453, %v8092, -inf
    %8113 = vmax.xlane.f32.xlu0 %v8112
    %v8114 = vpop.xlane.xlu0 %8113
    %v8115 = vsel %vm1453, %v8093, -inf
    %8116 = vmax.xlane.f32.xlu0 %v8115
    %v8117 = vpop.xlane.xlu0 %8116
    %v8118 = vsub.f32 %v8086, %v8096
    %v8119 = vsub.f32 %v8087, %v8099
    %v8120 = vsub.f32 %v8088, %v8102
    %v8121 = vsub.f32 %v8089, %v8105
    %v8122 = vsub.f32 %v8090, %v8108
    %v8123 = vsub.f32 %v8091, %v8111
    %v8124 = vsub.f32 %v8092, %v8114
    %v8125 = vsub.f32 %v8093, %v8117
    %v8126 = vmul.f32 %v8118, 1.442695
    %v8127 = vpow.pop %v8126
    %v8128 = vmul.f32 %v8119, 1.442695
    %v8129 = vpow.pop %v8128
    %v8130 = vmul.f32 %v8120, 1.442695
    %v8131 = vpow.pop %v8130
    %v8132 = vmul.f32 %v8121, 1.442695
    %v8133 = vpow.pop %v8132
    %v8134 = vmul.f32 %v8122, 1.442695
    %v8135 = vpow.pop %v8134
    %v8136 = vmul.f32 %v8123, 1.442695
    %v8137 = vpow.pop %v8136
    %v8138 = vmul.f32 %v8124, 1.442695
    %v8139 = vpow.pop %v8138
    %v8140 = vmul.f32 %v8125, 1.442695
    %v8141 = vpow.pop %v8140
    %v8142 = vsel %vm1453, %v8127, 0.0
    %8143 = vadd.xlane.f32.xlu0 %v8142
    %v8144 = vpop.xlane.xlu0 %8143
    %v8145 = vsel %vm1453, %v8129, 0.0
    %8146 = vadd.xlane.f32.xlu0 %v8145
    %v8147 = vpop.xlane.xlu0 %8146
    %v8148 = vsel %vm1453, %v8131, 0.0
    %8149 = vadd.xlane.f32.xlu0 %v8148
    %v8150 = vpop.xlane.xlu0 %8149
    %v8151 = vsel %vm1453, %v8133, 0.0
    %8152 = vadd.xlane.f32.xlu0 %v8151
    %v8153 = vpop.xlane.xlu0 %8152
    %v8154 = vsel %vm1453, %v8135, 0.0
    %8155 = vadd.xlane.f32.xlu0 %v8154
    %v8156 = vpop.xlane.xlu0 %8155
    %v8157 = vsel %vm1453, %v8137, 0.0
    %8158 = vadd.xlane.f32.xlu0 %v8157
    %v8159 = vpop.xlane.xlu0 %8158
    %v8160 = vsel %vm1453, %v8139, 0.0
    %8161 = vadd.xlane.f32.xlu0 %v8160
    %v8162 = vpop.xlane.xlu0 %8161
    %v8163 = vsel %vm1453, %v8141, 0.0
    %8164 = vadd.xlane.f32.xlu0 %v8163
    %v8165 = vpop.xlane.xlu0 %8164
    %v8166 = vrcp.pop %v8144
    %v8167 = vrcp.pop %v8147
    %v8168 = vrcp.pop %v8150
    %v8169 = vrcp.pop %v8153
    %v8170 = vrcp.pop %v8156
    %v8171 = vrcp.pop %v8159
    %v8172 = vrcp.pop %v8162
    %v8173 = vrcp.pop %v8165
    %v8174 = vmul.f32 %v8127, %v8166
    %v8175 = vmul.f32 %v8129, %v8167
    %v8176 = vmul.f32 %v8131, %v8168
    %v8177 = vmul.f32 %v8133, %v8169
    %v8178 = vmul.f32 %v8135, %v8170
    %v8179 = vmul.f32 %v8137, %v8171
    %v8180 = vmul.f32 %v8139, %v8172
    %v8181 = vmul.f32 %v8141, %v8173
    %v8182 = vpack.c.bf16 %v8175, %v8174
    %v8183 = vpack.c.bf16 %v8177, %v8176
    %v8184 = vpack.c.bf16 %v8179, %v8178
    %v8185 = vpack.c.bf16 %v8181, %v8180
    %8186 = vrot.lane.b32.xlu0 %v7308, 80
    %v8187 = vpop.permute.xlu0 %8186
    %8188 = vrot.lane.b32.xlu0 %v7309, 80
    %v8189 = vpop.permute.xlu0 %8188
    %8190 = vrot.lane.b32.xlu0 %v7310, 80
    %v8191 = vpop.permute.xlu0 %8190
    %8192 = vrot.lane.b32.xlu0 %v7311, 80
    %v8193 = vpop.permute.xlu0 %8192
    %v8199 = vsel %vm1453, %v8182, 0
    %v8202 = vsel %vm1453, %v8183, 0
    %v8205 = vsel %vm1453, %v8184, 0
    %v8208 = vsel %vm1453, %v8185, 0
    %8210 = vmatprep.subr.bf16.mxu0 0
    %8211 = vmatpush1.bf16.msra.mxu0 0
    %8212 = vmatprep.subr.bf16.mxu0 0
    %8213 = vmatpush1.bf16.msra.mxu0 0
    %8214 = vmatprep.subr.bf16.mxu0 0
    %8215 = vmatpush1.bf16.msra.mxu0 0
    %8216 = vmatprep.subr.bf16.mxu0 0
    %8217 = vmatpush1.bf16.msra.mxu0 0
    %8218 = vmatprep.subr.bf16.mxu0 0
    %8219 = vmatpush1.bf16.msra.mxu0 %v8193
    %8220 = vmatprep.subr.bf16.mxu0 0
    %8221 = vmatpush1.bf16.msra.mxu0 %v8191
    %8222 = vmatprep.subr.bf16.mxu0 0
    %8223 = vmatpush1.bf16.msra.mxu0 %v8189
    %8224 = vmatprep.subr.bf16.mxu0 0
    %8225 = vmatpush1.bf16.msra.mxu0 %v8187
    %8226 = vmatprep.subr.bf16.mxu0 0
    %8227 = vmatpush2.bf16.msra.mxu0 0
    %8228 = vmatprep.subr.bf16.mxu0 0
    %8229 = vmatpush2.bf16.msra.mxu0 0
    %8230 = vmatprep.subr.bf16.mxu0 0
    %8231 = vmatpush2.bf16.msra.mxu0 0
    %8232 = vmatprep.subr.bf16.mxu0 0
    %8233 = vmatpush2.bf16.msra.mxu0 0
    %8234 = vmatprep.subr.bf16.mxu0 0
    %8235 = vmatpush2.bf16.msra.mxu0 0
    %8236 = vmatprep.subr.bf16.mxu0 0
    %8237 = vmatpush2.bf16.msra.mxu0 0
    %8238 = vmatprep.subr.bf16.mxu0 0
    %8239 = vmatpush2.bf16.msra.mxu0 0
    %8240 = vmatprep.subr.bf16.mxu0 0
    %8241 = vmatpush2.bf16.msra.mxu0 0
    %8242 = vmatprep.mubr.bf16.mxu0 0
    %8243 = vmatmul.mubr.bf16.gmra.mxu0 %v8199
    %v8244 = vpop.f32.mrf.mxu0
    %v8245 = vadd.f32 0.0, %v8244
    %v8246 = vpop.f32.mrf.mxu0
    %v8247 = vpop.f32.mrf.mxu0
    %v8248 = vadd.f32 0.0, %v8247
    %v8249 = vpop.f32.mrf.mxu0
    %8250 = vmatprep.mubr.bf16.mxu0 0
    %8251 = vmatmul.mubr.bf16.gmra.mxu0 %v8202
    %v8252 = vpop.f32.mrf.mxu0
    %v8253 = vadd.f32 0.0, %v8252
    %v8254 = vpop.f32.mrf.mxu0
    %v8255 = vpop.f32.mrf.mxu0
    %v8256 = vadd.f32 0.0, %v8255
    %v8257 = vpop.f32.mrf.mxu0
    %8258 = vmatprep.mubr.bf16.mxu0 0
    %8259 = vmatmul.mubr.bf16.gmra.mxu0 %v8205
    %v8260 = vpop.f32.mrf.mxu0
    %v8261 = vadd.f32 0.0, %v8260
    %v8262 = vpop.f32.mrf.mxu0
    %v8263 = vpop.f32.mrf.mxu0
    %v8264 = vadd.f32 0.0, %v8263
    %v8265 = vpop.f32.mrf.mxu0
    %8266 = vmatprep.mubr.bf16.mxu0 0
    %8267 = vmatmul.mubr.bf16.gmra.mxu0 %v8208
    %v8268 = vpop.f32.mrf.mxu0
    %v8269 = vadd.f32 0.0, %v8268
    %v8270 = vpop.f32.mrf.mxu0
    %v8271 = vpop.f32.mrf.mxu0
    %v8272 = vadd.f32 0.0, %v8271
    %v8273 = vpop.f32.mrf.mxu0
    %8274 = vdwg.mxu0
    %8283 = vrot.lane.b32.xlu0 %v7657, 16
    %v8284 = vpop.permute.xlu0 %8283
    %8285 = vrot.lane.b32.xlu0 %v7660, 16
    %v8286 = vpop.permute.xlu0 %8285
    %8287 = vrot.lane.b32.xlu0 %v7665, 16
    %v8288 = vpop.permute.xlu0 %8287
    %8289 = vrot.lane.b32.xlu0 %v7668, 16
    %v8290 = vpop.permute.xlu0 %8289
    %8291 = vrot.lane.b32.xlu0 %v7673, 16
    %v8292 = vpop.permute.xlu0 %8291
    %8293 = vrot.lane.b32.xlu0 %v7676, 16
    %v8294 = vpop.permute.xlu0 %8293
    %8295 = vrot.lane.b32.xlu0 %v7681, 16
    %v8296 = vpop.permute.xlu0 %8295
    %8297 = vrot.lane.b32.xlu0 %v7684, 16
    %v8298 = vpop.permute.xlu0 %8297
    %8315 = vrot.lane.b32.xlu0 %v7951, 32
    %v8316 = vpop.permute.xlu0 %8315
    %8317 = vrot.lane.b32.xlu0 %v7954, 32
    %v8318 = vpop.permute.xlu0 %8317
    %8319 = vrot.lane.b32.xlu0 %v7959, 32
    %v8320 = vpop.permute.xlu0 %8319
    %8321 = vrot.lane.b32.xlu0 %v7962, 32
    %v8322 = vpop.permute.xlu0 %8321
    %8323 = vrot.lane.b32.xlu0 %v7967, 32
    %v8324 = vpop.permute.xlu0 %8323
    %8325 = vrot.lane.b32.xlu0 %v7970, 32
    %v8326 = vpop.permute.xlu0 %8325
    %8327 = vrot.lane.b32.xlu0 %v7975, 32
    %v8328 = vpop.permute.xlu0 %8327
    %8329 = vrot.lane.b32.xlu0 %v7978, 32
    %v8330 = vpop.permute.xlu0 %8329
    %8347 = vrot.lane.b32.xlu0 %v8245, 48
    %v8348 = vpop.permute.xlu0 %8347
    %8349 = vrot.lane.b32.xlu0 %v8248, 48
    %v8350 = vpop.permute.xlu0 %8349
    %8351 = vrot.lane.b32.xlu0 %v8253, 48
    %v8352 = vpop.permute.xlu0 %8351
    %8353 = vrot.lane.b32.xlu0 %v8256, 48
    %v8354 = vpop.permute.xlu0 %8353
    %8355 = vrot.lane.b32.xlu0 %v8261, 48
    %v8356 = vpop.permute.xlu0 %8355
    %8357 = vrot.lane.b32.xlu0 %v8264, 48
    %v8358 = vpop.permute.xlu0 %8357
    %8359 = vrot.lane.b32.xlu0 %v8269, 48
    %v8360 = vpop.permute.xlu0 %8359
    %8361 = vrot.lane.b32.xlu0 %v8272, 48
    %v8362 = vpop.permute.xlu0 %8361
    %v8371 = vsel %vm1749, %v7363, %v8284
    %v8372 = vsel %vm1749, %v7366, %v8286
    %v8373 = vsel %vm1749, %v7371, %v8288
    %v8374 = vsel %vm1749, %v7374, %v8290
    %v8375 = vsel %vm1749, %v7379, %v8292
    %v8376 = vsel %vm1749, %v7382, %v8294
    %v8377 = vsel %vm1749, %v7387, %v8296
    %v8378 = vsel %vm1749, %v7390, %v8298
    %v8379 = vsel %vm101, %v8371, %v8316
    %v8380 = vsel %vm101, %v8372, %v8318
    %v8381 = vsel %vm101, %v8373, %v8320
    %v8382 = vsel %vm101, %v8374, %v8322
    %v8383 = vsel %vm101, %v8375, %v8324
    %v8384 = vsel %vm101, %v8376, %v8326
    %v8385 = vsel %vm101, %v8377, %v8328
    %v8386 = vsel %vm101, %v8378, %v8330
    %v8387 = vsel %vm3034, %v8379, %v8348
    %v8388 = vsel %vm3034, %v8380, %v8350
    %v8389 = vsel %vm3034, %v8381, %v8352
    %v8390 = vsel %vm3034, %v8382, %v8354
    %v8391 = vsel %vm3034, %v8383, %v8356
    %v8392 = vsel %vm3034, %v8384, %v8358
    %v8393 = vsel %vm3034, %v8385, %v8360
    %v8394 = vsel %vm3034, %v8386, %v8362
    %v8395 = vpack.c.bf16 %v7052, %v7051
    %v8396 = vpack.c.bf16 %v7054, %v7053
    %v8397 = vpack.c.bf16 %v7056, %v7055
    %v8398 = vpack.c.bf16 %v7058, %v7057
    %v8399 = vpack.c.bf16 %v8388, %v8387
    %v8400 = vpack.c.bf16 %v8390, %v8389
    %v8401 = vpack.c.bf16 %v8392, %v8391
    %v8402 = vpack.c.bf16 %v8394, %v8393
    %v8403 = vlaneseq
    %v8404 = vshrl.u32 %v8403, 7
    %v8405 = vsub.s32 1, %v8404
    %v8406 = vrot.slane %v5416, %v8405
    %v8415 = vunpack.c.l.b16 %v5393
    %v8416 = vunpack.c.l.b16 %v5394
    %v8417 = vunpack.c.l.b16 %v5395
    %v8418 = vunpack.c.l.b16 %v5396
    %v8419 = vunpack.c.l.b16 %v5397
    %v8420 = vunpack.c.l.b16 %v5398
    %v8421 = vunpack.c.l.b16 %v5399
    %v8422 = vunpack.c.l.b16 %v5400
    %v8423 = vpack.c.b16 %v8416, %v8415
    %v8424 = vpack.c.b16 %v8418, %v8417
    %v8425 = vpack.c.b16 %v8420, %v8419
    %v8426 = vpack.c.b16 %v8422, %v8421
    %v8432 = vsel %vm1453, %v8395, 0
    %v8435 = vsel %vm1453, %v8396, 0
    %v8438 = vsel %vm1453, %v8397, 0
    %v8441 = vsel %vm1453, %v8398, 0
    %v8444 = vsel %vm1453, %v8399, 0
    %v8447 = vsel %vm1453, %v8400, 0
    %v8450 = vsel %vm1453, %v8401, 0
    %v8453 = vsel %vm1453, %v8402, 0
    %8455 = vmatprep.subr.bf16.mxu0 0
    %8456 = vmatpush1.bf16.msra.mxu0 0
    %8457 = vmatprep.subr.bf16.mxu0 0
    %8458 = vmatpush1.bf16.msra.mxu0 0
    %8459 = vmatprep.subr.bf16.mxu0 0
    %8460 = vmatpush1.bf16.msra.mxu0 0
    %8461 = vmatprep.subr.bf16.mxu0 0
    %8462 = vmatpush1.bf16.msra.mxu0 0
    %8463 = vmatprep.subr.bf16.mxu0 0
    %8464 = vmatpush1.bf16.msra.mxu0 %v8426
    %8465 = vmatprep.subr.bf16.mxu0 0
    %8466 = vmatpush1.bf16.msra.mxu0 %v8425
    %8467 = vmatprep.subr.bf16.mxu0 0
    %8468 = vmatpush1.bf16.msra.mxu0 %v8424
    %8469 = vmatprep.subr.bf16.mxu0 0
    %8470 = vmatpush1.bf16.msra.mxu0 %v8423
    %8471 = vmatprep.subr.bf16.mxu0 0
    %8472 = vmatpush2.bf16.msra.mxu0 0
    %8473 = vmatprep.subr.bf16.mxu0 0
    %8474 = vmatpush2.bf16.msra.mxu0 0
    %8475 = vmatprep.subr.bf16.mxu0 0
    %8476 = vmatpush2.bf16.msra.mxu0 0
    %8477 = vmatprep.subr.bf16.mxu0 0
    %8478 = vmatpush2.bf16.msra.mxu0 0
    %8479 = vmatprep.subr.bf16.mxu0 0
    %8480 = vmatpush2.bf16.msra.mxu0 0
    %8481 = vmatprep.subr.bf16.mxu0 0
    %8482 = vmatpush2.bf16.msra.mxu0 0
    %8483 = vmatprep.subr.bf16.mxu0 0
    %8484 = vmatpush2.bf16.msra.mxu0 0
    %8485 = vmatprep.subr.bf16.mxu0 0
    %8486 = vmatpush2.bf16.msra.mxu0 0
    %8487 = vmatprep.mubr.bf16.mxu0 0
    %8488 = vmatmul.mubr.bf16.gmra.mxu0 %v8432
    %v8489 = vpop.f32.mrf.mxu0
    %v8490 = vadd.f32 %v8406, %v8489
    %v8491 = vpop.f32.mrf.mxu0
    %v8492 = vpop.f32.mrf.mxu0
    %v8493 = vadd.f32 %v8406, %v8492
    %v8494 = vpop.f32.mrf.mxu0
    %8495 = vmatprep.mubr.bf16.mxu0 0
    %8496 = vmatmul.mubr.bf16.gmra.mxu0 %v8435
    %v8497 = vpop.f32.mrf.mxu0
    %v8498 = vadd.f32 %v8406, %v8497
    %v8499 = vpop.f32.mrf.mxu0
    %v8500 = vpop.f32.mrf.mxu0
    %v8501 = vadd.f32 %v8406, %v8500
    %v8502 = vpop.f32.mrf.mxu0
    %8503 = vmatprep.mubr.bf16.mxu0 0
    %8504 = vmatmul.mubr.bf16.gmra.mxu0 %v8438
    %v8505 = vpop.f32.mrf.mxu0
    %v8506 = vadd.f32 %v8406, %v8505
    %v8507 = vpop.f32.mrf.mxu0
    %v8508 = vpop.f32.mrf.mxu0
    %v8509 = vadd.f32 %v8406, %v8508
    %v8510 = vpop.f32.mrf.mxu0
    %8511 = vmatprep.mubr.bf16.mxu0 0
    %8512 = vmatmul.mubr.bf16.gmra.mxu0 %v8441
    %v8513 = vpop.f32.mrf.mxu0
    %v8514 = vadd.f32 %v8406, %v8513
    %v8515 = vpop.f32.mrf.mxu0
    %v8516 = vpop.f32.mrf.mxu0
    %v8517 = vadd.f32 %v8406, %v8516
    %v8518 = vpop.f32.mrf.mxu0
    %8519 = vmatprep.mubr.bf16.mxu0 0
    %8520 = vmatmul.mubr.bf16.gmra.mxu0 %v8444
    %v8521 = vpop.f32.mrf.mxu0
    %v8522 = vadd.f32 %v8406, %v8521
    %v8523 = vpop.f32.mrf.mxu0
    %v8524 = vpop.f32.mrf.mxu0
    %v8525 = vadd.f32 %v8406, %v8524
    %v8526 = vpop.f32.mrf.mxu0
    %8527 = vmatprep.mubr.bf16.mxu0 0
    %8528 = vmatmul.mubr.bf16.gmra.mxu0 %v8447
    %v8529 = vpop.f32.mrf.mxu0
    %v8530 = vadd.f32 %v8406, %v8529
    %v8531 = vpop.f32.mrf.mxu0
    %v8532 = vpop.f32.mrf.mxu0
    %v8533 = vadd.f32 %v8406, %v8532
    %v8534 = vpop.f32.mrf.mxu0
    %8535 = vmatprep.mubr.bf16.mxu0 0
    %8536 = vmatmul.mubr.bf16.gmra.mxu0 %v8450
    %v8537 = vpop.f32.mrf.mxu0
    %v8538 = vadd.f32 %v8406, %v8537
    %v8539 = vpop.f32.mrf.mxu0
    %v8540 = vpop.f32.mrf.mxu0
    %v8541 = vadd.f32 %v8406, %v8540
    %v8542 = vpop.f32.mrf.mxu0
    %8543 = vmatprep.mubr.bf16.mxu0 0
    %8544 = vmatmul.mubr.bf16.gmra.mxu0 %v8453
    %v8545 = vpop.f32.mrf.mxu0
    %v8546 = vadd.f32 %v8406, %v8545
    %v8547 = vpop.f32.mrf.mxu0
    %v8548 = vpop.f32.mrf.mxu0
    %v8549 = vadd.f32 %v8406, %v8548
    %v8550 = vpop.f32.mrf.mxu0
    %8551 = vdwg.mxu0
    %v8552 = vadd.f32 %v5367, %v8490
    %v8553 = vadd.f32 %v5368, %v8493
    %v8554 = vadd.f32 %v5369, %v8498
    %v8555 = vadd.f32 %v5370, %v8501
    %v8556 = vadd.f32 %v5371, %v8506
    %v8557 = vadd.f32 %v5372, %v8509
    %v8558 = vadd.f32 %v5373, %v8514
    %v8559 = vadd.f32 %v5374, %v8517
    %v8560 = vadd.f32 %v5375, %v8522
    %v8561 = vadd.f32 %v5376, %v8525
    %v8562 = vadd.f32 %v5377, %v8530
    %v8563 = vadd.f32 %v5378, %v8533
    %v8564 = vadd.f32 %v5379, %v8538
    %v8565 = vadd.f32 %v5380, %v8541
    %v8566 = vadd.f32 %v5381, %v8546
    %v8567 = vadd.f32 %v5382, %v8549
    %v8568 = vsel %vm1453, %v8552, 0.0
    %8569 = vadd.xlane.f32.xlu0 %v8568
    %v8570 = vpop.xlane.xlu0 %8569
    %v8571 = vsel %vm1453, %v8553, 0.0
    %8572 = vadd.xlane.f32.xlu0 %v8571
    %v8573 = vpop.xlane.xlu0 %8572
    %v8574 = vsel %vm1453, %v8554, 0.0
    %8575 = vadd.xlane.f32.xlu0 %v8574
    %v8576 = vpop.xlane.xlu0 %8575
    %v8577 = vsel %vm1453, %v8555, 0.0
    %8578 = vadd.xlane.f32.xlu0 %v8577
    %v8579 = vpop.xlane.xlu0 %8578
    %v8580 = vsel %vm1453, %v8556, 0.0
    %8581 = vadd.xlane.f32.xlu0 %v8580
    %v8582 = vpop.xlane.xlu0 %8581
    %v8583 = vsel %vm1453, %v8557, 0.0
    %8584 = vadd.xlane.f32.xlu0 %v8583
    %v8585 = vpop.xlane.xlu0 %8584
    %v8586 = vsel %vm1453, %v8558, 0.0
    %8587 = vadd.xlane.f32.xlu0 %v8586
    %v8588 = vpop.xlane.xlu0 %8587
    %v8589 = vsel %vm1453, %v8559, 0.0
    %8590 = vadd.xlane.f32.xlu0 %v8589
    %v8591 = vpop.xlane.xlu0 %8590
    %v8592 = vsel %vm1453, %v8560, 0.0
    %8593 = vadd.xlane.f32.xlu0 %v8592
    %v8594 = vpop.xlane.xlu0 %8593
    %v8595 = vsel %vm1453, %v8561, 0.0
    %8596 = vadd.xlane.f32.xlu0 %v8595
    %v8597 = vpop.xlane.xlu0 %8596
    %v8598 = vsel %vm1453, %v8562, 0.0
    %8599 = vadd.xlane.f32.xlu0 %v8598
    %v8600 = vpop.xlane.xlu0 %8599
    %v8601 = vsel %vm1453, %v8563, 0.0
    %8602 = vadd.xlane.f32.xlu0 %v8601
    %v8603 = vpop.xlane.xlu0 %8602
    %v8604 = vsel %vm1453, %v8564, 0.0
    %8605 = vadd.xlane.f32.xlu0 %v8604
    %v8606 = vpop.xlane.xlu0 %8605
    %v8607 = vsel %vm1453, %v8565, 0.0
    %8608 = vadd.xlane.f32.xlu0 %v8607
    %v8609 = vpop.xlane.xlu0 %8608
    %v8610 = vsel %vm1453, %v8566, 0.0
    %8611 = vadd.xlane.f32.xlu0 %v8610
    %v8612 = vpop.xlane.xlu0 %8611
    %v8613 = vsel %vm1453, %v8567, 0.0
    %8614 = vadd.xlane.f32.xlu0 %v8613
    %v8615 = vpop.xlane.xlu0 %8614
    %v8616 = vmul.f32 %v8570, %v4600
    %v8617 = vmul.f32 %v8573, %v4600
    %v8618 = vmul.f32 %v8576, %v4600
    %v8619 = vmul.f32 %v8579, %v4600
    %v8620 = vmul.f32 %v8582, %v4600
    %v8621 = vmul.f32 %v8585, %v4600
    %v8622 = vmul.f32 %v8588, %v4600
    %v8623 = vmul.f32 %v8591, %v4600
    %v8624 = vmul.f32 %v8594, %v4600
    %v8625 = vmul.f32 %v8597, %v4600
    %v8626 = vmul.f32 %v8600, %v4600
    %v8627 = vmul.f32 %v8603, %v4600
    %v8628 = vmul.f32 %v8606, %v4600
    %v8629 = vmul.f32 %v8609, %v4600
    %v8630 = vmul.f32 %v8612, %v4600
    %v8631 = vmul.f32 %v8615, %v4600
    %v8632 = vsub.f32 %v8552, %v8616
    %v8633 = vsub.f32 %v8553, %v8617
    %v8634 = vsub.f32 %v8554, %v8618
    %v8635 = vsub.f32 %v8555, %v8619
    %v8636 = vsub.f32 %v8556, %v8620
    %v8637 = vsub.f32 %v8557, %v8621
    %v8638 = vsub.f32 %v8558, %v8622
    %v8639 = vsub.f32 %v8559, %v8623
    %v8640 = vsub.f32 %v8560, %v8624
    %v8641 = vsub.f32 %v8561, %v8625
    %v8642 = vsub.f32 %v8562, %v8626
    %v8643 = vsub.f32 %v8563, %v8627
    %v8644 = vsub.f32 %v8564, %v8628
    %v8645 = vsub.f32 %v8565, %v8629
    %v8646 = vsub.f32 %v8566, %v8630
    %v8647 = vsub.f32 %v8567, %v8631
    %v8648 = vmul.f32 %v8632, %v8632
    %v8649 = vmul.f32 %v8633, %v8633
    %v8650 = vmul.f32 %v8634, %v8634
    %v8651 = vmul.f32 %v8635, %v8635
    %v8652 = vmul.f32 %v8636, %v8636
    %v8653 = vmul.f32 %v8637, %v8637
    %v8654 = vmul.f32 %v8638, %v8638
    %v8655 = vmul.f32 %v8639, %v8639
    %v8656 = vmul.f32 %v8640, %v8640
    %v8657 = vmul.f32 %v8641, %v8641
    %v8658 = vmul.f32 %v8642, %v8642
    %v8659 = vmul.f32 %v8643, %v8643
    %v8660 = vmul.f32 %v8644, %v8644
    %v8661 = vmul.f32 %v8645, %v8645
    %v8662 = vmul.f32 %v8646, %v8646
    %v8663 = vmul.f32 %v8647, %v8647
    %v8664 = vsel %vm1453, %v8648, 0.0
    %8665 = vadd.xlane.f32.xlu0 %v8664
    %v8666 = vpop.xlane.xlu0 %8665
    %v8667 = vsel %vm1453, %v8649, 0.0
    %8668 = vadd.xlane.f32.xlu0 %v8667
    %v8669 = vpop.xlane.xlu0 %8668
    %v8670 = vsel %vm1453, %v8650, 0.0
    %8671 = vadd.xlane.f32.xlu0 %v8670
    %v8672 = vpop.xlane.xlu0 %8671
    %v8673 = vsel %vm1453, %v8651, 0.0
    %8674 = vadd.xlane.f32.xlu0 %v8673
    %v8675 = vpop.xlane.xlu0 %8674
    %v8676 = vsel %vm1453, %v8652, 0.0
    %8677 = vadd.xlane.f32.xlu0 %v8676
    %v8678 = vpop.xlane.xlu0 %8677
    %v8679 = vsel %vm1453, %v8653, 0.0
    %8680 = vadd.xlane.f32.xlu0 %v8679
    %v8681 = vpop.xlane.xlu0 %8680
    %v8682 = vsel %vm1453, %v8654, 0.0
    %8683 = vadd.xlane.f32.xlu0 %v8682
    %v8684 = vpop.xlane.xlu0 %8683
    %v8685 = vsel %vm1453, %v8655, 0.0
    %8686 = vadd.xlane.f32.xlu0 %v8685
    %v8687 = vpop.xlane.xlu0 %8686
    %v8688 = vsel %vm1453, %v8656, 0.0
    %8689 = vadd.xlane.f32.xlu0 %v8688
    %v8690 = vpop.xlane.xlu0 %8689
    %v8691 = vsel %vm1453, %v8657, 0.0
    %8692 = vadd.xlane.f32.xlu0 %v8691
    %v8693 = vpop.xlane.xlu0 %8692
    %v8694 = vsel %vm1453, %v8658, 0.0
    %8695 = vadd.xlane.f32.xlu0 %v8694
    %v8696 = vpop.xlane.xlu0 %8695
    %v8697 = vsel %vm1453, %v8659, 0.0
    %8698 = vadd.xlane.f32.xlu0 %v8697
    %v8699 = vpop.xlane.xlu0 %8698
    %v8700 = vsel %vm1453, %v8660, 0.0
    %8701 = vadd.xlane.f32.xlu0 %v8700
    %v8702 = vpop.xlane.xlu0 %8701
    %v8703 = vsel %vm1453, %v8661, 0.0
    %8704 = vadd.xlane.f32.xlu0 %v8703
    %v8705 = vpop.xlane.xlu0 %8704
    %v8706 = vsel %vm1453, %v8662, 0.0
    %8707 = vadd.xlane.f32.xlu0 %v8706
    %v8708 = vpop.xlane.xlu0 %8707
    %v8709 = vsel %vm1453, %v8663, 0.0
    %8710 = vadd.xlane.f32.xlu0 %v8709
    %v8711 = vpop.xlane.xlu0 %8710
    %v8712 = vmul.f32 %v8666, %v4600
    %v8713 = vmul.f32 %v8669, %v4600
    %v8714 = vmul.f32 %v8672, %v4600
    %v8715 = vmul.f32 %v8675, %v4600
    %v8716 = vmul.f32 %v8678, %v4600
    %v8717 = vmul.f32 %v8681, %v4600
    %v8718 = vmul.f32 %v8684, %v4600
    %v8719 = vmul.f32 %v8687, %v4600
    %v8720 = vmul.f32 %v8690, %v4600
    %v8721 = vmul.f32 %v8693, %v4600
    %v8722 = vmul.f32 %v8696, %v4600
    %v8723 = vmul.f32 %v8699, %v4600
    %v8724 = vmul.f32 %v8702, %v4600
    %v8725 = vmul.f32 %v8705, %v4600
    %v8726 = vmul.f32 %v8708, %v4600
    %v8727 = vmul.f32 %v8711, %v4600
    %v8728 = vadd.f32 %v8712, 1e-05
    %v8729 = vadd.f32 %v8713, 1e-05
    %v8730 = vadd.f32 %v8714, 1e-05
    %v8731 = vadd.f32 %v8715, 1e-05
    %v8732 = vadd.f32 %v8716, 1e-05
    %v8733 = vadd.f32 %v8717, 1e-05
    %v8734 = vadd.f32 %v8718, 1e-05
    %v8735 = vadd.f32 %v8719, 1e-05
    %v8736 = vadd.f32 %v8720, 1e-05
    %v8737 = vadd.f32 %v8721, 1e-05
    %v8738 = vadd.f32 %v8722, 1e-05
    %v8739 = vadd.f32 %v8723, 1e-05
    %v8740 = vadd.f32 %v8724, 1e-05
    %v8741 = vadd.f32 %v8725, 1e-05
    %v8742 = vadd.f32 %v8726, 1e-05
    %v8743 = vadd.f32 %v8727, 1e-05
    %v8744 = vrsqrt.pop %v8728
    %v8745 = vrsqrt.pop %v8729
    %v8746 = vrsqrt.pop %v8730
    %v8747 = vrsqrt.pop %v8731
    %v8748 = vrsqrt.pop %v8732
    %v8749 = vrsqrt.pop %v8733
    %v8750 = vrsqrt.pop %v8734
    %v8751 = vrsqrt.pop %v8735
    %v8752 = vrsqrt.pop %v8736
    %v8753 = vrsqrt.pop %v8737
    %v8754 = vrsqrt.pop %v8738
    %v8755 = vrsqrt.pop %v8739
    %v8756 = vrsqrt.pop %v8740
    %v8757 = vrsqrt.pop %v8741
    %v8758 = vrsqrt.pop %v8742
    %v8759 = vrsqrt.pop %v8743
    %v8760 = vmul.f32 %v8632, %v8744
    %v8761 = vmul.f32 %v8633, %v8745
    %v8762 = vmul.f32 %v8634, %v8746
    %v8763 = vmul.f32 %v8635, %v8747
    %v8764 = vmul.f32 %v8636, %v8748
    %v8765 = vmul.f32 %v8637, %v8749
    %v8766 = vmul.f32 %v8638, %v8750
    %v8767 = vmul.f32 %v8639, %v8751
    %v8768 = vmul.f32 %v8640, %v8752
    %v8769 = vmul.f32 %v8641, %v8753
    %v8770 = vmul.f32 %v8642, %v8754
    %v8771 = vmul.f32 %v8643, %v8755
    %v8772 = vmul.f32 %v8644, %v8756
    %v8773 = vmul.f32 %v8645, %v8757
    %v8774 = vmul.f32 %v8646, %v8758
    %v8775 = vmul.f32 %v8647, %v8759
    %v8776 = vlaneseq
    %v8777 = vshrl.u32 %v8776, 7
    %v8778 = vsub.s32 4, %v8777
    %v8779 = vrot.slane %v5416, %v8778
    %v8780 = vmul.f32 %v8760, %v8779
    %v8781 = vmul.f32 %v8761, %v8779
    %v8782 = vmul.f32 %v8762, %v8779
    %v8783 = vmul.f32 %v8763, %v8779
    %v8784 = vmul.f32 %v8764, %v8779
    %v8785 = vmul.f32 %v8765, %v8779
    %v8786 = vmul.f32 %v8766, %v8779
    %v8787 = vmul.f32 %v8767, %v8779
    %v8788 = vmul.f32 %v8768, %v8779
    %v8789 = vmul.f32 %v8769, %v8779
    %v8790 = vmul.f32 %v8770, %v8779
    %v8791 = vmul.f32 %v8771, %v8779
    %v8792 = vmul.f32 %v8772, %v8779
    %v8793 = vmul.f32 %v8773, %v8779
    %v8794 = vmul.f32 %v8774, %v8779
    %v8795 = vmul.f32 %v8775, %v8779
    %v8796 = vlaneseq
    %v8797 = vshrl.u32 %v8796, 7
    %v8798 = vsub.s32 5, %v8797
    %v8799 = vrot.slane %v5416, %v8798
    %v8800 = vadd.f32 %v8780, %v8799
    %v8801 = vadd.f32 %v8781, %v8799
    %v8802 = vadd.f32 %v8782, %v8799
    %v8803 = vadd.f32 %v8783, %v8799
    %v8804 = vadd.f32 %v8784, %v8799
    %v8805 = vadd.f32 %v8785, %v8799
    %v8806 = vadd.f32 %v8786, %v8799
    %v8807 = vadd.f32 %v8787, %v8799
    %v8808 = vadd.f32 %v8788, %v8799
    %v8809 = vadd.f32 %v8789, %v8799
    %v8810 = vadd.f32 %v8790, %v8799
    %v8811 = vadd.f32 %v8791, %v8799
    %v8812 = vadd.f32 %v8792, %v8799
    %v8813 = vadd.f32 %v8793, %v8799
    %v8814 = vadd.f32 %v8794, %v8799
    %v8815 = vadd.f32 %v8795, %v8799
    %v8816 = vpack.c.bf16 %v8801, %v8800
    %v8817 = vpack.c.bf16 %v8803, %v8802
    %v8818 = vpack.c.bf16 %v8805, %v8804
    %v8819 = vpack.c.bf16 %v8807, %v8806
    %v8820 = vpack.c.bf16 %v8809, %v8808
    %v8821 = vpack.c.bf16 %v8811, %v8810
    %v8822 = vpack.c.bf16 %v8813, %v8812
    %v8823 = vpack.c.bf16 %v8815, %v8814
    %v8824 = vlaneseq
    %v8825 = vshrl.u32 %v8824, 7
    %v8826 = vsub.s32 2, %v8825
    %v8827 = vrot.slane %v5416, %v8826
    %v8836 = vunpack.c.l.b16 %v5402
    %v8837 = vunpack.c.l.b16 %v5403
    %v8838 = vunpack.c.l.b16 %v5404
    %v8839 = vunpack.c.l.b16 %v5405
    %v8840 = vunpack.c.l.b16 %v5406
    %v8841 = vunpack.c.l.b16 %v5407
    %v8842 = vunpack.c.l.b16 %v5408
    %v8843 = vunpack.c.l.b16 %v5409
    %v8844 = vpack.c.b16 %v8837, %v8836
    %v8845 = vpack.c.b16 %v8839, %v8838
    %v8846 = vpack.c.b16 %v8841, %v8840
    %v8847 = vpack.c.b16 %v8843, %v8842
    %v8853 = vsel %vm1453, %v8816, 0
    %v8856 = vsel %vm1453, %v8817, 0
    %v8859 = vsel %vm1453, %v8818, 0
    %v8862 = vsel %vm1453, %v8819, 0
    %v8865 = vsel %vm1453, %v8820, 0
    %v8868 = vsel %vm1453, %v8821, 0
    %v8871 = vsel %vm1453, %v8822, 0
    %v8874 = vsel %vm1453, %v8823, 0
    %8876 = vmatprep.subr.bf16.mxu0 0
    %8877 = vmatpush1.bf16.msra.mxu0 0
    %8878 = vmatprep.subr.bf16.mxu0 0
    %8879 = vmatpush1.bf16.msra.mxu0 0
    %8880 = vmatprep.subr.bf16.mxu0 0
    %8881 = vmatpush1.bf16.msra.mxu0 0
    %8882 = vmatprep.subr.bf16.mxu0 0
    %8883 = vmatpush1.bf16.msra.mxu0 0
    %8884 = vmatprep.subr.bf16.mxu0 0
    %8885 = vmatpush1.bf16.msra.mxu0 %v8847
    %8886 = vmatprep.subr.bf16.mxu0 0
    %8887 = vmatpush1.bf16.msra.mxu0 %v8846
    %8888 = vmatprep.subr.bf16.mxu0 0
    %8889 = vmatpush1.bf16.msra.mxu0 %v8845
    %8890 = vmatprep.subr.bf16.mxu0 0
    %8891 = vmatpush1.bf16.msra.mxu0 %v8844
    %8892 = vmatprep.subr.bf16.mxu0 0
    %8893 = vmatpush2.bf16.msra.mxu0 0
    %8894 = vmatprep.subr.bf16.mxu0 0
    %8895 = vmatpush2.bf16.msra.mxu0 0
    %8896 = vmatprep.subr.bf16.mxu0 0
    %8897 = vmatpush2.bf16.msra.mxu0 0
    %8898 = vmatprep.subr.bf16.mxu0 0
    %8899 = vmatpush2.bf16.msra.mxu0 0
    %8900 = vmatprep.subr.bf16.mxu0 0
    %8901 = vmatpush2.bf16.msra.mxu0 0
    %8902 = vmatprep.subr.bf16.mxu0 0
    %8903 = vmatpush2.bf16.msra.mxu0 0
    %8904 = vmatprep.subr.bf16.mxu0 0
    %8905 = vmatpush2.bf16.msra.mxu0 0
    %8906 = vmatprep.subr.bf16.mxu0 0
    %8907 = vmatpush2.bf16.msra.mxu0 0
    %8908 = vmatprep.mubr.bf16.mxu0 0
    %8909 = vmatmul.mubr.bf16.gmra.mxu0 %v8853
    %v8910 = vpop.f32.mrf.mxu0
    %v8911 = vadd.f32 %v8827, %v8910
    %v8912 = vpop.f32.mrf.mxu0
    %v8913 = vpop.f32.mrf.mxu0
    %v8914 = vadd.f32 %v8827, %v8913
    %v8915 = vpop.f32.mrf.mxu0
    %8916 = vmatprep.mubr.bf16.mxu0 0
    %8917 = vmatmul.mubr.bf16.gmra.mxu0 %v8856
    %v8918 = vpop.f32.mrf.mxu0
    %v8919 = vadd.f32 %v8827, %v8918
    %v8920 = vpop.f32.mrf.mxu0
    %v8921 = vpop.f32.mrf.mxu0
    %v8922 = vadd.f32 %v8827, %v8921
    %v8923 = vpop.f32.mrf.mxu0
    %8924 = vmatprep.mubr.bf16.mxu0 0
    %8925 = vmatmul.mubr.bf16.gmra.mxu0 %v8859
    %v8926 = vpop.f32.mrf.mxu0
    %v8927 = vadd.f32 %v8827, %v8926
    %v8928 = vpop.f32.mrf.mxu0
    %v8929 = vpop.f32.mrf.mxu0
    %v8930 = vadd.f32 %v8827, %v8929
    %v8931 = vpop.f32.mrf.mxu0
    %8932 = vmatprep.mubr.bf16.mxu0 0
    %8933 = vmatmul.mubr.bf16.gmra.mxu0 %v8862
    %v8934 = vpop.f32.mrf.mxu0
    %v8935 = vadd.f32 %v8827, %v8934
    %v8936 = vpop.f32.mrf.mxu0
    %v8937 = vpop.f32.mrf.mxu0
    %v8938 = vadd.f32 %v8827, %v8937
    %v8939 = vpop.f32.mrf.mxu0
    %8940 = vmatprep.mubr.bf16.mxu0 0
    %8941 = vmatmul.mubr.bf16.gmra.mxu0 %v8865
    %v8942 = vpop.f32.mrf.mxu0
    %v8943 = vadd.f32 %v8827, %v8942
    %v8944 = vpop.f32.mrf.mxu0
    %v8945 = vpop.f32.mrf.mxu0
    %v8946 = vadd.f32 %v8827, %v8945
    %v8947 = vpop.f32.mrf.mxu0
    %8948 = vmatprep.mubr.bf16.mxu0 0
    %8949 = vmatmul.mubr.bf16.gmra.mxu0 %v8868
    %v8950 = vpop.f32.mrf.mxu0
    %v8951 = vadd.f32 %v8827, %v8950
    %v8952 = vpop.f32.mrf.mxu0
    %v8953 = vpop.f32.mrf.mxu0
    %v8954 = vadd.f32 %v8827, %v8953
    %v8955 = vpop.f32.mrf.mxu0
    %8956 = vmatprep.mubr.bf16.mxu0 0
    %8957 = vmatmul.mubr.bf16.gmra.mxu0 %v8871
    %v8958 = vpop.f32.mrf.mxu0
    %v8959 = vadd.f32 %v8827, %v8958
    %v8960 = vpop.f32.mrf.mxu0
    %v8961 = vpop.f32.mrf.mxu0
    %v8962 = vadd.f32 %v8827, %v8961
    %v8963 = vpop.f32.mrf.mxu0
    %8964 = vmatprep.mubr.bf16.mxu0 0
    %8965 = vmatmul.mubr.bf16.gmra.mxu0 %v8874
    %v8966 = vpop.f32.mrf.mxu0
    %v8967 = vadd.f32 %v8827, %v8966
    %v8968 = vpop.f32.mrf.mxu0
    %v8969 = vpop.f32.mrf.mxu0
    %v8970 = vadd.f32 %v8827, %v8969
    %v8971 = vpop.f32.mrf.mxu0
    %8972 = vdwg.mxu0
    %v8973 = vmax.f32 %v8911, 0.0
    %v8974 = vmax.f32 %v8914, 0.0
    %v8975 = vmax.f32 %v8919, 0.0
    %v8976 = vmax.f32 %v8922, 0.0
    %v8977 = vmax.f32 %v8927, 0.0
    %v8978 = vmax.f32 %v8930, 0.0
    %v8979 = vmax.f32 %v8935, 0.0
    %v8980 = vmax.f32 %v8938, 0.0
    %v8981 = vmax.f32 %v8943, 0.0
    %v8982 = vmax.f32 %v8946, 0.0
    %v8983 = vmax.f32 %v8951, 0.0
    %v8984 = vmax.f32 %v8954, 0.0
    %v8985 = vmax.f32 %v8959, 0.0
    %v8986 = vmax.f32 %v8962, 0.0
    %v8987 = vmax.f32 %v8967, 0.0
    %v8988 = vmax.f32 %v8970, 0.0
    %v8989 = vpack.c.bf16 %v8974, %v8973
    %v8990 = vpack.c.bf16 %v8976, %v8975
    %v8991 = vpack.c.bf16 %v8978, %v8977
    %v8992 = vpack.c.bf16 %v8980, %v8979
    %v8993 = vpack.c.bf16 %v8982, %v8981
    %v8994 = vpack.c.bf16 %v8984, %v8983
    %v8995 = vpack.c.bf16 %v8986, %v8985
    %v8996 = vpack.c.bf16 %v8988, %v8987
    %v8997 = vlaneseq
    %v8998 = vshrl.u32 %v8997, 7
    %v8999 = vsub.s32 3, %v8998
    %v9000 = vrot.slane %v5416, %v8999
    %v9005 = vunpack.c.l.b16 %v5411
    %v9006 = vunpack.c.l.b16 %v5412
    %v9007 = vunpack.c.l.b16 %v5413
    %v9008 = vunpack.c.l.b16 %v5414
    %v9009 = vpack.c.b16 %v9006, %v9005
    %v9010 = vpack.c.b16 %v9008, %v9007
    %v9014 = vsel %vm101, %v8989, 0
    %v9017 = vsel %vm101, %v8990, 0
    %v9020 = vsel %vm101, %v8991, 0
    %v9023 = vsel %vm101, %v8992, 0
    %v9026 = vsel %vm101, %v8993, 0
    %v9029 = vsel %vm101, %v8994, 0
    %v9032 = vsel %vm101, %v8995, 0
    %v9035 = vsel %vm101, %v8996, 0
    %9037 = vmatprep.subr.bf16.mxu0 0
    %9038 = vmatpush1.bf16.msra.mxu0 0
    %9039 = vmatprep.subr.bf16.mxu0 0
    %9040 = vmatpush1.bf16.msra.mxu0 0
    %9041 = vmatprep.subr.bf16.mxu0 0
    %9042 = vmatpush1.bf16.msra.mxu0 0
    %9043 = vmatprep.subr.bf16.mxu0 0
    %9044 = vmatpush1.bf16.msra.mxu0 0
    %9045 = vmatprep.subr.bf16.mxu0 0
    %9046 = vmatpush1.bf16.msra.mxu0 0
    %9047 = vmatprep.subr.bf16.mxu0 0
    %9048 = vmatpush1.bf16.msra.mxu0 0
    %9049 = vmatprep.subr.bf16.mxu0 0
    %9050 = vmatpush1.bf16.msra.mxu0 %v9010
    %9051 = vmatprep.subr.bf16.mxu0 0
    %9052 = vmatpush1.bf16.msra.mxu0 %v9009
    %9053 = vmatprep.subr.bf16.mxu0 0
    %9054 = vmatpush2.bf16.msra.mxu0 0
    %9055 = vmatprep.subr.bf16.mxu0 0
    %9056 = vmatpush2.bf16.msra.mxu0 0
    %9057 = vmatprep.subr.bf16.mxu0 0
    %9058 = vmatpush2.bf16.msra.mxu0 0
    %9059 = vmatprep.subr.bf16.mxu0 0
    %9060 = vmatpush2.bf16.msra.mxu0 0
    %9061 = vmatprep.subr.bf16.mxu0 0
    %9062 = vmatpush2.bf16.msra.mxu0 0
    %9063 = vmatprep.subr.bf16.mxu0 0
    %9064 = vmatpush2.bf16.msra.mxu0 0
    %9065 = vmatprep.subr.bf16.mxu0 0
    %9066 = vmatpush2.bf16.msra.mxu0 0
    %9067 = vmatprep.subr.bf16.mxu0 0
    %9068 = vmatpush2.bf16.msra.mxu0 0
    %9069 = vmatprep.mubr.bf16.mxu0 0
    %9070 = vmatmul.mubr.bf16.gmra.mxu0 %v9014
    %v9071 = vpop.f32.mrf.mxu0
    %v9072 = vadd.f32 %v9000, %v9071
    %v9073 = vpop.f32.mrf.mxu0
    %v9074 = vpop.f32.mrf.mxu0
    %v9075 = vadd.f32 %v9000, %v9074
    %v9076 = vpop.f32.mrf.mxu0
    %9077 = vmatprep.mubr.bf16.mxu0 0
    %9078 = vmatmul.mubr.bf16.gmra.mxu0 %v9017
    %v9079 = vpop.f32.mrf.mxu0
    %v9080 = vadd.f32 %v9000, %v9079
    %v9081 = vpop.f32.mrf.mxu0
    %v9082 = vpop.f32.mrf.mxu0
    %v9083 = vadd.f32 %v9000, %v9082
    %v9084 = vpop.f32.mrf.mxu0
    %9085 = vmatprep.mubr.bf16.mxu0 0
    %9086 = vmatmul.mubr.bf16.gmra.mxu0 %v9020
    %v9087 = vpop.f32.mrf.mxu0
    %v9088 = vadd.f32 %v9000, %v9087
    %v9089 = vpop.f32.mrf.mxu0
    %v9090 = vpop.f32.mrf.mxu0
    %v9091 = vadd.f32 %v9000, %v9090
    %v9092 = vpop.f32.mrf.mxu0
    %9093 = vmatprep.mubr.bf16.mxu0 0
    %9094 = vmatmul.mubr.bf16.gmra.mxu0 %v9023
    %v9095 = vpop.f32.mrf.mxu0
    %v9096 = vadd.f32 %v9000, %v9095
    %v9097 = vpop.f32.mrf.mxu0
    %v9098 = vpop.f32.mrf.mxu0
    %v9099 = vadd.f32 %v9000, %v9098
    %v9100 = vpop.f32.mrf.mxu0
    %9101 = vmatprep.mubr.bf16.mxu0 0
    %9102 = vmatmul.mubr.bf16.gmra.mxu0 %v9026
    %v9103 = vpop.f32.mrf.mxu0
    %v9104 = vadd.f32 %v9000, %v9103
    %v9105 = vpop.f32.mrf.mxu0
    %v9106 = vpop.f32.mrf.mxu0
    %v9107 = vadd.f32 %v9000, %v9106
    %v9108 = vpop.f32.mrf.mxu0
    %9109 = vmatprep.mubr.bf16.mxu0 0
    %9110 = vmatmul.mubr.bf16.gmra.mxu0 %v9029
    %v9111 = vpop.f32.mrf.mxu0
    %v9112 = vadd.f32 %v9000, %v9111
    %v9113 = vpop.f32.mrf.mxu0
    %v9114 = vpop.f32.mrf.mxu0
    %v9115 = vadd.f32 %v9000, %v9114
    %v9116 = vpop.f32.mrf.mxu0
    %9117 = vmatprep.mubr.bf16.mxu0 0
    %9118 = vmatmul.mubr.bf16.gmra.mxu0 %v9032
    %v9119 = vpop.f32.mrf.mxu0
    %v9120 = vadd.f32 %v9000, %v9119
    %v9121 = vpop.f32.mrf.mxu0
    %v9122 = vpop.f32.mrf.mxu0
    %v9123 = vadd.f32 %v9000, %v9122
    %v9124 = vpop.f32.mrf.mxu0
    %9125 = vmatprep.mubr.bf16.mxu0 0
    %9126 = vmatmul.mubr.bf16.gmra.mxu0 %v9035
    %v9127 = vpop.f32.mrf.mxu0
    %v9128 = vadd.f32 %v9000, %v9127
    %v9129 = vpop.f32.mrf.mxu0
    %v9130 = vpop.f32.mrf.mxu0
    %v9131 = vadd.f32 %v9000, %v9130
    %v9132 = vpop.f32.mrf.mxu0
    %9133 = vdwg.mxu0
    %v9134 = vadd.f32 %v8800, %v9072
    %v9135 = vadd.f32 %v8801, %v9075
    %v9136 = vadd.f32 %v8802, %v9080
    %v9137 = vadd.f32 %v8803, %v9083
    %v9138 = vadd.f32 %v8804, %v9088
    %v9139 = vadd.f32 %v8805, %v9091
    %v9140 = vadd.f32 %v8806, %v9096
    %v9141 = vadd.f32 %v8807, %v9099
    %v9142 = vadd.f32 %v8808, %v9104
    %v9143 = vadd.f32 %v8809, %v9107
    %v9144 = vadd.f32 %v8810, %v9112
    %v9145 = vadd.f32 %v8811, %v9115
    %v9146 = vadd.f32 %v8812, %v9120
    %v9147 = vadd.f32 %v8813, %v9123
    %v9148 = vadd.f32 %v8814, %v9128
    %v9149 = vadd.f32 %v8815, %v9131
    %v9150 = vsel %vm1453, %v9134, 0.0
    %9151 = vadd.xlane.f32.xlu0 %v9150
    %v9152 = vpop.xlane.xlu0 %9151
    %v9153 = vsel %vm1453, %v9135, 0.0
    %9154 = vadd.xlane.f32.xlu0 %v9153
    %v9155 = vpop.xlane.xlu0 %9154
    %v9156 = vsel %vm1453, %v9136, 0.0
    %9157 = vadd.xlane.f32.xlu0 %v9156
    %v9158 = vpop.xlane.xlu0 %9157
    %v9159 = vsel %vm1453, %v9137, 0.0
    %9160 = vadd.xlane.f32.xlu0 %v9159
    %v9161 = vpop.xlane.xlu0 %9160
    %v9162 = vsel %vm1453, %v9138, 0.0
    %9163 = vadd.xlane.f32.xlu0 %v9162
    %v9164 = vpop.xlane.xlu0 %9163
    %v9165 = vsel %vm1453, %v9139, 0.0
    %9166 = vadd.xlane.f32.xlu0 %v9165
    %v9167 = vpop.xlane.xlu0 %9166
    %v9168 = vsel %vm1453, %v9140, 0.0
    %9169 = vadd.xlane.f32.xlu0 %v9168
    %v9170 = vpop.xlane.xlu0 %9169
    %v9171 = vsel %vm1453, %v9141, 0.0
    %9172 = vadd.xlane.f32.xlu0 %v9171
    %v9173 = vpop.xlane.xlu0 %9172
    %v9174 = vsel %vm1453, %v9142, 0.0
    %9175 = vadd.xlane.f32.xlu0 %v9174
    %v9176 = vpop.xlane.xlu0 %9175
    %v9177 = vsel %vm1453, %v9143, 0.0
    %9178 = vadd.xlane.f32.xlu0 %v9177
    %v9179 = vpop.xlane.xlu0 %9178
    %v9180 = vsel %vm1453, %v9144, 0.0
    %9181 = vadd.xlane.f32.xlu0 %v9180
    %v9182 = vpop.xlane.xlu0 %9181
    %v9183 = vsel %vm1453, %v9145, 0.0
    %9184 = vadd.xlane.f32.xlu0 %v9183
    %v9185 = vpop.xlane.xlu0 %9184
    %v9186 = vsel %vm1453, %v9146, 0.0
    %9187 = vadd.xlane.f32.xlu0 %v9186
    %v9188 = vpop.xlane.xlu0 %9187
    %v9189 = vsel %vm1453, %v9147, 0.0
    %9190 = vadd.xlane.f32.xlu0 %v9189
    %v9191 = vpop.xlane.xlu0 %9190
    %v9192 = vsel %vm1453, %v9148, 0.0
    %9193 = vadd.xlane.f32.xlu0 %v9192
    %v9194 = vpop.xlane.xlu0 %9193
    %v9195 = vsel %vm1453, %v9149, 0.0
    %9196 = vadd.xlane.f32.xlu0 %v9195
    %v9197 = vpop.xlane.xlu0 %9196
    %v9198 = vmul.f32 %v9152, %v4600
    %v9199 = vmul.f32 %v9155, %v4600
    %v9200 = vmul.f32 %v9158, %v4600
    %v9201 = vmul.f32 %v9161, %v4600
    %v9202 = vmul.f32 %v9164, %v4600
    %v9203 = vmul.f32 %v9167, %v4600
    %v9204 = vmul.f32 %v9170, %v4600
    %v9205 = vmul.f32 %v9173, %v4600
    %v9206 = vmul.f32 %v9176, %v4600
    %v9207 = vmul.f32 %v9179, %v4600
    %v9208 = vmul.f32 %v9182, %v4600
    %v9209 = vmul.f32 %v9185, %v4600
    %v9210 = vmul.f32 %v9188, %v4600
    %v9211 = vmul.f32 %v9191, %v4600
    %v9212 = vmul.f32 %v9194, %v4600
    %v9213 = vmul.f32 %v9197, %v4600
    %v9214 = vsub.f32 %v9134, %v9198
    %v9215 = vsub.f32 %v9135, %v9199
    %v9216 = vsub.f32 %v9136, %v9200
    %v9217 = vsub.f32 %v9137, %v9201
    %v9218 = vsub.f32 %v9138, %v9202
    %v9219 = vsub.f32 %v9139, %v9203
    %v9220 = vsub.f32 %v9140, %v9204
    %v9221 = vsub.f32 %v9141, %v9205
    %v9222 = vsub.f32 %v9142, %v9206
    %v9223 = vsub.f32 %v9143, %v9207
    %v9224 = vsub.f32 %v9144, %v9208
    %v9225 = vsub.f32 %v9145, %v9209
    %v9226 = vsub.f32 %v9146, %v9210
    %v9227 = vsub.f32 %v9147, %v9211
    %v9228 = vsub.f32 %v9148, %v9212
    %v9229 = vsub.f32 %v9149, %v9213
    %v9230 = vmul.f32 %v9214, %v9214
    %v9231 = vmul.f32 %v9215, %v9215
    %v9232 = vmul.f32 %v9216, %v9216
    %v9233 = vmul.f32 %v9217, %v9217
    %v9234 = vmul.f32 %v9218, %v9218
    %v9235 = vmul.f32 %v9219, %v9219
    %v9236 = vmul.f32 %v9220, %v9220
    %v9237 = vmul.f32 %v9221, %v9221
    %v9238 = vmul.f32 %v9222, %v9222
    %v9239 = vmul.f32 %v9223, %v9223
    %v9240 = vmul.f32 %v9224, %v9224
    %v9241 = vmul.f32 %v9225, %v9225
    %v9242 = vmul.f32 %v9226, %v9226
    %v9243 = vmul.f32 %v9227, %v9227
    %v9244 = vmul.f32 %v9228, %v9228
    %v9245 = vmul.f32 %v9229, %v9229
    %v9246 = vsel %vm1453, %v9230, 0.0
    %9247 = vadd.xlane.f32.xlu0 %v9246
    %v9248 = vpop.xlane.xlu0 %9247
    %v9249 = vsel %vm1453, %v9231, 0.0
    %9250 = vadd.xlane.f32.xlu0 %v9249
    %v9251 = vpop.xlane.xlu0 %9250
    %v9252 = vsel %vm1453, %v9232, 0.0
    %9253 = vadd.xlane.f32.xlu0 %v9252
    %v9254 = vpop.xlane.xlu0 %9253
    %v9255 = vsel %vm1453, %v9233, 0.0
    %9256 = vadd.xlane.f32.xlu0 %v9255
    %v9257 = vpop.xlane.xlu0 %9256
    %v9258 = vsel %vm1453, %v9234, 0.0
    %9259 = vadd.xlane.f32.xlu0 %v9258
    %v9260 = vpop.xlane.xlu0 %9259
    %v9261 = vsel %vm1453, %v9235, 0.0
    %9262 = vadd.xlane.f32.xlu0 %v9261
    %v9263 = vpop.xlane.xlu0 %9262
    %v9264 = vsel %vm1453, %v9236, 0.0
    %9265 = vadd.xlane.f32.xlu0 %v9264
    %v9266 = vpop.xlane.xlu0 %9265
    %v9267 = vsel %vm1453, %v9237, 0.0
    %9268 = vadd.xlane.f32.xlu0 %v9267
    %v9269 = vpop.xlane.xlu0 %9268
    %v9270 = vsel %vm1453, %v9238, 0.0
    %9271 = vadd.xlane.f32.xlu0 %v9270
    %v9272 = vpop.xlane.xlu0 %9271
    %v9273 = vsel %vm1453, %v9239, 0.0
    %9274 = vadd.xlane.f32.xlu0 %v9273
    %v9275 = vpop.xlane.xlu0 %9274
    %v9276 = vsel %vm1453, %v9240, 0.0
    %9277 = vadd.xlane.f32.xlu0 %v9276
    %v9278 = vpop.xlane.xlu0 %9277
    %v9279 = vsel %vm1453, %v9241, 0.0
    %9280 = vadd.xlane.f32.xlu0 %v9279
    %v9281 = vpop.xlane.xlu0 %9280
    %v9282 = vsel %vm1453, %v9242, 0.0
    %9283 = vadd.xlane.f32.xlu0 %v9282
    %v9284 = vpop.xlane.xlu0 %9283
    %v9285 = vsel %vm1453, %v9243, 0.0
    %9286 = vadd.xlane.f32.xlu0 %v9285
    %v9287 = vpop.xlane.xlu0 %9286
    %v9288 = vsel %vm1453, %v9244, 0.0
    %9289 = vadd.xlane.f32.xlu0 %v9288
    %v9290 = vpop.xlane.xlu0 %9289
    %v9291 = vsel %vm1453, %v9245, 0.0
    %9292 = vadd.xlane.f32.xlu0 %v9291
    %v9293 = vpop.xlane.xlu0 %9292
    %v9294 = vmul.f32 %v9248, %v4600
    %v9295 = vmul.f32 %v9251, %v4600
    %v9296 = vmul.f32 %v9254, %v4600
    %v9297 = vmul.f32 %v9257, %v4600
    %v9298 = vmul.f32 %v9260, %v4600
    %v9299 = vmul.f32 %v9263, %v4600
    %v9300 = vmul.f32 %v9266, %v4600
    %v9301 = vmul.f32 %v9269, %v4600
    %v9302 = vmul.f32 %v9272, %v4600
    %v9303 = vmul.f32 %v9275, %v4600
    %v9304 = vmul.f32 %v9278, %v4600
    %v9305 = vmul.f32 %v9281, %v4600
    %v9306 = vmul.f32 %v9284, %v4600
    %v9307 = vmul.f32 %v9287, %v4600
    %v9308 = vmul.f32 %v9290, %v4600
    %v9309 = vmul.f32 %v9293, %v4600
    %v9310 = vadd.f32 %v9294, 1e-05
    %v9311 = vadd.f32 %v9295, 1e-05
    %v9312 = vadd.f32 %v9296, 1e-05
    %v9313 = vadd.f32 %v9297, 1e-05
    %v9314 = vadd.f32 %v9298, 1e-05
    %v9315 = vadd.f32 %v9299, 1e-05
    %v9316 = vadd.f32 %v9300, 1e-05
    %v9317 = vadd.f32 %v9301, 1e-05
    %v9318 = vadd.f32 %v9302, 1e-05
    %v9319 = vadd.f32 %v9303, 1e-05
    %v9320 = vadd.f32 %v9304, 1e-05
    %v9321 = vadd.f32 %v9305, 1e-05
    %v9322 = vadd.f32 %v9306, 1e-05
    %v9323 = vadd.f32 %v9307, 1e-05
    %v9324 = vadd.f32 %v9308, 1e-05
    %v9325 = vadd.f32 %v9309, 1e-05
    %v9326 = vrsqrt.pop %v9310
    %v9327 = vrsqrt.pop %v9311
    %v9328 = vrsqrt.pop %v9312
    %v9329 = vrsqrt.pop %v9313
    %v9330 = vrsqrt.pop %v9314
    %v9331 = vrsqrt.pop %v9315
    %v9332 = vrsqrt.pop %v9316
    %v9333 = vrsqrt.pop %v9317
    %v9334 = vrsqrt.pop %v9318
    %v9335 = vrsqrt.pop %v9319
    %v9336 = vrsqrt.pop %v9320
    %v9337 = vrsqrt.pop %v9321
    %v9338 = vrsqrt.pop %v9322
    %v9339 = vrsqrt.pop %v9323
    %v9340 = vrsqrt.pop %v9324
    %v9341 = vrsqrt.pop %v9325
    %v9342 = vmul.f32 %v9214, %v9326
    %v9343 = vmul.f32 %v9215, %v9327
    %v9344 = vmul.f32 %v9216, %v9328
    %v9345 = vmul.f32 %v9217, %v9329
    %v9346 = vmul.f32 %v9218, %v9330
    %v9347 = vmul.f32 %v9219, %v9331
    %v9348 = vmul.f32 %v9220, %v9332
    %v9349 = vmul.f32 %v9221, %v9333
    %v9350 = vmul.f32 %v9222, %v9334
    %v9351 = vmul.f32 %v9223, %v9335
    %v9352 = vmul.f32 %v9224, %v9336
    %v9353 = vmul.f32 %v9225, %v9337
    %v9354 = vmul.f32 %v9226, %v9338
    %v9355 = vmul.f32 %v9227, %v9339
    %v9356 = vmul.f32 %v9228, %v9340
    %v9357 = vmul.f32 %v9229, %v9341
    %v9358 = vlaneseq
    %v9359 = vshrl.u32 %v9358, 7
    %v9360 = vsub.s32 6, %v9359
    %v9361 = vrot.slane %v5416, %v9360
    %v9362 = vmul.f32 %v9342, %v9361
    %v9363 = vmul.f32 %v9343, %v9361
    %v9364 = vmul.f32 %v9344, %v9361
    %v9365 = vmul.f32 %v9345, %v9361
    %v9366 = vmul.f32 %v9346, %v9361
    %v9367 = vmul.f32 %v9347, %v9361
    %v9368 = vmul.f32 %v9348, %v9361
    %v9369 = vmul.f32 %v9349, %v9361
    %v9370 = vmul.f32 %v9350, %v9361
    %v9371 = vmul.f32 %v9351, %v9361
    %v9372 = vmul.f32 %v9352, %v9361
    %v9373 = vmul.f32 %v9353, %v9361
    %v9374 = vmul.f32 %v9354, %v9361
    %v9375 = vmul.f32 %v9355, %v9361
    %v9376 = vmul.f32 %v9356, %v9361
    %v9377 = vmul.f32 %v9357, %v9361
    %v9378 = vlaneseq
    %v9379 = vshrl.u32 %v9378, 7
    %v9380 = vsub.s32 7, %v9379
    %v9381 = vrot.slane %v5416, %v9380
    %v9382 = vadd.f32 %v9362, %v9381
    %v9383 = vadd.f32 %v9363, %v9381
    %v9384 = vadd.f32 %v9364, %v9381
    %v9385 = vadd.f32 %v9365, %v9381
    %v9386 = vadd.f32 %v9366, %v9381
    %v9387 = vadd.f32 %v9367, %v9381
    %v9388 = vadd.f32 %v9368, %v9381
    %v9389 = vadd.f32 %v9369, %v9381
    %v9390 = vadd.f32 %v9370, %v9381
    %v9391 = vadd.f32 %v9371, %v9381
    %v9392 = vadd.f32 %v9372, %v9381
    %v9393 = vadd.f32 %v9373, %v9381
    %v9394 = vadd.f32 %v9374, %v9381
    %v9395 = vadd.f32 %v9375, %v9381
    %v9396 = vadd.f32 %v9376, %v9381
    %v9397 = vadd.f32 %v9377, %v9381
    %9398 = vst.msk [vmem:[#allocation13] sm:$0xff] %vm1453, %v9382
    %9399 = vst.msk [vmem:[#allocation13 + $0x8] sm:$0xff] %vm1453, %v9383
    %9400 = vst.msk [vmem:[#allocation13 + $0x10] sm:$0xff] %vm1453, %v9384
    %9401 = vst.msk [vmem:[#allocation13 + $0x18] sm:$0xff] %vm1453, %v9385
    %9402 = vst.msk [vmem:[#allocation13 + $0x20] sm:$0xff] %vm1453, %v9386
    %9403 = vst.msk [vmem:[#allocation13 + $0x28] sm:$0xff] %vm1453, %v9387
    %9404 = vst.msk [vmem:[#allocation13 + $0x30] sm:$0xff] %vm1453, %v9388
    %9405 = vst.msk [vmem:[#allocation13 + $0x38] sm:$0xff] %vm1453, %v9389
    %s9406 = scalar_lea.vmem [#allocation13], 64
    %9407 = vst.msk [vmem:[%s9406] sm:$0xff] %vm1453, %v9390
    %9408 = vst.msk [vmem:[%s9406 + $0x8] sm:$0xff] %vm1453, %v9391
    %9409 = vst.msk [vmem:[%s9406 + $0x10] sm:$0xff] %vm1453, %v9392
    %9410 = vst.msk [vmem:[%s9406 + $0x18] sm:$0xff] %vm1453, %v9393
    %9411 = vst.msk [vmem:[%s9406 + $0x20] sm:$0xff] %vm1453, %v9394
    %9412 = vst.msk [vmem:[%s9406 + $0x28] sm:$0xff] %vm1453, %v9395
    %9413 = vst.msk [vmem:[%s9406 + $0x30] sm:$0xff] %vm1453, %v9396
    %9414 = vst.msk [vmem:[%s9406 + $0x38] sm:$0xff] %vm1453, %v9397
    // Predicated region
    $region54: #{_lambda_.1} parent=1 // pred_check
      _
    $region55: #{_lambda_.1} parent=1 // pred_check_branch
      %9416 = sbr.rel (0) target = $region57
    $region56: #{_lambda_.1} parent=1 // pred_region
      %s9418 = ssub.s32 2048, 2048
      %9419 = vsyncadd [#allocation6], %s9418
      %s9420 = sshll.u32 [#allocation13], 4
      %s9421 = int_to_ptr.vmem [resolvable:$true] %s9420
      %9426 = dma.vmem_to_hbm [thread:$0]  %s9421, 2048, %s8, [#allocation6], 128, 128, 8
    $region57: #{_lambda_.1} parent=1 // pred_fallthru
      _
    // Predicated region
    $region58: #{_lambda_.1} parent=1 // pred_check
      _
    $region59: #{_lambda_.1} parent=1 // pred_check_branch
      %9428 = sbr.rel (0) target = $region61
    $region60: #{_lambda_.1} parent=1 // pred_region
      %9429 = dma.done [#allocation6], 2048
    $region61: #{_lambda_.1} parent=1 // pred_fallthru
      _
    %9430 = vsyncpa [#allocation5], 1
    %9431 = vsyncpa [#allocation8], 1
    %9432 = vsyncpa [#allocation11], 1
    %9433 = vsyncpa [#allocation6], 1

</llo_original>
